<compile_context>
chip_gen: v7x
topology: tpu7x:2x2x1
jax: 0.10.0
libtpu: 0.0.40
codegen_flags: <defaults>
</compile_context>

<pallas_src>
import functools

import jax
import jax.numpy as jnp
from jax.experimental import pallas as pl
from jax.experimental.pallas import tpu as pltpu

EPS = 1e-5
NEG_SLOPE = 0.2
LANE = 128


# ---------------------------------------------------------------------------
# Small helpers
# ---------------------------------------------------------------------------
def _round_up(x, m):
    return (x + m - 1) // m * m


def _tpu_vmem_capacity():
    try:
        return int(pltpu.get_tpu_info().vmem_capacity_bytes)
    except Exception:
        return 64 * 1024 * 1024  # conservative (v7x per-core size)


_VMEM_CAP = _tpu_vmem_capacity()
# Scoped limit: 3/4 of physical, capped at 96 MiB (96 MiB on v5e/v6e, 48 MiB on v7x).
_VMEM_LIMIT = max(min(_VMEM_CAP * 3 // 4, 96 * 1024 * 1024), 32 * 1024 * 1024)
# Bigger tiles amortize per-grid-step overhead on 128 MiB parts; keep v7x modest.
_TARGET_TILE_M = 1536 if _VMEM_CAP >= 100 * 1024 * 1024 else 512
_MIN_GRID_STEPS = 2  # keep both TensorCores busy on v7x; negligible cost on 1-TC parts


def _cparams():
    return pltpu.CompilerParams(
        dimension_semantics=("parallel",),
        vmem_limit_bytes=_VMEM_LIMIT,
    )


def _tile_plan(m, row_bytes):
    """Pick (tile_m, num_tiles, m_pad): tile_m multiple of 16, m_pad = nt*tile_m."""
    cap = (_VMEM_LIMIT // 4) // max(row_bytes, 1)
    cap = max(16, cap // 16 * 16)
    target = min(_TARGET_TILE_M, cap)
    nt = max(1, -(-m // target))
    if m >= 32:                       # >=2 grid steps whenever there is enough work
        nt = max(nt, _MIN_GRID_STEPS)
    tile_m = _round_up(-(-m // nt), 16)
    return tile_m, nt, tile_m * nt


# ---------------------------------------------------------------------------
# Pallas kernels — stride-2 (im2col) path
# ---------------------------------------------------------------------------
def mm_stats_kernel(p_ref, w_ref, sum_ref, sq_ref):
    """Stats-only pass 1: y = P @ W (bf16 in, f32 acc); channel sum / sum(y^2)."""
    y = jnp.dot(p_ref[...], w_ref[...], preferred_element_type=jnp.float32)
    sum_ref[0] = jnp.sum(y, axis=0, keepdims=True)
    sq_ref[0] = jnp.sum(y * y, axis=0, keepdims=True)


def mm_y_stats_kernel(p_ref, w_ref, y_ref, sum_ref, sq_ref):
    """Pass 1 (large K): additionally store y in bf16 for the elementwise pass 2."""
    y = jnp.dot(p_ref[...], w_ref[...], preferred_element_type=jnp.float32)
    y_ref[...] = y.astype(y_ref.dtype)
    sum_ref[0] = jnp.sum(y, axis=0, keepdims=True)
    sq_ref[0] = jnp.sum(y * y, axis=0, keepdims=True)


def mm_bn_lrelu_kernel(p_ref, w_ref, scale_ref, shift_ref, o_ref):
    """Fused pass 2 (small K): recompute matmul, apply BN affine + LeakyReLU(0.2)."""
    y = jnp.dot(p_ref[...], w_ref[...], preferred_element_type=jnp.float32)
    y = y * scale_ref[...] + shift_ref[...]
    o_ref[...] = jnp.where(y >= 0.0, y, NEG_SLOPE * y).astype(o_ref.dtype)


def bn_lrelu_kernel(y_ref, scale_ref, shift_ref, o_ref):
    """Elementwise pass 2 (large K): normalize stored bf16 y + LeakyReLU(0.2)."""
    y = y_ref[...].astype(jnp.float32) * scale_ref[...] + shift_ref[...]
    o_ref[...] = jnp.where(y >= 0.0, y, NEG_SLOPE * y).astype(o_ref.dtype)


# ---------------------------------------------------------------------------
# Pallas kernels — stride-1 (direct, shifted-matmul) path
# ---------------------------------------------------------------------------
def _shifted_conv_acc(x2_ref, w_ref, rows, wp):
    """4x4 stride-1 conv over a flattened padded image as 16 shifted matmuls."""
    np_ = w_ref.shape[-1]
    acc = jnp.zeros((rows, np_), jnp.float32)
    for t in range(16):
        shift = (t // 4) * wp + (t % 4)
        slab = x2_ref[0, shift:shift + rows, :]          # (rows, Cin) bf16
        acc = acc + jnp.dot(slab, w_ref[t], preferred_element_type=jnp.float32)
    return acc


def conv_s1_stats_kernel(x2_ref, w_ref, mask_ref, sum_ref, sq_ref, *, rows, wp):
    acc = _shifted_conv_acc(x2_ref, w_ref, rows, wp) * mask_ref[...]
    sum_ref[0] = jnp.sum(acc, axis=0, keepdims=True)
    sq_ref[0] = jnp.sum(acc * acc, axis=0, keepdims=True)


def conv_s1_bn_lrelu_kernel(x2_ref, w_ref, scale_ref, shift_ref, o_ref, *, rows, wp):
    y = _shifted_conv_acc(x2_ref, w_ref, rows, wp) * scale_ref[...] + shift_ref[...]
    o_ref[0] = jnp.where(y >= 0.0, y, NEG_SLOPE * y).astype(o_ref.dtype)


def conv_s1_bias_kernel(x2_ref, w_ref, b_ref, o_ref, *, rows, wp):
    y = _shifted_conv_acc(x2_ref, w_ref, rows, wp) + b_ref[...]
    o_ref[0] = y.astype(o_ref.dtype)


# ---------------------------------------------------------------------------
# Glue: stride-2 im2col layers (conv1..conv3)
# ---------------------------------------------------------------------------
def _im2col_s2(x):
    """x: (N,H,W,C) bf16 -> patches (N*OH*OW, C*16) bf16; k=4, stride=2, pad=1."""
    n, h, w, c = x.shape
    xp = jnp.pad(x, ((0, 0), (1, 1), (1, 1), (0, 0)))
    oh = (h + 2 - 4) // 2 + 1
    ow = (w + 2 - 4) // 2 + 1
    cols = []
    for i in range(4):
        for j in range(4):
            cols.append(xp[:, i:i + 2 * (oh - 1) + 1:2, j:j + 2 * (ow - 1) + 1:2, :])
    p = jnp.stack(cols, axis=-1)                 # (N, OH, OW, C, 16): col = c*16 + t
    return p.reshape(n * oh * ow, c * 16), oh, ow


def conv_bn_lrelu_s2(x, layer):
    """Conv2d(k=4,s=2,p=1) -> BatchNorm2d(batch stats) -> LeakyReLU(0.2); bf16 NHWC."""
    wmat, gamma, beta = layer["wmat"], layer["gamma"], layer["beta"]
    cout, cin_p = layer["cout"], layer["cin_p"]
    k, np_ = wmat.shape
    n, _, _, c = x.shape
    if c < cin_p:                                 # lane-dense K (multiple of 128)
        x = jnp.pad(x, ((0, 0), (0, 0), (0, 0), (0, cin_p - c)))
    patches, oh, ow = _im2col_s2(x)
    m = patches.shape[0]
    tile_m, nt, m_pad = _tile_plan(m, 2 * k + 6 * np_)
    if m_pad > m:
        patches = jnp.pad(patches, ((0, m_pad - m), (0, 0)))

    p_spec = pl.BlockSpec((tile_m, k), lambda i: (i, 0))
    w_spec = pl.BlockSpec((k, np_), lambda i: (0, 0))
    vec_spec = pl.BlockSpec((1, np_), lambda i: (0, 0))
    row_spec = pl.BlockSpec((tile_m, np_), lambda i: (i, 0))
    stat_spec = pl.BlockSpec((1, 1, np_), lambda i: (i, 0, 0))
    stat_shape = jax.ShapeDtypeStruct((nt, 1, np_), jnp.float32)

    # Recompute the matmul in pass 2 when re-reading patches (2*K B/row) is
    # cheaper than a bf16 y round-trip (4*Np B/row).
    recompute = k <= 2 * np_

    if recompute:
        sums, sqs = pl.pallas_call(
            mm_stats_kernel,
            out_shape=(stat_shape, stat_shape),
            grid=(nt,),
            in_specs=[p_spec, w_spec],
            out_specs=(stat_spec, stat_spec),
            compiler_params=_cparams(),
            cost_estimate=pl.CostEstimate(
                flops=2 * m_pad * k * np_, transcendentals=0,
                bytes_accessed=m_pad * k * 2 + k * np_ * 2 + 2 * nt * np_ * 4),
        )(patches, wmat)
        y = None
    else:
        y, sums, sqs = pl.pallas_call(
            mm_y_stats_kernel,
            out_shape=(jax.ShapeDtypeStruct((m_pad, np_), jnp.bfloat16),
                       stat_shape, stat_shape),
            grid=(nt,),
            in_specs=[p_spec, w_spec],
            out_specs=(row_spec, stat_spec, stat_spec),
            compiler_params=_cparams(),
            cost_estimate=pl.CostEstimate(
                flops=2 * m_pad * k * np_, transcendentals=0,
                bytes_accessed=(m_pad * k * 2 + k * np_ * 2
                                + m_pad * np_ * 2 + 2 * nt * np_ * 4)),
        )(patches, wmat)

    # Batch statistics (training-mode BN, biased variance).  The conv bias is
    # deliberately omitted (exactly cancelled by the mean subtraction), so zero
    # pad rows contribute nothing and no correction is needed.
    s = jnp.sum(sums, axis=0)                     # (1, Np)
    sq = jnp.sum(sqs, axis=0)                     # (1, Np)
    mean = s / m
    var = jnp.maximum(sq / m - mean * mean, 0.0)
    scale = gamma * jax.lax.rsqrt(var + EPS)      # (1, Np)
    shift = beta - mean * scale                   # (1, Np)

    if recompute:
        act = pl.pallas_call(
            mm_bn_lrelu_kernel,
            out_shape=jax.ShapeDtypeStruct((m_pad, np_), jnp.bfloat16),
            grid=(nt,),
            in_specs=[p_spec, w_spec, vec_spec, vec_spec],
            out_specs=row_spec,
            compiler_params=_cparams(),
            cost_estimate=pl.CostEstimate(
                flops=2 * m_pad * k * np_, transcendentals=0,
                bytes_accessed=m_pad * k * 2 + k * np_ * 2 + m_pad * np_ * 2),
        )(patches, wmat, scale, shift)
    else:
        act = pl.pallas_call(
            bn_lrelu_kernel,
            out_shape=jax.ShapeDtypeStruct((m_pad, np_), jnp.bfloat16),
            grid=(nt,),
            in_specs=[row_spec, vec_spec, vec_spec],
            out_specs=row_spec,
            compiler_params=_cparams(),
            cost_estimate=pl.CostEstimate(
                flops=3 * m_pad * np_, transcendentals=0,
                bytes_accessed=2 * m_pad * np_ * 2),
        )(y, scale, shift)

    return act[:m, :cout].reshape(n, oh, ow, cout)          # bf16 NHWC


# ---------------------------------------------------------------------------
# Glue: stride-1 direct layers (conv4, final) — no im2col matrix in HBM
# ---------------------------------------------------------------------------
def _prep_s1(x):
    """Flatten a zero-padded NHWC image so the k=4 s=1 p=1 conv becomes 16
    row-shifted matmuls.  Returns (X2, rows, hp, wp, oh, ow)."""
    n, h, w, c = x.shape
    hp, wp = h + 2, w + 2
    oh, ow = h - 1, w - 1
    # pad=1 on every side, plus 4 extra zero rows at the bottom so every shifted
    # slab (max shift 3*wp + 3) stays in bounds.
    xp = jnp.pad(x, ((0, 0), (1, 5), (1, 1), (0, 0)))
    x2 = xp.reshape(n, (hp + 4) * wp, c)
    return x2, hp * wp, hp, wp, oh, ow


def _valid_mask(rows, wp, oh, ow):
    r = jnp.arange(rows)
    valid = ((r % wp) < ow) & ((r // wp) < oh)
    return valid.astype(jnp.float32).reshape(rows, 1)


def conv_bn_lrelu_s1(x, layer):
    """Conv2d(k=4,s=1,p=1) -> BatchNorm2d(batch stats) -> LeakyReLU(0.2); bf16 NHWC."""
    w16, gamma, beta, cout = layer["w16"], layer["gamma"], layer["beta"], layer["cout"]
    _, c, np_ = w16.shape
    n = x.shape[0]
    x2, rows, hp, wp, oh, ow = _prep_s1(x)
    rtot = x2.shape[1]
    mask = _valid_mask(rows, wp, oh, ow)          # masks wrap-around / bottom-pad rows
    m = n * oh * ow

    x_spec = pl.BlockSpec((1, rtot, c), lambda b: (b, 0, 0))
    w_spec = pl.BlockSpec((16, c, np_), lambda b: (0, 0, 0))
    mask_spec = pl.BlockSpec((rows, 1), lambda b: (0, 0))
    vec_spec = pl.BlockSpec((1, np_), lambda b: (0, 0))
    stat_spec = pl.BlockSpec((1, 1, np_), lambda b: (b, 0, 0))
    stat_shape = jax.ShapeDtypeStruct((n, 1, np_), jnp.float32)

    # pass 1: per-batch-element channel sum / sumsq over valid output pixels
    sums, sqs = pl.pallas_call(
        functools.partial(conv_s1_stats_kernel, rows=rows, wp=wp),
        out_shape=(stat_shape, stat_shape),
        grid=(n,),
        in_specs=[x_spec, w_spec, mask_spec],
        out_specs=(stat_spec, stat_spec),
        compiler_params=_cparams(),
    )(x2, w16, mask)

    s = jnp.sum(sums, axis=0)
    sq = jnp.sum(sqs, axis=0)
    mean = s / m
    var = jnp.maximum(sq / m - mean * mean, 0.0)
    scale = gamma * jax.lax.rsqrt(var + EPS)
    shift = beta - mean * scale

    # pass 2: recompute conv (reads only the small raw image) + BN + LeakyReLU
    ypad = pl.pallas_call(
        functools.partial(conv_s1_bn_lrelu_kernel, rows=rows, wp=wp),
        out_shape=jax.ShapeDtypeStruct((n, rows, np_), jnp.bfloat16),
        grid=(n,),
        in_specs=[x_spec, w_spec, vec_spec, vec_spec],
        out_specs=pl.BlockSpec((1, rows, np_), lambda b: (b, 0, 0)),
        compiler_params=_cparams(),
    )(x2, w16, scale, shift)

    # garbage rows (wrap-around / bottom pad) are sliced off here
    return ypad.reshape(n, hp, wp, np_)[:, :oh, :ow, :cout]


def conv_final_s1(x, layer):
    """Final Conv2d(k=4, s=1, p=1) with bias; f32 NHWC output."""
    w16, bias, cout = layer["w16"], layer["b"], layer["cout"]
    _, c, np_ = w16.shape
    n = x.shape[0]
    x2, rows, hp, wp, oh, ow = _prep_s1(x)
    rtot = x2.shape[1]

    ypad = pl.pallas_call(
        functools.partial(conv_s1_bias_kernel, rows=rows, wp=wp),
        out_shape=jax.ShapeDtypeStruct((n, rows, np_), jnp.float32),
        grid=(n,),
        in_specs=[pl.BlockSpec((1, rtot, c), lambda b: (b, 0, 0)),
                  pl.BlockSpec((16, c, np_), lambda b: (0, 0, 0)),
                  pl.BlockSpec((1, np_), lambda b: (0, 0))],
        out_specs=pl.BlockSpec((1, rows, np_), lambda b: (b, 0, 0)),
        compiler_params=_cparams(),
    )(x2, w16, bias)

    return ypad.reshape(n, hp, wp, np_)[:, :oh, :ow, :cout]


# ---------------------------------------------------------------------------
# Parameters
# ---------------------------------------------------------------------------
def init_params(key, input_channels, num_filters=64):
    """Deterministic parameter construction (same shapes as the nn.Module)."""
    cfg = [
        ("conv1", input_channels, num_filters),
        ("conv2", num_filters, num_filters * 2),
        ("conv3", num_filters * 2, num_filters * 4),
        ("conv4", num_filters * 4, num_filters * 8),
        ("final", num_filters * 8, 1),
    ]
    params = {}
    for idx, (name, cin, cout) in enumerate(cfg, start=1):
        key, kw_, kb_ = jax.random.split(key, 3)
        params[name] = {
            "w": 0.05 * jax.random.normal(kw_, (cout, cin, 4, 4), jnp.float32),
            "b": 0.01 * jax.random.normal(kb_, (cout,), jnp.float32),
        }
        if name != "final":
            params[f"bn{idx}"] = {
                "gamma": jnp.ones((cout,), jnp.float32),    # PyTorch BN defaults
                "beta": jnp.zeros((cout,), jnp.float32),
            }
    return params


def _pad_vec(v, np_, fill=0.0):
    return jnp.pad(v, (0, np_ - v.shape[0]),
                   constant_values=fill).reshape(1, np_).astype(jnp.float32)


def _pack_conv_mm(w, gamma, beta):
    """im2col-form weights for stride-2 BN layers: (K, Np) bf16, K = cin_p*16.
    Conv bias is dropped on purpose: batch-stats BN cancels it exactly."""
    cout, cin, kh, kw = w.shape
    cin_p = _round_up(cin, 8)                     # K multiple of 128
    np_ = _round_up(cout, LANE)
    wp = jnp.pad(w, ((0, 0), (0, cin_p - cin), (0, 0), (0, 0)))
    wmat = wp.reshape(cout, cin_p * kh * kw).T    # row index = c*16 + i*4 + j
    wmat = jnp.pad(wmat, ((0, 0), (0, np_ - cout))).astype(jnp.bfloat16)
    return {"wmat": wmat, "cout": cout, "cin_p": cin_p,
            "gamma": _pad_vec(gamma, np_, 1.0), "beta": _pad_vec(beta, np_)}


def _pack_conv_s1(w, b=None, gamma=None, beta=None):
    """Direct-form weights for stride-1 layers: (16, cin, Np) bf16, tap-major."""
    cout, cin, kh, kw = w.shape
    np_ = _round_up(cout, LANE)
    taps = [jnp.pad(w[:, :, i, j].T, ((0, 0), (0, np_ - cout)))
            for i in range(kh) for j in range(kw)]
    packed = {"w16": jnp.stack(taps, axis=0).astype(jnp.bfloat16), "cout": cout}
    if b is not None:
        packed["b"] = _pad_vec(b, np_)
    if gamma is not None:
        packed["gamma"] = _pad_vec(gamma, np_, 1.0)
        packed["beta"] = _pad_vec(beta, np_)
    return packed


def pack_params(params):
    packed = {}
    for idx in (1, 2, 3):
        packed[f"layer{idx}"] = _pack_conv_mm(
            params[f"conv{idx}"]["w"],
            params[f"bn{idx}"]["gamma"], params[f"bn{idx}"]["beta"])
    packed["layer4"] = _pack_conv_s1(
        params["conv4"]["w"],
        gamma=params["bn4"]["gamma"], beta=params["bn4"]["beta"])
    packed["final"] = _pack_conv_s1(params["final"]["w"], b=params["final"]["b"])
    return packed


# ---------------------------------------------------------------------------
# PatchDiscriminator forward
# ---------------------------------------------------------------------------
def patch_discriminator_forward(packed, x_nchw):
    x = jnp.transpose(x_nchw, (0, 2, 3, 1)).astype(jnp.bfloat16)   # NCHW -> NHWC once
    feat1 = conv_bn_lrelu_s2(x, packed["layer1"])        # stride 2
    feat2 = conv_bn_lrelu_s2(feat1, packed["layer2"])    # stride 2
    feat3 = conv_bn_lrelu_s2(feat2, packed["layer3"])    # stride 2
    feat4 = conv_bn_lrelu_s1(feat3, packed["layer4"])    # stride 1, in-kernel conv
    out = conv_final_s1(feat4, packed["final"])          # stride 1, in-kernel conv

    def to_nchw(t):                                      # module boundary only
        return jnp.transpose(t, (0, 3, 1, 2)).astype(jnp.float32)

    return to_nchw(out), [to_nchw(feat1), to_nchw(feat2),
                          to_nchw(feat3), to_nchw(feat4)]


if __name__ == "__main__":
    key = jax.random.PRNGKey(0)
    key, kx = jax.random.split(key)

    # Small but valid shape: 32x32 spatial keeps every conv output non-empty
    # (the final 4x4 conv needs a >=3x3 feature map from conv4).
    batch, in_ch, spatial, nf = 2, 4, 32, 16
    x = jax.random.normal(kx, (batch, in_ch, spatial, spatial), jnp.float32)

    params = init_params(key, input_channels=in_ch, num_filters=nf)
    packed = pack_params(params)

    fwd = jax.jit(functools.partial(patch_discriminator_forward, packed))
    out, feats = fwd(x)
    out = jax.block_until_ready(out)
    for f in feats:
        jax.block_until_ready(f)

    # Sanity checks on shape semantics (matches PyTorch output shapes).
    assert out.shape == (batch, 1, 2, 2), out.shape
    assert feats[0].shape == (batch, nf, 16, 16)
    assert feats[1].shape == (batch, nf * 2, 8, 8)
    assert feats[2].shape == (batch, nf * 4, 4, 4)
    assert feats[3].shape == (batch, nf * 8, 3, 3)
    assert bool(jnp.all(jnp.isfinite(out)))

    print("KERNEL_OK")
</pallas_src>

<mosaic_0001>
module attributes {stable_mosaic.version = 11 : i64} {
  func.func @mm_stats_kernel(%arg0: i32, %arg1: memref<256x128xbf16, #tpu.memory_space<vmem>>, %arg2: memref<128x128xbf16, #tpu.memory_space<vmem>>, %arg3: memref<1x1x128xf32, #tpu.memory_space<vmem>>, %arg4: memref<1x1x128xf32, #tpu.memory_space<vmem>>) attributes {dimension_semantics = [#tpu.dimension_semantics<parallel>], iteration_bounds = array<i64: 2>, scalar_prefetch = 0 : i64, scratch_operands = 0 : i64, tpu.core_type = #tpu.core_type<tc>, window_params = [{transform_indices = @transform_0, window_bounds = array<i64: 256, 128>}, {pipeline_mode = #tpu.pipeline_mode<synchronous>, transform_indices = @transform_1, window_bounds = array<i64: 128, 128>}, {transform_indices = @transform_2, window_bounds = array<i64: 1, 1, 128>}, {transform_indices = @transform_3, window_bounds = array<i64: 1, 1, 128>}]} {
    %c0 = arith.constant 0 : index
    %c0_0 = arith.constant 0 : index
    %0 = vector.load %arg1[%c0, %c0_0] : memref<256x128xbf16, #tpu.memory_space<vmem>>, vector<256x128xbf16>
    %c0_1 = arith.constant 0 : index
    %c0_2 = arith.constant 0 : index
    %1 = vector.load %arg2[%c0_1, %c0_2] : memref<128x128xbf16, #tpu.memory_space<vmem>>, vector<128x128xbf16>
    %cst = arith.constant dense<0.000000e+00> : vector<256x128xf32>
    %2 = tpu.matmul %0, %1, %cst {dimension_numbers = #tpu.dot_dimension_numbers<[1], [0], [0], [1], [0, 0, 1, 1], [], []>} : vector<256x128xbf16>, vector<128x128xbf16>, vector<256x128xf32> -> vector<256x128xf32>
    %cst_3 = arith.constant dense<0.000000e+00> : vector<128xf32>
    %3 = vector.multi_reduction <add>, %2, %cst_3 [0] : vector<256x128xf32> to vector<128xf32>
    %4 = vector.shape_cast %3 : vector<128xf32> to vector<1x128xf32>
    %c0_4 = arith.constant 0 : index
    %c0_5 = arith.constant 0 : index
    %c0_6 = arith.constant 0 : index
    %5 = vector.load %arg3[%c0_4, %c0_5, %c0_6] : memref<1x1x128xf32, #tpu.memory_space<vmem>>, vector<1x1x128xf32>
    %6 = vector.shape_cast %5 : vector<1x1x128xf32> to vector<1x128xf32>
    %7 = vector.shape_cast %4 : vector<1x128xf32> to vector<1x1x128xf32>
    tpu.vector_store %arg3[%c0_4, %c0_5, %c0_6], %7 {strides = array<i32>} : memref<1x1x128xf32, #tpu.memory_space<vmem>>, vector<1x1x128xf32>,
    %8 = arith.mulf %2, %2 : vector<256x128xf32>
    %cst_7 = arith.constant dense<0.000000e+00> : vector<128xf32>
    %9 = vector.multi_reduction <add>, %8, %cst_7 [0] : vector<256x128xf32> to vector<128xf32>
    %10 = vector.shape_cast %9 : vector<128xf32> to vector<1x128xf32>
    %c0_8 = arith.constant 0 : index
    %c0_9 = arith.constant 0 : index
    %c0_10 = arith.constant 0 : index
    %11 = vector.load %arg4[%c0_8, %c0_9, %c0_10] : memref<1x1x128xf32, #tpu.memory_space<vmem>>, vector<1x1x128xf32>
    %12 = vector.shape_cast %11 : vector<1x1x128xf32> to vector<1x128xf32>
    %13 = vector.shape_cast %10 : vector<1x128xf32> to vector<1x1x128xf32>
    tpu.vector_store %arg4[%c0_8, %c0_9, %c0_10], %13 {strides = array<i32>} : memref<1x1x128xf32, #tpu.memory_space<vmem>>, vector<1x1x128xf32>,
    return
  }
  func.func @transform_0(%arg0: i32) -> (i32, i32) {
    %c0_i32 = arith.constant 0 : i32
    %c0_i32_0 = arith.constant 0 : i32
    return %arg0, %c0_i32 : i32, i32
  }
  func.func @transform_1(%arg0: i32) -> (i32, i32) {
    %c0_i32 = arith.constant 0 : i32
    %c0_i32_0 = arith.constant 0 : i32
    %c0_i32_1 = arith.constant 0 : i32
    return %c0_i32, %c0_i32_0 : i32, i32
  }
  func.func @transform_2(%arg0: i32) -> (i32, i32, i32) {
    %c0_i32 = arith.constant 0 : i32
    %c0_i32_0 = arith.constant 0 : i32
    %c0_i32_1 = arith.constant 0 : i32
    return %arg0, %c0_i32, %c0_i32_0 : i32, i32, i32
  }
  func.func @transform_3(%arg0: i32) -> (i32, i32, i32) {
    %c0_i32 = arith.constant 0 : i32
    %c0_i32_0 = arith.constant 0 : i32
    %c0_i32_1 = arith.constant 0 : i32
    return %arg0, %c0_i32, %c0_i32_0 : i32, i32, i32
  }
}

module attributes {stable_mosaic.version = 11 : i64} {
  func.func @mm_bn_lrelu_kernel(%arg0: i32, %arg1: memref<256x128xbf16, #tpu.memory_space<vmem>>, %arg2: memref<128x128xbf16, #tpu.memory_space<vmem>>, %arg3: memref<1x128xf32, #tpu.memory_space<vmem>>, %arg4: memref<1x128xf32, #tpu.memory_space<vmem>>, %arg5: memref<256x128xbf16, #tpu.memory_space<vmem>>) attributes {dimension_semantics = [#tpu.dimension_semantics<parallel>], iteration_bounds = array<i64: 2>, scalar_prefetch = 0 : i64, scratch_operands = 0 : i64, tpu.core_type = #tpu.core_type<tc>, window_params = [{transform_indices = @transform_0, window_bounds = array<i64: 256, 128>}, {pipeline_mode = #tpu.pipeline_mode<synchronous>, transform_indices = @transform_1, window_bounds = array<i64: 128, 128>}, {pipeline_mode = #tpu.pipeline_mode<synchronous>, transform_indices = @transform_2, window_bounds = array<i64: 1, 128>}, {pipeline_mode = #tpu.pipeline_mode<synchronous>, transform_indices = @transform_3, window_bounds = array<i64: 1, 128>}, {transform_indices = @transform_4, window_bounds = array<i64: 256, 128>}]} {
    %c0 = arith.constant 0 : index
    %c0_0 = arith.constant 0 : index
    %0 = vector.load %arg1[%c0, %c0_0] : memref<256x128xbf16, #tpu.memory_space<vmem>>, vector<256x128xbf16>
    %c0_1 = arith.constant 0 : index
    %c0_2 = arith.constant 0 : index
    %1 = vector.load %arg2[%c0_1, %c0_2] : memref<128x128xbf16, #tpu.memory_space<vmem>>, vector<128x128xbf16>
    %cst = arith.constant dense<0.000000e+00> : vector<256x128xf32>
    %2 = tpu.matmul %0, %1, %cst {dimension_numbers = #tpu.dot_dimension_numbers<[1], [0], [0], [1], [0, 0, 1, 1], [], []>} : vector<256x128xbf16>, vector<128x128xbf16>, vector<256x128xf32> -> vector<256x128xf32>
    %c0_3 = arith.constant 0 : index
    %c0_4 = arith.constant 0 : index
    %3 = vector.load %arg3[%c0_3, %c0_4] : memref<1x128xf32, #tpu.memory_space<vmem>>, vector<1x128xf32>
    %4 = vector.broadcast %3 : vector<1x128xf32> to vector<256x128xf32>
    %5 = arith.mulf %2, %4 : vector<256x128xf32>
    %c0_5 = arith.constant 0 : index
    %c0_6 = arith.constant 0 : index
    %6 = vector.load %arg4[%c0_5, %c0_6] : memref<1x128xf32, #tpu.memory_space<vmem>>, vector<1x128xf32>
    %7 = vector.broadcast %6 : vector<1x128xf32> to vector<256x128xf32>
    %8 = arith.addf %5, %7 : vector<256x128xf32>
    %cst_7 = arith.constant 0.000000e+00 : f32
    %9 = vector.broadcast %cst_7 : f32 to vector<256x128xf32>
    %10 = arith.cmpf oge, %8, %9 : vector<256x128xf32>
    %cst_8 = arith.constant 2.000000e-01 : f32
    %11 = vector.broadcast %cst_8 : f32 to vector<256x128xf32>
    %12 = arith.mulf %11, %8 : vector<256x128xf32>
    %13 = arith.select %10, %8, %12 : vector<256x128xi1>, vector<256x128xf32>
    %14 = arith.truncf %13 : vector<256x128xf32> to vector<256x128xbf16>
    %c0_9 = arith.constant 0 : index
    %c0_10 = arith.constant 0 : index
    %15 = vector.load %arg5[%c0_9, %c0_10] : memref<256x128xbf16, #tpu.memory_space<vmem>>, vector<256x128xbf16>
    tpu.vector_store %arg5[%c0_9, %c0_10], %14 {strides = array<i32>} : memref<256x128xbf16, #tpu.memory_space<vmem>>, vector<256x128xbf16>,
    return
  }
  func.func @transform_0(%arg0: i32) -> (i32, i32) {
    %c0_i32 = arith.constant 0 : i32
    %c0_i32_0 = arith.constant 0 : i32
    return %arg0, %c0_i32 : i32, i32
  }
  func.func @transform_1(%arg0: i32) -> (i32, i32) {
    %c0_i32 = arith.constant 0 : i32
    %c0_i32_0 = arith.constant 0 : i32
    %c0_i32_1 = arith.constant 0 : i32
    return %c0_i32, %c0_i32_0 : i32, i32
  }
  func.func @transform_2(%arg0: i32) -> (i32, i32) {
    %c0_i32 = arith.constant 0 : i32
    %c0_i32_0 = arith.constant 0 : i32
    %c0_i32_1 = arith.constant 0 : i32
    return %c0_i32, %c0_i32_0 : i32, i32
  }
  func.func @transform_3(%arg0: i32) -> (i32, i32) {
    %c0_i32 = arith.constant 0 : i32
    %c0_i32_0 = arith.constant 0 : i32
    %c0_i32_1 = arith.constant 0 : i32
    return %c0_i32, %c0_i32_0 : i32, i32
  }
  func.func @transform_4(%arg0: i32) -> (i32, i32) {
    %c0_i32 = arith.constant 0 : i32
    %c0_i32_0 = arith.constant 0 : i32
    return %arg0, %c0_i32 : i32, i32
  }
}

module attributes {stable_mosaic.version = 11 : i64} {
  func.func @mm_stats_kernel(%arg0: i32, %arg1: memref<64x256xbf16, #tpu.memory_space<vmem>>, %arg2: memref<256x128xbf16, #tpu.memory_space<vmem>>, %arg3: memref<1x1x128xf32, #tpu.memory_space<vmem>>, %arg4: memref<1x1x128xf32, #tpu.memory_space<vmem>>) attributes {dimension_semantics = [#tpu.dimension_semantics<parallel>], iteration_bounds = array<i64: 2>, scalar_prefetch = 0 : i64, scratch_operands = 0 : i64, tpu.core_type = #tpu.core_type<tc>, window_params = [{transform_indices = @transform_0, window_bounds = array<i64: 64, 256>}, {pipeline_mode = #tpu.pipeline_mode<synchronous>, transform_indices = @transform_1, window_bounds = array<i64: 256, 128>}, {transform_indices = @transform_2, window_bounds = array<i64: 1, 1, 128>}, {transform_indices = @transform_3, window_bounds = array<i64: 1, 1, 128>}]} {
    %c0 = arith.constant 0 : index
    %c0_0 = arith.constant 0 : index
    %0 = vector.load %arg1[%c0, %c0_0] : memref<64x256xbf16, #tpu.memory_space<vmem>>, vector<64x256xbf16>
    %c0_1 = arith.constant 0 : index
    %c0_2 = arith.constant 0 : index
    %1 = vector.load %arg2[%c0_1, %c0_2] : memref<256x128xbf16, #tpu.memory_space<vmem>>, vector<256x128xbf16>
    %cst = arith.constant dense<0.000000e+00> : vector<64x128xf32>
    %2 = tpu.matmul %0, %1, %cst {dimension_numbers = #tpu.dot_dimension_numbers<[1], [0], [0], [1], [0, 0, 1, 1], [], []>} : vector<64x256xbf16>, vector<256x128xbf16>, vector<64x128xf32> -> vector<64x128xf32>
    %cst_3 = arith.constant dense<0.000000e+00> : vector<128xf32>
    %3 = vector.multi_reduction <add>, %2, %cst_3 [0] : vector<64x128xf32> to vector<128xf32>
    %4 = vector.shape_cast %3 : vector<128xf32> to vector<1x128xf32>
    %c0_4 = arith.constant 0 : index
    %c0_5 = arith.constant 0 : index
    %c0_6 = arith.constant 0 : index
    %5 = vector.load %arg3[%c0_4, %c0_5, %c0_6] : memref<1x1x128xf32, #tpu.memory_space<vmem>>, vector<1x1x128xf32>
    %6 = vector.shape_cast %5 : vector<1x1x128xf32> to vector<1x128xf32>
    %7 = vector.shape_cast %4 : vector<1x128xf32> to vector<1x1x128xf32>
    tpu.vector_store %arg3[%c0_4, %c0_5, %c0_6], %7 {strides = array<i32>} : memref<1x1x128xf32, #tpu.memory_space<vmem>>, vector<1x1x128xf32>,
    %8 = arith.mulf %2, %2 : vector<64x128xf32>
    %cst_7 = arith.constant dense<0.000000e+00> : vector<128xf32>
    %9 = vector.multi_reduction <add>, %8, %cst_7 [0] : vector<64x128xf32> to vector<128xf32>
    %10 = vector.shape_cast %9 : vector<128xf32> to vector<1x128xf32>
    %c0_8 = arith.constant 0 : index
    %c0_9 = arith.constant 0 : index
    %c0_10 = arith.constant 0 : index
    %11 = vector.load %arg4[%c0_8, %c0_9, %c0_10] : memref<1x1x128xf32, #tpu.memory_space<vmem>>, vector<1x1x128xf32>
    %12 = vector.shape_cast %11 : vector<1x1x128xf32> to vector<1x128xf32>
    %13 = vector.shape_cast %10 : vector<1x128xf32> to vector<1x1x128xf32>
    tpu.vector_store %arg4[%c0_8, %c0_9, %c0_10], %13 {strides = array<i32>} : memref<1x1x128xf32, #tpu.memory_space<vmem>>, vector<1x1x128xf32>,
    return
  }
  func.func @transform_0(%arg0: i32) -> (i32, i32) {
    %c0_i32 = arith.constant 0 : i32
    %c0_i32_0 = arith.constant 0 : i32
    return %arg0, %c0_i32 : i32, i32
  }
  func.func @transform_1(%arg0: i32) -> (i32, i32) {
    %c0_i32 = arith.constant 0 : i32
    %c0_i32_0 = arith.constant 0 : i32
    %c0_i32_1 = arith.constant 0 : i32
    return %c0_i32, %c0_i32_0 : i32, i32
  }
  func.func @transform_2(%arg0: i32) -> (i32, i32, i32) {
    %c0_i32 = arith.constant 0 : i32
    %c0_i32_0 = arith.constant 0 : i32
    %c0_i32_1 = arith.constant 0 : i32
    return %arg0, %c0_i32, %c0_i32_0 : i32, i32, i32
  }
  func.func @transform_3(%arg0: i32) -> (i32, i32, i32) {
    %c0_i32 = arith.constant 0 : i32
    %c0_i32_0 = arith.constant 0 : i32
    %c0_i32_1 = arith.constant 0 : i32
    return %arg0, %c0_i32, %c0_i32_0 : i32, i32, i32
  }
}

module attributes {stable_mosaic.version = 11 : i64} {
  func.func @mm_bn_lrelu_kernel(%arg0: i32, %arg1: memref<64x256xbf16, #tpu.memory_space<vmem>>, %arg2: memref<256x128xbf16, #tpu.memory_space<vmem>>, %arg3: memref<1x128xf32, #tpu.memory_space<vmem>>, %arg4: memref<1x128xf32, #tpu.memory_space<vmem>>, %arg5: memref<64x128xbf16, #tpu.memory_space<vmem>>) attributes {dimension_semantics = [#tpu.dimension_semantics<parallel>], iteration_bounds = array<i64: 2>, scalar_prefetch = 0 : i64, scratch_operands = 0 : i64, tpu.core_type = #tpu.core_type<tc>, window_params = [{transform_indices = @transform_0, window_bounds = array<i64: 64, 256>}, {pipeline_mode = #tpu.pipeline_mode<synchronous>, transform_indices = @transform_1, window_bounds = array<i64: 256, 128>}, {pipeline_mode = #tpu.pipeline_mode<synchronous>, transform_indices = @transform_2, window_bounds = array<i64: 1, 128>}, {pipeline_mode = #tpu.pipeline_mode<synchronous>, transform_indices = @transform_3, window_bounds = array<i64: 1, 128>}, {transform_indices = @transform_4, window_bounds = array<i64: 64, 128>}]} {
    %c0 = arith.constant 0 : index
    %c0_0 = arith.constant 0 : index
    %0 = vector.load %arg1[%c0, %c0_0] : memref<64x256xbf16, #tpu.memory_space<vmem>>, vector<64x256xbf16>
    %c0_1 = arith.constant 0 : index
    %c0_2 = arith.constant 0 : index
    %1 = vector.load %arg2[%c0_1, %c0_2] : memref<256x128xbf16, #tpu.memory_space<vmem>>, vector<256x128xbf16>
    %cst = arith.constant dense<0.000000e+00> : vector<64x128xf32>
    %2 = tpu.matmul %0, %1, %cst {dimension_numbers = #tpu.dot_dimension_numbers<[1], [0], [0], [1], [0, 0, 1, 1], [], []>} : vector<64x256xbf16>, vector<256x128xbf16>, vector<64x128xf32> -> vector<64x128xf32>
    %c0_3 = arith.constant 0 : index
    %c0_4 = arith.constant 0 : index
    %3 = vector.load %arg3[%c0_3, %c0_4] : memref<1x128xf32, #tpu.memory_space<vmem>>, vector<1x128xf32>
    %4 = vector.broadcast %3 : vector<1x128xf32> to vector<64x128xf32>
    %5 = arith.mulf %2, %4 : vector<64x128xf32>
    %c0_5 = arith.constant 0 : index
    %c0_6 = arith.constant 0 : index
    %6 = vector.load %arg4[%c0_5, %c0_6] : memref<1x128xf32, #tpu.memory_space<vmem>>, vector<1x128xf32>
    %7 = vector.broadcast %6 : vector<1x128xf32> to vector<64x128xf32>
    %8 = arith.addf %5, %7 : vector<64x128xf32>
    %cst_7 = arith.constant 0.000000e+00 : f32
    %9 = vector.broadcast %cst_7 : f32 to vector<64x128xf32>
    %10 = arith.cmpf oge, %8, %9 : vector<64x128xf32>
    %cst_8 = arith.constant 2.000000e-01 : f32
    %11 = vector.broadcast %cst_8 : f32 to vector<64x128xf32>
    %12 = arith.mulf %11, %8 : vector<64x128xf32>
    %13 = arith.select %10, %8, %12 : vector<64x128xi1>, vector<64x128xf32>
    %14 = arith.truncf %13 : vector<64x128xf32> to vector<64x128xbf16>
    %c0_9 = arith.constant 0 : index
    %c0_10 = arith.constant 0 : index
    %15 = vector.load %arg5[%c0_9, %c0_10] : memref<64x128xbf16, #tpu.memory_space<vmem>>, vector<64x128xbf16>
    tpu.vector_store %arg5[%c0_9, %c0_10], %14 {strides = array<i32>} : memref<64x128xbf16, #tpu.memory_space<vmem>>, vector<64x128xbf16>,
    return
  }
  func.func @transform_0(%arg0: i32) -> (i32, i32) {
    %c0_i32 = arith.constant 0 : i32
    %c0_i32_0 = arith.constant 0 : i32
    return %arg0, %c0_i32 : i32, i32
  }
  func.func @transform_1(%arg0: i32) -> (i32, i32) {
    %c0_i32 = arith.constant 0 : i32
    %c0_i32_0 = arith.constant 0 : i32
    %c0_i32_1 = arith.constant 0 : i32
    return %c0_i32, %c0_i32_0 : i32, i32
  }
  func.func @transform_2(%arg0: i32) -> (i32, i32) {
    %c0_i32 = arith.constant 0 : i32
    %c0_i32_0 = arith.constant 0 : i32
    %c0_i32_1 = arith.constant 0 : i32
    return %c0_i32, %c0_i32_0 : i32, i32
  }
  func.func @transform_3(%arg0: i32) -> (i32, i32) {
    %c0_i32 = arith.constant 0 : i32
    %c0_i32_0 = arith.constant 0 : i32
    %c0_i32_1 = arith.constant 0 : i32
    return %c0_i32, %c0_i32_0 : i32, i32
  }
  func.func @transform_4(%arg0: i32) -> (i32, i32) {
    %c0_i32 = arith.constant 0 : i32
    %c0_i32_0 = arith.constant 0 : i32
    return %arg0, %c0_i32 : i32, i32
  }
}

module attributes {stable_mosaic.version = 11 : i64} {
  func.func @mm_y_stats_kernel(%arg0: i32, %arg1: memref<16x512xbf16, #tpu.memory_space<vmem>>, %arg2: memref<512x128xbf16, #tpu.memory_space<vmem>>, %arg3: memref<16x128xbf16, #tpu.memory_space<vmem>>, %arg4: memref<1x1x128xf32, #tpu.memory_space<vmem>>, %arg5: memref<1x1x128xf32, #tpu.memory_space<vmem>>) attributes {dimension_semantics = [#tpu.dimension_semantics<parallel>], iteration_bounds = array<i64: 2>, scalar_prefetch = 0 : i64, scratch_operands = 0 : i64, tpu.core_type = #tpu.core_type<tc>, window_params = [{transform_indices = @transform_0, window_bounds = array<i64: 16, 512>}, {pipeline_mode = #tpu.pipeline_mode<synchronous>, transform_indices = @transform_1, window_bounds = array<i64: 512, 128>}, {transform_indices = @transform_2, window_bounds = array<i64: 16, 128>}, {transform_indices = @transform_3, window_bounds = array<i64: 1, 1, 128>}, {transform_indices = @transform_4, window_bounds = array<i64: 1, 1, 128>}]} {
    %c0 = arith.constant 0 : index
    %c0_0 = arith.constant 0 : index
    %0 = vector.load %arg1[%c0, %c0_0] : memref<16x512xbf16, #tpu.memory_space<vmem>>, vector<16x512xbf16>
    %c0_1 = arith.constant 0 : index
    %c0_2 = arith.constant 0 : index
    %1 = vector.load %arg2[%c0_1, %c0_2] : memref<512x128xbf16, #tpu.memory_space<vmem>>, vector<512x128xbf16>
    %cst = arith.constant dense<0.000000e+00> : vector<16x128xf32>
    %2 = tpu.matmul %0, %1, %cst {dimension_numbers = #tpu.dot_dimension_numbers<[1], [0], [0], [1], [0, 0, 1, 1], [], []>} : vector<16x512xbf16>, vector<512x128xbf16>, vector<16x128xf32> -> vector<16x128xf32>
    %3 = arith.truncf %2 : vector<16x128xf32> to vector<16x128xbf16>
    %c0_3 = arith.constant 0 : index
    %c0_4 = arith.constant 0 : index
    %4 = vector.load %arg3[%c0_3, %c0_4] : memref<16x128xbf16, #tpu.memory_space<vmem>>, vector<16x128xbf16>
    tpu.vector_store %arg3[%c0_3, %c0_4], %3 {strides = array<i32>} : memref<16x128xbf16, #tpu.memory_space<vmem>>, vector<16x128xbf16>,
    %cst_5 = arith.constant dense<0.000000e+00> : vector<128xf32>
    %5 = vector.multi_reduction <add>, %2, %cst_5 [0] : vector<16x128xf32> to vector<128xf32>
    %6 = vector.shape_cast %5 : vector<128xf32> to vector<1x128xf32>
    %c0_6 = arith.constant 0 : index
    %c0_7 = arith.constant 0 : index
    %c0_8 = arith.constant 0 : index
    %7 = vector.load %arg4[%c0_6, %c0_7, %c0_8] : memref<1x1x128xf32, #tpu.memory_space<vmem>>, vector<1x1x128xf32>
    %8 = vector.shape_cast %7 : vector<1x1x128xf32> to vector<1x128xf32>
    %9 = vector.shape_cast %6 : vector<1x128xf32> to vector<1x1x128xf32>
    tpu.vector_store %arg4[%c0_6, %c0_7, %c0_8], %9 {strides = array<i32>} : memref<1x1x128xf32, #tpu.memory_space<vmem>>, vector<1x1x128xf32>,
    %10 = arith.mulf %2, %2 : vector<16x128xf32>
    %cst_9 = arith.constant dense<0.000000e+00> : vector<128xf32>
    %11 = vector.multi_reduction <add>, %10, %cst_9 [0] : vector<16x128xf32> to vector<128xf32>
    %12 = vector.shape_cast %11 : vector<128xf32> to vector<1x128xf32>
    %c0_10 = arith.constant 0 : index
    %c0_11 = arith.constant 0 : index
    %c0_12 = arith.constant 0 : index
    %13 = vector.load %arg5[%c0_10, %c0_11, %c0_12] : memref<1x1x128xf32, #tpu.memory_space<vmem>>, vector<1x1x128xf32>
    %14 = vector.shape_cast %13 : vector<1x1x128xf32> to vector<1x128xf32>
    %15 = vector.shape_cast %12 : vector<1x128xf32> to vector<1x1x128xf32>
    tpu.vector_store %arg5[%c0_10, %c0_11, %c0_12], %15 {strides = array<i32>} : memref<1x1x128xf32, #tpu.memory_space<vmem>>, vector<1x1x128xf32>,
    return
  }
  func.func @transform_0(%arg0: i32) -> (i32, i32) {
    %c0_i32 = arith.constant 0 : i32
    %c0_i32_0 = arith.constant 0 : i32
    return %arg0, %c0_i32 : i32, i32
  }
  func.func @transform_1(%arg0: i32) -> (i32, i32) {
    %c0_i32 = arith.constant 0 : i32
    %c0_i32_0 = arith.constant 0 : i32
    %c0_i32_1 = arith.constant 0 : i32
    return %c0_i32, %c0_i32_0 : i32, i32
  }
  func.func @transform_2(%arg0: i32) -> (i32, i32) {
    %c0_i32 = arith.constant 0 : i32
    %c0_i32_0 = arith.constant 0 : i32
    return %arg0, %c0_i32 : i32, i32
  }
  func.func @transform_3(%arg0: i32) -> (i32, i32, i32) {
    %c0_i32 = arith.constant 0 : i32
    %c0_i32_0 = arith.constant 0 : i32
    %c0_i32_1 = arith.constant 0 : i32
    return %arg0, %c0_i32, %c0_i32_0 : i32, i32, i32
  }
  func.func @transform_4(%arg0: i32) -> (i32, i32, i32) {
    %c0_i32 = arith.constant 0 : i32
    %c0_i32_0 = arith.constant 0 : i32
    %c0_i32_1 = arith.constant 0 : i32
    return %arg0, %c0_i32, %c0_i32_0 : i32, i32, i32
  }
}

module attributes {stable_mosaic.version = 11 : i64} {
  func.func @bn_lrelu_kernel(%arg0: i32, %arg1: memref<16x128xbf16, #tpu.memory_space<vmem>>, %arg2: memref<1x128xf32, #tpu.memory_space<vmem>>, %arg3: memref<1x128xf32, #tpu.memory_space<vmem>>, %arg4: memref<16x128xbf16, #tpu.memory_space<vmem>>) attributes {dimension_semantics = [#tpu.dimension_semantics<parallel>], iteration_bounds = array<i64: 2>, scalar_prefetch = 0 : i64, scratch_operands = 0 : i64, tpu.core_type = #tpu.core_type<tc>, window_params = [{transform_indices = @transform_0, window_bounds = array<i64: 16, 128>}, {pipeline_mode = #tpu.pipeline_mode<synchronous>, transform_indices = @transform_1, window_bounds = array<i64: 1, 128>}, {pipeline_mode = #tpu.pipeline_mode<synchronous>, transform_indices = @transform_2, window_bounds = array<i64: 1, 128>}, {transform_indices = @transform_3, window_bounds = array<i64: 16, 128>}]} {
    %c0 = arith.constant 0 : index
    %c0_0 = arith.constant 0 : index
    %0 = vector.load %arg1[%c0, %c0_0] : memref<16x128xbf16, #tpu.memory_space<vmem>>, vector<16x128xbf16>
    %1 = arith.extf %0 : vector<16x128xbf16> to vector<16x128xf32>
    %c0_1 = arith.constant 0 : index
    %c0_2 = arith.constant 0 : index
    %2 = vector.load %arg2[%c0_1, %c0_2] : memref<1x128xf32, #tpu.memory_space<vmem>>, vector<1x128xf32>
    %3 = vector.broadcast %2 : vector<1x128xf32> to vector<16x128xf32>
    %4 = arith.mulf %1, %3 : vector<16x128xf32>
    %c0_3 = arith.constant 0 : index
    %c0_4 = arith.constant 0 : index
    %5 = vector.load %arg3[%c0_3, %c0_4] : memref<1x128xf32, #tpu.memory_space<vmem>>, vector<1x128xf32>
    %6 = vector.broadcast %5 : vector<1x128xf32> to vector<16x128xf32>
    %7 = arith.addf %4, %6 : vector<16x128xf32>
    %cst = arith.constant 0.000000e+00 : f32
    %8 = vector.broadcast %cst : f32 to vector<16x128xf32>
    %9 = arith.cmpf oge, %7, %8 : vector<16x128xf32>
    %cst_5 = arith.constant 2.000000e-01 : f32
    %10 = vector.broadcast %cst_5 : f32 to vector<16x128xf32>
    %11 = arith.mulf %10, %7 : vector<16x128xf32>
    %12 = arith.select %9, %7, %11 : vector<16x128xi1>, vector<16x128xf32>
    %13 = arith.truncf %12 : vector<16x128xf32> to vector<16x128xbf16>
    %c0_6 = arith.constant 0 : index
    %c0_7 = arith.constant 0 : index
    %14 = vector.load %arg4[%c0_6, %c0_7] : memref<16x128xbf16, #tpu.memory_space<vmem>>, vector<16x128xbf16>
    tpu.vector_store %arg4[%c0_6, %c0_7], %13 {strides = array<i32>} : memref<16x128xbf16, #tpu.memory_space<vmem>>, vector<16x128xbf16>,
    return
  }
  func.func @transform_0(%arg0: i32) -> (i32, i32) {
    %c0_i32 = arith.constant 0 : i32
    %c0_i32_0 = arith.constant 0 : i32
    return %arg0, %c0_i32 : i32, i32
  }
  func.func @transform_1(%arg0: i32) -> (i32, i32) {
    %c0_i32 = arith.constant 0 : i32
    %c0_i32_0 = arith.constant 0 : i32
    %c0_i32_1 = arith.constant 0 : i32
    return %c0_i32, %c0_i32_0 : i32, i32
  }
  func.func @transform_2(%arg0: i32) -> (i32, i32) {
    %c0_i32 = arith.constant 0 : i32
    %c0_i32_0 = arith.constant 0 : i32
    %c0_i32_1 = arith.constant 0 : i32
    return %c0_i32, %c0_i32_0 : i32, i32
  }
  func.func @transform_3(%arg0: i32) -> (i32, i32) {
    %c0_i32 = arith.constant 0 : i32
    %c0_i32_0 = arith.constant 0 : i32
    return %arg0, %c0_i32 : i32, i32
  }
}

module attributes {stable_mosaic.version = 11 : i64} {
  func.func @conv_s1_stats_kernel(%arg0: i32, %arg1: memref<1x60x64xbf16, #tpu.memory_space<vmem>>, %arg2: memref<16x64x128xbf16, #tpu.memory_space<vmem>>, %arg3: memref<36x1xf32, #tpu.memory_space<vmem>>, %arg4: memref<1x1x128xf32, #tpu.memory_space<vmem>>, %arg5: memref<1x1x128xf32, #tpu.memory_space<vmem>>) attributes {dimension_semantics = [#tpu.dimension_semantics<parallel>], iteration_bounds = array<i64: 2>, scalar_prefetch = 0 : i64, scratch_operands = 0 : i64, tpu.core_type = #tpu.core_type<tc>, window_params = [{transform_indices = @transform_0, window_bounds = array<i64: 1, 60, 64>}, {pipeline_mode = #tpu.pipeline_mode<synchronous>, transform_indices = @transform_1, window_bounds = array<i64: 16, 64, 128>}, {pipeline_mode = #tpu.pipeline_mode<synchronous>, transform_indices = @transform_2, window_bounds = array<i64: 36, 1>}, {transform_indices = @transform_3, window_bounds = array<i64: 1, 1, 128>}, {transform_indices = @transform_4, window_bounds = array<i64: 1, 1, 128>}]} {
    %cst = arith.constant 0.000000e+00 : f32
    %0 = vector.broadcast %cst : f32 to vector<36x128xf32>
    %c0 = arith.constant 0 : index
    %c0_0 = arith.constant 0 : index
    %c0_1 = arith.constant 0 : index
    %1 = vector.load %arg1[%c0, %c0_0, %c0_1] : memref<1x60x64xbf16, #tpu.memory_space<vmem>>, vector<1x36x64xbf16>
    %2 = vector.shape_cast %1 : vector<1x36x64xbf16> to vector<36x64xbf16>
    %c0_2 = arith.constant 0 : index
    %c0_3 = arith.constant 0 : index
    %c0_4 = arith.constant 0 : index
    %3 = vector.load %arg2[%c0_2, %c0_3, %c0_4] : memref<16x64x128xbf16, #tpu.memory_space<vmem>>, vector<1x64x128xbf16>
    %4 = vector.shape_cast %3 : vector<1x64x128xbf16> to vector<64x128xbf16>
    %cst_5 = arith.constant dense<0.000000e+00> : vector<36x128xf32>
    %5 = tpu.matmul %2, %4, %cst_5 {dimension_numbers = #tpu.dot_dimension_numbers<[1], [0], [0], [1], [0, 0, 1, 1], [], []>} : vector<36x64xbf16>, vector<64x128xbf16>, vector<36x128xf32> -> vector<36x128xf32>
    %6 = arith.addf %0, %5 : vector<36x128xf32>
    %c0_6 = arith.constant 0 : index
    %c1 = arith.constant 1 : index
    %c0_7 = arith.constant 0 : index
    %7 = vector.load %arg1[%c0_6, %c1, %c0_7] : memref<1x60x64xbf16, #tpu.memory_space<vmem>>, vector<1x36x64xbf16>
    %8 = vector.shape_cast %7 : vector<1x36x64xbf16> to vector<36x64xbf16>
    %c1_8 = arith.constant 1 : index
    %c0_9 = arith.constant 0 : index
    %c0_10 = arith.constant 0 : index
    %9 = vector.load %arg2[%c1_8, %c0_9, %c0_10] : memref<16x64x128xbf16, #tpu.memory_space<vmem>>, vector<1x64x128xbf16>
    %10 = vector.shape_cast %9 : vector<1x64x128xbf16> to vector<64x128xbf16>
    %cst_11 = arith.constant dense<0.000000e+00> : vector<36x128xf32>
    %11 = tpu.matmul %8, %10, %cst_11 {dimension_numbers = #tpu.dot_dimension_numbers<[1], [0], [0], [1], [0, 0, 1, 1], [], []>} : vector<36x64xbf16>, vector<64x128xbf16>, vector<36x128xf32> -> vector<36x128xf32>
    %12 = arith.addf %6, %11 : vector<36x128xf32>
    %c0_12 = arith.constant 0 : index
    %c2 = arith.constant 2 : index
    %c0_13 = arith.constant 0 : index
    %13 = vector.load %arg1[%c0_12, %c2, %c0_13] : memref<1x60x64xbf16, #tpu.memory_space<vmem>>, vector<1x36x64xbf16>
    %14 = vector.shape_cast %13 : vector<1x36x64xbf16> to vector<36x64xbf16>
    %c2_14 = arith.constant 2 : index
    %c0_15 = arith.constant 0 : index
    %c0_16 = arith.constant 0 : index
    %15 = vector.load %arg2[%c2_14, %c0_15, %c0_16] : memref<16x64x128xbf16, #tpu.memory_space<vmem>>, vector<1x64x128xbf16>
    %16 = vector.shape_cast %15 : vector<1x64x128xbf16> to vector<64x128xbf16>
    %cst_17 = arith.constant dense<0.000000e+00> : vector<36x128xf32>
    %17 = tpu.matmul %14, %16, %cst_17 {dimension_numbers = #tpu.dot_dimension_numbers<[1], [0], [0], [1], [0, 0, 1, 1], [], []>} : vector<36x64xbf16>, vector<64x128xbf16>, vector<36x128xf32> -> vector<36x128xf32>
    %18 = arith.addf %12, %17 : vector<36x128xf32>
    %c0_18 = arith.constant 0 : index
    %c3 = arith.constant 3 : index
    %c0_19 = arith.constant 0 : index
    %19 = vector.load %arg1[%c0_18, %c3, %c0_19] : memref<1x60x64xbf16, #tpu.memory_space<vmem>>, vector<1x36x64xbf16>
    %20 = vector.shape_cast %19 : vector<1x36x64xbf16> to vector<36x64xbf16>
    %c3_20 = arith.constant 3 : index
    %c0_21 = arith.constant 0 : index
    %c0_22 = arith.constant 0 : index
    %21 = vector.load %arg2[%c3_20, %c0_21, %c0_22] : memref<16x64x128xbf16, #tpu.memory_space<vmem>>, vector<1x64x128xbf16>
    %22 = vector.shape_cast %21 : vector<1x64x128xbf16> to vector<64x128xbf16>
    %cst_23 = arith.constant dense<0.000000e+00> : vector<36x128xf32>
    %23 = tpu.matmul %20, %22, %cst_23 {dimension_numbers = #tpu.dot_dimension_numbers<[1], [0], [0], [1], [0, 0, 1, 1], [], []>} : vector<36x64xbf16>, vector<64x128xbf16>, vector<36x128xf32> -> vector<36x128xf32>
    %24 = arith.addf %18, %23 : vector<36x128xf32>
    %c0_24 = arith.constant 0 : index
    %c6 = arith.constant 6 : index
    %c0_25 = arith.constant 0 : index
    %25 = vector.load %arg1[%c0_24, %c6, %c0_25] : memref<1x60x64xbf16, #tpu.memory_space<vmem>>, vector<1x36x64xbf16>
    %26 = vector.shape_cast %25 : vector<1x36x64xbf16> to vector<36x64xbf16>
    %c4 = arith.constant 4 : index
    %c0_26 = arith.constant 0 : index
    %c0_27 = arith.constant 0 : index
    %27 = vector.load %arg2[%c4, %c0_26, %c0_27] : memref<16x64x128xbf16, #tpu.memory_space<vmem>>, vector<1x64x128xbf16>
    %28 = vector.shape_cast %27 : vector<1x64x128xbf16> to vector<64x128xbf16>
    %cst_28 = arith.constant dense<0.000000e+00> : vector<36x128xf32>
    %29 = tpu.matmul %26, %28, %cst_28 {dimension_numbers = #tpu.dot_dimension_numbers<[1], [0], [0], [1], [0, 0, 1, 1], [], []>} : vector<36x64xbf16>, vector<64x128xbf16>, vector<36x128xf32> -> vector<36x128xf32>
    %30 = arith.addf %24, %29 : vector<36x128xf32>
    %c0_29 = arith.constant 0 : index
    %c7 = arith.constant 7 : index
    %c0_30 = arith.constant 0 : index
    %31 = vector.load %arg1[%c0_29, %c7, %c0_30] : memref<1x60x64xbf16, #tpu.memory_space<vmem>>, vector<1x36x64xbf16>
    %32 = vector.shape_cast %31 : vector<1x36x64xbf16> to vector<36x64xbf16>
    %c5 = arith.constant 5 : index
    %c0_31 = arith.constant 0 : index
    %c0_32 = arith.constant 0 : index
    %33 = vector.load %arg2[%c5, %c0_31, %c0_32] : memref<16x64x128xbf16, #tpu.memory_space<vmem>>, vector<1x64x128xbf16>
    %34 = vector.shape_cast %33 : vector<1x64x128xbf16> to vector<64x128xbf16>
    %cst_33 = arith.constant dense<0.000000e+00> : vector<36x128xf32>
    %35 = tpu.matmul %32, %34, %cst_33 {dimension_numbers = #tpu.dot_dimension_numbers<[1], [0], [0], [1], [0, 0, 1, 1], [], []>} : vector<36x64xbf16>, vector<64x128xbf16>, vector<36x128xf32> -> vector<36x128xf32>
    %36 = arith.addf %30, %35 : vector<36x128xf32>
    %c0_34 = arith.constant 0 : index
    %c8 = arith.constant 8 : index
    %c0_35 = arith.constant 0 : index
    %37 = vector.load %arg1[%c0_34, %c8, %c0_35] : memref<1x60x64xbf16, #tpu.memory_space<vmem>>, vector<1x36x64xbf16>
    %38 = vector.shape_cast %37 : vector<1x36x64xbf16> to vector<36x64xbf16>
    %c6_36 = arith.constant 6 : index
    %c0_37 = arith.constant 0 : index
    %c0_38 = arith.constant 0 : index
    %39 = vector.load %arg2[%c6_36, %c0_37, %c0_38] : memref<16x64x128xbf16, #tpu.memory_space<vmem>>, vector<1x64x128xbf16>
    %40 = vector.shape_cast %39 : vector<1x64x128xbf16> to vector<64x128xbf16>
    %cst_39 = arith.constant dense<0.000000e+00> : vector<36x128xf32>
    %41 = tpu.matmul %38, %40, %cst_39 {dimension_numbers = #tpu.dot_dimension_numbers<[1], [0], [0], [1], [0, 0, 1, 1], [], []>} : vector<36x64xbf16>, vector<64x128xbf16>, vector<36x128xf32> -> vector<36x128xf32>
    %42 = arith.addf %36, %41 : vector<36x128xf32>
    %c0_40 = arith.constant 0 : index
    %c9 = arith.constant 9 : index
    %c0_41 = arith.constant 0 : index
    %43 = vector.load %arg1[%c0_40, %c9, %c0_41] : memref<1x60x64xbf16, #tpu.memory_space<vmem>>, vector<1x36x64xbf16>
    %44 = vector.shape_cast %43 : vector<1x36x64xbf16> to vector<36x64xbf16>
    %c7_42 = arith.constant 7 : index
    %c0_43 = arith.constant 0 : index
    %c0_44 = arith.constant 0 : index
    %45 = vector.load %arg2[%c7_42, %c0_43, %c0_44] : memref<16x64x128xbf16, #tpu.memory_space<vmem>>, vector<1x64x128xbf16>
    %46 = vector.shape_cast %45 : vector<1x64x128xbf16> to vector<64x128xbf16>
    %cst_45 = arith.constant dense<0.000000e+00> : vector<36x128xf32>
    %47 = tpu.matmul %44, %46, %cst_45 {dimension_numbers = #tpu.dot_dimension_numbers<[1], [0], [0], [1], [0, 0, 1, 1], [], []>} : vector<36x64xbf16>, vector<64x128xbf16>, vector<36x128xf32> -> vector<36x128xf32>
    %48 = arith.addf %42, %47 : vector<36x128xf32>
    %c0_46 = arith.constant 0 : index
    %c12 = arith.constant 12 : index
    %c0_47 = arith.constant 0 : index
    %49 = vector.load %arg1[%c0_46, %c12, %c0_47] : memref<1x60x64xbf16, #tpu.memory_space<vmem>>, vector<1x36x64xbf16>
    %50 = vector.shape_cast %49 : vector<1x36x64xbf16> to vector<36x64xbf16>
    %c8_48 = arith.constant 8 : index
    %c0_49 = arith.constant 0 : index
    %c0_50 = arith.constant 0 : index
    %51 = vector.load %arg2[%c8_48, %c0_49, %c0_50] : memref<16x64x128xbf16, #tpu.memory_space<vmem>>, vector<1x64x128xbf16>
    %52 = vector.shape_cast %51 : vector<1x64x128xbf16> to vector<64x128xbf16>
    %cst_51 = arith.constant dense<0.000000e+00> : vector<36x128xf32>
    %53 = tpu.matmul %50, %52, %cst_51 {dimension_numbers = #tpu.dot_dimension_numbers<[1], [0], [0], [1], [0, 0, 1, 1], [], []>} : vector<36x64xbf16>, vector<64x128xbf16>, vector<36x128xf32> -> vector<36x128xf32>
    %54 = arith.addf %48, %53 : vector<36x128xf32>
    %c0_52 = arith.constant 0 : index
    %c13 = arith.constant 13 : index
    %c0_53 = arith.constant 0 : index
    %55 = vector.load %arg1[%c0_52, %c13, %c0_53] : memref<1x60x64xbf16, #tpu.memory_space<vmem>>, vector<1x36x64xbf16>
    %56 = vector.shape_cast %55 : vector<1x36x64xbf16> to vector<36x64xbf16>
    %c9_54 = arith.constant 9 : index
    %c0_55 = arith.constant 0 : index
    %c0_56 = arith.constant 0 : index
    %57 = vector.load %arg2[%c9_54, %c0_55, %c0_56] : memref<16x64x128xbf16, #tpu.memory_space<vmem>>, vector<1x64x128xbf16>
    %58 = vector.shape_cast %57 : vector<1x64x128xbf16> to vector<64x128xbf16>
    %cst_57 = arith.constant dense<0.000000e+00> : vector<36x128xf32>
    %59 = tpu.matmul %56, %58, %cst_57 {dimension_numbers = #tpu.dot_dimension_numbers<[1], [0], [0], [1], [0, 0, 1, 1], [], []>} : vector<36x64xbf16>, vector<64x128xbf16>, vector<36x128xf32> -> vector<36x128xf32>
    %60 = arith.addf %54, %59 : vector<36x128xf32>
    %c0_58 = arith.constant 0 : index
    %c14 = arith.constant 14 : index
    %c0_59 = arith.constant 0 : index
    %61 = vector.load %arg1[%c0_58, %c14, %c0_59] : memref<1x60x64xbf16, #tpu.memory_space<vmem>>, vector<1x36x64xbf16>
    %62 = vector.shape_cast %61 : vector<1x36x64xbf16> to vector<36x64xbf16>
    %c10 = arith.constant 10 : index
    %c0_60 = arith.constant 0 : index
    %c0_61 = arith.constant 0 : index
    %63 = vector.load %arg2[%c10, %c0_60, %c0_61] : memref<16x64x128xbf16, #tpu.memory_space<vmem>>, vector<1x64x128xbf16>
    %64 = vector.shape_cast %63 : vector<1x64x128xbf16> to vector<64x128xbf16>
    %cst_62 = arith.constant dense<0.000000e+00> : vector<36x128xf32>
    %65 = tpu.matmul %62, %64, %cst_62 {dimension_numbers = #tpu.dot_dimension_numbers<[1], [0], [0], [1], [0, 0, 1, 1], [], []>} : vector<36x64xbf16>, vector<64x128xbf16>, vector<36x128xf32> -> vector<36x128xf32>
    %66 = arith.addf %60, %65 : vector<36x128xf32>
    %c0_63 = arith.constant 0 : index
    %c15 = arith.constant 15 : index
    %c0_64 = arith.constant 0 : index
    %67 = vector.load %arg1[%c0_63, %c15, %c0_64] : memref<1x60x64xbf16, #tpu.memory_space<vmem>>, vector<1x36x64xbf16>
    %68 = vector.shape_cast %67 : vector<1x36x64xbf16> to vector<36x64xbf16>
    %c11 = arith.constant 11 : index
    %c0_65 = arith.constant 0 : index
    %c0_66 = arith.constant 0 : index
    %69 = vector.load %arg2[%c11, %c0_65, %c0_66] : memref<16x64x128xbf16, #tpu.memory_space<vmem>>, vector<1x64x128xbf16>
    %70 = vector.shape_cast %69 : vector<1x64x128xbf16> to vector<64x128xbf16>
    %cst_67 = arith.constant dense<0.000000e+00> : vector<36x128xf32>
    %71 = tpu.matmul %68, %70, %cst_67 {dimension_numbers = #tpu.dot_dimension_numbers<[1], [0], [0], [1], [0, 0, 1, 1], [], []>} : vector<36x64xbf16>, vector<64x128xbf16>, vector<36x128xf32> -> vector<36x128xf32>
    %72 = arith.addf %66, %71 : vector<36x128xf32>
    %c0_68 = arith.constant 0 : index
    %c18 = arith.constant 18 : index
    %c0_69 = arith.constant 0 : index
    %73 = vector.load %arg1[%c0_68, %c18, %c0_69] : memref<1x60x64xbf16, #tpu.memory_space<vmem>>, vector<1x36x64xbf16>
    %74 = vector.shape_cast %73 : vector<1x36x64xbf16> to vector<36x64xbf16>
    %c12_70 = arith.constant 12 : index
    %c0_71 = arith.constant 0 : index
    %c0_72 = arith.constant 0 : index
    %75 = vector.load %arg2[%c12_70, %c0_71, %c0_72] : memref<16x64x128xbf16, #tpu.memory_space<vmem>>, vector<1x64x128xbf16>
    %76 = vector.shape_cast %75 : vector<1x64x128xbf16> to vector<64x128xbf16>
    %cst_73 = arith.constant dense<0.000000e+00> : vector<36x128xf32>
    %77 = tpu.matmul %74, %76, %cst_73 {dimension_numbers = #tpu.dot_dimension_numbers<[1], [0], [0], [1], [0, 0, 1, 1], [], []>} : vector<36x64xbf16>, vector<64x128xbf16>, vector<36x128xf32> -> vector<36x128xf32>
    %78 = arith.addf %72, %77 : vector<36x128xf32>
    %c0_74 = arith.constant 0 : index
    %c19 = arith.constant 19 : index
    %c0_75 = arith.constant 0 : index
    %79 = vector.load %arg1[%c0_74, %c19, %c0_75] : memref<1x60x64xbf16, #tpu.memory_space<vmem>>, vector<1x36x64xbf16>
    %80 = vector.shape_cast %79 : vector<1x36x64xbf16> to vector<36x64xbf16>
    %c13_76 = arith.constant 13 : index
    %c0_77 = arith.constant 0 : index
    %c0_78 = arith.constant 0 : index
    %81 = vector.load %arg2[%c13_76, %c0_77, %c0_78] : memref<16x64x128xbf16, #tpu.memory_space<vmem>>, vector<1x64x128xbf16>
    %82 = vector.shape_cast %81 : vector<1x64x128xbf16> to vector<64x128xbf16>
    %cst_79 = arith.constant dense<0.000000e+00> : vector<36x128xf32>
    %83 = tpu.matmul %80, %82, %cst_79 {dimension_numbers = #tpu.dot_dimension_numbers<[1], [0], [0], [1], [0, 0, 1, 1], [], []>} : vector<36x64xbf16>, vector<64x128xbf16>, vector<36x128xf32> -> vector<36x128xf32>
    %84 = arith.addf %78, %83 : vector<36x128xf32>
    %c0_80 = arith.constant 0 : index
    %c20 = arith.constant 20 : index
    %c0_81 = arith.constant 0 : index
    %85 = vector.load %arg1[%c0_80, %c20, %c0_81] : memref<1x60x64xbf16, #tpu.memory_space<vmem>>, vector<1x36x64xbf16>
    %86 = vector.shape_cast %85 : vector<1x36x64xbf16> to vector<36x64xbf16>
    %c14_82 = arith.constant 14 : index
    %c0_83 = arith.constant 0 : index
    %c0_84 = arith.constant 0 : index
    %87 = vector.load %arg2[%c14_82, %c0_83, %c0_84] : memref<16x64x128xbf16, #tpu.memory_space<vmem>>, vector<1x64x128xbf16>
    %88 = vector.shape_cast %87 : vector<1x64x128xbf16> to vector<64x128xbf16>
    %cst_85 = arith.constant dense<0.000000e+00> : vector<36x128xf32>
    %89 = tpu.matmul %86, %88, %cst_85 {dimension_numbers = #tpu.dot_dimension_numbers<[1], [0], [0], [1], [0, 0, 1, 1], [], []>} : vector<36x64xbf16>, vector<64x128xbf16>, vector<36x128xf32> -> vector<36x128xf32>
    %90 = arith.addf %84, %89 : vector<36x128xf32>
    %c0_86 = arith.constant 0 : index
    %c21 = arith.constant 21 : index
    %c0_87 = arith.constant 0 : index
    %91 = vector.load %arg1[%c0_86, %c21, %c0_87] : memref<1x60x64xbf16, #tpu.memory_space<vmem>>, vector<1x36x64xbf16>
    %92 = vector.shape_cast %91 : vector<1x36x64xbf16> to vector<36x64xbf16>
    %c15_88 = arith.constant 15 : index
    %c0_89 = arith.constant 0 : index
    %c0_90 = arith.constant 0 : index
    %93 = vector.load %arg2[%c15_88, %c0_89, %c0_90] : memref<16x64x128xbf16, #tpu.memory_space<vmem>>, vector<1x64x128xbf16>
    %94 = vector.shape_cast %93 : vector<1x64x128xbf16> to vector<64x128xbf16>
    %cst_91 = arith.constant dense<0.000000e+00> : vector<36x128xf32>
    %95 = tpu.matmul %92, %94, %cst_91 {dimension_numbers = #tpu.dot_dimension_numbers<[1], [0], [0], [1], [0, 0, 1, 1], [], []>} : vector<36x64xbf16>, vector<64x128xbf16>, vector<36x128xf32> -> vector<36x128xf32>
    %96 = arith.addf %90, %95 : vector<36x128xf32>
    %c0_92 = arith.constant 0 : index
    %c0_93 = arith.constant 0 : index
    %97 = vector.load %arg3[%c0_92, %c0_93] : memref<36x1xf32, #tpu.memory_space<vmem>>, vector<36x1xf32>
    %98 = vector.broadcast %97 : vector<36x1xf32> to vector<36x128xf32>
    %99 = arith.mulf %96, %98 : vector<36x128xf32>
    %cst_94 = arith.constant dense<0.000000e+00> : vector<128xf32>
    %100 = vector.multi_reduction <add>, %99, %cst_94 [0] : vector<36x128xf32> to vector<128xf32>
    %101 = vector.shape_cast %100 : vector<128xf32> to vector<1x128xf32>
    %c0_95 = arith.constant 0 : index
    %c0_96 = arith.constant 0 : index
    %c0_97 = arith.constant 0 : index
    %102 = vector.load %arg4[%c0_95, %c0_96, %c0_97] : memref<1x1x128xf32, #tpu.memory_space<vmem>>, vector<1x1x128xf32>
    %103 = vector.shape_cast %102 : vector<1x1x128xf32> to vector<1x128xf32>
    %104 = vector.shape_cast %101 : vector<1x128xf32> to vector<1x1x128xf32>
    tpu.vector_store %arg4[%c0_95, %c0_96, %c0_97], %104 {strides = array<i32>} : memref<1x1x128xf32, #tpu.memory_space<vmem>>, vector<1x1x128xf32>,
    %105 = arith.mulf %99, %99 : vector<36x128xf32>
    %cst_98 = arith.constant dense<0.000000e+00> : vector<128xf32>
    %106 = vector.multi_reduction <add>, %105, %cst_98 [0] : vector<36x128xf32> to vector<128xf32>
    %107 = vector.shape_cast %106 : vector<128xf32> to vector<1x128xf32>
    %c0_99 = arith.constant 0 : index
    %c0_100 = arith.constant 0 : index
    %c0_101 = arith.constant 0 : index
    %108 = vector.load %arg5[%c0_99, %c0_100, %c0_101] : memref<1x1x128xf32, #tpu.memory_space<vmem>>, vector<1x1x128xf32>
    %109 = vector.shape_cast %108 : vector<1x1x128xf32> to vector<1x128xf32>
    %110 = vector.shape_cast %107 : vector<1x128xf32> to vector<1x1x128xf32>
    tpu.vector_store %arg5[%c0_99, %c0_100, %c0_101], %110 {strides = array<i32>} : memref<1x1x128xf32, #tpu.memory_space<vmem>>, vector<1x1x128xf32>,
    return
  }
  func.func @transform_0(%arg0: i32) -> (i32, i32, i32) {
    %c0_i32 = arith.constant 0 : i32
    %c0_i32_0 = arith.constant 0 : i32
    %c0_i32_1 = arith.constant 0 : i32
    return %arg0, %c0_i32, %c0_i32_0 : i32, i32, i32
  }
  func.func @transform_1(%arg0: i32) -> (i32, i32, i32) {
    %c0_i32 = arith.constant 0 : i32
    %c0_i32_0 = arith.constant 0 : i32
    %c0_i32_1 = arith.constant 0 : i32
    %c0_i32_2 = arith.constant 0 : i32
    return %c0_i32, %c0_i32_0, %c0_i32_1 : i32, i32, i32
  }
  func.func @transform_2(%arg0: i32) -> (i32, i32) {
    %c0_i32 = arith.constant 0 : i32
    %c0_i32_0 = arith.constant 0 : i32
    %c0_i32_1 = arith.constant 0 : i32
    return %c0_i32, %c0_i32_0 : i32, i32
  }
  func.func @transform_3(%arg0: i32) -> (i32, i32, i32) {
    %c0_i32 = arith.constant 0 : i32
    %c0_i32_0 = arith.constant 0 : i32
    %c0_i32_1 = arith.constant 0 : i32
    return %arg0, %c0_i32, %c0_i32_0 : i32, i32, i32
  }
  func.func @transform_4(%arg0: i32) -> (i32, i32, i32) {
    %c0_i32 = arith.constant 0 : i32
    %c0_i32_0 = arith.constant 0 : i32
    %c0_i32_1 = arith.constant 0 : i32
    return %arg0, %c0_i32, %c0_i32_0 : i32, i32, i32
  }
}

module attributes {stable_mosaic.version = 11 : i64} {
  func.func @conv_s1_bn_lrelu_kernel(%arg0: i32, %arg1: memref<1x60x64xbf16, #tpu.memory_space<vmem>>, %arg2: memref<16x64x128xbf16, #tpu.memory_space<vmem>>, %arg3: memref<1x128xf32, #tpu.memory_space<vmem>>, %arg4: memref<1x128xf32, #tpu.memory_space<vmem>>, %arg5: memref<1x36x128xbf16, #tpu.memory_space<vmem>>) attributes {dimension_semantics = [#tpu.dimension_semantics<parallel>], iteration_bounds = array<i64: 2>, scalar_prefetch = 0 : i64, scratch_operands = 0 : i64, tpu.core_type = #tpu.core_type<tc>, window_params = [{transform_indices = @transform_0, window_bounds = array<i64: 1, 60, 64>}, {pipeline_mode = #tpu.pipeline_mode<synchronous>, transform_indices = @transform_1, window_bounds = array<i64: 16, 64, 128>}, {pipeline_mode = #tpu.pipeline_mode<synchronous>, transform_indices = @transform_2, window_bounds = array<i64: 1, 128>}, {pipeline_mode = #tpu.pipeline_mode<synchronous>, transform_indices = @transform_3, window_bounds = array<i64: 1, 128>}, {transform_indices = @transform_4, window_bounds = array<i64: 1, 36, 128>}]} {
    %cst = arith.constant 0.000000e+00 : f32
    %0 = vector.broadcast %cst : f32 to vector<36x128xf32>
    %c0 = arith.constant 0 : index
    %c0_0 = arith.constant 0 : index
    %c0_1 = arith.constant 0 : index
    %1 = vector.load %arg1[%c0, %c0_0, %c0_1] : memref<1x60x64xbf16, #tpu.memory_space<vmem>>, vector<1x36x64xbf16>
    %2 = vector.shape_cast %1 : vector<1x36x64xbf16> to vector<36x64xbf16>
    %c0_2 = arith.constant 0 : index
    %c0_3 = arith.constant 0 : index
    %c0_4 = arith.constant 0 : index
    %3 = vector.load %arg2[%c0_2, %c0_3, %c0_4] : memref<16x64x128xbf16, #tpu.memory_space<vmem>>, vector<1x64x128xbf16>
    %4 = vector.shape_cast %3 : vector<1x64x128xbf16> to vector<64x128xbf16>
    %cst_5 = arith.constant dense<0.000000e+00> : vector<36x128xf32>
    %5 = tpu.matmul %2, %4, %cst_5 {dimension_numbers = #tpu.dot_dimension_numbers<[1], [0], [0], [1], [0, 0, 1, 1], [], []>} : vector<36x64xbf16>, vector<64x128xbf16>, vector<36x128xf32> -> vector<36x128xf32>
    %6 = arith.addf %0, %5 : vector<36x128xf32>
    %c0_6 = arith.constant 0 : index
    %c1 = arith.constant 1 : index
    %c0_7 = arith.constant 0 : index
    %7 = vector.load %arg1[%c0_6, %c1, %c0_7] : memref<1x60x64xbf16, #tpu.memory_space<vmem>>, vector<1x36x64xbf16>
    %8 = vector.shape_cast %7 : vector<1x36x64xbf16> to vector<36x64xbf16>
    %c1_8 = arith.constant 1 : index
    %c0_9 = arith.constant 0 : index
    %c0_10 = arith.constant 0 : index
    %9 = vector.load %arg2[%c1_8, %c0_9, %c0_10] : memref<16x64x128xbf16, #tpu.memory_space<vmem>>, vector<1x64x128xbf16>
    %10 = vector.shape_cast %9 : vector<1x64x128xbf16> to vector<64x128xbf16>
    %cst_11 = arith.constant dense<0.000000e+00> : vector<36x128xf32>
    %11 = tpu.matmul %8, %10, %cst_11 {dimension_numbers = #tpu.dot_dimension_numbers<[1], [0], [0], [1], [0, 0, 1, 1], [], []>} : vector<36x64xbf16>, vector<64x128xbf16>, vector<36x128xf32> -> vector<36x128xf32>
    %12 = arith.addf %6, %11 : vector<36x128xf32>
    %c0_12 = arith.constant 0 : index
    %c2 = arith.constant 2 : index
    %c0_13 = arith.constant 0 : index
    %13 = vector.load %arg1[%c0_12, %c2, %c0_13] : memref<1x60x64xbf16, #tpu.memory_space<vmem>>, vector<1x36x64xbf16>
    %14 = vector.shape_cast %13 : vector<1x36x64xbf16> to vector<36x64xbf16>
    %c2_14 = arith.constant 2 : index
    %c0_15 = arith.constant 0 : index
    %c0_16 = arith.constant 0 : index
    %15 = vector.load %arg2[%c2_14, %c0_15, %c0_16] : memref<16x64x128xbf16, #tpu.memory_space<vmem>>, vector<1x64x128xbf16>
    %16 = vector.shape_cast %15 : vector<1x64x128xbf16> to vector<64x128xbf16>
    %cst_17 = arith.constant dense<0.000000e+00> : vector<36x128xf32>
    %17 = tpu.matmul %14, %16, %cst_17 {dimension_numbers = #tpu.dot_dimension_numbers<[1], [0], [0], [1], [0, 0, 1, 1], [], []>} : vector<36x64xbf16>, vector<64x128xbf16>, vector<36x128xf32> -> vector<36x128xf32>
    %18 = arith.addf %12, %17 : vector<36x128xf32>
    %c0_18 = arith.constant 0 : index
    %c3 = arith.constant 3 : index
    %c0_19 = arith.constant 0 : index
    %19 = vector.load %arg1[%c0_18, %c3, %c0_19] : memref<1x60x64xbf16, #tpu.memory_space<vmem>>, vector<1x36x64xbf16>
    %20 = vector.shape_cast %19 : vector<1x36x64xbf16> to vector<36x64xbf16>
    %c3_20 = arith.constant 3 : index
    %c0_21 = arith.constant 0 : index
    %c0_22 = arith.constant 0 : index
    %21 = vector.load %arg2[%c3_20, %c0_21, %c0_22] : memref<16x64x128xbf16, #tpu.memory_space<vmem>>, vector<1x64x128xbf16>
    %22 = vector.shape_cast %21 : vector<1x64x128xbf16> to vector<64x128xbf16>
    %cst_23 = arith.constant dense<0.000000e+00> : vector<36x128xf32>
    %23 = tpu.matmul %20, %22, %cst_23 {dimension_numbers = #tpu.dot_dimension_numbers<[1], [0], [0], [1], [0, 0, 1, 1], [], []>} : vector<36x64xbf16>, vector<64x128xbf16>, vector<36x128xf32> -> vector<36x128xf32>
    %24 = arith.addf %18, %23 : vector<36x128xf32>
    %c0_24 = arith.constant 0 : index
    %c6 = arith.constant 6 : index
    %c0_25 = arith.constant 0 : index
    %25 = vector.load %arg1[%c0_24, %c6, %c0_25] : memref<1x60x64xbf16, #tpu.memory_space<vmem>>, vector<1x36x64xbf16>
    %26 = vector.shape_cast %25 : vector<1x36x64xbf16> to vector<36x64xbf16>
    %c4 = arith.constant 4 : index
    %c0_26 = arith.constant 0 : index
    %c0_27 = arith.constant 0 : index
    %27 = vector.load %arg2[%c4, %c0_26, %c0_27] : memref<16x64x128xbf16, #tpu.memory_space<vmem>>, vector<1x64x128xbf16>
    %28 = vector.shape_cast %27 : vector<1x64x128xbf16> to vector<64x128xbf16>
    %cst_28 = arith.constant dense<0.000000e+00> : vector<36x128xf32>
    %29 = tpu.matmul %26, %28, %cst_28 {dimension_numbers = #tpu.dot_dimension_numbers<[1], [0], [0], [1], [0, 0, 1, 1], [], []>} : vector<36x64xbf16>, vector<64x128xbf16>, vector<36x128xf32> -> vector<36x128xf32>
    %30 = arith.addf %24, %29 : vector<36x128xf32>
    %c0_29 = arith.constant 0 : index
    %c7 = arith.constant 7 : index
    %c0_30 = arith.constant 0 : index
    %31 = vector.load %arg1[%c0_29, %c7, %c0_30] : memref<1x60x64xbf16, #tpu.memory_space<vmem>>, vector<1x36x64xbf16>
    %32 = vector.shape_cast %31 : vector<1x36x64xbf16> to vector<36x64xbf16>
    %c5 = arith.constant 5 : index
    %c0_31 = arith.constant 0 : index
    %c0_32 = arith.constant 0 : index
    %33 = vector.load %arg2[%c5, %c0_31, %c0_32] : memref<16x64x128xbf16, #tpu.memory_space<vmem>>, vector<1x64x128xbf16>
    %34 = vector.shape_cast %33 : vector<1x64x128xbf16> to vector<64x128xbf16>
    %cst_33 = arith.constant dense<0.000000e+00> : vector<36x128xf32>
    %35 = tpu.matmul %32, %34, %cst_33 {dimension_numbers = #tpu.dot_dimension_numbers<[1], [0], [0], [1], [0, 0, 1, 1], [], []>} : vector<36x64xbf16>, vector<64x128xbf16>, vector<36x128xf32> -> vector<36x128xf32>
    %36 = arith.addf %30, %35 : vector<36x128xf32>
    %c0_34 = arith.constant 0 : index
    %c8 = arith.constant 8 : index
    %c0_35 = arith.constant 0 : index
    %37 = vector.load %arg1[%c0_34, %c8, %c0_35] : memref<1x60x64xbf16, #tpu.memory_space<vmem>>, vector<1x36x64xbf16>
    %38 = vector.shape_cast %37 : vector<1x36x64xbf16> to vector<36x64xbf16>
    %c6_36 = arith.constant 6 : index
    %c0_37 = arith.constant 0 : index
    %c0_38 = arith.constant 0 : index
    %39 = vector.load %arg2[%c6_36, %c0_37, %c0_38] : memref<16x64x128xbf16, #tpu.memory_space<vmem>>, vector<1x64x128xbf16>
    %40 = vector.shape_cast %39 : vector<1x64x128xbf16> to vector<64x128xbf16>
    %cst_39 = arith.constant dense<0.000000e+00> : vector<36x128xf32>
    %41 = tpu.matmul %38, %40, %cst_39 {dimension_numbers = #tpu.dot_dimension_numbers<[1], [0], [0], [1], [0, 0, 1, 1], [], []>} : vector<36x64xbf16>, vector<64x128xbf16>, vector<36x128xf32> -> vector<36x128xf32>
    %42 = arith.addf %36, %41 : vector<36x128xf32>
    %c0_40 = arith.constant 0 : index
    %c9 = arith.constant 9 : index
    %c0_41 = arith.constant 0 : index
    %43 = vector.load %arg1[%c0_40, %c9, %c0_41] : memref<1x60x64xbf16, #tpu.memory_space<vmem>>, vector<1x36x64xbf16>
    %44 = vector.shape_cast %43 : vector<1x36x64xbf16> to vector<36x64xbf16>
    %c7_42 = arith.constant 7 : index
    %c0_43 = arith.constant 0 : index
    %c0_44 = arith.constant 0 : index
    %45 = vector.load %arg2[%c7_42, %c0_43, %c0_44] : memref<16x64x128xbf16, #tpu.memory_space<vmem>>, vector<1x64x128xbf16>
    %46 = vector.shape_cast %45 : vector<1x64x128xbf16> to vector<64x128xbf16>
    %cst_45 = arith.constant dense<0.000000e+00> : vector<36x128xf32>
    %47 = tpu.matmul %44, %46, %cst_45 {dimension_numbers = #tpu.dot_dimension_numbers<[1], [0], [0], [1], [0, 0, 1, 1], [], []>} : vector<36x64xbf16>, vector<64x128xbf16>, vector<36x128xf32> -> vector<36x128xf32>
    %48 = arith.addf %42, %47 : vector<36x128xf32>
    %c0_46 = arith.constant 0 : index
    %c12 = arith.constant 12 : index
    %c0_47 = arith.constant 0 : index
    %49 = vector.load %arg1[%c0_46, %c12, %c0_47] : memref<1x60x64xbf16, #tpu.memory_space<vmem>>, vector<1x36x64xbf16>
    %50 = vector.shape_cast %49 : vector<1x36x64xbf16> to vector<36x64xbf16>
    %c8_48 = arith.constant 8 : index
    %c0_49 = arith.constant 0 : index
    %c0_50 = arith.constant 0 : index
    %51 = vector.load %arg2[%c8_48, %c0_49, %c0_50] : memref<16x64x128xbf16, #tpu.memory_space<vmem>>, vector<1x64x128xbf16>
    %52 = vector.shape_cast %51 : vector<1x64x128xbf16> to vector<64x128xbf16>
    %cst_51 = arith.constant dense<0.000000e+00> : vector<36x128xf32>
    %53 = tpu.matmul %50, %52, %cst_51 {dimension_numbers = #tpu.dot_dimension_numbers<[1], [0], [0], [1], [0, 0, 1, 1], [], []>} : vector<36x64xbf16>, vector<64x128xbf16>, vector<36x128xf32> -> vector<36x128xf32>
    %54 = arith.addf %48, %53 : vector<36x128xf32>
    %c0_52 = arith.constant 0 : index
    %c13 = arith.constant 13 : index
    %c0_53 = arith.constant 0 : index
    %55 = vector.load %arg1[%c0_52, %c13, %c0_53] : memref<1x60x64xbf16, #tpu.memory_space<vmem>>, vector<1x36x64xbf16>
    %56 = vector.shape_cast %55 : vector<1x36x64xbf16> to vector<36x64xbf16>
    %c9_54 = arith.constant 9 : index
    %c0_55 = arith.constant 0 : index
    %c0_56 = arith.constant 0 : index
    %57 = vector.load %arg2[%c9_54, %c0_55, %c0_56] : memref<16x64x128xbf16, #tpu.memory_space<vmem>>, vector<1x64x128xbf16>
    %58 = vector.shape_cast %57 : vector<1x64x128xbf16> to vector<64x128xbf16>
    %cst_57 = arith.constant dense<0.000000e+00> : vector<36x128xf32>
    %59 = tpu.matmul %56, %58, %cst_57 {dimension_numbers = #tpu.dot_dimension_numbers<[1], [0], [0], [1], [0, 0, 1, 1], [], []>} : vector<36x64xbf16>, vector<64x128xbf16>, vector<36x128xf32> -> vector<36x128xf32>
    %60 = arith.addf %54, %59 : vector<36x128xf32>
    %c0_58 = arith.constant 0 : index
    %c14 = arith.constant 14 : index
    %c0_59 = arith.constant 0 : index
    %61 = vector.load %arg1[%c0_58, %c14, %c0_59] : memref<1x60x64xbf16, #tpu.memory_space<vmem>>, vector<1x36x64xbf16>
    %62 = vector.shape_cast %61 : vector<1x36x64xbf16> to vector<36x64xbf16>
    %c10 = arith.constant 10 : index
    %c0_60 = arith.constant 0 : index
    %c0_61 = arith.constant 0 : index
    %63 = vector.load %arg2[%c10, %c0_60, %c0_61] : memref<16x64x128xbf16, #tpu.memory_space<vmem>>, vector<1x64x128xbf16>
    %64 = vector.shape_cast %63 : vector<1x64x128xbf16> to vector<64x128xbf16>
    %cst_62 = arith.constant dense<0.000000e+00> : vector<36x128xf32>
    %65 = tpu.matmul %62, %64, %cst_62 {dimension_numbers = #tpu.dot_dimension_numbers<[1], [0], [0], [1], [0, 0, 1, 1], [], []>} : vector<36x64xbf16>, vector<64x128xbf16>, vector<36x128xf32> -> vector<36x128xf32>
    %66 = arith.addf %60, %65 : vector<36x128xf32>
    %c0_63 = arith.constant 0 : index
    %c15 = arith.constant 15 : index
    %c0_64 = arith.constant 0 : index
    %67 = vector.load %arg1[%c0_63, %c15, %c0_64] : memref<1x60x64xbf16, #tpu.memory_space<vmem>>, vector<1x36x64xbf16>
    %68 = vector.shape_cast %67 : vector<1x36x64xbf16> to vector<36x64xbf16>
    %c11 = arith.constant 11 : index
    %c0_65 = arith.constant 0 : index
    %c0_66 = arith.constant 0 : index
    %69 = vector.load %arg2[%c11, %c0_65, %c0_66] : memref<16x64x128xbf16, #tpu.memory_space<vmem>>, vector<1x64x128xbf16>
    %70 = vector.shape_cast %69 : vector<1x64x128xbf16> to vector<64x128xbf16>
    %cst_67 = arith.constant dense<0.000000e+00> : vector<36x128xf32>
    %71 = tpu.matmul %68, %70, %cst_67 {dimension_numbers = #tpu.dot_dimension_numbers<[1], [0], [0], [1], [0, 0, 1, 1], [], []>} : vector<36x64xbf16>, vector<64x128xbf16>, vector<36x128xf32> -> vector<36x128xf32>
    %72 = arith.addf %66, %71 : vector<36x128xf32>
    %c0_68 = arith.constant 0 : index
    %c18 = arith.constant 18 : index
    %c0_69 = arith.constant 0 : index
    %73 = vector.load %arg1[%c0_68, %c18, %c0_69] : memref<1x60x64xbf16, #tpu.memory_space<vmem>>, vector<1x36x64xbf16>
    %74 = vector.shape_cast %73 : vector<1x36x64xbf16> to vector<36x64xbf16>
    %c12_70 = arith.constant 12 : index
    %c0_71 = arith.constant 0 : index
    %c0_72 = arith.constant 0 : index
    %75 = vector.load %arg2[%c12_70, %c0_71, %c0_72] : memref<16x64x128xbf16, #tpu.memory_space<vmem>>, vector<1x64x128xbf16>
    %76 = vector.shape_cast %75 : vector<1x64x128xbf16> to vector<64x128xbf16>
    %cst_73 = arith.constant dense<0.000000e+00> : vector<36x128xf32>
    %77 = tpu.matmul %74, %76, %cst_73 {dimension_numbers = #tpu.dot_dimension_numbers<[1], [0], [0], [1], [0, 0, 1, 1], [], []>} : vector<36x64xbf16>, vector<64x128xbf16>, vector<36x128xf32> -> vector<36x128xf32>
    %78 = arith.addf %72, %77 : vector<36x128xf32>
    %c0_74 = arith.constant 0 : index
    %c19 = arith.constant 19 : index
    %c0_75 = arith.constant 0 : index
    %79 = vector.load %arg1[%c0_74, %c19, %c0_75] : memref<1x60x64xbf16, #tpu.memory_space<vmem>>, vector<1x36x64xbf16>
    %80 = vector.shape_cast %79 : vector<1x36x64xbf16> to vector<36x64xbf16>
    %c13_76 = arith.constant 13 : index
    %c0_77 = arith.constant 0 : index
    %c0_78 = arith.constant 0 : index
    %81 = vector.load %arg2[%c13_76, %c0_77, %c0_78] : memref<16x64x128xbf16, #tpu.memory_space<vmem>>, vector<1x64x128xbf16>
    %82 = vector.shape_cast %81 : vector<1x64x128xbf16> to vector<64x128xbf16>
    %cst_79 = arith.constant dense<0.000000e+00> : vector<36x128xf32>
    %83 = tpu.matmul %80, %82, %cst_79 {dimension_numbers = #tpu.dot_dimension_numbers<[1], [0], [0], [1], [0, 0, 1, 1], [], []>} : vector<36x64xbf16>, vector<64x128xbf16>, vector<36x128xf32> -> vector<36x128xf32>
    %84 = arith.addf %78, %83 : vector<36x128xf32>
    %c0_80 = arith.constant 0 : index
    %c20 = arith.constant 20 : index
    %c0_81 = arith.constant 0 : index
    %85 = vector.load %arg1[%c0_80, %c20, %c0_81] : memref<1x60x64xbf16, #tpu.memory_space<vmem>>, vector<1x36x64xbf16>
    %86 = vector.shape_cast %85 : vector<1x36x64xbf16> to vector<36x64xbf16>
    %c14_82 = arith.constant 14 : index
    %c0_83 = arith.constant 0 : index
    %c0_84 = arith.constant 0 : index
    %87 = vector.load %arg2[%c14_82, %c0_83, %c0_84] : memref<16x64x128xbf16, #tpu.memory_space<vmem>>, vector<1x64x128xbf16>
    %88 = vector.shape_cast %87 : vector<1x64x128xbf16> to vector<64x128xbf16>
    %cst_85 = arith.constant dense<0.000000e+00> : vector<36x128xf32>
    %89 = tpu.matmul %86, %88, %cst_85 {dimension_numbers = #tpu.dot_dimension_numbers<[1], [0], [0], [1], [0, 0, 1, 1], [], []>} : vector<36x64xbf16>, vector<64x128xbf16>, vector<36x128xf32> -> vector<36x128xf32>
    %90 = arith.addf %84, %89 : vector<36x128xf32>
    %c0_86 = arith.constant 0 : index
    %c21 = arith.constant 21 : index
    %c0_87 = arith.constant 0 : index
    %91 = vector.load %arg1[%c0_86, %c21, %c0_87] : memref<1x60x64xbf16, #tpu.memory_space<vmem>>, vector<1x36x64xbf16>
    %92 = vector.shape_cast %91 : vector<1x36x64xbf16> to vector<36x64xbf16>
    %c15_88 = arith.constant 15 : index
    %c0_89 = arith.constant 0 : index
    %c0_90 = arith.constant 0 : index
    %93 = vector.load %arg2[%c15_88, %c0_89, %c0_90] : memref<16x64x128xbf16, #tpu.memory_space<vmem>>, vector<1x64x128xbf16>
    %94 = vector.shape_cast %93 : vector<1x64x128xbf16> to vector<64x128xbf16>
    %cst_91 = arith.constant dense<0.000000e+00> : vector<36x128xf32>
    %95 = tpu.matmul %92, %94, %cst_91 {dimension_numbers = #tpu.dot_dimension_numbers<[1], [0], [0], [1], [0, 0, 1, 1], [], []>} : vector<36x64xbf16>, vector<64x128xbf16>, vector<36x128xf32> -> vector<36x128xf32>
    %96 = arith.addf %90, %95 : vector<36x128xf32>
    %c0_92 = arith.constant 0 : index
    %c0_93 = arith.constant 0 : index
    %97 = vector.load %arg3[%c0_92, %c0_93] : memref<1x128xf32, #tpu.memory_space<vmem>>, vector<1x128xf32>
    %98 = vector.broadcast %97 : vector<1x128xf32> to vector<36x128xf32>
    %99 = arith.mulf %96, %98 : vector<36x128xf32>
    %c0_94 = arith.constant 0 : index
    %c0_95 = arith.constant 0 : index
    %100 = vector.load %arg4[%c0_94, %c0_95] : memref<1x128xf32, #tpu.memory_space<vmem>>, vector<1x128xf32>
    %101 = vector.broadcast %100 : vector<1x128xf32> to vector<36x128xf32>
    %102 = arith.addf %99, %101 : vector<36x128xf32>
    %cst_96 = arith.constant 0.000000e+00 : f32
    %103 = vector.broadcast %cst_96 : f32 to vector<36x128xf32>
    %104 = arith.cmpf oge, %102, %103 : vector<36x128xf32>
    %cst_97 = arith.constant 2.000000e-01 : f32
    %105 = vector.broadcast %cst_97 : f32 to vector<36x128xf32>
    %106 = arith.mulf %105, %102 : vector<36x128xf32>
    %107 = arith.select %104, %102, %106 : vector<36x128xi1>, vector<36x128xf32>
    %108 = arith.truncf %107 : vector<36x128xf32> to vector<36x128xbf16>
    %c0_98 = arith.constant 0 : index
    %c0_99 = arith.constant 0 : index
    %c0_100 = arith.constant 0 : index
    %109 = vector.load %arg5[%c0_98, %c0_99, %c0_100] : memref<1x36x128xbf16, #tpu.memory_space<vmem>>, vector<1x36x128xbf16>
    %110 = vector.shape_cast %109 : vector<1x36x128xbf16> to vector<36x128xbf16>
    %111 = vector.shape_cast %108 : vector<36x128xbf16> to vector<1x36x128xbf16>
    tpu.vector_store %arg5[%c0_98, %c0_99, %c0_100], %111 {strides = array<i32>} : memref<1x36x128xbf16, #tpu.memory_space<vmem>>, vector<1x36x128xbf16>,
    return
  }
  func.func @transform_0(%arg0: i32) -> (i32, i32, i32) {
    %c0_i32 = arith.constant 0 : i32
    %c0_i32_0 = arith.constant 0 : i32
    %c0_i32_1 = arith.constant 0 : i32
    return %arg0, %c0_i32, %c0_i32_0 : i32, i32, i32
  }
  func.func @transform_1(%arg0: i32) -> (i32, i32, i32) {
    %c0_i32 = arith.constant 0 : i32
    %c0_i32_0 = arith.constant 0 : i32
    %c0_i32_1 = arith.constant 0 : i32
    %c0_i32_2 = arith.constant 0 : i32
    return %c0_i32, %c0_i32_0, %c0_i32_1 : i32, i32, i32
  }
  func.func @transform_2(%arg0: i32) -> (i32, i32) {
    %c0_i32 = arith.constant 0 : i32
    %c0_i32_0 = arith.constant 0 : i32
    %c0_i32_1 = arith.constant 0 : i32
    return %c0_i32, %c0_i32_0 : i32, i32
  }
  func.func @transform_3(%arg0: i32) -> (i32, i32) {
    %c0_i32 = arith.constant 0 : i32
    %c0_i32_0 = arith.constant 0 : i32
    %c0_i32_1 = arith.constant 0 : i32
    return %c0_i32, %c0_i32_0 : i32, i32
  }
  func.func @transform_4(%arg0: i32) -> (i32, i32, i32) {
    %c0_i32 = arith.constant 0 : i32
    %c0_i32_0 = arith.constant 0 : i32
    %c0_i32_1 = arith.constant 0 : i32
    return %arg0, %c0_i32, %c0_i32_0 : i32, i32, i32
  }
}

module attributes {stable_mosaic.version = 11 : i64} {
  func.func @conv_s1_bias_kernel(%arg0: i32, %arg1: memref<1x45x128xbf16, #tpu.memory_space<vmem>>, %arg2: memref<16x128x128xbf16, #tpu.memory_space<vmem>>, %arg3: memref<1x128xf32, #tpu.memory_space<vmem>>, %arg4: memref<1x25x128xf32, #tpu.memory_space<vmem>>) attributes {dimension_semantics = [#tpu.dimension_semantics<parallel>], iteration_bounds = array<i64: 2>, scalar_prefetch = 0 : i64, scratch_operands = 0 : i64, tpu.core_type = #tpu.core_type<tc>, window_params = [{transform_indices = @transform_0, window_bounds = array<i64: 1, 45, 128>}, {pipeline_mode = #tpu.pipeline_mode<synchronous>, transform_indices = @transform_1, window_bounds = array<i64: 16, 128, 128>}, {pipeline_mode = #tpu.pipeline_mode<synchronous>, transform_indices = @transform_2, window_bounds = array<i64: 1, 128>}, {transform_indices = @transform_3, window_bounds = array<i64: 1, 25, 128>}]} {
    %cst = arith.constant 0.000000e+00 : f32
    %0 = vector.broadcast %cst : f32 to vector<25x128xf32>
    %c0 = arith.constant 0 : index
    %c0_0 = arith.constant 0 : index
    %c0_1 = arith.constant 0 : index
    %1 = vector.load %arg1[%c0, %c0_0, %c0_1] : memref<1x45x128xbf16, #tpu.memory_space<vmem>>, vector<1x25x128xbf16>
    %2 = vector.shape_cast %1 : vector<1x25x128xbf16> to vector<25x128xbf16>
    %c0_2 = arith.constant 0 : index
    %c0_3 = arith.constant 0 : index
    %c0_4 = arith.constant 0 : index
    %3 = vector.load %arg2[%c0_2, %c0_3, %c0_4] : memref<16x128x128xbf16, #tpu.memory_space<vmem>>, vector<1x128x128xbf16>
    %4 = vector.shape_cast %3 : vector<1x128x128xbf16> to vector<128x128xbf16>
    %cst_5 = arith.constant dense<0.000000e+00> : vector<25x128xf32>
    %5 = tpu.matmul %2, %4, %cst_5 {dimension_numbers = #tpu.dot_dimension_numbers<[1], [0], [0], [1], [0, 0, 1, 1], [], []>} : vector<25x128xbf16>, vector<128x128xbf16>, vector<25x128xf32> -> vector<25x128xf32>
    %6 = arith.addf %0, %5 : vector<25x128xf32>
    %c0_6 = arith.constant 0 : index
    %c1 = arith.constant 1 : index
    %c0_7 = arith.constant 0 : index
    %7 = vector.load %arg1[%c0_6, %c1, %c0_7] : memref<1x45x128xbf16, #tpu.memory_space<vmem>>, vector<1x25x128xbf16>
    %8 = vector.shape_cast %7 : vector<1x25x128xbf16> to vector<25x128xbf16>
    %c1_8 = arith.constant 1 : index
    %c0_9 = arith.constant 0 : index
    %c0_10 = arith.constant 0 : index
    %9 = vector.load %arg2[%c1_8, %c0_9, %c0_10] : memref<16x128x128xbf16, #tpu.memory_space<vmem>>, vector<1x128x128xbf16>
    %10 = vector.shape_cast %9 : vector<1x128x128xbf16> to vector<128x128xbf16>
    %cst_11 = arith.constant dense<0.000000e+00> : vector<25x128xf32>
    %11 = tpu.matmul %8, %10, %cst_11 {dimension_numbers = #tpu.dot_dimension_numbers<[1], [0], [0], [1], [0, 0, 1, 1], [], []>} : vector<25x128xbf16>, vector<128x128xbf16>, vector<25x128xf32> -> vector<25x128xf32>
    %12 = arith.addf %6, %11 : vector<25x128xf32>
    %c0_12 = arith.constant 0 : index
    %c2 = arith.constant 2 : index
    %c0_13 = arith.constant 0 : index
    %13 = vector.load %arg1[%c0_12, %c2, %c0_13] : memref<1x45x128xbf16, #tpu.memory_space<vmem>>, vector<1x25x128xbf16>
    %14 = vector.shape_cast %13 : vector<1x25x128xbf16> to vector<25x128xbf16>
    %c2_14 = arith.constant 2 : index
    %c0_15 = arith.constant 0 : index
    %c0_16 = arith.constant 0 : index
    %15 = vector.load %arg2[%c2_14, %c0_15, %c0_16] : memref<16x128x128xbf16, #tpu.memory_space<vmem>>, vector<1x128x128xbf16>
    %16 = vector.shape_cast %15 : vector<1x128x128xbf16> to vector<128x128xbf16>
    %cst_17 = arith.constant dense<0.000000e+00> : vector<25x128xf32>
    %17 = tpu.matmul %14, %16, %cst_17 {dimension_numbers = #tpu.dot_dimension_numbers<[1], [0], [0], [1], [0, 0, 1, 1], [], []>} : vector<25x128xbf16>, vector<128x128xbf16>, vector<25x128xf32> -> vector<25x128xf32>
    %18 = arith.addf %12, %17 : vector<25x128xf32>
    %c0_18 = arith.constant 0 : index
    %c3 = arith.constant 3 : index
    %c0_19 = arith.constant 0 : index
    %19 = vector.load %arg1[%c0_18, %c3, %c0_19] : memref<1x45x128xbf16, #tpu.memory_space<vmem>>, vector<1x25x128xbf16>
    %20 = vector.shape_cast %19 : vector<1x25x128xbf16> to vector<25x128xbf16>
    %c3_20 = arith.constant 3 : index
    %c0_21 = arith.constant 0 : index
    %c0_22 = arith.constant 0 : index
    %21 = vector.load %arg2[%c3_20, %c0_21, %c0_22] : memref<16x128x128xbf16, #tpu.memory_space<vmem>>, vector<1x128x128xbf16>
    %22 = vector.shape_cast %21 : vector<1x128x128xbf16> to vector<128x128xbf16>
    %cst_23 = arith.constant dense<0.000000e+00> : vector<25x128xf32>
    %23 = tpu.matmul %20, %22, %cst_23 {dimension_numbers = #tpu.dot_dimension_numbers<[1], [0], [0], [1], [0, 0, 1, 1], [], []>} : vector<25x128xbf16>, vector<128x128xbf16>, vector<25x128xf32> -> vector<25x128xf32>
    %24 = arith.addf %18, %23 : vector<25x128xf32>
    %c0_24 = arith.constant 0 : index
    %c5 = arith.constant 5 : index
    %c0_25 = arith.constant 0 : index
    %25 = vector.load %arg1[%c0_24, %c5, %c0_25] : memref<1x45x128xbf16, #tpu.memory_space<vmem>>, vector<1x25x128xbf16>
    %26 = vector.shape_cast %25 : vector<1x25x128xbf16> to vector<25x128xbf16>
    %c4 = arith.constant 4 : index
    %c0_26 = arith.constant 0 : index
    %c0_27 = arith.constant 0 : index
    %27 = vector.load %arg2[%c4, %c0_26, %c0_27] : memref<16x128x128xbf16, #tpu.memory_space<vmem>>, vector<1x128x128xbf16>
    %28 = vector.shape_cast %27 : vector<1x128x128xbf16> to vector<128x128xbf16>
    %cst_28 = arith.constant dense<0.000000e+00> : vector<25x128xf32>
    %29 = tpu.matmul %26, %28, %cst_28 {dimension_numbers = #tpu.dot_dimension_numbers<[1], [0], [0], [1], [0, 0, 1, 1], [], []>} : vector<25x128xbf16>, vector<128x128xbf16>, vector<25x128xf32> -> vector<25x128xf32>
    %30 = arith.addf %24, %29 : vector<25x128xf32>
    %c0_29 = arith.constant 0 : index
    %c6 = arith.constant 6 : index
    %c0_30 = arith.constant 0 : index
    %31 = vector.load %arg1[%c0_29, %c6, %c0_30] : memref<1x45x128xbf16, #tpu.memory_space<vmem>>, vector<1x25x128xbf16>
    %32 = vector.shape_cast %31 : vector<1x25x128xbf16> to vector<25x128xbf16>
    %c5_31 = arith.constant 5 : index
    %c0_32 = arith.constant 0 : index
    %c0_33 = arith.constant 0 : index
    %33 = vector.load %arg2[%c5_31, %c0_32, %c0_33] : memref<16x128x128xbf16, #tpu.memory_space<vmem>>, vector<1x128x128xbf16>
    %34 = vector.shape_cast %33 : vector<1x128x128xbf16> to vector<128x128xbf16>
    %cst_34 = arith.constant dense<0.000000e+00> : vector<25x128xf32>
    %35 = tpu.matmul %32, %34, %cst_34 {dimension_numbers = #tpu.dot_dimension_numbers<[1], [0], [0], [1], [0, 0, 1, 1], [], []>} : vector<25x128xbf16>, vector<128x128xbf16>, vector<25x128xf32> -> vector<25x128xf32>
    %36 = arith.addf %30, %35 : vector<25x128xf32>
    %c0_35 = arith.constant 0 : index
    %c7 = arith.constant 7 : index
    %c0_36 = arith.constant 0 : index
    %37 = vector.load %arg1[%c0_35, %c7, %c0_36] : memref<1x45x128xbf16, #tpu.memory_space<vmem>>, vector<1x25x128xbf16>
    %38 = vector.shape_cast %37 : vector<1x25x128xbf16> to vector<25x128xbf16>
    %c6_37 = arith.constant 6 : index
    %c0_38 = arith.constant 0 : index
    %c0_39 = arith.constant 0 : index
    %39 = vector.load %arg2[%c6_37, %c0_38, %c0_39] : memref<16x128x128xbf16, #tpu.memory_space<vmem>>, vector<1x128x128xbf16>
    %40 = vector.shape_cast %39 : vector<1x128x128xbf16> to vector<128x128xbf16>
    %cst_40 = arith.constant dense<0.000000e+00> : vector<25x128xf32>
    %41 = tpu.matmul %38, %40, %cst_40 {dimension_numbers = #tpu.dot_dimension_numbers<[1], [0], [0], [1], [0, 0, 1, 1], [], []>} : vector<25x128xbf16>, vector<128x128xbf16>, vector<25x128xf32> -> vector<25x128xf32>
    %42 = arith.addf %36, %41 : vector<25x128xf32>
    %c0_41 = arith.constant 0 : index
    %c8 = arith.constant 8 : index
    %c0_42 = arith.constant 0 : index
    %43 = vector.load %arg1[%c0_41, %c8, %c0_42] : memref<1x45x128xbf16, #tpu.memory_space<vmem>>, vector<1x25x128xbf16>
    %44 = vector.shape_cast %43 : vector<1x25x128xbf16> to vector<25x128xbf16>
    %c7_43 = arith.constant 7 : index
    %c0_44 = arith.constant 0 : index
    %c0_45 = arith.constant 0 : index
    %45 = vector.load %arg2[%c7_43, %c0_44, %c0_45] : memref<16x128x128xbf16, #tpu.memory_space<vmem>>, vector<1x128x128xbf16>
    %46 = vector.shape_cast %45 : vector<1x128x128xbf16> to vector<128x128xbf16>
    %cst_46 = arith.constant dense<0.000000e+00> : vector<25x128xf32>
    %47 = tpu.matmul %44, %46, %cst_46 {dimension_numbers = #tpu.dot_dimension_numbers<[1], [0], [0], [1], [0, 0, 1, 1], [], []>} : vector<25x128xbf16>, vector<128x128xbf16>, vector<25x128xf32> -> vector<25x128xf32>
    %48 = arith.addf %42, %47 : vector<25x128xf32>
    %c0_47 = arith.constant 0 : index
    %c10 = arith.constant 10 : index
    %c0_48 = arith.constant 0 : index
    %49 = vector.load %arg1[%c0_47, %c10, %c0_48] : memref<1x45x128xbf16, #tpu.memory_space<vmem>>, vector<1x25x128xbf16>
    %50 = vector.shape_cast %49 : vector<1x25x128xbf16> to vector<25x128xbf16>
    %c8_49 = arith.constant 8 : index
    %c0_50 = arith.constant 0 : index
    %c0_51 = arith.constant 0 : index
    %51 = vector.load %arg2[%c8_49, %c0_50, %c0_51] : memref<16x128x128xbf16, #tpu.memory_space<vmem>>, vector<1x128x128xbf16>
    %52 = vector.shape_cast %51 : vector<1x128x128xbf16> to vector<128x128xbf16>
    %cst_52 = arith.constant dense<0.000000e+00> : vector<25x128xf32>
    %53 = tpu.matmul %50, %52, %cst_52 {dimension_numbers = #tpu.dot_dimension_numbers<[1], [0], [0], [1], [0, 0, 1, 1], [], []>} : vector<25x128xbf16>, vector<128x128xbf16>, vector<25x128xf32> -> vector<25x128xf32>
    %54 = arith.addf %48, %53 : vector<25x128xf32>
    %c0_53 = arith.constant 0 : index
    %c11 = arith.constant 11 : index
    %c0_54 = arith.constant 0 : index
    %55 = vector.load %arg1[%c0_53, %c11, %c0_54] : memref<1x45x128xbf16, #tpu.memory_space<vmem>>, vector<1x25x128xbf16>
    %56 = vector.shape_cast %55 : vector<1x25x128xbf16> to vector<25x128xbf16>
    %c9 = arith.constant 9 : index
    %c0_55 = arith.constant 0 : index
    %c0_56 = arith.constant 0 : index
    %57 = vector.load %arg2[%c9, %c0_55, %c0_56] : memref<16x128x128xbf16, #tpu.memory_space<vmem>>, vector<1x128x128xbf16>
    %58 = vector.shape_cast %57 : vector<1x128x128xbf16> to vector<128x128xbf16>
    %cst_57 = arith.constant dense<0.000000e+00> : vector<25x128xf32>
    %59 = tpu.matmul %56, %58, %cst_57 {dimension_numbers = #tpu.dot_dimension_numbers<[1], [0], [0], [1], [0, 0, 1, 1], [], []>} : vector<25x128xbf16>, vector<128x128xbf16>, vector<25x128xf32> -> vector<25x128xf32>
    %60 = arith.addf %54, %59 : vector<25x128xf32>
    %c0_58 = arith.constant 0 : index
    %c12 = arith.constant 12 : index
    %c0_59 = arith.constant 0 : index
    %61 = vector.load %arg1[%c0_58, %c12, %c0_59] : memref<1x45x128xbf16, #tpu.memory_space<vmem>>, vector<1x25x128xbf16>
    %62 = vector.shape_cast %61 : vector<1x25x128xbf16> to vector<25x128xbf16>
    %c10_60 = arith.constant 10 : index
    %c0_61 = arith.constant 0 : index
    %c0_62 = arith.constant 0 : index
    %63 = vector.load %arg2[%c10_60, %c0_61, %c0_62] : memref<16x128x128xbf16, #tpu.memory_space<vmem>>, vector<1x128x128xbf16>
    %64 = vector.shape_cast %63 : vector<1x128x128xbf16> to vector<128x128xbf16>
    %cst_63 = arith.constant dense<0.000000e+00> : vector<25x128xf32>
    %65 = tpu.matmul %62, %64, %cst_63 {dimension_numbers = #tpu.dot_dimension_numbers<[1], [0], [0], [1], [0, 0, 1, 1], [], []>} : vector<25x128xbf16>, vector<128x128xbf16>, vector<25x128xf32> -> vector<25x128xf32>
    %66 = arith.addf %60, %65 : vector<25x128xf32>
    %c0_64 = arith.constant 0 : index
    %c13 = arith.constant 13 : index
    %c0_65 = arith.constant 0 : index
    %67 = vector.load %arg1[%c0_64, %c13, %c0_65] : memref<1x45x128xbf16, #tpu.memory_space<vmem>>, vector<1x25x128xbf16>
    %68 = vector.shape_cast %67 : vector<1x25x128xbf16> to vector<25x128xbf16>
    %c11_66 = arith.constant 11 : index
    %c0_67 = arith.constant 0 : index
    %c0_68 = arith.constant 0 : index
    %69 = vector.load %arg2[%c11_66, %c0_67, %c0_68] : memref<16x128x128xbf16, #tpu.memory_space<vmem>>, vector<1x128x128xbf16>
    %70 = vector.shape_cast %69 : vector<1x128x128xbf16> to vector<128x128xbf16>
    %cst_69 = arith.constant dense<0.000000e+00> : vector<25x128xf32>
    %71 = tpu.matmul %68, %70, %cst_69 {dimension_numbers = #tpu.dot_dimension_numbers<[1], [0], [0], [1], [0, 0, 1, 1], [], []>} : vector<25x128xbf16>, vector<128x128xbf16>, vector<25x128xf32> -> vector<25x128xf32>
    %72 = arith.addf %66, %71 : vector<25x128xf32>
    %c0_70 = arith.constant 0 : index
    %c15 = arith.constant 15 : index
    %c0_71 = arith.constant 0 : index
    %73 = vector.load %arg1[%c0_70, %c15, %c0_71] : memref<1x45x128xbf16, #tpu.memory_space<vmem>>, vector<1x25x128xbf16>
    %74 = vector.shape_cast %73 : vector<1x25x128xbf16> to vector<25x128xbf16>
    %c12_72 = arith.constant 12 : index
    %c0_73 = arith.constant 0 : index
    %c0_74 = arith.constant 0 : index
    %75 = vector.load %arg2[%c12_72, %c0_73, %c0_74] : memref<16x128x128xbf16, #tpu.memory_space<vmem>>, vector<1x128x128xbf16>
    %76 = vector.shape_cast %75 : vector<1x128x128xbf16> to vector<128x128xbf16>
    %cst_75 = arith.constant dense<0.000000e+00> : vector<25x128xf32>
    %77 = tpu.matmul %74, %76, %cst_75 {dimension_numbers = #tpu.dot_dimension_numbers<[1], [0], [0], [1], [0, 0, 1, 1], [], []>} : vector<25x128xbf16>, vector<128x128xbf16>, vector<25x128xf32> -> vector<25x128xf32>
    %78 = arith.addf %72, %77 : vector<25x128xf32>
    %c0_76 = arith.constant 0 : index
    %c16 = arith.constant 16 : index
    %c0_77 = arith.constant 0 : index
    %79 = vector.load %arg1[%c0_76, %c16, %c0_77] : memref<1x45x128xbf16, #tpu.memory_space<vmem>>, vector<1x25x128xbf16>
    %80 = vector.shape_cast %79 : vector<1x25x128xbf16> to vector<25x128xbf16>
    %c13_78 = arith.constant 13 : index
    %c0_79 = arith.constant 0 : index
    %c0_80 = arith.constant 0 : index
    %81 = vector.load %arg2[%c13_78, %c0_79, %c0_80] : memref<16x128x128xbf16, #tpu.memory_space<vmem>>, vector<1x128x128xbf16>
    %82 = vector.shape_cast %81 : vector<1x128x128xbf16> to vector<128x128xbf16>
    %cst_81 = arith.constant dense<0.000000e+00> : vector<25x128xf32>
    %83 = tpu.matmul %80, %82, %cst_81 {dimension_numbers = #tpu.dot_dimension_numbers<[1], [0], [0], [1], [0, 0, 1, 1], [], []>} : vector<25x128xbf16>, vector<128x128xbf16>, vector<25x128xf32> -> vector<25x128xf32>
    %84 = arith.addf %78, %83 : vector<25x128xf32>
    %c0_82 = arith.constant 0 : index
    %c17 = arith.constant 17 : index
    %c0_83 = arith.constant 0 : index
    %85 = vector.load %arg1[%c0_82, %c17, %c0_83] : memref<1x45x128xbf16, #tpu.memory_space<vmem>>, vector<1x25x128xbf16>
    %86 = vector.shape_cast %85 : vector<1x25x128xbf16> to vector<25x128xbf16>
    %c14 = arith.constant 14 : index
    %c0_84 = arith.constant 0 : index
    %c0_85 = arith.constant 0 : index
    %87 = vector.load %arg2[%c14, %c0_84, %c0_85] : memref<16x128x128xbf16, #tpu.memory_space<vmem>>, vector<1x128x128xbf16>
    %88 = vector.shape_cast %87 : vector<1x128x128xbf16> to vector<128x128xbf16>
    %cst_86 = arith.constant dense<0.000000e+00> : vector<25x128xf32>
    %89 = tpu.matmul %86, %88, %cst_86 {dimension_numbers = #tpu.dot_dimension_numbers<[1], [0], [0], [1], [0, 0, 1, 1], [], []>} : vector<25x128xbf16>, vector<128x128xbf16>, vector<25x128xf32> -> vector<25x128xf32>
    %90 = arith.addf %84, %89 : vector<25x128xf32>
    %c0_87 = arith.constant 0 : index
    %c18 = arith.constant 18 : index
    %c0_88 = arith.constant 0 : index
    %91 = vector.load %arg1[%c0_87, %c18, %c0_88] : memref<1x45x128xbf16, #tpu.memory_space<vmem>>, vector<1x25x128xbf16>
    %92 = vector.shape_cast %91 : vector<1x25x128xbf16> to vector<25x128xbf16>
    %c15_89 = arith.constant 15 : index
    %c0_90 = arith.constant 0 : index
    %c0_91 = arith.constant 0 : index
    %93 = vector.load %arg2[%c15_89, %c0_90, %c0_91] : memref<16x128x128xbf16, #tpu.memory_space<vmem>>, vector<1x128x128xbf16>
    %94 = vector.shape_cast %93 : vector<1x128x128xbf16> to vector<128x128xbf16>
    %cst_92 = arith.constant dense<0.000000e+00> : vector<25x128xf32>
    %95 = tpu.matmul %92, %94, %cst_92 {dimension_numbers = #tpu.dot_dimension_numbers<[1], [0], [0], [1], [0, 0, 1, 1], [], []>} : vector<25x128xbf16>, vector<128x128xbf16>, vector<25x128xf32> -> vector<25x128xf32>
    %96 = arith.addf %90, %95 : vector<25x128xf32>
    %c0_93 = arith.constant 0 : index
    %c0_94 = arith.constant 0 : index
    %97 = vector.load %arg3[%c0_93, %c0_94] : memref<1x128xf32, #tpu.memory_space<vmem>>, vector<1x128xf32>
    %98 = vector.broadcast %97 : vector<1x128xf32> to vector<25x128xf32>
    %99 = arith.addf %96, %98 : vector<25x128xf32>
    %c0_95 = arith.constant 0 : index
    %c0_96 = arith.constant 0 : index
    %c0_97 = arith.constant 0 : index
    %100 = vector.load %arg4[%c0_95, %c0_96, %c0_97] : memref<1x25x128xf32, #tpu.memory_space<vmem>>, vector<1x25x128xf32>
    %101 = vector.shape_cast %100 : vector<1x25x128xf32> to vector<25x128xf32>
    %102 = vector.shape_cast %99 : vector<25x128xf32> to vector<1x25x128xf32>
    tpu.vector_store %arg4[%c0_95, %c0_96, %c0_97], %102 {strides = array<i32>} : memref<1x25x128xf32, #tpu.memory_space<vmem>>, vector<1x25x128xf32>,
    return
  }
  func.func @transform_0(%arg0: i32) -> (i32, i32, i32) {
    %c0_i32 = arith.constant 0 : i32
    %c0_i32_0 = arith.constant 0 : i32
    %c0_i32_1 = arith.constant 0 : i32
    return %arg0, %c0_i32, %c0_i32_0 : i32, i32, i32
  }
  func.func @transform_1(%arg0: i32) -> (i32, i32, i32) {
    %c0_i32 = arith.constant 0 : i32
    %c0_i32_0 = arith.constant 0 : i32
    %c0_i32_1 = arith.constant 0 : i32
    %c0_i32_2 = arith.constant 0 : i32
    return %c0_i32, %c0_i32_0, %c0_i32_1 : i32, i32, i32
  }
  func.func @transform_2(%arg0: i32) -> (i32, i32) {
    %c0_i32 = arith.constant 0 : i32
    %c0_i32_0 = arith.constant 0 : i32
    %c0_i32_1 = arith.constant 0 : i32
    return %c0_i32, %c0_i32_0 : i32, i32
  }
  func.func @transform_3(%arg0: i32) -> (i32, i32, i32) {
    %c0_i32 = arith.constant 0 : i32
    %c0_i32_0 = arith.constant 0 : i32
    %c0_i32_1 = arith.constant 0 : i32
    return %arg0, %c0_i32, %c0_i32_0 : i32, i32, i32
  }
}

</mosaic_0001>

<llo_original>
// kernel: patch_discriminator_forward.9
$region0: #{patch_discriminator_forward.9}
  #allocation0 [shape = 'u32[]', space=smem, size = 0x4, offset = 0x4, fixed_abs, tag = 'smem constant byte address 0x4 - core index']
  #allocation1 [shape = 'u32[144,128]{1,0:T(1,128)}', space=vmem, size = 0x12000, scoped, tag = 'internal scratch']
  %s0 = inlined_call_operand.vmem [shape: bf16[512,128], index: 0, kind: input, shape index: {}]
  %s1 = inlined_call_operand.vmem [shape: bf16[128,128], index: 1, kind: input, shape index: {}]
  %s2 = inlined_call_operand.vmem [shape: f32[2,1,128], index: 2, kind: output, shape index: {0}]
  %s3 = inlined_call_operand.vmem [shape: f32[2,1,128], index: 3, kind: output, shape index: {1}]
  %4 = xla_tuple %s2, %s3
  %s5 = sld [smem:[#allocation0]]
  $region49: #{patch_discriminator_forward.9} parent=0
    _
  %s7 = ssub.s32 1, %s5
  %s8 = scalar_select 0, %s7, %s5
  loop: start=0, step=1, limit=4
  $region2: #{patch_discriminator_forward.9} parent=0 // loop_pre_header
    _
  $region3: #{patch_discriminator_forward.9} parent=0 // loop_header
    %s10 = sphi 0, %s14
    %p11 = scmp.ge.s32.totalorder %s10, 4
    %s20 = sphi 0, %s22
    %s23 = sphi 0, %s20
    %s24 = sphi 0, %s23
    %s40 = sphi 0, %s24
    %s44 = sphi 0, %s44
    %s46 = sphi 0, %s44
    %s47 = sphi 0, %s46
    %s61 = sphi 0, %s47
    %s67 = sphi 0, %s69
    %s70 = sphi 0, %s67
    %s71 = sphi 0, %s70
    %s87 = sphi 0, %s71
    %s93 = sphi 0, %s95
    %s96 = sphi 0, %s93
    %s97 = sphi 0, %s96
    %s113 = sphi 0, %s97
  $region4: #{patch_discriminator_forward.9} parent=0 // loop_header_branch
    %13 = sbr.rel (%p11) target = $region8
  $region5: #{patch_discriminator_forward.9} parent=0 // loop_body
    %s15 = ssub.s32 %s10, 1
    %s16 = ssub.s32 %s10, 2
    %s17 = sadd.s32 %s10, 1
    %s18 = ssub.s32 %s10, %s17
    %p19 = scmp.eq.s32.totalorder %s18, 0
    %s21 = sadd.s32 %s20, 1
    %s22 = scalar_select %p19, %s20, %s21
    %p25 = pneg %p19
    %p26 = scmp.eq.s32.totalorder %s10, 1
    %p27 = por %p25, %p26
    %p28 = scmp.ne.s32.totalorder %s20, %s23
    %p29 = scmp.eq.s32.totalorder %s10, 0
    %p30 = por %p28, %p29
    %p31 = scmp.ne.s32.totalorder %s20, %s23
    %p32 = scmp.eq.s32.totalorder %s15, 1
    %p33 = por %p31, %p32
    %p34 = scmp.ne.s32.totalorder %s23, %s24
    %p35 = scmp.eq.s32.totalorder %s15, 0
    %p36 = por %p34, %p35
    %p37 = scmp.ne.s32.totalorder %s23, %s24
    %p38 = scmp.eq.s32.totalorder %s16, 1
    %p39 = por %p37, %p38
    %p41 = scmp.ne.s32.totalorder %s24, %s40
    %p42 = scmp.eq.s32.totalorder %s16, 0
    %p43 = por %p41, %p42
    %s45 = sadd.s32 %s44, 1
    %p48 = scmp.eq.s32.totalorder %s10, 1
    %p49 = scmp.ne.s32.totalorder %s44, %s46
    %p50 = scmp.eq.s32.totalorder %s10, 0
    %p51 = por %p49, %p50
    %p52 = scmp.ne.s32.totalorder %s44, %s46
    %p53 = scmp.eq.s32.totalorder %s15, 1
    %p54 = por %p52, %p53
    %p55 = scmp.ne.s32.totalorder %s46, %s47
    %p56 = scmp.eq.s32.totalorder %s15, 0
    %p57 = por %p55, %p56
    %p58 = scmp.ne.s32.totalorder %s46, %s47
    %p59 = scmp.eq.s32.totalorder %s16, 1
    %p60 = por %p58, %p59
    %p62 = scmp.ne.s32.totalorder %s47, %s61
    %p63 = scmp.eq.s32.totalorder %s16, 0
    %p64 = por %p62, %p63
    %s65 = ssub.s32 %s10, %s17
    %p66 = scmp.eq.s32.totalorder %s65, 0
    %s68 = sadd.s32 %s67, 1
    %s69 = scalar_select %p66, %s67, %s68
    %p72 = pneg %p66
    %p73 = scmp.eq.s32.totalorder %s10, 1
    %p74 = por %p72, %p73
    %p75 = scmp.ne.s32.totalorder %s67, %s70
    %p76 = scmp.eq.s32.totalorder %s10, 0
    %p77 = por %p75, %p76
    %p78 = scmp.ne.s32.totalorder %s67, %s70
    %p79 = scmp.eq.s32.totalorder %s15, 1
    %p80 = por %p78, %p79
    %p81 = scmp.ne.s32.totalorder %s70, %s71
    %p82 = scmp.eq.s32.totalorder %s15, 0
    %p83 = por %p81, %p82
    %p84 = scmp.ne.s32.totalorder %s70, %s71
    %p85 = scmp.eq.s32.totalorder %s16, 1
    %p86 = por %p84, %p85
    %p88 = scmp.ne.s32.totalorder %s71, %s87
    %p89 = scmp.eq.s32.totalorder %s16, 0
    %p90 = por %p88, %p89
    %s91 = ssub.s32 %s10, %s17
    %p92 = scmp.eq.s32.totalorder %s91, 0
    %s94 = sadd.s32 %s93, 1
    %s95 = scalar_select %p92, %s93, %s94
    %p98 = pneg %p92
    %p99 = scmp.eq.s32.totalorder %s10, 1
    %p100 = por %p98, %p99
    %p101 = scmp.ne.s32.totalorder %s93, %s96
    %p102 = scmp.eq.s32.totalorder %s10, 0
    %p103 = por %p101, %p102
    %p104 = scmp.ne.s32.totalorder %s93, %s96
    %p105 = scmp.eq.s32.totalorder %s15, 1
    %p106 = por %p104, %p105
    %p107 = scmp.ne.s32.totalorder %s96, %s97
    %p108 = scmp.eq.s32.totalorder %s15, 0
    %p109 = por %p107, %p108
    %p110 = scmp.ne.s32.totalorder %s96, %s97
    %p111 = scmp.eq.s32.totalorder %s16, 1
    %p112 = por %p110, %p111
    %p114 = scmp.ne.s32.totalorder %s97, %s113
    %p115 = scmp.eq.s32.totalorder %s16, 0
    %p116 = por %p114, %p115
    %p117 = scmp.le.s32.totalorder 1, %s10
    %p118 = scmp.lt.s32.totalorder %s10, 3
    %p119 = pnand %p117, %p118
    %p120 = pneg %p119
    // Predicated region
    $region9: #{patch_discriminator_forward.9} parent=5 // pred_check
      _
    $region10: #{patch_discriminator_forward.9} parent=5 // pred_check_branch
      %122 = sbr.rel (%p119) target = $region12
    $region11: #{patch_discriminator_forward.9} parent=5 // pred_region
      %s123 = ssub.s32 %s10, 1
      // Predicated region
      $region13: #{patch_discriminator_forward.9} parent=11 // pred_check
        %p124 = pneg %p57
      $region14: #{patch_discriminator_forward.9} parent=11 // pred_check_branch
        %126 = sbr.rel (%p124) target = $region16
      $region15: #{patch_discriminator_forward.9} parent=11 // pred_region
        _
      $region16: #{patch_discriminator_forward.9} parent=11 // pred_fallthru
        _
    $region12: #{patch_discriminator_forward.9} parent=5 // pred_fallthru
      _
    %p127 = scmp.lt.s32.totalorder %s10, 2
    // Predicated region
    $region17: #{patch_discriminator_forward.9} parent=5 // pred_check
      %p128 = pneg %p127
    $region18: #{patch_discriminator_forward.9} parent=5 // pred_check_branch
      %130 = sbr.rel (%p128) target = $region20
    $region19: #{patch_discriminator_forward.9} parent=5 // pred_region
      // Predicated region
      $region21: #{patch_discriminator_forward.9} parent=19 // pred_check
        %p131 = pneg %p30
      $region22: #{patch_discriminator_forward.9} parent=19 // pred_check_branch
        %133 = sbr.rel (%p131) target = $region24
      $region23: #{patch_discriminator_forward.9} parent=19 // pred_region
        %s134 = smul.u32 32, %s10
        %p135 = scmp.lt.s32.totalorder %s134, 63
        %s136 = scalar_select %p135, %s134, 63
        %s137 = smul.addr %s136, 4
        %s138 = scalar_lea.vmem %s0, %s137
        %s139 = smul.u32 32, %s10
      $region24: #{patch_discriminator_forward.9} parent=19 // pred_fallthru
        _
    $region20: #{patch_discriminator_forward.9} parent=5 // pred_fallthru
      _
    %p140 = scmp.le.s32.totalorder 1, %s10
    %p141 = scmp.lt.s32.totalorder %s10, 3
    %p142 = pnand %p140, %p141
    %p143 = pneg %p142
    // Predicated region
    $region25: #{patch_discriminator_forward.9} parent=5 // pred_check
      _
    $region26: #{patch_discriminator_forward.9} parent=5 // pred_check_branch
      %145 = sbr.rel (%p142) target = $region28
    $region27: #{patch_discriminator_forward.9} parent=5 // pred_region
      %s146 = ssub.s32 %s10, 1
      %s147 = smul.u32 32, %s15
      %p148 = scmp.lt.s32.totalorder %s147, 63
      %s149 = scalar_select %p148, %s147, 63
      %s150 = smul.addr %s149, 4
      %s151 = scalar_lea.vmem %s0, %s150
      %p152 = pneg %p36
      %p153 = pneg %p33
      %p154 = pneg %p57
      %p155 = pneg %p54
      %p156 = pneg %p83
      %p157 = pneg %p80
      %p158 = scmp.lt.s32.totalorder %s15, 1
      %s159 = scalar_select %p158, %s15, 1
      %s160 = scalar_lea.vmem %s2, %s159
      %p161 = pneg %p109
      %p162 = pneg %p106
      %p163 = scmp.lt.s32.totalorder %s15, 1
      %s164 = scalar_select %p163, %s15, 1
      %s165 = scalar_lea.vmem %s3, %s164
      %s166 = smul.u32 32, %s15
      %p167 = scmp.lt.s32.totalorder %s166, 63
      %s168 = scalar_select %p167, %s166, 63
      %s169 = smul.addr %s168, 4
      %s170 = scalar_lea.vmem %s0, %s169
      %s171 = smul.u32 32, %s15
      %p172 = scmp.lt.s32.totalorder %s15, 1
      %s173 = scalar_select %p172, %s15, 1
      %s174 = scalar_lea.vmem %s2, %s173
      %p175 = scmp.lt.s32.totalorder %s15, 1
      %s176 = scalar_select %p175, %s15, 1
      %s177 = scalar_lea.vmem %s3, %s176
      %v179 = vld [vmem:[%s170] sm:$0xf]
      %v180 = vld [vmem:[%s170 + $0x4] sm:$0xf]
      %v181 = vld [vmem:[%s170 + $0x8] sm:$0xf]
      %v182 = vld [vmem:[%s170 + $0xc] sm:$0xf]
      %v183 = vld [vmem:[%s170 + $0x10] sm:$0xf]
      %v184 = vld [vmem:[%s170 + $0x14] sm:$0xf]
      %v185 = vld [vmem:[%s170 + $0x18] sm:$0xf]
      %v186 = vld [vmem:[%s170 + $0x1c] sm:$0xf]
      %v187 = vld [vmem:[%s170 + $0x20] sm:$0xf]
      %v188 = vld [vmem:[%s170 + $0x24] sm:$0xf]
      %v189 = vld [vmem:[%s170 + $0x28] sm:$0xf]
      %v190 = vld [vmem:[%s170 + $0x2c] sm:$0xf]
      %v191 = vld [vmem:[%s170 + $0x30] sm:$0xf]
      %v192 = vld [vmem:[%s170 + $0x34] sm:$0xf]
      %v193 = vld [vmem:[%s170 + $0x38] sm:$0xf]
      %v194 = vld [vmem:[%s170 + $0x3c] sm:$0xf]
      %v195 = vld [vmem:[%s170 + $0x40] sm:$0xf]
      %v196 = vld [vmem:[%s170 + $0x44] sm:$0xf]
      %v197 = vld [vmem:[%s170 + $0x48] sm:$0xf]
      %v198 = vld [vmem:[%s170 + $0x4c] sm:$0xf]
      %v199 = vld [vmem:[%s170 + $0x50] sm:$0xf]
      %v200 = vld [vmem:[%s170 + $0x54] sm:$0xf]
      %v201 = vld [vmem:[%s170 + $0x58] sm:$0xf]
      %v202 = vld [vmem:[%s170 + $0x5c] sm:$0xf]
      %v203 = vld [vmem:[%s170 + $0x60] sm:$0xf]
      %v204 = vld [vmem:[%s170 + $0x64] sm:$0xf]
      %v205 = vld [vmem:[%s170 + $0x68] sm:$0xf]
      %v206 = vld [vmem:[%s170 + $0x6c] sm:$0xf]
      %v207 = vld [vmem:[%s170 + $0x70] sm:$0xf]
      %v208 = vld [vmem:[%s170 + $0x74] sm:$0xf]
      %v209 = vld [vmem:[%s170 + $0x78] sm:$0xf]
      %v210 = vld [vmem:[%s170 + $0x7c] sm:$0xf]
      %v211 = vld [vmem:[%s1] sm:$0xf]
      %v212 = vld [vmem:[%s1 + $0x4] sm:$0xf]
      %v213 = vld [vmem:[%s1 + $0x8] sm:$0xf]
      %v214 = vld [vmem:[%s1 + $0xc] sm:$0xf]
      %v215 = vld [vmem:[%s1 + $0x10] sm:$0xf]
      %v216 = vld [vmem:[%s1 + $0x14] sm:$0xf]
      %v217 = vld [vmem:[%s1 + $0x18] sm:$0xf]
      %v218 = vld [vmem:[%s1 + $0x1c] sm:$0xf]
      %v219 = vld [vmem:[%s1 + $0x20] sm:$0xf]
      %v220 = vld [vmem:[%s1 + $0x24] sm:$0xf]
      %v221 = vld [vmem:[%s1 + $0x28] sm:$0xf]
      %v222 = vld [vmem:[%s1 + $0x2c] sm:$0xf]
      %v223 = vld [vmem:[%s1 + $0x30] sm:$0xf]
      %v224 = vld [vmem:[%s1 + $0x34] sm:$0xf]
      %v225 = vld [vmem:[%s1 + $0x38] sm:$0xf]
      %v226 = vld [vmem:[%s1 + $0x3c] sm:$0xf]
      %v259 = vunpack.c.l.b16 %v179
      %v260 = vunpack.c.l.b16 %v180
      %v261 = vunpack.c.l.b16 %v181
      %v262 = vunpack.c.l.b16 %v182
      %v263 = vunpack.c.l.b16 %v183
      %v264 = vunpack.c.l.b16 %v184
      %v265 = vunpack.c.l.b16 %v185
      %v266 = vunpack.c.l.b16 %v186
      %v267 = vunpack.c.l.b16 %v187
      %v268 = vunpack.c.l.b16 %v188
      %v269 = vunpack.c.l.b16 %v189
      %v270 = vunpack.c.l.b16 %v190
      %v271 = vunpack.c.l.b16 %v191
      %v272 = vunpack.c.l.b16 %v192
      %v273 = vunpack.c.l.b16 %v193
      %v274 = vunpack.c.l.b16 %v194
      %v275 = vunpack.c.l.b16 %v195
      %v276 = vunpack.c.l.b16 %v196
      %v277 = vunpack.c.l.b16 %v197
      %v278 = vunpack.c.l.b16 %v198
      %v279 = vunpack.c.l.b16 %v199
      %v280 = vunpack.c.l.b16 %v200
      %v281 = vunpack.c.l.b16 %v201
      %v282 = vunpack.c.l.b16 %v202
      %v283 = vunpack.c.l.b16 %v203
      %v284 = vunpack.c.l.b16 %v204
      %v285 = vunpack.c.l.b16 %v205
      %v286 = vunpack.c.l.b16 %v206
      %v287 = vunpack.c.l.b16 %v207
      %v288 = vunpack.c.l.b16 %v208
      %v289 = vunpack.c.l.b16 %v209
      %v290 = vunpack.c.l.b16 %v210
      %v291 = vpack.c.b16 %v260, %v259
      %v292 = vpack.c.b16 %v262, %v261
      %v293 = vpack.c.b16 %v264, %v263
      %v294 = vpack.c.b16 %v266, %v265
      %v295 = vpack.c.b16 %v268, %v267
      %v296 = vpack.c.b16 %v270, %v269
      %v297 = vpack.c.b16 %v272, %v271
      %v298 = vpack.c.b16 %v274, %v273
      %v299 = vpack.c.b16 %v276, %v275
      %v300 = vpack.c.b16 %v278, %v277
      %v301 = vpack.c.b16 %v280, %v279
      %v302 = vpack.c.b16 %v282, %v281
      %v303 = vpack.c.b16 %v284, %v283
      %v304 = vpack.c.b16 %v286, %v285
      %v305 = vpack.c.b16 %v288, %v287
      %v306 = vpack.c.b16 %v290, %v289
      %v339 = vunpack.c.l.b16 %v211
      %v340 = vunpack.c.l.b16 %v212
      %v341 = vunpack.c.l.b16 %v213
      %v342 = vunpack.c.l.b16 %v214
      %v343 = vunpack.c.l.b16 %v215
      %v344 = vunpack.c.l.b16 %v216
      %v345 = vunpack.c.l.b16 %v217
      %v346 = vunpack.c.l.b16 %v218
      %v347 = vunpack.c.l.b16 %v219
      %v348 = vunpack.c.l.b16 %v220
      %v349 = vunpack.c.l.b16 %v221
      %v350 = vunpack.c.l.b16 %v222
      %v351 = vunpack.c.l.b16 %v223
      %v352 = vunpack.c.l.b16 %v224
      %v353 = vunpack.c.l.b16 %v225
      %v354 = vunpack.c.l.b16 %v226
      %v355 = vpack.c.b16 %v340, %v339
      %v356 = vpack.c.b16 %v342, %v341
      %v357 = vpack.c.b16 %v344, %v343
      %v358 = vpack.c.b16 %v346, %v345
      %v359 = vpack.c.b16 %v348, %v347
      %v360 = vpack.c.b16 %v350, %v349
      %v361 = vpack.c.b16 %v352, %v351
      %v362 = vpack.c.b16 %v354, %v353
      %371 = vmatprep.subr.bf16.mxu0 0
      %372 = vmatpush1.bf16.msra.mxu0 %v355
      %373 = vmatprep.subr.bf16.mxu0 0
      %374 = vmatpush1.bf16.msra.mxu0 %v356
      %375 = vmatprep.subr.bf16.mxu0 0
      %376 = vmatpush1.bf16.msra.mxu0 %v357
      %377 = vmatprep.subr.bf16.mxu0 0
      %378 = vmatpush1.bf16.msra.mxu0 %v358
      %379 = vmatprep.subr.bf16.mxu0 0
      %380 = vmatpush1.bf16.msra.mxu0 %v359
      %381 = vmatprep.subr.bf16.mxu0 0
      %382 = vmatpush1.bf16.msra.mxu0 %v360
      %383 = vmatprep.subr.bf16.mxu0 0
      %384 = vmatpush1.bf16.msra.mxu0 %v361
      %385 = vmatprep.subr.bf16.mxu0 0
      %386 = vmatpush1.bf16.msra.mxu0 %v362
      %387 = vmatprep.subr.bf16.mxu0 0
      %388 = vmatpush1.bf16.msra.mxu0 0
      %389 = vmatprep.subr.bf16.mxu0 0
      %390 = vmatpush1.bf16.msra.mxu0 0
      %391 = vmatprep.subr.bf16.mxu0 0
      %392 = vmatpush1.bf16.msra.mxu0 0
      %393 = vmatprep.subr.bf16.mxu0 0
      %394 = vmatpush1.bf16.msra.mxu0 0
      %395 = vmatprep.subr.bf16.mxu0 0
      %396 = vmatpush1.bf16.msra.mxu0 0
      %397 = vmatprep.subr.bf16.mxu0 0
      %398 = vmatpush1.bf16.msra.mxu0 0
      %399 = vmatprep.subr.bf16.mxu0 0
      %400 = vmatpush1.bf16.msra.mxu0 0
      %401 = vmatprep.subr.bf16.mxu0 0
      %402 = vmatpush1.bf16.msra.mxu0 0
      %403 = vmatprep.mubr.bf16.mxu0 0
      %404 = vmatmul.mubr.bf16.gmra.mrb[0].mxu0 %v291
      %v405 = vpop.f32.mrb[0].mxu0
      %v406 = vadd.f32 0.0, %v405
      %v407 = vpop.f32.mrb[0].mxu0
      %v408 = vpop.f32.mrb[0].mxu0
      %v409 = vadd.f32 0.0, %v408
      %v410 = vpop.f32.mrb[0].mxu0
      %411 = vmatprep.mubr.bf16.mxu0 0
      %412 = vmatmul.mubr.bf16.gmra.mrb[0].mxu0 %v292
      %v413 = vpop.f32.mrb[0].mxu0
      %v414 = vadd.f32 0.0, %v413
      %v415 = vpop.f32.mrb[0].mxu0
      %v416 = vpop.f32.mrb[0].mxu0
      %v417 = vadd.f32 0.0, %v416
      %v418 = vpop.f32.mrb[0].mxu0
      %419 = vmatprep.mubr.bf16.mxu0 0
      %420 = vmatmul.mubr.bf16.gmra.mrb[0].mxu0 %v293
      %v421 = vpop.f32.mrb[0].mxu0
      %v422 = vadd.f32 0.0, %v421
      %v423 = vpop.f32.mrb[0].mxu0
      %v424 = vpop.f32.mrb[0].mxu0
      %v425 = vadd.f32 0.0, %v424
      %v426 = vpop.f32.mrb[0].mxu0
      %427 = vmatprep.mubr.bf16.mxu0 0
      %428 = vmatmul.mubr.bf16.gmra.mrb[0].mxu0 %v294
      %v429 = vpop.f32.mrb[0].mxu0
      %v430 = vadd.f32 0.0, %v429
      %v431 = vpop.f32.mrb[0].mxu0
      %v432 = vpop.f32.mrb[0].mxu0
      %v433 = vadd.f32 0.0, %v432
      %v434 = vpop.f32.mrb[0].mxu0
      %435 = vmatprep.mubr.bf16.mxu0 0
      %436 = vmatmul.mubr.bf16.gmra.mrb[0].mxu0 %v295
      %v437 = vpop.f32.mrb[0].mxu0
      %v438 = vadd.f32 0.0, %v437
      %v439 = vpop.f32.mrb[0].mxu0
      %v440 = vpop.f32.mrb[0].mxu0
      %v441 = vadd.f32 0.0, %v440
      %v442 = vpop.f32.mrb[0].mxu0
      %443 = vmatprep.mubr.bf16.mxu0 0
      %444 = vmatmul.mubr.bf16.gmra.mrb[0].mxu0 %v296
      %v445 = vpop.f32.mrb[0].mxu0
      %v446 = vadd.f32 0.0, %v445
      %v447 = vpop.f32.mrb[0].mxu0
      %v448 = vpop.f32.mrb[0].mxu0
      %v449 = vadd.f32 0.0, %v448
      %v450 = vpop.f32.mrb[0].mxu0
      %451 = vmatprep.mubr.bf16.mxu0 0
      %452 = vmatmul.mubr.bf16.gmra.mrb[0].mxu0 %v297
      %v453 = vpop.f32.mrb[0].mxu0
      %v454 = vadd.f32 0.0, %v453
      %v455 = vpop.f32.mrb[0].mxu0
      %v456 = vpop.f32.mrb[0].mxu0
      %v457 = vadd.f32 0.0, %v456
      %v458 = vpop.f32.mrb[0].mxu0
      %459 = vmatprep.mubr.bf16.mxu0 0
      %460 = vmatmul.mubr.bf16.gmra.mrb[0].mxu0 %v298
      %v461 = vpop.f32.mrb[0].mxu0
      %v462 = vadd.f32 0.0, %v461
      %v463 = vpop.f32.mrb[0].mxu0
      %v464 = vpop.f32.mrb[0].mxu0
      %v465 = vadd.f32 0.0, %v464
      %v466 = vpop.f32.mrb[0].mxu0
      %467 = vmatprep.mubr.bf16.mxu0 0
      %468 = vmatmul.mubr.bf16.gmra.mrb[0].mxu0 %v299
      %v469 = vpop.f32.mrb[0].mxu0
      %v470 = vadd.f32 0.0, %v469
      %v471 = vpop.f32.mrb[0].mxu0
      %v472 = vpop.f32.mrb[0].mxu0
      %v473 = vadd.f32 0.0, %v472
      %v474 = vpop.f32.mrb[0].mxu0
      %475 = vmatprep.mubr.bf16.mxu0 0
      %476 = vmatmul.mubr.bf16.gmra.mrb[0].mxu0 %v300
      %v477 = vpop.f32.mrb[0].mxu0
      %v478 = vadd.f32 0.0, %v477
      %v479 = vpop.f32.mrb[0].mxu0
      %v480 = vpop.f32.mrb[0].mxu0
      %v481 = vadd.f32 0.0, %v480
      %v482 = vpop.f32.mrb[0].mxu0
      %483 = vmatprep.mubr.bf16.mxu0 0
      %484 = vmatmul.mubr.bf16.gmra.mrb[0].mxu0 %v301
      %v485 = vpop.f32.mrb[0].mxu0
      %v486 = vadd.f32 0.0, %v485
      %v487 = vpop.f32.mrb[0].mxu0
      %v488 = vpop.f32.mrb[0].mxu0
      %v489 = vadd.f32 0.0, %v488
      %v490 = vpop.f32.mrb[0].mxu0
      %491 = vmatprep.mubr.bf16.mxu0 0
      %492 = vmatmul.mubr.bf16.gmra.mrb[0].mxu0 %v302
      %v493 = vpop.f32.mrb[0].mxu0
      %v494 = vadd.f32 0.0, %v493
      %v495 = vpop.f32.mrb[0].mxu0
      %v496 = vpop.f32.mrb[0].mxu0
      %v497 = vadd.f32 0.0, %v496
      %v498 = vpop.f32.mrb[0].mxu0
      %499 = vmatprep.mubr.bf16.mxu0 0
      %500 = vmatmul.mubr.bf16.gmra.mrb[0].mxu0 %v303
      %v501 = vpop.f32.mrb[0].mxu0
      %v502 = vadd.f32 0.0, %v501
      %v503 = vpop.f32.mrb[0].mxu0
      %v504 = vpop.f32.mrb[0].mxu0
      %v505 = vadd.f32 0.0, %v504
      %v506 = vpop.f32.mrb[0].mxu0
      %507 = vmatprep.mubr.bf16.mxu0 0
      %508 = vmatmul.mubr.bf16.gmra.mrb[0].mxu0 %v304
      %v509 = vpop.f32.mrb[0].mxu0
      %v510 = vadd.f32 0.0, %v509
      %v511 = vpop.f32.mrb[0].mxu0
      %v512 = vpop.f32.mrb[0].mxu0
      %v513 = vadd.f32 0.0, %v512
      %v514 = vpop.f32.mrb[0].mxu0
      %515 = vmatprep.mubr.bf16.mxu0 0
      %516 = vmatmul.mubr.bf16.gmra.mrb[0].mxu0 %v305
      %v517 = vpop.f32.mrb[0].mxu0
      %v518 = vadd.f32 0.0, %v517
      %v519 = vpop.f32.mrb[0].mxu0
      %v520 = vpop.f32.mrb[0].mxu0
      %v521 = vadd.f32 0.0, %v520
      %v522 = vpop.f32.mrb[0].mxu0
      %523 = vmatprep.mubr.bf16.mxu0 0
      %524 = vmatmul.mubr.bf16.gmra.mrb[0].mxu0 %v306
      %v525 = vpop.f32.mrb[0].mxu0
      %v526 = vadd.f32 0.0, %v525
      %v527 = vpop.f32.mrb[0].mxu0
      %v528 = vpop.f32.mrb[0].mxu0
      %v529 = vadd.f32 0.0, %v528
      %v530 = vpop.f32.mrb[0].mxu0
      %531 = vdwg.mxu0
      %v532 = vadd.f32 %v406, %v409
      %v533 = vadd.f32 %v532, %v414
      %v534 = vadd.f32 %v533, %v417
      %v535 = vadd.f32 %v534, %v422
      %v536 = vadd.f32 %v535, %v425
      %v537 = vadd.f32 %v536, %v430
      %v538 = vadd.f32 %v537, %v433
      %v539 = vadd.f32 %v538, %v438
      %v540 = vadd.f32 %v539, %v441
      %v541 = vadd.f32 %v540, %v446
      %v542 = vadd.f32 %v541, %v449
      %v543 = vadd.f32 %v542, %v454
      %v544 = vadd.f32 %v543, %v457
      %v545 = vadd.f32 %v544, %v462
      %v546 = vadd.f32 %v545, %v465
      %v547 = vadd.f32 %v546, %v470
      %v548 = vadd.f32 %v547, %v473
      %v549 = vadd.f32 %v548, %v478
      %v550 = vadd.f32 %v549, %v481
      %v551 = vadd.f32 %v550, %v486
      %v552 = vadd.f32 %v551, %v489
      %v553 = vadd.f32 %v552, %v494
      %v554 = vadd.f32 %v553, %v497
      %v555 = vadd.f32 %v554, %v502
      %v556 = vadd.f32 %v555, %v505
      %v557 = vadd.f32 %v556, %v510
      %v558 = vadd.f32 %v557, %v513
      %v559 = vadd.f32 %v558, %v518
      %v560 = vadd.f32 %v559, %v521
      %v561 = vadd.f32 %v560, %v526
      %v562 = vadd.f32 %v561, %v529
      %v563 = vrot.slane %v562, 4
      %v564 = vadd.f32 %v562, %v563
      %v565 = vrot.slane %v564, 2
      %v566 = vadd.f32 %v564, %v565
      %v567 = vrot.slane %v566, 1
      %v568 = vadd.f32 %v566, %v567
      %569 = vst [vmem:[%s174] sm:$0x1] %v568
      %v570 = vmul.f32 %v406, %v406
      %v571 = vmul.f32 %v409, %v409
      %v572 = vmul.f32 %v414, %v414
      %v573 = vmul.f32 %v417, %v417
      %v574 = vmul.f32 %v422, %v422
      %v575 = vmul.f32 %v425, %v425
      %v576 = vmul.f32 %v430, %v430
      %v577 = vmul.f32 %v433, %v433
      %v578 = vmul.f32 %v438, %v438
      %v579 = vmul.f32 %v441, %v441
      %v580 = vmul.f32 %v446, %v446
      %v581 = vmul.f32 %v449, %v449
      %v582 = vmul.f32 %v454, %v454
      %v583 = vmul.f32 %v457, %v457
      %v584 = vmul.f32 %v462, %v462
      %v585 = vmul.f32 %v465, %v465
      %v586 = vmul.f32 %v470, %v470
      %v587 = vmul.f32 %v473, %v473
      %v588 = vmul.f32 %v478, %v478
      %v589 = vmul.f32 %v481, %v481
      %v590 = vmul.f32 %v486, %v486
      %v591 = vmul.f32 %v489, %v489
      %v592 = vmul.f32 %v494, %v494
      %v593 = vmul.f32 %v497, %v497
      %v594 = vmul.f32 %v502, %v502
      %v595 = vmul.f32 %v505, %v505
      %v596 = vmul.f32 %v510, %v510
      %v597 = vmul.f32 %v513, %v513
      %v598 = vmul.f32 %v518, %v518
      %v599 = vmul.f32 %v521, %v521
      %v600 = vmul.f32 %v526, %v526
      %v601 = vmul.f32 %v529, %v529
      %v602 = vadd.f32 %v570, %v571
      %v603 = vadd.f32 %v602, %v572
      %v604 = vadd.f32 %v603, %v573
      %v605 = vadd.f32 %v604, %v574
      %v606 = vadd.f32 %v605, %v575
      %v607 = vadd.f32 %v606, %v576
      %v608 = vadd.f32 %v607, %v577
      %v609 = vadd.f32 %v608, %v578
      %v610 = vadd.f32 %v609, %v579
      %v611 = vadd.f32 %v610, %v580
      %v612 = vadd.f32 %v611, %v581
      %v613 = vadd.f32 %v612, %v582
      %v614 = vadd.f32 %v613, %v583
      %v615 = vadd.f32 %v614, %v584
      %v616 = vadd.f32 %v615, %v585
      %v617 = vadd.f32 %v616, %v586
      %v618 = vadd.f32 %v617, %v587
      %v619 = vadd.f32 %v618, %v588
      %v620 = vadd.f32 %v619, %v589
      %v621 = vadd.f32 %v620, %v590
      %v622 = vadd.f32 %v621, %v591
      %v623 = vadd.f32 %v622, %v592
      %v624 = vadd.f32 %v623, %v593
      %v625 = vadd.f32 %v624, %v594
      %v626 = vadd.f32 %v625, %v595
      %v627 = vadd.f32 %v626, %v596
      %v628 = vadd.f32 %v627, %v597
      %v629 = vadd.f32 %v628, %v598
      %v630 = vadd.f32 %v629, %v599
      %v631 = vadd.f32 %v630, %v600
      %v632 = vadd.f32 %v631, %v601
      %v633 = vrot.slane %v632, 4
      %v634 = vadd.f32 %v632, %v633
      %v635 = vrot.slane %v634, 2
      %v636 = vadd.f32 %v634, %v635
      %v637 = vrot.slane %v636, 1
      %v638 = vadd.f32 %v636, %v637
      %639 = vst [vmem:[%s177] sm:$0x1] %v638
      %p640 = scmp.lt.s32.totalorder %s15, 1
      %s641 = scalar_select %p640, %s15, 1
      %s642 = scalar_lea.vmem %s2, %s641
      %p643 = scmp.lt.s32.totalorder %s15, 1
      %s644 = scalar_select %p643, %s15, 1
      %s645 = scalar_lea.vmem %s3, %s644
      // Predicated region
      $region29: #{patch_discriminator_forward.9} parent=27 // pred_check
        %p646 = pneg %p80
      $region30: #{patch_discriminator_forward.9} parent=27 // pred_check_branch
        %648 = sbr.rel (%p646) target = $region32
      $region31: #{patch_discriminator_forward.9} parent=27 // pred_region
        _
      $region32: #{patch_discriminator_forward.9} parent=27 // pred_fallthru
        _
      // Predicated region
      $region33: #{patch_discriminator_forward.9} parent=27 // pred_check
        %p649 = pneg %p106
      $region34: #{patch_discriminator_forward.9} parent=27 // pred_check_branch
        %651 = sbr.rel (%p649) target = $region36
      $region35: #{patch_discriminator_forward.9} parent=27 // pred_region
        _
      $region36: #{patch_discriminator_forward.9} parent=27 // pred_fallthru
        _
    $region28: #{patch_discriminator_forward.9} parent=5 // pred_fallthru
      _
    %p652 = scmp.le.s32.totalorder 2, %s10
    // Predicated region
    $region37: #{patch_discriminator_forward.9} parent=5 // pred_check
      %p653 = pneg %p652
    $region38: #{patch_discriminator_forward.9} parent=5 // pred_check_branch
      %655 = sbr.rel (%p653) target = $region40
    $region39: #{patch_discriminator_forward.9} parent=5 // pred_region
      %s656 = ssub.s32 %s10, 2
      // Predicated region
      $region41: #{patch_discriminator_forward.9} parent=39 // pred_check
        %p657 = pneg %p86
      $region42: #{patch_discriminator_forward.9} parent=39 // pred_check_branch
        %659 = sbr.rel (%p657) target = $region44
      $region43: #{patch_discriminator_forward.9} parent=39 // pred_region
        %p660 = scmp.lt.s32.totalorder %s16, 1
        %s661 = scalar_select %p660, %s16, 1
        %s662 = scalar_lea.vmem %s2, %s661
      $region44: #{patch_discriminator_forward.9} parent=39 // pred_fallthru
        _
      // Predicated region
      $region45: #{patch_discriminator_forward.9} parent=39 // pred_check
        %p663 = pneg %p112
      $region46: #{patch_discriminator_forward.9} parent=39 // pred_check_branch
        %665 = sbr.rel (%p663) target = $region48
      $region47: #{patch_discriminator_forward.9} parent=39 // pred_region
        %p666 = scmp.lt.s32.totalorder %s16, 1
        %s667 = scalar_select %p666, %s16, 1
        %s668 = scalar_lea.vmem %s3, %s667
      $region48: #{patch_discriminator_forward.9} parent=39 // pred_fallthru
        _
    $region40: #{patch_discriminator_forward.9} parent=5 // pred_fallthru
      _
  $region6: #{patch_discriminator_forward.9} parent=0 // loop_footer
    %s14 = sadd.s32 1, %s10
  $region7: #{patch_discriminator_forward.9} parent=0 // loop_footer_branch
    %9 = sbr.rel target = $region3
  $region8: #{patch_discriminator_forward.9} parent=0 // loop_exit
    _

// kernel: patch_discriminator_forward.10
$region0: #{patch_discriminator_forward.10}
  #allocation0 [shape = 'u32[]', space=smem, size = 0x4, offset = 0x4, fixed_abs, tag = 'smem constant byte address 0x4 - core index']
  #allocation1 [shape = 'u32[144,128]{1,0:T(1,128)}', space=vmem, size = 0x12000, scoped, tag = 'internal scratch']
  %s0 = inlined_call_operand.vmem [shape: bf16[512,128], index: 0, kind: input, shape index: {}]
  %s1 = inlined_call_operand.vmem [shape: bf16[128,128], index: 1, kind: input, shape index: {}]
  %s2 = inlined_call_operand.vmem [shape: f32[1,128], index: 2, kind: input, shape index: {}]
  %s3 = inlined_call_operand.vmem [shape: f32[1,128], index: 3, kind: input, shape index: {}]
  %s4 = inlined_call_operand.vmem [shape: bf16[512,128], index: 4, kind: output, shape index: {}]
  %s5 = sld [smem:[#allocation0]]
  $region49: #{patch_discriminator_forward.10} parent=0
    _
  %s7 = ssub.s32 1, %s5
  %s8 = scalar_select 0, %s7, %s5
  loop: start=0, step=1, limit=4
  $region2: #{patch_discriminator_forward.10} parent=0 // loop_pre_header
    _
  $region3: #{patch_discriminator_forward.10} parent=0 // loop_header
    %s10 = sphi 0, %s14
    %p11 = scmp.ge.s32.totalorder %s10, 4
    %s20 = sphi 0, %s22
    %s23 = sphi 0, %s20
    %s24 = sphi 0, %s23
    %s40 = sphi 0, %s24
    %s44 = sphi 0, %s44
    %s46 = sphi 0, %s44
    %s47 = sphi 0, %s46
    %s61 = sphi 0, %s47
    %s65 = sphi 0, %s65
    %s67 = sphi 0, %s65
    %s68 = sphi 0, %s67
    %s82 = sphi 0, %s68
    %s86 = sphi 0, %s86
    %s88 = sphi 0, %s86
    %s89 = sphi 0, %s88
    %s103 = sphi 0, %s89
    %s109 = sphi 0, %s111
    %s112 = sphi 0, %s109
    %s113 = sphi 0, %s112
    %s129 = sphi 0, %s113
  $region4: #{patch_discriminator_forward.10} parent=0 // loop_header_branch
    %13 = sbr.rel (%p11) target = $region8
  $region5: #{patch_discriminator_forward.10} parent=0 // loop_body
    %s15 = ssub.s32 %s10, 1
    %s16 = ssub.s32 %s10, 2
    %s17 = sadd.s32 %s10, 1
    %s18 = ssub.s32 %s10, %s17
    %p19 = scmp.eq.s32.totalorder %s18, 0
    %s21 = sadd.s32 %s20, 1
    %s22 = scalar_select %p19, %s20, %s21
    %p25 = pneg %p19
    %p26 = scmp.eq.s32.totalorder %s10, 1
    %p27 = por %p25, %p26
    %p28 = scmp.ne.s32.totalorder %s20, %s23
    %p29 = scmp.eq.s32.totalorder %s10, 0
    %p30 = por %p28, %p29
    %p31 = scmp.ne.s32.totalorder %s20, %s23
    %p32 = scmp.eq.s32.totalorder %s15, 1
    %p33 = por %p31, %p32
    %p34 = scmp.ne.s32.totalorder %s23, %s24
    %p35 = scmp.eq.s32.totalorder %s15, 0
    %p36 = por %p34, %p35
    %p37 = scmp.ne.s32.totalorder %s23, %s24
    %p38 = scmp.eq.s32.totalorder %s16, 1
    %p39 = por %p37, %p38
    %p41 = scmp.ne.s32.totalorder %s24, %s40
    %p42 = scmp.eq.s32.totalorder %s16, 0
    %p43 = por %p41, %p42
    %s45 = sadd.s32 %s44, 1
    %p48 = scmp.eq.s32.totalorder %s10, 1
    %p49 = scmp.ne.s32.totalorder %s44, %s46
    %p50 = scmp.eq.s32.totalorder %s10, 0
    %p51 = por %p49, %p50
    %p52 = scmp.ne.s32.totalorder %s44, %s46
    %p53 = scmp.eq.s32.totalorder %s15, 1
    %p54 = por %p52, %p53
    %p55 = scmp.ne.s32.totalorder %s46, %s47
    %p56 = scmp.eq.s32.totalorder %s15, 0
    %p57 = por %p55, %p56
    %p58 = scmp.ne.s32.totalorder %s46, %s47
    %p59 = scmp.eq.s32.totalorder %s16, 1
    %p60 = por %p58, %p59
    %p62 = scmp.ne.s32.totalorder %s47, %s61
    %p63 = scmp.eq.s32.totalorder %s16, 0
    %p64 = por %p62, %p63
    %s66 = sadd.s32 %s65, 1
    %p69 = scmp.eq.s32.totalorder %s10, 1
    %p70 = scmp.ne.s32.totalorder %s65, %s67
    %p71 = scmp.eq.s32.totalorder %s10, 0
    %p72 = por %p70, %p71
    %p73 = scmp.ne.s32.totalorder %s65, %s67
    %p74 = scmp.eq.s32.totalorder %s15, 1
    %p75 = por %p73, %p74
    %p76 = scmp.ne.s32.totalorder %s67, %s68
    %p77 = scmp.eq.s32.totalorder %s15, 0
    %p78 = por %p76, %p77
    %p79 = scmp.ne.s32.totalorder %s67, %s68
    %p80 = scmp.eq.s32.totalorder %s16, 1
    %p81 = por %p79, %p80
    %p83 = scmp.ne.s32.totalorder %s68, %s82
    %p84 = scmp.eq.s32.totalorder %s16, 0
    %p85 = por %p83, %p84
    %s87 = sadd.s32 %s86, 1
    %p90 = scmp.eq.s32.totalorder %s10, 1
    %p91 = scmp.ne.s32.totalorder %s86, %s88
    %p92 = scmp.eq.s32.totalorder %s10, 0
    %p93 = por %p91, %p92
    %p94 = scmp.ne.s32.totalorder %s86, %s88
    %p95 = scmp.eq.s32.totalorder %s15, 1
    %p96 = por %p94, %p95
    %p97 = scmp.ne.s32.totalorder %s88, %s89
    %p98 = scmp.eq.s32.totalorder %s15, 0
    %p99 = por %p97, %p98
    %p100 = scmp.ne.s32.totalorder %s88, %s89
    %p101 = scmp.eq.s32.totalorder %s16, 1
    %p102 = por %p100, %p101
    %p104 = scmp.ne.s32.totalorder %s89, %s103
    %p105 = scmp.eq.s32.totalorder %s16, 0
    %p106 = por %p104, %p105
    %s107 = ssub.s32 %s10, %s17
    %p108 = scmp.eq.s32.totalorder %s107, 0
    %s110 = sadd.s32 %s109, 1
    %s111 = scalar_select %p108, %s109, %s110
    %p114 = pneg %p108
    %p115 = scmp.eq.s32.totalorder %s10, 1
    %p116 = por %p114, %p115
    %p117 = scmp.ne.s32.totalorder %s109, %s112
    %p118 = scmp.eq.s32.totalorder %s10, 0
    %p119 = por %p117, %p118
    %p120 = scmp.ne.s32.totalorder %s109, %s112
    %p121 = scmp.eq.s32.totalorder %s15, 1
    %p122 = por %p120, %p121
    %p123 = scmp.ne.s32.totalorder %s112, %s113
    %p124 = scmp.eq.s32.totalorder %s15, 0
    %p125 = por %p123, %p124
    %p126 = scmp.ne.s32.totalorder %s112, %s113
    %p127 = scmp.eq.s32.totalorder %s16, 1
    %p128 = por %p126, %p127
    %p130 = scmp.ne.s32.totalorder %s113, %s129
    %p131 = scmp.eq.s32.totalorder %s16, 0
    %p132 = por %p130, %p131
    %p133 = scmp.le.s32.totalorder 1, %s10
    %p134 = scmp.lt.s32.totalorder %s10, 3
    %p135 = pnand %p133, %p134
    %p136 = pneg %p135
    // Predicated region
    $region9: #{patch_discriminator_forward.10} parent=5 // pred_check
      _
    $region10: #{patch_discriminator_forward.10} parent=5 // pred_check_branch
      %138 = sbr.rel (%p135) target = $region12
    $region11: #{patch_discriminator_forward.10} parent=5 // pred_region
      %s139 = ssub.s32 %s10, 1
      // Predicated region
      $region13: #{patch_discriminator_forward.10} parent=11 // pred_check
        %p140 = pneg %p57
      $region14: #{patch_discriminator_forward.10} parent=11 // pred_check_branch
        %142 = sbr.rel (%p140) target = $region16
      $region15: #{patch_discriminator_forward.10} parent=11 // pred_region
        _
      $region16: #{patch_discriminator_forward.10} parent=11 // pred_fallthru
        _
      // Predicated region
      $region17: #{patch_discriminator_forward.10} parent=11 // pred_check
        %p143 = pneg %p78
      $region18: #{patch_discriminator_forward.10} parent=11 // pred_check_branch
        %145 = sbr.rel (%p143) target = $region20
      $region19: #{patch_discriminator_forward.10} parent=11 // pred_region
        _
      $region20: #{patch_discriminator_forward.10} parent=11 // pred_fallthru
        _
      // Predicated region
      $region21: #{patch_discriminator_forward.10} parent=11 // pred_check
        %p146 = pneg %p99
      $region22: #{patch_discriminator_forward.10} parent=11 // pred_check_branch
        %148 = sbr.rel (%p146) target = $region24
      $region23: #{patch_discriminator_forward.10} parent=11 // pred_region
        _
      $region24: #{patch_discriminator_forward.10} parent=11 // pred_fallthru
        _
    $region12: #{patch_discriminator_forward.10} parent=5 // pred_fallthru
      _
    %p149 = scmp.lt.s32.totalorder %s10, 2
    // Predicated region
    $region25: #{patch_discriminator_forward.10} parent=5 // pred_check
      %p150 = pneg %p149
    $region26: #{patch_discriminator_forward.10} parent=5 // pred_check_branch
      %152 = sbr.rel (%p150) target = $region28
    $region27: #{patch_discriminator_forward.10} parent=5 // pred_region
      // Predicated region
      $region29: #{patch_discriminator_forward.10} parent=27 // pred_check
        %p153 = pneg %p30
      $region30: #{patch_discriminator_forward.10} parent=27 // pred_check_branch
        %155 = sbr.rel (%p153) target = $region32
      $region31: #{patch_discriminator_forward.10} parent=27 // pred_region
        %s156 = smul.u32 32, %s10
        %p157 = scmp.lt.s32.totalorder %s156, 63
        %s158 = scalar_select %p157, %s156, 63
        %s159 = smul.addr %s158, 4
        %s160 = scalar_lea.vmem %s0, %s159
        %s161 = smul.u32 32, %s10
      $region32: #{patch_discriminator_forward.10} parent=27 // pred_fallthru
        _
    $region28: #{patch_discriminator_forward.10} parent=5 // pred_fallthru
      _
    %p162 = scmp.le.s32.totalorder 1, %s10
    %p163 = scmp.lt.s32.totalorder %s10, 3
    %p164 = pnand %p162, %p163
    %p165 = pneg %p164
    // Predicated region
    $region33: #{patch_discriminator_forward.10} parent=5 // pred_check
      _
    $region34: #{patch_discriminator_forward.10} parent=5 // pred_check_branch
      %167 = sbr.rel (%p164) target = $region36
    $region35: #{patch_discriminator_forward.10} parent=5 // pred_region
      %s168 = ssub.s32 %s10, 1
      %s169 = smul.u32 32, %s15
      %p170 = scmp.lt.s32.totalorder %s169, 63
      %s171 = scalar_select %p170, %s169, 63
      %s172 = smul.addr %s171, 4
      %s173 = scalar_lea.vmem %s0, %s172
      %p174 = pneg %p36
      %p175 = pneg %p33
      %p176 = pneg %p57
      %p177 = pneg %p54
      %p178 = pneg %p78
      %p179 = pneg %p75
      %p180 = pneg %p99
      %p181 = pneg %p96
      %p182 = pneg %p125
      %p183 = pneg %p122
      %s184 = smul.u32 32, %s15
      %p185 = scmp.lt.s32.totalorder %s184, 63
      %s186 = scalar_select %p185, %s184, 63
      %s187 = smul.addr %s186, 4
      %s188 = scalar_lea.vmem %s4, %s187
      %s189 = smul.u32 32, %s15
      %p190 = scmp.lt.s32.totalorder %s189, 63
      %s191 = scalar_select %p190, %s189, 63
      %s192 = smul.addr %s191, 4
      %s193 = scalar_lea.vmem %s0, %s192
      %s194 = smul.u32 32, %s15
      %s195 = smul.u32 32, %s15
      %p196 = scmp.lt.s32.totalorder %s195, 63
      %s197 = scalar_select %p196, %s195, 63
      %s198 = smul.addr %s197, 4
      %s199 = scalar_lea.vmem %s4, %s198
      %s200 = smul.u32 32, %s15
      %v202 = vld [vmem:[%s193] sm:$0xf]
      %v203 = vld [vmem:[%s193 + $0x4] sm:$0xf]
      %v204 = vld [vmem:[%s193 + $0x8] sm:$0xf]
      %v205 = vld [vmem:[%s193 + $0xc] sm:$0xf]
      %v206 = vld [vmem:[%s193 + $0x10] sm:$0xf]
      %v207 = vld [vmem:[%s193 + $0x14] sm:$0xf]
      %v208 = vld [vmem:[%s193 + $0x18] sm:$0xf]
      %v209 = vld [vmem:[%s193 + $0x1c] sm:$0xf]
      %v210 = vld [vmem:[%s193 + $0x20] sm:$0xf]
      %v211 = vld [vmem:[%s193 + $0x24] sm:$0xf]
      %v212 = vld [vmem:[%s193 + $0x28] sm:$0xf]
      %v213 = vld [vmem:[%s193 + $0x2c] sm:$0xf]
      %v214 = vld [vmem:[%s193 + $0x30] sm:$0xf]
      %v215 = vld [vmem:[%s193 + $0x34] sm:$0xf]
      %v216 = vld [vmem:[%s193 + $0x38] sm:$0xf]
      %v217 = vld [vmem:[%s193 + $0x3c] sm:$0xf]
      %v218 = vld [vmem:[%s193 + $0x40] sm:$0xf]
      %v219 = vld [vmem:[%s193 + $0x44] sm:$0xf]
      %v220 = vld [vmem:[%s193 + $0x48] sm:$0xf]
      %v221 = vld [vmem:[%s193 + $0x4c] sm:$0xf]
      %v222 = vld [vmem:[%s193 + $0x50] sm:$0xf]
      %v223 = vld [vmem:[%s193 + $0x54] sm:$0xf]
      %v224 = vld [vmem:[%s193 + $0x58] sm:$0xf]
      %v225 = vld [vmem:[%s193 + $0x5c] sm:$0xf]
      %v226 = vld [vmem:[%s193 + $0x60] sm:$0xf]
      %v227 = vld [vmem:[%s193 + $0x64] sm:$0xf]
      %v228 = vld [vmem:[%s193 + $0x68] sm:$0xf]
      %v229 = vld [vmem:[%s193 + $0x6c] sm:$0xf]
      %v230 = vld [vmem:[%s193 + $0x70] sm:$0xf]
      %v231 = vld [vmem:[%s193 + $0x74] sm:$0xf]
      %v232 = vld [vmem:[%s193 + $0x78] sm:$0xf]
      %v233 = vld [vmem:[%s193 + $0x7c] sm:$0xf]
      %v234 = vld [vmem:[%s1] sm:$0xf]
      %v235 = vld [vmem:[%s1 + $0x4] sm:$0xf]
      %v236 = vld [vmem:[%s1 + $0x8] sm:$0xf]
      %v237 = vld [vmem:[%s1 + $0xc] sm:$0xf]
      %v238 = vld [vmem:[%s1 + $0x10] sm:$0xf]
      %v239 = vld [vmem:[%s1 + $0x14] sm:$0xf]
      %v240 = vld [vmem:[%s1 + $0x18] sm:$0xf]
      %v241 = vld [vmem:[%s1 + $0x1c] sm:$0xf]
      %v242 = vld [vmem:[%s1 + $0x20] sm:$0xf]
      %v243 = vld [vmem:[%s1 + $0x24] sm:$0xf]
      %v244 = vld [vmem:[%s1 + $0x28] sm:$0xf]
      %v245 = vld [vmem:[%s1 + $0x2c] sm:$0xf]
      %v246 = vld [vmem:[%s1 + $0x30] sm:$0xf]
      %v247 = vld [vmem:[%s1 + $0x34] sm:$0xf]
      %v248 = vld [vmem:[%s1 + $0x38] sm:$0xf]
      %v249 = vld [vmem:[%s1 + $0x3c] sm:$0xf]
      %v282 = vunpack.c.l.b16 %v202
      %v283 = vunpack.c.l.b16 %v203
      %v284 = vunpack.c.l.b16 %v204
      %v285 = vunpack.c.l.b16 %v205
      %v286 = vunpack.c.l.b16 %v206
      %v287 = vunpack.c.l.b16 %v207
      %v288 = vunpack.c.l.b16 %v208
      %v289 = vunpack.c.l.b16 %v209
      %v290 = vunpack.c.l.b16 %v210
      %v291 = vunpack.c.l.b16 %v211
      %v292 = vunpack.c.l.b16 %v212
      %v293 = vunpack.c.l.b16 %v213
      %v294 = vunpack.c.l.b16 %v214
      %v295 = vunpack.c.l.b16 %v215
      %v296 = vunpack.c.l.b16 %v216
      %v297 = vunpack.c.l.b16 %v217
      %v298 = vunpack.c.l.b16 %v218
      %v299 = vunpack.c.l.b16 %v219
      %v300 = vunpack.c.l.b16 %v220
      %v301 = vunpack.c.l.b16 %v221
      %v302 = vunpack.c.l.b16 %v222
      %v303 = vunpack.c.l.b16 %v223
      %v304 = vunpack.c.l.b16 %v224
      %v305 = vunpack.c.l.b16 %v225
      %v306 = vunpack.c.l.b16 %v226
      %v307 = vunpack.c.l.b16 %v227
      %v308 = vunpack.c.l.b16 %v228
      %v309 = vunpack.c.l.b16 %v229
      %v310 = vunpack.c.l.b16 %v230
      %v311 = vunpack.c.l.b16 %v231
      %v312 = vunpack.c.l.b16 %v232
      %v313 = vunpack.c.l.b16 %v233
      %v314 = vpack.c.b16 %v283, %v282
      %v315 = vpack.c.b16 %v285, %v284
      %v316 = vpack.c.b16 %v287, %v286
      %v317 = vpack.c.b16 %v289, %v288
      %v318 = vpack.c.b16 %v291, %v290
      %v319 = vpack.c.b16 %v293, %v292
      %v320 = vpack.c.b16 %v295, %v294
      %v321 = vpack.c.b16 %v297, %v296
      %v322 = vpack.c.b16 %v299, %v298
      %v323 = vpack.c.b16 %v301, %v300
      %v324 = vpack.c.b16 %v303, %v302
      %v325 = vpack.c.b16 %v305, %v304
      %v326 = vpack.c.b16 %v307, %v306
      %v327 = vpack.c.b16 %v309, %v308
      %v328 = vpack.c.b16 %v311, %v310
      %v329 = vpack.c.b16 %v313, %v312
      %v362 = vunpack.c.l.b16 %v234
      %v363 = vunpack.c.l.b16 %v235
      %v364 = vunpack.c.l.b16 %v236
      %v365 = vunpack.c.l.b16 %v237
      %v366 = vunpack.c.l.b16 %v238
      %v367 = vunpack.c.l.b16 %v239
      %v368 = vunpack.c.l.b16 %v240
      %v369 = vunpack.c.l.b16 %v241
      %v370 = vunpack.c.l.b16 %v242
      %v371 = vunpack.c.l.b16 %v243
      %v372 = vunpack.c.l.b16 %v244
      %v373 = vunpack.c.l.b16 %v245
      %v374 = vunpack.c.l.b16 %v246
      %v375 = vunpack.c.l.b16 %v247
      %v376 = vunpack.c.l.b16 %v248
      %v377 = vunpack.c.l.b16 %v249
      %v378 = vpack.c.b16 %v363, %v362
      %v379 = vpack.c.b16 %v365, %v364
      %v380 = vpack.c.b16 %v367, %v366
      %v381 = vpack.c.b16 %v369, %v368
      %v382 = vpack.c.b16 %v371, %v370
      %v383 = vpack.c.b16 %v373, %v372
      %v384 = vpack.c.b16 %v375, %v374
      %v385 = vpack.c.b16 %v377, %v376
      %394 = vmatprep.subr.bf16.mxu0 0
      %395 = vmatpush1.bf16.msra.mxu0 %v378
      %396 = vmatprep.subr.bf16.mxu0 0
      %397 = vmatpush1.bf16.msra.mxu0 %v379
      %398 = vmatprep.subr.bf16.mxu0 0
      %399 = vmatpush1.bf16.msra.mxu0 %v380
      %400 = vmatprep.subr.bf16.mxu0 0
      %401 = vmatpush1.bf16.msra.mxu0 %v381
      %402 = vmatprep.subr.bf16.mxu0 0
      %403 = vmatpush1.bf16.msra.mxu0 %v382
      %404 = vmatprep.subr.bf16.mxu0 0
      %405 = vmatpush1.bf16.msra.mxu0 %v383
      %406 = vmatprep.subr.bf16.mxu0 0
      %407 = vmatpush1.bf16.msra.mxu0 %v384
      %408 = vmatprep.subr.bf16.mxu0 0
      %409 = vmatpush1.bf16.msra.mxu0 %v385
      %410 = vmatprep.subr.bf16.mxu0 0
      %411 = vmatpush1.bf16.msra.mxu0 0
      %412 = vmatprep.subr.bf16.mxu0 0
      %413 = vmatpush1.bf16.msra.mxu0 0
      %414 = vmatprep.subr.bf16.mxu0 0
      %415 = vmatpush1.bf16.msra.mxu0 0
      %416 = vmatprep.subr.bf16.mxu0 0
      %417 = vmatpush1.bf16.msra.mxu0 0
      %418 = vmatprep.subr.bf16.mxu0 0
      %419 = vmatpush1.bf16.msra.mxu0 0
      %420 = vmatprep.subr.bf16.mxu0 0
      %421 = vmatpush1.bf16.msra.mxu0 0
      %422 = vmatprep.subr.bf16.mxu0 0
      %423 = vmatpush1.bf16.msra.mxu0 0
      %424 = vmatprep.subr.bf16.mxu0 0
      %425 = vmatpush1.bf16.msra.mxu0 0
      %426 = vmatprep.mubr.bf16.mxu0 0
      %427 = vmatmul.mubr.bf16.gmra.mrb[0].mxu0 %v314
      %v428 = vpop.f32.mrb[0].mxu0
      %v429 = vadd.f32 0.0, %v428
      %v430 = vpop.f32.mrb[0].mxu0
      %v431 = vpop.f32.mrb[0].mxu0
      %v432 = vadd.f32 0.0, %v431
      %v433 = vpop.f32.mrb[0].mxu0
      %434 = vmatprep.mubr.bf16.mxu0 0
      %435 = vmatmul.mubr.bf16.gmra.mrb[0].mxu0 %v315
      %v436 = vpop.f32.mrb[0].mxu0
      %v437 = vadd.f32 0.0, %v436
      %v438 = vpop.f32.mrb[0].mxu0
      %v439 = vpop.f32.mrb[0].mxu0
      %v440 = vadd.f32 0.0, %v439
      %v441 = vpop.f32.mrb[0].mxu0
      %442 = vmatprep.mubr.bf16.mxu0 0
      %443 = vmatmul.mubr.bf16.gmra.mrb[0].mxu0 %v316
      %v444 = vpop.f32.mrb[0].mxu0
      %v445 = vadd.f32 0.0, %v444
      %v446 = vpop.f32.mrb[0].mxu0
      %v447 = vpop.f32.mrb[0].mxu0
      %v448 = vadd.f32 0.0, %v447
      %v449 = vpop.f32.mrb[0].mxu0
      %450 = vmatprep.mubr.bf16.mxu0 0
      %451 = vmatmul.mubr.bf16.gmra.mrb[0].mxu0 %v317
      %v452 = vpop.f32.mrb[0].mxu0
      %v453 = vadd.f32 0.0, %v452
      %v454 = vpop.f32.mrb[0].mxu0
      %v455 = vpop.f32.mrb[0].mxu0
      %v456 = vadd.f32 0.0, %v455
      %v457 = vpop.f32.mrb[0].mxu0
      %458 = vmatprep.mubr.bf16.mxu0 0
      %459 = vmatmul.mubr.bf16.gmra.mrb[0].mxu0 %v318
      %v460 = vpop.f32.mrb[0].mxu0
      %v461 = vadd.f32 0.0, %v460
      %v462 = vpop.f32.mrb[0].mxu0
      %v463 = vpop.f32.mrb[0].mxu0
      %v464 = vadd.f32 0.0, %v463
      %v465 = vpop.f32.mrb[0].mxu0
      %466 = vmatprep.mubr.bf16.mxu0 0
      %467 = vmatmul.mubr.bf16.gmra.mrb[0].mxu0 %v319
      %v468 = vpop.f32.mrb[0].mxu0
      %v469 = vadd.f32 0.0, %v468
      %v470 = vpop.f32.mrb[0].mxu0
      %v471 = vpop.f32.mrb[0].mxu0
      %v472 = vadd.f32 0.0, %v471
      %v473 = vpop.f32.mrb[0].mxu0
      %474 = vmatprep.mubr.bf16.mxu0 0
      %475 = vmatmul.mubr.bf16.gmra.mrb[0].mxu0 %v320
      %v476 = vpop.f32.mrb[0].mxu0
      %v477 = vadd.f32 0.0, %v476
      %v478 = vpop.f32.mrb[0].mxu0
      %v479 = vpop.f32.mrb[0].mxu0
      %v480 = vadd.f32 0.0, %v479
      %v481 = vpop.f32.mrb[0].mxu0
      %482 = vmatprep.mubr.bf16.mxu0 0
      %483 = vmatmul.mubr.bf16.gmra.mrb[0].mxu0 %v321
      %v484 = vpop.f32.mrb[0].mxu0
      %v485 = vadd.f32 0.0, %v484
      %v486 = vpop.f32.mrb[0].mxu0
      %v487 = vpop.f32.mrb[0].mxu0
      %v488 = vadd.f32 0.0, %v487
      %v489 = vpop.f32.mrb[0].mxu0
      %490 = vmatprep.mubr.bf16.mxu0 0
      %491 = vmatmul.mubr.bf16.gmra.mrb[0].mxu0 %v322
      %v492 = vpop.f32.mrb[0].mxu0
      %v493 = vadd.f32 0.0, %v492
      %v494 = vpop.f32.mrb[0].mxu0
      %v495 = vpop.f32.mrb[0].mxu0
      %v496 = vadd.f32 0.0, %v495
      %v497 = vpop.f32.mrb[0].mxu0
      %498 = vmatprep.mubr.bf16.mxu0 0
      %499 = vmatmul.mubr.bf16.gmra.mrb[0].mxu0 %v323
      %v500 = vpop.f32.mrb[0].mxu0
      %v501 = vadd.f32 0.0, %v500
      %v502 = vpop.f32.mrb[0].mxu0
      %v503 = vpop.f32.mrb[0].mxu0
      %v504 = vadd.f32 0.0, %v503
      %v505 = vpop.f32.mrb[0].mxu0
      %506 = vmatprep.mubr.bf16.mxu0 0
      %507 = vmatmul.mubr.bf16.gmra.mrb[0].mxu0 %v324
      %v508 = vpop.f32.mrb[0].mxu0
      %v509 = vadd.f32 0.0, %v508
      %v510 = vpop.f32.mrb[0].mxu0
      %v511 = vpop.f32.mrb[0].mxu0
      %v512 = vadd.f32 0.0, %v511
      %v513 = vpop.f32.mrb[0].mxu0
      %514 = vmatprep.mubr.bf16.mxu0 0
      %515 = vmatmul.mubr.bf16.gmra.mrb[0].mxu0 %v325
      %v516 = vpop.f32.mrb[0].mxu0
      %v517 = vadd.f32 0.0, %v516
      %v518 = vpop.f32.mrb[0].mxu0
      %v519 = vpop.f32.mrb[0].mxu0
      %v520 = vadd.f32 0.0, %v519
      %v521 = vpop.f32.mrb[0].mxu0
      %522 = vmatprep.mubr.bf16.mxu0 0
      %523 = vmatmul.mubr.bf16.gmra.mrb[0].mxu0 %v326
      %v524 = vpop.f32.mrb[0].mxu0
      %v525 = vadd.f32 0.0, %v524
      %v526 = vpop.f32.mrb[0].mxu0
      %v527 = vpop.f32.mrb[0].mxu0
      %v528 = vadd.f32 0.0, %v527
      %v529 = vpop.f32.mrb[0].mxu0
      %530 = vmatprep.mubr.bf16.mxu0 0
      %531 = vmatmul.mubr.bf16.gmra.mrb[0].mxu0 %v327
      %v532 = vpop.f32.mrb[0].mxu0
      %v533 = vadd.f32 0.0, %v532
      %v534 = vpop.f32.mrb[0].mxu0
      %v535 = vpop.f32.mrb[0].mxu0
      %v536 = vadd.f32 0.0, %v535
      %v537 = vpop.f32.mrb[0].mxu0
      %538 = vmatprep.mubr.bf16.mxu0 0
      %539 = vmatmul.mubr.bf16.gmra.mrb[0].mxu0 %v328
      %v540 = vpop.f32.mrb[0].mxu0
      %v541 = vadd.f32 0.0, %v540
      %v542 = vpop.f32.mrb[0].mxu0
      %v543 = vpop.f32.mrb[0].mxu0
      %v544 = vadd.f32 0.0, %v543
      %v545 = vpop.f32.mrb[0].mxu0
      %546 = vmatprep.mubr.bf16.mxu0 0
      %547 = vmatmul.mubr.bf16.gmra.mrb[0].mxu0 %v329
      %v548 = vpop.f32.mrb[0].mxu0
      %v549 = vadd.f32 0.0, %v548
      %v550 = vpop.f32.mrb[0].mxu0
      %v551 = vpop.f32.mrb[0].mxu0
      %v552 = vadd.f32 0.0, %v551
      %v553 = vpop.f32.mrb[0].mxu0
      %554 = vdwg.mxu0
      %v555 = vld [vmem:[%s2] sm:$0x1]
      %v557 = vlaneseq
      %v558 = vshrl.u32 %v557, 7
      %v559 = vsub.s32 0, %v558
      %v560 = vrot.slane %v555, %v559
      %v562 = vmul.f32 %v429, %v560
      %v563 = vmul.f32 %v432, %v560
      %v564 = vmul.f32 %v437, %v560
      %v565 = vmul.f32 %v440, %v560
      %v566 = vmul.f32 %v445, %v560
      %v567 = vmul.f32 %v448, %v560
      %v568 = vmul.f32 %v453, %v560
      %v569 = vmul.f32 %v456, %v560
      %v570 = vmul.f32 %v461, %v560
      %v571 = vmul.f32 %v464, %v560
      %v572 = vmul.f32 %v469, %v560
      %v573 = vmul.f32 %v472, %v560
      %v574 = vmul.f32 %v477, %v560
      %v575 = vmul.f32 %v480, %v560
      %v576 = vmul.f32 %v485, %v560
      %v577 = vmul.f32 %v488, %v560
      %v578 = vmul.f32 %v493, %v560
      %v579 = vmul.f32 %v496, %v560
      %v580 = vmul.f32 %v501, %v560
      %v581 = vmul.f32 %v504, %v560
      %v582 = vmul.f32 %v509, %v560
      %v583 = vmul.f32 %v512, %v560
      %v584 = vmul.f32 %v517, %v560
      %v585 = vmul.f32 %v520, %v560
      %v586 = vmul.f32 %v525, %v560
      %v587 = vmul.f32 %v528, %v560
      %v588 = vmul.f32 %v533, %v560
      %v589 = vmul.f32 %v536, %v560
      %v590 = vmul.f32 %v541, %v560
      %v591 = vmul.f32 %v544, %v560
      %v592 = vmul.f32 %v549, %v560
      %v593 = vmul.f32 %v552, %v560
      %v594 = vld [vmem:[%s3] sm:$0x1]
      %v596 = vlaneseq
      %v597 = vshrl.u32 %v596, 7
      %v598 = vsub.s32 0, %v597
      %v599 = vrot.slane %v594, %v598
      %v601 = vadd.f32 %v562, %v599
      %v602 = vadd.f32 %v563, %v599
      %v603 = vadd.f32 %v564, %v599
      %v604 = vadd.f32 %v565, %v599
      %v605 = vadd.f32 %v566, %v599
      %v606 = vadd.f32 %v567, %v599
      %v607 = vadd.f32 %v568, %v599
      %v608 = vadd.f32 %v569, %v599
      %v609 = vadd.f32 %v570, %v599
      %v610 = vadd.f32 %v571, %v599
      %v611 = vadd.f32 %v572, %v599
      %v612 = vadd.f32 %v573, %v599
      %v613 = vadd.f32 %v574, %v599
      %v614 = vadd.f32 %v575, %v599
      %v615 = vadd.f32 %v576, %v599
      %v616 = vadd.f32 %v577, %v599
      %v617 = vadd.f32 %v578, %v599
      %v618 = vadd.f32 %v579, %v599
      %v619 = vadd.f32 %v580, %v599
      %v620 = vadd.f32 %v581, %v599
      %v621 = vadd.f32 %v582, %v599
      %v622 = vadd.f32 %v583, %v599
      %v623 = vadd.f32 %v584, %v599
      %v624 = vadd.f32 %v585, %v599
      %v625 = vadd.f32 %v586, %v599
      %v626 = vadd.f32 %v587, %v599
      %v627 = vadd.f32 %v588, %v599
      %v628 = vadd.f32 %v589, %v599
      %v629 = vadd.f32 %v590, %v599
      %v630 = vadd.f32 %v591, %v599
      %v631 = vadd.f32 %v592, %v599
      %v632 = vadd.f32 %v593, %v599
      %vm633 = vcmp.ge.f32.partialorder %v601, 0.0
      %vm634 = vcmp.ge.f32.partialorder %v602, 0.0
      %vm635 = vcmp.ge.f32.partialorder %v603, 0.0
      %vm636 = vcmp.ge.f32.partialorder %v604, 0.0
      %vm637 = vcmp.ge.f32.partialorder %v605, 0.0
      %vm638 = vcmp.ge.f32.partialorder %v606, 0.0
      %vm639 = vcmp.ge.f32.partialorder %v607, 0.0
      %vm640 = vcmp.ge.f32.partialorder %v608, 0.0
      %vm641 = vcmp.ge.f32.partialorder %v609, 0.0
      %vm642 = vcmp.ge.f32.partialorder %v610, 0.0
      %vm643 = vcmp.ge.f32.partialorder %v611, 0.0
      %vm644 = vcmp.ge.f32.partialorder %v612, 0.0
      %vm645 = vcmp.ge.f32.partialorder %v613, 0.0
      %vm646 = vcmp.ge.f32.partialorder %v614, 0.0
      %vm647 = vcmp.ge.f32.partialorder %v615, 0.0
      %vm648 = vcmp.ge.f32.partialorder %v616, 0.0
      %vm649 = vcmp.ge.f32.partialorder %v617, 0.0
      %vm650 = vcmp.ge.f32.partialorder %v618, 0.0
      %vm651 = vcmp.ge.f32.partialorder %v619, 0.0
      %vm652 = vcmp.ge.f32.partialorder %v620, 0.0
      %vm653 = vcmp.ge.f32.partialorder %v621, 0.0
      %vm654 = vcmp.ge.f32.partialorder %v622, 0.0
      %vm655 = vcmp.ge.f32.partialorder %v623, 0.0
      %vm656 = vcmp.ge.f32.partialorder %v624, 0.0
      %vm657 = vcmp.ge.f32.partialorder %v625, 0.0
      %vm658 = vcmp.ge.f32.partialorder %v626, 0.0
      %vm659 = vcmp.ge.f32.partialorder %v627, 0.0
      %vm660 = vcmp.ge.f32.partialorder %v628, 0.0
      %vm661 = vcmp.ge.f32.partialorder %v629, 0.0
      %vm662 = vcmp.ge.f32.partialorder %v630, 0.0
      %vm663 = vcmp.ge.f32.partialorder %v631, 0.0
      %vm664 = vcmp.ge.f32.partialorder %v632, 0.0
      %v665 = vmul.f32 %v601, 0.2
      %v666 = vmul.f32 %v602, 0.2
      %v667 = vmul.f32 %v603, 0.2
      %v668 = vmul.f32 %v604, 0.2
      %v669 = vmul.f32 %v605, 0.2
      %v670 = vmul.f32 %v606, 0.2
      %v671 = vmul.f32 %v607, 0.2
      %v672 = vmul.f32 %v608, 0.2
      %v673 = vmul.f32 %v609, 0.2
      %v674 = vmul.f32 %v610, 0.2
      %v675 = vmul.f32 %v611, 0.2
      %v676 = vmul.f32 %v612, 0.2
      %v677 = vmul.f32 %v613, 0.2
      %v678 = vmul.f32 %v614, 0.2
      %v679 = vmul.f32 %v615, 0.2
      %v680 = vmul.f32 %v616, 0.2
      %v681 = vmul.f32 %v617, 0.2
      %v682 = vmul.f32 %v618, 0.2
      %v683 = vmul.f32 %v619, 0.2
      %v684 = vmul.f32 %v620, 0.2
      %v685 = vmul.f32 %v621, 0.2
      %v686 = vmul.f32 %v622, 0.2
      %v687 = vmul.f32 %v623, 0.2
      %v688 = vmul.f32 %v624, 0.2
      %v689 = vmul.f32 %v625, 0.2
      %v690 = vmul.f32 %v626, 0.2
      %v691 = vmul.f32 %v627, 0.2
      %v692 = vmul.f32 %v628, 0.2
      %v693 = vmul.f32 %v629, 0.2
      %v694 = vmul.f32 %v630, 0.2
      %v695 = vmul.f32 %v631, 0.2
      %v696 = vmul.f32 %v632, 0.2
      %v697 = vsel %vm633, %v601, %v665
      %v698 = vsel %vm634, %v602, %v666
      %v699 = vsel %vm635, %v603, %v667
      %v700 = vsel %vm636, %v604, %v668
      %v701 = vsel %vm637, %v605, %v669
      %v702 = vsel %vm638, %v606, %v670
      %v703 = vsel %vm639, %v607, %v671
      %v704 = vsel %vm640, %v608, %v672
      %v705 = vsel %vm641, %v609, %v673
      %v706 = vsel %vm642, %v610, %v674
      %v707 = vsel %vm643, %v611, %v675
      %v708 = vsel %vm644, %v612, %v676
      %v709 = vsel %vm645, %v613, %v677
      %v710 = vsel %vm646, %v614, %v678
      %v711 = vsel %vm647, %v615, %v679
      %v712 = vsel %vm648, %v616, %v680
      %v713 = vsel %vm649, %v617, %v681
      %v714 = vsel %vm650, %v618, %v682
      %v715 = vsel %vm651, %v619, %v683
      %v716 = vsel %vm652, %v620, %v684
      %v717 = vsel %vm653, %v621, %v685
      %v718 = vsel %vm654, %v622, %v686
      %v719 = vsel %vm655, %v623, %v687
      %v720 = vsel %vm656, %v624, %v688
      %v721 = vsel %vm657, %v625, %v689
      %v722 = vsel %vm658, %v626, %v690
      %v723 = vsel %vm659, %v627, %v691
      %v724 = vsel %vm660, %v628, %v692
      %v725 = vsel %vm661, %v629, %v693
      %v726 = vsel %vm662, %v630, %v694
      %v727 = vsel %vm663, %v631, %v695
      %v728 = vsel %vm664, %v632, %v696
      %v729 = vpack.c.bf16 %v698, %v697
      %v730 = vpack.c.bf16 %v700, %v699
      %v731 = vpack.c.bf16 %v702, %v701
      %v732 = vpack.c.bf16 %v704, %v703
      %v733 = vpack.c.bf16 %v706, %v705
      %v734 = vpack.c.bf16 %v708, %v707
      %v735 = vpack.c.bf16 %v710, %v709
      %v736 = vpack.c.bf16 %v712, %v711
      %v737 = vpack.c.bf16 %v714, %v713
      %v738 = vpack.c.bf16 %v716, %v715
      %v739 = vpack.c.bf16 %v718, %v717
      %v740 = vpack.c.bf16 %v720, %v719
      %v741 = vpack.c.bf16 %v722, %v721
      %v742 = vpack.c.bf16 %v724, %v723
      %v743 = vpack.c.bf16 %v726, %v725
      %v744 = vpack.c.bf16 %v728, %v727
      %v761 = vunpack.c.l.b16 %v729
      %v762 = vunpack.c.h.b16 %v729
      %v763 = vunpack.c.l.b16 %v730
      %v764 = vunpack.c.h.b16 %v730
      %v765 = vunpack.c.l.b16 %v731
      %v766 = vunpack.c.h.b16 %v731
      %v767 = vunpack.c.l.b16 %v732
      %v768 = vunpack.c.h.b16 %v732
      %v769 = vunpack.c.l.b16 %v733
      %v770 = vunpack.c.h.b16 %v733
      %v771 = vunpack.c.l.b16 %v734
      %v772 = vunpack.c.h.b16 %v734
      %v773 = vunpack.c.l.b16 %v735
      %v774 = vunpack.c.h.b16 %v735
      %v775 = vunpack.c.l.b16 %v736
      %v776 = vunpack.c.h.b16 %v736
      %v777 = vunpack.c.l.b16 %v737
      %v778 = vunpack.c.h.b16 %v737
      %v779 = vunpack.c.l.b16 %v738
      %v780 = vunpack.c.h.b16 %v738
      %v781 = vunpack.c.l.b16 %v739
      %v782 = vunpack.c.h.b16 %v739
      %v783 = vunpack.c.l.b16 %v740
      %v784 = vunpack.c.h.b16 %v740
      %v785 = vunpack.c.l.b16 %v741
      %v786 = vunpack.c.h.b16 %v741
      %v787 = vunpack.c.l.b16 %v742
      %v788 = vunpack.c.h.b16 %v742
      %v789 = vunpack.c.l.b16 %v743
      %v790 = vunpack.c.h.b16 %v743
      %v791 = vunpack.c.l.b16 %v744
      %v792 = vunpack.c.h.b16 %v744
      %v793 = vpack.c.b16 %v761, %v761
      %v794 = vpack.c.b16 %v762, %v762
      %v795 = vpack.c.b16 %v763, %v763
      %v796 = vpack.c.b16 %v764, %v764
      %v797 = vpack.c.b16 %v765, %v765
      %v798 = vpack.c.b16 %v766, %v766
      %v799 = vpack.c.b16 %v767, %v767
      %v800 = vpack.c.b16 %v768, %v768
      %v801 = vpack.c.b16 %v769, %v769
      %v802 = vpack.c.b16 %v770, %v770
      %v803 = vpack.c.b16 %v771, %v771
      %v804 = vpack.c.b16 %v772, %v772
      %v805 = vpack.c.b16 %v773, %v773
      %v806 = vpack.c.b16 %v774, %v774
      %v807 = vpack.c.b16 %v775, %v775
      %v808 = vpack.c.b16 %v776, %v776
      %v809 = vpack.c.b16 %v777, %v777
      %v810 = vpack.c.b16 %v778, %v778
      %v811 = vpack.c.b16 %v779, %v779
      %v812 = vpack.c.b16 %v780, %v780
      %v813 = vpack.c.b16 %v781, %v781
      %v814 = vpack.c.b16 %v782, %v782
      %v815 = vpack.c.b16 %v783, %v783
      %v816 = vpack.c.b16 %v784, %v784
      %v817 = vpack.c.b16 %v785, %v785
      %v818 = vpack.c.b16 %v786, %v786
      %v819 = vpack.c.b16 %v787, %v787
      %v820 = vpack.c.b16 %v788, %v788
      %v821 = vpack.c.b16 %v789, %v789
      %v822 = vpack.c.b16 %v790, %v790
      %v823 = vpack.c.b16 %v791, %v791
      %v824 = vpack.c.b16 %v792, %v792
      %857 = vst [vmem:[%s199] sm:$0xf] %v793
      %858 = vst [vmem:[%s199 + $0x4] sm:$0xf] %v794
      %859 = vst [vmem:[%s199 + $0x8] sm:$0xf] %v795
      %860 = vst [vmem:[%s199 + $0xc] sm:$0xf] %v796
      %861 = vst [vmem:[%s199 + $0x10] sm:$0xf] %v797
      %862 = vst [vmem:[%s199 + $0x14] sm:$0xf] %v798
      %863 = vst [vmem:[%s199 + $0x18] sm:$0xf] %v799
      %864 = vst [vmem:[%s199 + $0x1c] sm:$0xf] %v800
      %865 = vst [vmem:[%s199 + $0x20] sm:$0xf] %v801
      %866 = vst [vmem:[%s199 + $0x24] sm:$0xf] %v802
      %867 = vst [vmem:[%s199 + $0x28] sm:$0xf] %v803
      %868 = vst [vmem:[%s199 + $0x2c] sm:$0xf] %v804
      %869 = vst [vmem:[%s199 + $0x30] sm:$0xf] %v805
      %870 = vst [vmem:[%s199 + $0x34] sm:$0xf] %v806
      %871 = vst [vmem:[%s199 + $0x38] sm:$0xf] %v807
      %872 = vst [vmem:[%s199 + $0x3c] sm:$0xf] %v808
      %873 = vst [vmem:[%s199 + $0x40] sm:$0xf] %v809
      %874 = vst [vmem:[%s199 + $0x44] sm:$0xf] %v810
      %875 = vst [vmem:[%s199 + $0x48] sm:$0xf] %v811
      %876 = vst [vmem:[%s199 + $0x4c] sm:$0xf] %v812
      %877 = vst [vmem:[%s199 + $0x50] sm:$0xf] %v813
      %878 = vst [vmem:[%s199 + $0x54] sm:$0xf] %v814
      %879 = vst [vmem:[%s199 + $0x58] sm:$0xf] %v815
      %880 = vst [vmem:[%s199 + $0x5c] sm:$0xf] %v816
      %881 = vst [vmem:[%s199 + $0x60] sm:$0xf] %v817
      %882 = vst [vmem:[%s199 + $0x64] sm:$0xf] %v818
      %883 = vst [vmem:[%s199 + $0x68] sm:$0xf] %v819
      %884 = vst [vmem:[%s199 + $0x6c] sm:$0xf] %v820
      %885 = vst [vmem:[%s199 + $0x70] sm:$0xf] %v821
      %886 = vst [vmem:[%s199 + $0x74] sm:$0xf] %v822
      %887 = vst [vmem:[%s199 + $0x78] sm:$0xf] %v823
      %888 = vst [vmem:[%s199 + $0x7c] sm:$0xf] %v824
      %s889 = smul.u32 32, %s15
      %p890 = scmp.lt.s32.totalorder %s889, 63
      %s891 = scalar_select %p890, %s889, 63
      %s892 = smul.addr %s891, 4
      %s893 = scalar_lea.vmem %s4, %s892
      // Predicated region
      $region37: #{patch_discriminator_forward.10} parent=35 // pred_check
        %p894 = pneg %p122
      $region38: #{patch_discriminator_forward.10} parent=35 // pred_check_branch
        %896 = sbr.rel (%p894) target = $region40
      $region39: #{patch_discriminator_forward.10} parent=35 // pred_region
        %s897 = smul.u32 32, %s15
      $region40: #{patch_discriminator_forward.10} parent=35 // pred_fallthru
        _
    $region36: #{patch_discriminator_forward.10} parent=5 // pred_fallthru
      _
    %p898 = scmp.le.s32.totalorder 2, %s10
    // Predicated region
    $region41: #{patch_discriminator_forward.10} parent=5 // pred_check
      %p899 = pneg %p898
    $region42: #{patch_discriminator_forward.10} parent=5 // pred_check_branch
      %901 = sbr.rel (%p899) target = $region44
    $region43: #{patch_discriminator_forward.10} parent=5 // pred_region
      %s902 = ssub.s32 %s10, 2
      // Predicated region
      $region45: #{patch_discriminator_forward.10} parent=43 // pred_check
        %p903 = pneg %p128
      $region46: #{patch_discriminator_forward.10} parent=43 // pred_check_branch
        %905 = sbr.rel (%p903) target = $region48
      $region47: #{patch_discriminator_forward.10} parent=43 // pred_region
        %s906 = smul.u32 32, %s16
        %p907 = scmp.lt.s32.totalorder %s906, 63
        %s908 = scalar_select %p907, %s906, 63
        %s909 = smul.addr %s908, 4
        %s910 = scalar_lea.vmem %s4, %s909
      $region48: #{patch_discriminator_forward.10} parent=43 // pred_fallthru
        _
    $region44: #{patch_discriminator_forward.10} parent=5 // pred_fallthru
      _
  $region6: #{patch_discriminator_forward.10} parent=0 // loop_footer
    %s14 = sadd.s32 1, %s10
  $region7: #{patch_discriminator_forward.10} parent=0 // loop_footer_branch
    %9 = sbr.rel target = $region3
  $region8: #{patch_discriminator_forward.10} parent=0 // loop_exit
    _

// kernel: patch_discriminator_forward.11
$region0: #{patch_discriminator_forward.11}
  #allocation0 [shape = 'u32[]', space=smem, size = 0x4, offset = 0x4, fixed_abs, tag = 'smem constant byte address 0x4 - core index']
  #allocation1 [shape = 'u32[144,128]{1,0:T(1,128)}', space=vmem, size = 0x12000, scoped, tag = 'internal scratch']
  %s0 = inlined_call_operand.vmem [shape: bf16[128,256], index: 0, kind: input, shape index: {}]
  %s1 = inlined_call_operand.vmem [shape: bf16[256,128], index: 1, kind: input, shape index: {}]
  %s2 = inlined_call_operand.vmem [shape: f32[2,1,128], index: 2, kind: output, shape index: {0}]
  %s3 = inlined_call_operand.vmem [shape: f32[2,1,128], index: 3, kind: output, shape index: {1}]
  %4 = xla_tuple %s2, %s3
  %s5 = sld [smem:[#allocation0]]
  $region49: #{patch_discriminator_forward.11} parent=0
    _
  %s7 = ssub.s32 1, %s5
  %s8 = scalar_select 0, %s7, %s5
  loop: start=0, step=1, limit=4
  $region2: #{patch_discriminator_forward.11} parent=0 // loop_pre_header
    _
  $region3: #{patch_discriminator_forward.11} parent=0 // loop_header
    %s10 = sphi 0, %s14
    %p11 = scmp.ge.s32.totalorder %s10, 4
    %s20 = sphi 0, %s22
    %s23 = sphi 0, %s20
    %s24 = sphi 0, %s23
    %s40 = sphi 0, %s24
    %s44 = sphi 0, %s44
    %s46 = sphi 0, %s44
    %s47 = sphi 0, %s46
    %s61 = sphi 0, %s47
    %s67 = sphi 0, %s69
    %s70 = sphi 0, %s67
    %s71 = sphi 0, %s70
    %s87 = sphi 0, %s71
    %s93 = sphi 0, %s95
    %s96 = sphi 0, %s93
    %s97 = sphi 0, %s96
    %s113 = sphi 0, %s97
  $region4: #{patch_discriminator_forward.11} parent=0 // loop_header_branch
    %13 = sbr.rel (%p11) target = $region8
  $region5: #{patch_discriminator_forward.11} parent=0 // loop_body
    %s15 = ssub.s32 %s10, 1
    %s16 = ssub.s32 %s10, 2
    %s17 = sadd.s32 %s10, 1
    %s18 = ssub.s32 %s10, %s17
    %p19 = scmp.eq.s32.totalorder %s18, 0
    %s21 = sadd.s32 %s20, 1
    %s22 = scalar_select %p19, %s20, %s21
    %p25 = pneg %p19
    %p26 = scmp.eq.s32.totalorder %s10, 1
    %p27 = por %p25, %p26
    %p28 = scmp.ne.s32.totalorder %s20, %s23
    %p29 = scmp.eq.s32.totalorder %s10, 0
    %p30 = por %p28, %p29
    %p31 = scmp.ne.s32.totalorder %s20, %s23
    %p32 = scmp.eq.s32.totalorder %s15, 1
    %p33 = por %p31, %p32
    %p34 = scmp.ne.s32.totalorder %s23, %s24
    %p35 = scmp.eq.s32.totalorder %s15, 0
    %p36 = por %p34, %p35
    %p37 = scmp.ne.s32.totalorder %s23, %s24
    %p38 = scmp.eq.s32.totalorder %s16, 1
    %p39 = por %p37, %p38
    %p41 = scmp.ne.s32.totalorder %s24, %s40
    %p42 = scmp.eq.s32.totalorder %s16, 0
    %p43 = por %p41, %p42
    %s45 = sadd.s32 %s44, 1
    %p48 = scmp.eq.s32.totalorder %s10, 1
    %p49 = scmp.ne.s32.totalorder %s44, %s46
    %p50 = scmp.eq.s32.totalorder %s10, 0
    %p51 = por %p49, %p50
    %p52 = scmp.ne.s32.totalorder %s44, %s46
    %p53 = scmp.eq.s32.totalorder %s15, 1
    %p54 = por %p52, %p53
    %p55 = scmp.ne.s32.totalorder %s46, %s47
    %p56 = scmp.eq.s32.totalorder %s15, 0
    %p57 = por %p55, %p56
    %p58 = scmp.ne.s32.totalorder %s46, %s47
    %p59 = scmp.eq.s32.totalorder %s16, 1
    %p60 = por %p58, %p59
    %p62 = scmp.ne.s32.totalorder %s47, %s61
    %p63 = scmp.eq.s32.totalorder %s16, 0
    %p64 = por %p62, %p63
    %s65 = ssub.s32 %s10, %s17
    %p66 = scmp.eq.s32.totalorder %s65, 0
    %s68 = sadd.s32 %s67, 1
    %s69 = scalar_select %p66, %s67, %s68
    %p72 = pneg %p66
    %p73 = scmp.eq.s32.totalorder %s10, 1
    %p74 = por %p72, %p73
    %p75 = scmp.ne.s32.totalorder %s67, %s70
    %p76 = scmp.eq.s32.totalorder %s10, 0
    %p77 = por %p75, %p76
    %p78 = scmp.ne.s32.totalorder %s67, %s70
    %p79 = scmp.eq.s32.totalorder %s15, 1
    %p80 = por %p78, %p79
    %p81 = scmp.ne.s32.totalorder %s70, %s71
    %p82 = scmp.eq.s32.totalorder %s15, 0
    %p83 = por %p81, %p82
    %p84 = scmp.ne.s32.totalorder %s70, %s71
    %p85 = scmp.eq.s32.totalorder %s16, 1
    %p86 = por %p84, %p85
    %p88 = scmp.ne.s32.totalorder %s71, %s87
    %p89 = scmp.eq.s32.totalorder %s16, 0
    %p90 = por %p88, %p89
    %s91 = ssub.s32 %s10, %s17
    %p92 = scmp.eq.s32.totalorder %s91, 0
    %s94 = sadd.s32 %s93, 1
    %s95 = scalar_select %p92, %s93, %s94
    %p98 = pneg %p92
    %p99 = scmp.eq.s32.totalorder %s10, 1
    %p100 = por %p98, %p99
    %p101 = scmp.ne.s32.totalorder %s93, %s96
    %p102 = scmp.eq.s32.totalorder %s10, 0
    %p103 = por %p101, %p102
    %p104 = scmp.ne.s32.totalorder %s93, %s96
    %p105 = scmp.eq.s32.totalorder %s15, 1
    %p106 = por %p104, %p105
    %p107 = scmp.ne.s32.totalorder %s96, %s97
    %p108 = scmp.eq.s32.totalorder %s15, 0
    %p109 = por %p107, %p108
    %p110 = scmp.ne.s32.totalorder %s96, %s97
    %p111 = scmp.eq.s32.totalorder %s16, 1
    %p112 = por %p110, %p111
    %p114 = scmp.ne.s32.totalorder %s97, %s113
    %p115 = scmp.eq.s32.totalorder %s16, 0
    %p116 = por %p114, %p115
    %p117 = scmp.le.s32.totalorder 1, %s10
    %p118 = scmp.lt.s32.totalorder %s10, 3
    %p119 = pnand %p117, %p118
    %p120 = pneg %p119
    // Predicated region
    $region9: #{patch_discriminator_forward.11} parent=5 // pred_check
      _
    $region10: #{patch_discriminator_forward.11} parent=5 // pred_check_branch
      %122 = sbr.rel (%p119) target = $region12
    $region11: #{patch_discriminator_forward.11} parent=5 // pred_region
      %s123 = ssub.s32 %s10, 1
      // Predicated region
      $region13: #{patch_discriminator_forward.11} parent=11 // pred_check
        %p124 = pneg %p57
      $region14: #{patch_discriminator_forward.11} parent=11 // pred_check_branch
        %126 = sbr.rel (%p124) target = $region16
      $region15: #{patch_discriminator_forward.11} parent=11 // pred_region
        _
      $region16: #{patch_discriminator_forward.11} parent=11 // pred_fallthru
        _
    $region12: #{patch_discriminator_forward.11} parent=5 // pred_fallthru
      _
    %p127 = scmp.lt.s32.totalorder %s10, 2
    // Predicated region
    $region17: #{patch_discriminator_forward.11} parent=5 // pred_check
      %p128 = pneg %p127
    $region18: #{patch_discriminator_forward.11} parent=5 // pred_check_branch
      %130 = sbr.rel (%p128) target = $region20
    $region19: #{patch_discriminator_forward.11} parent=5 // pred_region
      // Predicated region
      $region21: #{patch_discriminator_forward.11} parent=19 // pred_check
        %p131 = pneg %p30
      $region22: #{patch_discriminator_forward.11} parent=19 // pred_check_branch
        %133 = sbr.rel (%p131) target = $region24
      $region23: #{patch_discriminator_forward.11} parent=19 // pred_region
        %s134 = smul.u32 8, %s10
        %p135 = scmp.lt.s32.totalorder %s134, 15
        %s136 = scalar_select %p135, %s134, 15
        %s137 = smul.addr %s136, 2
        %s138 = smul.addr %s137, 4
        %s139 = scalar_lea.vmem %s0, %s138
        %s140 = smul.u32 8, %s10
      $region24: #{patch_discriminator_forward.11} parent=19 // pred_fallthru
        _
    $region20: #{patch_discriminator_forward.11} parent=5 // pred_fallthru
      _
    %p141 = scmp.le.s32.totalorder 1, %s10
    %p142 = scmp.lt.s32.totalorder %s10, 3
    %p143 = pnand %p141, %p142
    %p144 = pneg %p143
    // Predicated region
    $region25: #{patch_discriminator_forward.11} parent=5 // pred_check
      _
    $region26: #{patch_discriminator_forward.11} parent=5 // pred_check_branch
      %146 = sbr.rel (%p143) target = $region28
    $region27: #{patch_discriminator_forward.11} parent=5 // pred_region
      %s147 = ssub.s32 %s10, 1
      %s148 = smul.u32 8, %s15
      %p149 = scmp.lt.s32.totalorder %s148, 15
      %s150 = scalar_select %p149, %s148, 15
      %s151 = smul.addr %s150, 2
      %s152 = smul.addr %s151, 4
      %s153 = scalar_lea.vmem %s0, %s152
      %p154 = pneg %p36
      %p155 = pneg %p33
      %p156 = pneg %p57
      %p157 = pneg %p54
      %p158 = pneg %p83
      %p159 = pneg %p80
      %p160 = scmp.lt.s32.totalorder %s15, 1
      %s161 = scalar_select %p160, %s15, 1
      %s162 = scalar_lea.vmem %s2, %s161
      %p163 = pneg %p109
      %p164 = pneg %p106
      %p165 = scmp.lt.s32.totalorder %s15, 1
      %s166 = scalar_select %p165, %s15, 1
      %s167 = scalar_lea.vmem %s3, %s166
      %s168 = smul.u32 8, %s15
      %p169 = scmp.lt.s32.totalorder %s168, 15
      %s170 = scalar_select %p169, %s168, 15
      %s171 = smul.addr %s170, 2
      %s172 = smul.addr %s171, 4
      %s173 = scalar_lea.vmem %s0, %s172
      %s174 = smul.u32 8, %s15
      %p175 = scmp.lt.s32.totalorder %s15, 1
      %s176 = scalar_select %p175, %s15, 1
      %s177 = scalar_lea.vmem %s2, %s176
      %p178 = scmp.lt.s32.totalorder %s15, 1
      %s179 = scalar_select %p178, %s15, 1
      %s180 = scalar_lea.vmem %s3, %s179
      %v182 = vld [vmem:[%s173] sm:$0xff]
      %v183 = vld [vmem:[%s173 + $0x8] sm:$0xff]
      %v184 = vld [vmem:[%s173 + $0x10] sm:$0xff]
      %v185 = vld [vmem:[%s173 + $0x18] sm:$0xff]
      %v186 = vld [vmem:[%s173 + $0x20] sm:$0xff]
      %v187 = vld [vmem:[%s173 + $0x28] sm:$0xff]
      %v188 = vld [vmem:[%s173 + $0x30] sm:$0xff]
      %v189 = vld [vmem:[%s173 + $0x38] sm:$0xff]
      %v190 = vld [vmem:[%s1] sm:$0xf]
      %v191 = vld [vmem:[%s1 + $0x4] sm:$0xf]
      %v192 = vld [vmem:[%s1 + $0x8] sm:$0xf]
      %v193 = vld [vmem:[%s1 + $0xc] sm:$0xf]
      %v194 = vld [vmem:[%s1 + $0x10] sm:$0xf]
      %v195 = vld [vmem:[%s1 + $0x14] sm:$0xf]
      %v196 = vld [vmem:[%s1 + $0x18] sm:$0xf]
      %v197 = vld [vmem:[%s1 + $0x1c] sm:$0xf]
      %v198 = vld [vmem:[%s1 + $0x20] sm:$0xf]
      %v199 = vld [vmem:[%s1 + $0x24] sm:$0xf]
      %v200 = vld [vmem:[%s1 + $0x28] sm:$0xf]
      %v201 = vld [vmem:[%s1 + $0x2c] sm:$0xf]
      %v202 = vld [vmem:[%s1 + $0x30] sm:$0xf]
      %v203 = vld [vmem:[%s1 + $0x34] sm:$0xf]
      %v204 = vld [vmem:[%s1 + $0x38] sm:$0xf]
      %v205 = vld [vmem:[%s1 + $0x3c] sm:$0xf]
      %v206 = vld [vmem:[%s1 + $0x40] sm:$0xf]
      %v207 = vld [vmem:[%s1 + $0x44] sm:$0xf]
      %v208 = vld [vmem:[%s1 + $0x48] sm:$0xf]
      %v209 = vld [vmem:[%s1 + $0x4c] sm:$0xf]
      %v210 = vld [vmem:[%s1 + $0x50] sm:$0xf]
      %v211 = vld [vmem:[%s1 + $0x54] sm:$0xf]
      %v212 = vld [vmem:[%s1 + $0x58] sm:$0xf]
      %v213 = vld [vmem:[%s1 + $0x5c] sm:$0xf]
      %v214 = vld [vmem:[%s1 + $0x60] sm:$0xf]
      %v215 = vld [vmem:[%s1 + $0x64] sm:$0xf]
      %v216 = vld [vmem:[%s1 + $0x68] sm:$0xf]
      %v217 = vld [vmem:[%s1 + $0x6c] sm:$0xf]
      %v218 = vld [vmem:[%s1 + $0x70] sm:$0xf]
      %v219 = vld [vmem:[%s1 + $0x74] sm:$0xf]
      %v220 = vld [vmem:[%s1 + $0x78] sm:$0xf]
      %v221 = vld [vmem:[%s1 + $0x7c] sm:$0xf]
      %v230 = vunpack.c.l.b16 %v182
      %v231 = vunpack.c.h.b16 %v182
      %v232 = vunpack.c.l.b16 %v183
      %v233 = vunpack.c.h.b16 %v183
      %v234 = vunpack.c.l.b16 %v184
      %v235 = vunpack.c.h.b16 %v184
      %v236 = vunpack.c.l.b16 %v185
      %v237 = vunpack.c.h.b16 %v185
      %v238 = vunpack.c.l.b16 %v186
      %v239 = vunpack.c.h.b16 %v186
      %v240 = vunpack.c.l.b16 %v187
      %v241 = vunpack.c.h.b16 %v187
      %v242 = vunpack.c.l.b16 %v188
      %v243 = vunpack.c.h.b16 %v188
      %v244 = vunpack.c.l.b16 %v189
      %v245 = vunpack.c.h.b16 %v189
      %v246 = vpack.c.b16 %v232, %v230
      %v247 = vpack.c.b16 %v233, %v231
      %v248 = vpack.c.b16 %v236, %v234
      %v249 = vpack.c.b16 %v237, %v235
      %v250 = vpack.c.b16 %v240, %v238
      %v251 = vpack.c.b16 %v241, %v239
      %v252 = vpack.c.b16 %v244, %v242
      %v253 = vpack.c.b16 %v245, %v243
      %v294 = vunpack.c.l.b16 %v190
      %v295 = vunpack.c.l.b16 %v191
      %v296 = vunpack.c.l.b16 %v192
      %v297 = vunpack.c.l.b16 %v193
      %v298 = vunpack.c.l.b16 %v194
      %v299 = vunpack.c.l.b16 %v195
      %v300 = vunpack.c.l.b16 %v196
      %v301 = vunpack.c.l.b16 %v197
      %v302 = vunpack.c.l.b16 %v198
      %v303 = vunpack.c.l.b16 %v199
      %v304 = vunpack.c.l.b16 %v200
      %v305 = vunpack.c.l.b16 %v201
      %v306 = vunpack.c.l.b16 %v202
      %v307 = vunpack.c.l.b16 %v203
      %v308 = vunpack.c.l.b16 %v204
      %v309 = vunpack.c.l.b16 %v205
      %v310 = vunpack.c.l.b16 %v206
      %v311 = vunpack.c.l.b16 %v207
      %v312 = vunpack.c.l.b16 %v208
      %v313 = vunpack.c.l.b16 %v209
      %v314 = vunpack.c.l.b16 %v210
      %v315 = vunpack.c.l.b16 %v211
      %v316 = vunpack.c.l.b16 %v212
      %v317 = vunpack.c.l.b16 %v213
      %v318 = vunpack.c.l.b16 %v214
      %v319 = vunpack.c.l.b16 %v215
      %v320 = vunpack.c.l.b16 %v216
      %v321 = vunpack.c.l.b16 %v217
      %v322 = vunpack.c.l.b16 %v218
      %v323 = vunpack.c.l.b16 %v219
      %v324 = vunpack.c.l.b16 %v220
      %v325 = vunpack.c.l.b16 %v221
      %v326 = vpack.c.b16 %v295, %v294
      %v327 = vpack.c.b16 %v297, %v296
      %v328 = vpack.c.b16 %v299, %v298
      %v329 = vpack.c.b16 %v301, %v300
      %v330 = vpack.c.b16 %v303, %v302
      %v331 = vpack.c.b16 %v305, %v304
      %v332 = vpack.c.b16 %v307, %v306
      %v333 = vpack.c.b16 %v309, %v308
      %v334 = vpack.c.b16 %v311, %v310
      %v335 = vpack.c.b16 %v313, %v312
      %v336 = vpack.c.b16 %v315, %v314
      %v337 = vpack.c.b16 %v317, %v316
      %v338 = vpack.c.b16 %v319, %v318
      %v339 = vpack.c.b16 %v321, %v320
      %v340 = vpack.c.b16 %v323, %v322
      %v341 = vpack.c.b16 %v325, %v324
      %358 = vmatprep.subr.bf16.mxu0 0
      %359 = vmatpush1.bf16.msra.mxu0 %v326
      %360 = vmatprep.subr.bf16.mxu0 0
      %361 = vmatpush1.bf16.msra.mxu0 %v327
      %362 = vmatprep.subr.bf16.mxu0 0
      %363 = vmatpush1.bf16.msra.mxu0 %v328
      %364 = vmatprep.subr.bf16.mxu0 0
      %365 = vmatpush1.bf16.msra.mxu0 %v329
      %366 = vmatprep.subr.bf16.mxu0 0
      %367 = vmatpush1.bf16.msra.mxu0 %v330
      %368 = vmatprep.subr.bf16.mxu0 0
      %369 = vmatpush1.bf16.msra.mxu0 %v331
      %370 = vmatprep.subr.bf16.mxu0 0
      %371 = vmatpush1.bf16.msra.mxu0 %v332
      %372 = vmatprep.subr.bf16.mxu0 0
      %373 = vmatpush1.bf16.msra.mxu0 %v333
      %374 = vmatprep.subr.bf16.mxu0 0
      %375 = vmatpush1.bf16.msra.mxu0 %v334
      %376 = vmatprep.subr.bf16.mxu0 0
      %377 = vmatpush1.bf16.msra.mxu0 %v335
      %378 = vmatprep.subr.bf16.mxu0 0
      %379 = vmatpush1.bf16.msra.mxu0 %v336
      %380 = vmatprep.subr.bf16.mxu0 0
      %381 = vmatpush1.bf16.msra.mxu0 %v337
      %382 = vmatprep.subr.bf16.mxu0 0
      %383 = vmatpush1.bf16.msra.mxu0 %v338
      %384 = vmatprep.subr.bf16.mxu0 0
      %385 = vmatpush1.bf16.msra.mxu0 %v339
      %386 = vmatprep.subr.bf16.mxu0 0
      %387 = vmatpush1.bf16.msra.mxu0 %v340
      %388 = vmatprep.subr.bf16.mxu0 0
      %389 = vmatpush1.bf16.msra.mxu0 %v341
      %390 = vmatprep.mubr.bf16.mxu0 %v247
      %391 = vmatmul.mubr.bf16.gmra.mrb[0].mxu0 %v246
      %v392 = vpop.f32.mrb[0].mxu0
      %v393 = vadd.f32 0.0, %v392
      %v394 = vpop.f32.mrb[0].mxu0
      %v395 = vpop.f32.mrb[0].mxu0
      %v396 = vadd.f32 0.0, %v395
      %v397 = vpop.f32.mrb[0].mxu0
      %398 = vmatprep.mubr.bf16.mxu0 %v249
      %399 = vmatmul.mubr.bf16.gmra.mrb[0].mxu0 %v248
      %v400 = vpop.f32.mrb[0].mxu0
      %v401 = vadd.f32 0.0, %v400
      %v402 = vpop.f32.mrb[0].mxu0
      %v403 = vpop.f32.mrb[0].mxu0
      %v404 = vadd.f32 0.0, %v403
      %v405 = vpop.f32.mrb[0].mxu0
      %406 = vmatprep.mubr.bf16.mxu0 %v251
      %407 = vmatmul.mubr.bf16.gmra.mrb[0].mxu0 %v250
      %v408 = vpop.f32.mrb[0].mxu0
      %v409 = vadd.f32 0.0, %v408
      %v410 = vpop.f32.mrb[0].mxu0
      %v411 = vpop.f32.mrb[0].mxu0
      %v412 = vadd.f32 0.0, %v411
      %v413 = vpop.f32.mrb[0].mxu0
      %414 = vmatprep.mubr.bf16.mxu0 %v253
      %415 = vmatmul.mubr.bf16.gmra.mrb[0].mxu0 %v252
      %v416 = vpop.f32.mrb[0].mxu0
      %v417 = vadd.f32 0.0, %v416
      %v418 = vpop.f32.mrb[0].mxu0
      %v419 = vpop.f32.mrb[0].mxu0
      %v420 = vadd.f32 0.0, %v419
      %v421 = vpop.f32.mrb[0].mxu0
      %422 = vdwg.mxu0
      %v423 = vadd.f32 %v393, %v396
      %v424 = vadd.f32 %v423, %v401
      %v425 = vadd.f32 %v424, %v404
      %v426 = vadd.f32 %v425, %v409
      %v427 = vadd.f32 %v426, %v412
      %v428 = vadd.f32 %v427, %v417
      %v429 = vadd.f32 %v428, %v420
      %v430 = vrot.slane %v429, 4
      %v431 = vadd.f32 %v429, %v430
      %v432 = vrot.slane %v431, 2
      %v433 = vadd.f32 %v431, %v432
      %v434 = vrot.slane %v433, 1
      %v435 = vadd.f32 %v433, %v434
      %436 = vst [vmem:[%s177] sm:$0x1] %v435
      %v437 = vmul.f32 %v393, %v393
      %v438 = vmul.f32 %v396, %v396
      %v439 = vmul.f32 %v401, %v401
      %v440 = vmul.f32 %v404, %v404
      %v441 = vmul.f32 %v409, %v409
      %v442 = vmul.f32 %v412, %v412
      %v443 = vmul.f32 %v417, %v417
      %v444 = vmul.f32 %v420, %v420
      %v445 = vadd.f32 %v437, %v438
      %v446 = vadd.f32 %v445, %v439
      %v447 = vadd.f32 %v446, %v440
      %v448 = vadd.f32 %v447, %v441
      %v449 = vadd.f32 %v448, %v442
      %v450 = vadd.f32 %v449, %v443
      %v451 = vadd.f32 %v450, %v444
      %v452 = vrot.slane %v451, 4
      %v453 = vadd.f32 %v451, %v452
      %v454 = vrot.slane %v453, 2
      %v455 = vadd.f32 %v453, %v454
      %v456 = vrot.slane %v455, 1
      %v457 = vadd.f32 %v455, %v456
      %458 = vst [vmem:[%s180] sm:$0x1] %v457
      %p459 = scmp.lt.s32.totalorder %s15, 1
      %s460 = scalar_select %p459, %s15, 1
      %s461 = scalar_lea.vmem %s2, %s460
      %p462 = scmp.lt.s32.totalorder %s15, 1
      %s463 = scalar_select %p462, %s15, 1
      %s464 = scalar_lea.vmem %s3, %s463
      // Predicated region
      $region29: #{patch_discriminator_forward.11} parent=27 // pred_check
        %p465 = pneg %p80
      $region30: #{patch_discriminator_forward.11} parent=27 // pred_check_branch
        %467 = sbr.rel (%p465) target = $region32
      $region31: #{patch_discriminator_forward.11} parent=27 // pred_region
        _
      $region32: #{patch_discriminator_forward.11} parent=27 // pred_fallthru
        _
      // Predicated region
      $region33: #{patch_discriminator_forward.11} parent=27 // pred_check
        %p468 = pneg %p106
      $region34: #{patch_discriminator_forward.11} parent=27 // pred_check_branch
        %470 = sbr.rel (%p468) target = $region36
      $region35: #{patch_discriminator_forward.11} parent=27 // pred_region
        _
      $region36: #{patch_discriminator_forward.11} parent=27 // pred_fallthru
        _
    $region28: #{patch_discriminator_forward.11} parent=5 // pred_fallthru
      _
    %p471 = scmp.le.s32.totalorder 2, %s10
    // Predicated region
    $region37: #{patch_discriminator_forward.11} parent=5 // pred_check
      %p472 = pneg %p471
    $region38: #{patch_discriminator_forward.11} parent=5 // pred_check_branch
      %474 = sbr.rel (%p472) target = $region40
    $region39: #{patch_discriminator_forward.11} parent=5 // pred_region
      %s475 = ssub.s32 %s10, 2
      // Predicated region
      $region41: #{patch_discriminator_forward.11} parent=39 // pred_check
        %p476 = pneg %p86
      $region42: #{patch_discriminator_forward.11} parent=39 // pred_check_branch
        %478 = sbr.rel (%p476) target = $region44
      $region43: #{patch_discriminator_forward.11} parent=39 // pred_region
        %p479 = scmp.lt.s32.totalorder %s16, 1
        %s480 = scalar_select %p479, %s16, 1
        %s481 = scalar_lea.vmem %s2, %s480
      $region44: #{patch_discriminator_forward.11} parent=39 // pred_fallthru
        _
      // Predicated region
      $region45: #{patch_discriminator_forward.11} parent=39 // pred_check
        %p482 = pneg %p112
      $region46: #{patch_discriminator_forward.11} parent=39 // pred_check_branch
        %484 = sbr.rel (%p482) target = $region48
      $region47: #{patch_discriminator_forward.11} parent=39 // pred_region
        %p485 = scmp.lt.s32.totalorder %s16, 1
        %s486 = scalar_select %p485, %s16, 1
        %s487 = scalar_lea.vmem %s3, %s486
      $region48: #{patch_discriminator_forward.11} parent=39 // pred_fallthru
        _
    $region40: #{patch_discriminator_forward.11} parent=5 // pred_fallthru
      _
  $region6: #{patch_discriminator_forward.11} parent=0 // loop_footer
    %s14 = sadd.s32 1, %s10
  $region7: #{patch_discriminator_forward.11} parent=0 // loop_footer_branch
    %9 = sbr.rel target = $region3
  $region8: #{patch_discriminator_forward.11} parent=0 // loop_exit
    _

// kernel: patch_discriminator_forward.12
$region0: #{patch_discriminator_forward.12}
  #allocation0 [shape = 'u32[]', space=smem, size = 0x4, offset = 0x4, fixed_abs, tag = 'smem constant byte address 0x4 - core index']
  #allocation1 [shape = 'u32[144,128]{1,0:T(1,128)}', space=vmem, size = 0x12000, scoped, tag = 'internal scratch']
  %s0 = inlined_call_operand.vmem [shape: bf16[128,256], index: 0, kind: input, shape index: {}]
  %s1 = inlined_call_operand.vmem [shape: bf16[256,128], index: 1, kind: input, shape index: {}]
  %s2 = inlined_call_operand.vmem [shape: f32[1,128], index: 2, kind: input, shape index: {}]
  %s3 = inlined_call_operand.vmem [shape: f32[1,128], index: 3, kind: input, shape index: {}]
  %s4 = inlined_call_operand.vmem [shape: bf16[128,128], index: 4, kind: output, shape index: {}]
  %s5 = sld [smem:[#allocation0]]
  $region49: #{patch_discriminator_forward.12} parent=0
    _
  %s7 = ssub.s32 1, %s5
  %s8 = scalar_select 0, %s7, %s5
  loop: start=0, step=1, limit=4
  $region2: #{patch_discriminator_forward.12} parent=0 // loop_pre_header
    _
  $region3: #{patch_discriminator_forward.12} parent=0 // loop_header
    %s10 = sphi 0, %s14
    %p11 = scmp.ge.s32.totalorder %s10, 4
    %s20 = sphi 0, %s22
    %s23 = sphi 0, %s20
    %s24 = sphi 0, %s23
    %s40 = sphi 0, %s24
    %s44 = sphi 0, %s44
    %s46 = sphi 0, %s44
    %s47 = sphi 0, %s46
    %s61 = sphi 0, %s47
    %s65 = sphi 0, %s65
    %s67 = sphi 0, %s65
    %s68 = sphi 0, %s67
    %s82 = sphi 0, %s68
    %s86 = sphi 0, %s86
    %s88 = sphi 0, %s86
    %s89 = sphi 0, %s88
    %s103 = sphi 0, %s89
    %s109 = sphi 0, %s111
    %s112 = sphi 0, %s109
    %s113 = sphi 0, %s112
    %s129 = sphi 0, %s113
  $region4: #{patch_discriminator_forward.12} parent=0 // loop_header_branch
    %13 = sbr.rel (%p11) target = $region8
  $region5: #{patch_discriminator_forward.12} parent=0 // loop_body
    %s15 = ssub.s32 %s10, 1
    %s16 = ssub.s32 %s10, 2
    %s17 = sadd.s32 %s10, 1
    %s18 = ssub.s32 %s10, %s17
    %p19 = scmp.eq.s32.totalorder %s18, 0
    %s21 = sadd.s32 %s20, 1
    %s22 = scalar_select %p19, %s20, %s21
    %p25 = pneg %p19
    %p26 = scmp.eq.s32.totalorder %s10, 1
    %p27 = por %p25, %p26
    %p28 = scmp.ne.s32.totalorder %s20, %s23
    %p29 = scmp.eq.s32.totalorder %s10, 0
    %p30 = por %p28, %p29
    %p31 = scmp.ne.s32.totalorder %s20, %s23
    %p32 = scmp.eq.s32.totalorder %s15, 1
    %p33 = por %p31, %p32
    %p34 = scmp.ne.s32.totalorder %s23, %s24
    %p35 = scmp.eq.s32.totalorder %s15, 0
    %p36 = por %p34, %p35
    %p37 = scmp.ne.s32.totalorder %s23, %s24
    %p38 = scmp.eq.s32.totalorder %s16, 1
    %p39 = por %p37, %p38
    %p41 = scmp.ne.s32.totalorder %s24, %s40
    %p42 = scmp.eq.s32.totalorder %s16, 0
    %p43 = por %p41, %p42
    %s45 = sadd.s32 %s44, 1
    %p48 = scmp.eq.s32.totalorder %s10, 1
    %p49 = scmp.ne.s32.totalorder %s44, %s46
    %p50 = scmp.eq.s32.totalorder %s10, 0
    %p51 = por %p49, %p50
    %p52 = scmp.ne.s32.totalorder %s44, %s46
    %p53 = scmp.eq.s32.totalorder %s15, 1
    %p54 = por %p52, %p53
    %p55 = scmp.ne.s32.totalorder %s46, %s47
    %p56 = scmp.eq.s32.totalorder %s15, 0
    %p57 = por %p55, %p56
    %p58 = scmp.ne.s32.totalorder %s46, %s47
    %p59 = scmp.eq.s32.totalorder %s16, 1
    %p60 = por %p58, %p59
    %p62 = scmp.ne.s32.totalorder %s47, %s61
    %p63 = scmp.eq.s32.totalorder %s16, 0
    %p64 = por %p62, %p63
    %s66 = sadd.s32 %s65, 1
    %p69 = scmp.eq.s32.totalorder %s10, 1
    %p70 = scmp.ne.s32.totalorder %s65, %s67
    %p71 = scmp.eq.s32.totalorder %s10, 0
    %p72 = por %p70, %p71
    %p73 = scmp.ne.s32.totalorder %s65, %s67
    %p74 = scmp.eq.s32.totalorder %s15, 1
    %p75 = por %p73, %p74
    %p76 = scmp.ne.s32.totalorder %s67, %s68
    %p77 = scmp.eq.s32.totalorder %s15, 0
    %p78 = por %p76, %p77
    %p79 = scmp.ne.s32.totalorder %s67, %s68
    %p80 = scmp.eq.s32.totalorder %s16, 1
    %p81 = por %p79, %p80
    %p83 = scmp.ne.s32.totalorder %s68, %s82
    %p84 = scmp.eq.s32.totalorder %s16, 0
    %p85 = por %p83, %p84
    %s87 = sadd.s32 %s86, 1
    %p90 = scmp.eq.s32.totalorder %s10, 1
    %p91 = scmp.ne.s32.totalorder %s86, %s88
    %p92 = scmp.eq.s32.totalorder %s10, 0
    %p93 = por %p91, %p92
    %p94 = scmp.ne.s32.totalorder %s86, %s88
    %p95 = scmp.eq.s32.totalorder %s15, 1
    %p96 = por %p94, %p95
    %p97 = scmp.ne.s32.totalorder %s88, %s89
    %p98 = scmp.eq.s32.totalorder %s15, 0
    %p99 = por %p97, %p98
    %p100 = scmp.ne.s32.totalorder %s88, %s89
    %p101 = scmp.eq.s32.totalorder %s16, 1
    %p102 = por %p100, %p101
    %p104 = scmp.ne.s32.totalorder %s89, %s103
    %p105 = scmp.eq.s32.totalorder %s16, 0
    %p106 = por %p104, %p105
    %s107 = ssub.s32 %s10, %s17
    %p108 = scmp.eq.s32.totalorder %s107, 0
    %s110 = sadd.s32 %s109, 1
    %s111 = scalar_select %p108, %s109, %s110
    %p114 = pneg %p108
    %p115 = scmp.eq.s32.totalorder %s10, 1
    %p116 = por %p114, %p115
    %p117 = scmp.ne.s32.totalorder %s109, %s112
    %p118 = scmp.eq.s32.totalorder %s10, 0
    %p119 = por %p117, %p118
    %p120 = scmp.ne.s32.totalorder %s109, %s112
    %p121 = scmp.eq.s32.totalorder %s15, 1
    %p122 = por %p120, %p121
    %p123 = scmp.ne.s32.totalorder %s112, %s113
    %p124 = scmp.eq.s32.totalorder %s15, 0
    %p125 = por %p123, %p124
    %p126 = scmp.ne.s32.totalorder %s112, %s113
    %p127 = scmp.eq.s32.totalorder %s16, 1
    %p128 = por %p126, %p127
    %p130 = scmp.ne.s32.totalorder %s113, %s129
    %p131 = scmp.eq.s32.totalorder %s16, 0
    %p132 = por %p130, %p131
    %p133 = scmp.le.s32.totalorder 1, %s10
    %p134 = scmp.lt.s32.totalorder %s10, 3
    %p135 = pnand %p133, %p134
    %p136 = pneg %p135
    // Predicated region
    $region9: #{patch_discriminator_forward.12} parent=5 // pred_check
      _
    $region10: #{patch_discriminator_forward.12} parent=5 // pred_check_branch
      %138 = sbr.rel (%p135) target = $region12
    $region11: #{patch_discriminator_forward.12} parent=5 // pred_region
      %s139 = ssub.s32 %s10, 1
      // Predicated region
      $region13: #{patch_discriminator_forward.12} parent=11 // pred_check
        %p140 = pneg %p57
      $region14: #{patch_discriminator_forward.12} parent=11 // pred_check_branch
        %142 = sbr.rel (%p140) target = $region16
      $region15: #{patch_discriminator_forward.12} parent=11 // pred_region
        _
      $region16: #{patch_discriminator_forward.12} parent=11 // pred_fallthru
        _
      // Predicated region
      $region17: #{patch_discriminator_forward.12} parent=11 // pred_check
        %p143 = pneg %p78
      $region18: #{patch_discriminator_forward.12} parent=11 // pred_check_branch
        %145 = sbr.rel (%p143) target = $region20
      $region19: #{patch_discriminator_forward.12} parent=11 // pred_region
        _
      $region20: #{patch_discriminator_forward.12} parent=11 // pred_fallthru
        _
      // Predicated region
      $region21: #{patch_discriminator_forward.12} parent=11 // pred_check
        %p146 = pneg %p99
      $region22: #{patch_discriminator_forward.12} parent=11 // pred_check_branch
        %148 = sbr.rel (%p146) target = $region24
      $region23: #{patch_discriminator_forward.12} parent=11 // pred_region
        _
      $region24: #{patch_discriminator_forward.12} parent=11 // pred_fallthru
        _
    $region12: #{patch_discriminator_forward.12} parent=5 // pred_fallthru
      _
    %p149 = scmp.lt.s32.totalorder %s10, 2
    // Predicated region
    $region25: #{patch_discriminator_forward.12} parent=5 // pred_check
      %p150 = pneg %p149
    $region26: #{patch_discriminator_forward.12} parent=5 // pred_check_branch
      %152 = sbr.rel (%p150) target = $region28
    $region27: #{patch_discriminator_forward.12} parent=5 // pred_region
      // Predicated region
      $region29: #{patch_discriminator_forward.12} parent=27 // pred_check
        %p153 = pneg %p30
      $region30: #{patch_discriminator_forward.12} parent=27 // pred_check_branch
        %155 = sbr.rel (%p153) target = $region32
      $region31: #{patch_discriminator_forward.12} parent=27 // pred_region
        %s156 = smul.u32 8, %s10
        %p157 = scmp.lt.s32.totalorder %s156, 15
        %s158 = scalar_select %p157, %s156, 15
        %s159 = smul.addr %s158, 2
        %s160 = smul.addr %s159, 4
        %s161 = scalar_lea.vmem %s0, %s160
        %s162 = smul.u32 8, %s10
      $region32: #{patch_discriminator_forward.12} parent=27 // pred_fallthru
        _
    $region28: #{patch_discriminator_forward.12} parent=5 // pred_fallthru
      _
    %p163 = scmp.le.s32.totalorder 1, %s10
    %p164 = scmp.lt.s32.totalorder %s10, 3
    %p165 = pnand %p163, %p164
    %p166 = pneg %p165
    // Predicated region
    $region33: #{patch_discriminator_forward.12} parent=5 // pred_check
      _
    $region34: #{patch_discriminator_forward.12} parent=5 // pred_check_branch
      %168 = sbr.rel (%p165) target = $region36
    $region35: #{patch_discriminator_forward.12} parent=5 // pred_region
      %s169 = ssub.s32 %s10, 1
      %s170 = smul.u32 8, %s15
      %p171 = scmp.lt.s32.totalorder %s170, 15
      %s172 = scalar_select %p171, %s170, 15
      %s173 = smul.addr %s172, 2
      %s174 = smul.addr %s173, 4
      %s175 = scalar_lea.vmem %s0, %s174
      %p176 = pneg %p36
      %p177 = pneg %p33
      %p178 = pneg %p57
      %p179 = pneg %p54
      %p180 = pneg %p78
      %p181 = pneg %p75
      %p182 = pneg %p99
      %p183 = pneg %p96
      %p184 = pneg %p125
      %p185 = pneg %p122
      %s186 = smul.u32 8, %s15
      %p187 = scmp.lt.s32.totalorder %s186, 15
      %s188 = scalar_select %p187, %s186, 15
      %s189 = smul.addr %s188, 4
      %s190 = scalar_lea.vmem %s4, %s189
      %s191 = smul.u32 8, %s15
      %p192 = scmp.lt.s32.totalorder %s191, 15
      %s193 = scalar_select %p192, %s191, 15
      %s194 = smul.addr %s193, 2
      %s195 = smul.addr %s194, 4
      %s196 = scalar_lea.vmem %s0, %s195
      %s197 = smul.u32 8, %s15
      %s198 = smul.u32 8, %s15
      %p199 = scmp.lt.s32.totalorder %s198, 15
      %s200 = scalar_select %p199, %s198, 15
      %s201 = smul.addr %s200, 4
      %s202 = scalar_lea.vmem %s4, %s201
      %s203 = smul.u32 8, %s15
      %v205 = vld [vmem:[%s196] sm:$0xff]
      %v206 = vld [vmem:[%s196 + $0x8] sm:$0xff]
      %v207 = vld [vmem:[%s196 + $0x10] sm:$0xff]
      %v208 = vld [vmem:[%s196 + $0x18] sm:$0xff]
      %v209 = vld [vmem:[%s196 + $0x20] sm:$0xff]
      %v210 = vld [vmem:[%s196 + $0x28] sm:$0xff]
      %v211 = vld [vmem:[%s196 + $0x30] sm:$0xff]
      %v212 = vld [vmem:[%s196 + $0x38] sm:$0xff]
      %v213 = vld [vmem:[%s1] sm:$0xf]
      %v214 = vld [vmem:[%s1 + $0x4] sm:$0xf]
      %v215 = vld [vmem:[%s1 + $0x8] sm:$0xf]
      %v216 = vld [vmem:[%s1 + $0xc] sm:$0xf]
      %v217 = vld [vmem:[%s1 + $0x10] sm:$0xf]
      %v218 = vld [vmem:[%s1 + $0x14] sm:$0xf]
      %v219 = vld [vmem:[%s1 + $0x18] sm:$0xf]
      %v220 = vld [vmem:[%s1 + $0x1c] sm:$0xf]
      %v221 = vld [vmem:[%s1 + $0x20] sm:$0xf]
      %v222 = vld [vmem:[%s1 + $0x24] sm:$0xf]
      %v223 = vld [vmem:[%s1 + $0x28] sm:$0xf]
      %v224 = vld [vmem:[%s1 + $0x2c] sm:$0xf]
      %v225 = vld [vmem:[%s1 + $0x30] sm:$0xf]
      %v226 = vld [vmem:[%s1 + $0x34] sm:$0xf]
      %v227 = vld [vmem:[%s1 + $0x38] sm:$0xf]
      %v228 = vld [vmem:[%s1 + $0x3c] sm:$0xf]
      %v229 = vld [vmem:[%s1 + $0x40] sm:$0xf]
      %v230 = vld [vmem:[%s1 + $0x44] sm:$0xf]
      %v231 = vld [vmem:[%s1 + $0x48] sm:$0xf]
      %v232 = vld [vmem:[%s1 + $0x4c] sm:$0xf]
      %v233 = vld [vmem:[%s1 + $0x50] sm:$0xf]
      %v234 = vld [vmem:[%s1 + $0x54] sm:$0xf]
      %v235 = vld [vmem:[%s1 + $0x58] sm:$0xf]
      %v236 = vld [vmem:[%s1 + $0x5c] sm:$0xf]
      %v237 = vld [vmem:[%s1 + $0x60] sm:$0xf]
      %v238 = vld [vmem:[%s1 + $0x64] sm:$0xf]
      %v239 = vld [vmem:[%s1 + $0x68] sm:$0xf]
      %v240 = vld [vmem:[%s1 + $0x6c] sm:$0xf]
      %v241 = vld [vmem:[%s1 + $0x70] sm:$0xf]
      %v242 = vld [vmem:[%s1 + $0x74] sm:$0xf]
      %v243 = vld [vmem:[%s1 + $0x78] sm:$0xf]
      %v244 = vld [vmem:[%s1 + $0x7c] sm:$0xf]
      %v253 = vunpack.c.l.b16 %v205
      %v254 = vunpack.c.h.b16 %v205
      %v255 = vunpack.c.l.b16 %v206
      %v256 = vunpack.c.h.b16 %v206
      %v257 = vunpack.c.l.b16 %v207
      %v258 = vunpack.c.h.b16 %v207
      %v259 = vunpack.c.l.b16 %v208
      %v260 = vunpack.c.h.b16 %v208
      %v261 = vunpack.c.l.b16 %v209
      %v262 = vunpack.c.h.b16 %v209
      %v263 = vunpack.c.l.b16 %v210
      %v264 = vunpack.c.h.b16 %v210
      %v265 = vunpack.c.l.b16 %v211
      %v266 = vunpack.c.h.b16 %v211
      %v267 = vunpack.c.l.b16 %v212
      %v268 = vunpack.c.h.b16 %v212
      %v269 = vpack.c.b16 %v255, %v253
      %v270 = vpack.c.b16 %v256, %v254
      %v271 = vpack.c.b16 %v259, %v257
      %v272 = vpack.c.b16 %v260, %v258
      %v273 = vpack.c.b16 %v263, %v261
      %v274 = vpack.c.b16 %v264, %v262
      %v275 = vpack.c.b16 %v267, %v265
      %v276 = vpack.c.b16 %v268, %v266
      %v317 = vunpack.c.l.b16 %v213
      %v318 = vunpack.c.l.b16 %v214
      %v319 = vunpack.c.l.b16 %v215
      %v320 = vunpack.c.l.b16 %v216
      %v321 = vunpack.c.l.b16 %v217
      %v322 = vunpack.c.l.b16 %v218
      %v323 = vunpack.c.l.b16 %v219
      %v324 = vunpack.c.l.b16 %v220
      %v325 = vunpack.c.l.b16 %v221
      %v326 = vunpack.c.l.b16 %v222
      %v327 = vunpack.c.l.b16 %v223
      %v328 = vunpack.c.l.b16 %v224
      %v329 = vunpack.c.l.b16 %v225
      %v330 = vunpack.c.l.b16 %v226
      %v331 = vunpack.c.l.b16 %v227
      %v332 = vunpack.c.l.b16 %v228
      %v333 = vunpack.c.l.b16 %v229
      %v334 = vunpack.c.l.b16 %v230
      %v335 = vunpack.c.l.b16 %v231
      %v336 = vunpack.c.l.b16 %v232
      %v337 = vunpack.c.l.b16 %v233
      %v338 = vunpack.c.l.b16 %v234
      %v339 = vunpack.c.l.b16 %v235
      %v340 = vunpack.c.l.b16 %v236
      %v341 = vunpack.c.l.b16 %v237
      %v342 = vunpack.c.l.b16 %v238
      %v343 = vunpack.c.l.b16 %v239
      %v344 = vunpack.c.l.b16 %v240
      %v345 = vunpack.c.l.b16 %v241
      %v346 = vunpack.c.l.b16 %v242
      %v347 = vunpack.c.l.b16 %v243
      %v348 = vunpack.c.l.b16 %v244
      %v349 = vpack.c.b16 %v318, %v317
      %v350 = vpack.c.b16 %v320, %v319
      %v351 = vpack.c.b16 %v322, %v321
      %v352 = vpack.c.b16 %v324, %v323
      %v353 = vpack.c.b16 %v326, %v325
      %v354 = vpack.c.b16 %v328, %v327
      %v355 = vpack.c.b16 %v330, %v329
      %v356 = vpack.c.b16 %v332, %v331
      %v357 = vpack.c.b16 %v334, %v333
      %v358 = vpack.c.b16 %v336, %v335
      %v359 = vpack.c.b16 %v338, %v337
      %v360 = vpack.c.b16 %v340, %v339
      %v361 = vpack.c.b16 %v342, %v341
      %v362 = vpack.c.b16 %v344, %v343
      %v363 = vpack.c.b16 %v346, %v345
      %v364 = vpack.c.b16 %v348, %v347
      %381 = vmatprep.subr.bf16.mxu0 0
      %382 = vmatpush1.bf16.msra.mxu0 %v349
      %383 = vmatprep.subr.bf16.mxu0 0
      %384 = vmatpush1.bf16.msra.mxu0 %v350
      %385 = vmatprep.subr.bf16.mxu0 0
      %386 = vmatpush1.bf16.msra.mxu0 %v351
      %387 = vmatprep.subr.bf16.mxu0 0
      %388 = vmatpush1.bf16.msra.mxu0 %v352
      %389 = vmatprep.subr.bf16.mxu0 0
      %390 = vmatpush1.bf16.msra.mxu0 %v353
      %391 = vmatprep.subr.bf16.mxu0 0
      %392 = vmatpush1.bf16.msra.mxu0 %v354
      %393 = vmatprep.subr.bf16.mxu0 0
      %394 = vmatpush1.bf16.msra.mxu0 %v355
      %395 = vmatprep.subr.bf16.mxu0 0
      %396 = vmatpush1.bf16.msra.mxu0 %v356
      %397 = vmatprep.subr.bf16.mxu0 0
      %398 = vmatpush1.bf16.msra.mxu0 %v357
      %399 = vmatprep.subr.bf16.mxu0 0
      %400 = vmatpush1.bf16.msra.mxu0 %v358
      %401 = vmatprep.subr.bf16.mxu0 0
      %402 = vmatpush1.bf16.msra.mxu0 %v359
      %403 = vmatprep.subr.bf16.mxu0 0
      %404 = vmatpush1.bf16.msra.mxu0 %v360
      %405 = vmatprep.subr.bf16.mxu0 0
      %406 = vmatpush1.bf16.msra.mxu0 %v361
      %407 = vmatprep.subr.bf16.mxu0 0
      %408 = vmatpush1.bf16.msra.mxu0 %v362
      %409 = vmatprep.subr.bf16.mxu0 0
      %410 = vmatpush1.bf16.msra.mxu0 %v363
      %411 = vmatprep.subr.bf16.mxu0 0
      %412 = vmatpush1.bf16.msra.mxu0 %v364
      %413 = vmatprep.mubr.bf16.mxu0 %v270
      %414 = vmatmul.mubr.bf16.gmra.mrb[0].mxu0 %v269
      %v415 = vpop.f32.mrb[0].mxu0
      %v416 = vadd.f32 0.0, %v415
      %v417 = vpop.f32.mrb[0].mxu0
      %v418 = vpop.f32.mrb[0].mxu0
      %v419 = vadd.f32 0.0, %v418
      %v420 = vpop.f32.mrb[0].mxu0
      %421 = vmatprep.mubr.bf16.mxu0 %v272
      %422 = vmatmul.mubr.bf16.gmra.mrb[0].mxu0 %v271
      %v423 = vpop.f32.mrb[0].mxu0
      %v424 = vadd.f32 0.0, %v423
      %v425 = vpop.f32.mrb[0].mxu0
      %v426 = vpop.f32.mrb[0].mxu0
      %v427 = vadd.f32 0.0, %v426
      %v428 = vpop.f32.mrb[0].mxu0
      %429 = vmatprep.mubr.bf16.mxu0 %v274
      %430 = vmatmul.mubr.bf16.gmra.mrb[0].mxu0 %v273
      %v431 = vpop.f32.mrb[0].mxu0
      %v432 = vadd.f32 0.0, %v431
      %v433 = vpop.f32.mrb[0].mxu0
      %v434 = vpop.f32.mrb[0].mxu0
      %v435 = vadd.f32 0.0, %v434
      %v436 = vpop.f32.mrb[0].mxu0
      %437 = vmatprep.mubr.bf16.mxu0 %v276
      %438 = vmatmul.mubr.bf16.gmra.mrb[0].mxu0 %v275
      %v439 = vpop.f32.mrb[0].mxu0
      %v440 = vadd.f32 0.0, %v439
      %v441 = vpop.f32.mrb[0].mxu0
      %v442 = vpop.f32.mrb[0].mxu0
      %v443 = vadd.f32 0.0, %v442
      %v444 = vpop.f32.mrb[0].mxu0
      %445 = vdwg.mxu0
      %v446 = vld [vmem:[%s2] sm:$0x1]
      %v448 = vlaneseq
      %v449 = vshrl.u32 %v448, 7
      %v450 = vsub.s32 0, %v449
      %v451 = vrot.slane %v446, %v450
      %v453 = vmul.f32 %v416, %v451
      %v454 = vmul.f32 %v419, %v451
      %v455 = vmul.f32 %v424, %v451
      %v456 = vmul.f32 %v427, %v451
      %v457 = vmul.f32 %v432, %v451
      %v458 = vmul.f32 %v435, %v451
      %v459 = vmul.f32 %v440, %v451
      %v460 = vmul.f32 %v443, %v451
      %v461 = vld [vmem:[%s3] sm:$0x1]
      %v463 = vlaneseq
      %v464 = vshrl.u32 %v463, 7
      %v465 = vsub.s32 0, %v464
      %v466 = vrot.slane %v461, %v465
      %v468 = vadd.f32 %v453, %v466
      %v469 = vadd.f32 %v454, %v466
      %v470 = vadd.f32 %v455, %v466
      %v471 = vadd.f32 %v456, %v466
      %v472 = vadd.f32 %v457, %v466
      %v473 = vadd.f32 %v458, %v466
      %v474 = vadd.f32 %v459, %v466
      %v475 = vadd.f32 %v460, %v466
      %vm476 = vcmp.ge.f32.partialorder %v468, 0.0
      %vm477 = vcmp.ge.f32.partialorder %v469, 0.0
      %vm478 = vcmp.ge.f32.partialorder %v470, 0.0
      %vm479 = vcmp.ge.f32.partialorder %v471, 0.0
      %vm480 = vcmp.ge.f32.partialorder %v472, 0.0
      %vm481 = vcmp.ge.f32.partialorder %v473, 0.0
      %vm482 = vcmp.ge.f32.partialorder %v474, 0.0
      %vm483 = vcmp.ge.f32.partialorder %v475, 0.0
      %v484 = vmul.f32 %v468, 0.2
      %v485 = vmul.f32 %v469, 0.2
      %v486 = vmul.f32 %v470, 0.2
      %v487 = vmul.f32 %v471, 0.2
      %v488 = vmul.f32 %v472, 0.2
      %v489 = vmul.f32 %v473, 0.2
      %v490 = vmul.f32 %v474, 0.2
      %v491 = vmul.f32 %v475, 0.2
      %v492 = vsel %vm476, %v468, %v484
      %v493 = vsel %vm477, %v469, %v485
      %v494 = vsel %vm478, %v470, %v486
      %v495 = vsel %vm479, %v471, %v487
      %v496 = vsel %vm480, %v472, %v488
      %v497 = vsel %vm481, %v473, %v489
      %v498 = vsel %vm482, %v474, %v490
      %v499 = vsel %vm483, %v475, %v491
      %v500 = vpack.c.bf16 %v493, %v492
      %v501 = vpack.c.bf16 %v495, %v494
      %v502 = vpack.c.bf16 %v497, %v496
      %v503 = vpack.c.bf16 %v499, %v498
      %v508 = vunpack.c.l.b16 %v500
      %v509 = vunpack.c.h.b16 %v500
      %v510 = vunpack.c.l.b16 %v501
      %v511 = vunpack.c.h.b16 %v501
      %v512 = vunpack.c.l.b16 %v502
      %v513 = vunpack.c.h.b16 %v502
      %v514 = vunpack.c.l.b16 %v503
      %v515 = vunpack.c.h.b16 %v503
      %v516 = vpack.c.b16 %v508, %v508
      %v517 = vpack.c.b16 %v509, %v509
      %v518 = vpack.c.b16 %v510, %v510
      %v519 = vpack.c.b16 %v511, %v511
      %v520 = vpack.c.b16 %v512, %v512
      %v521 = vpack.c.b16 %v513, %v513
      %v522 = vpack.c.b16 %v514, %v514
      %v523 = vpack.c.b16 %v515, %v515
      %532 = vst [vmem:[%s202] sm:$0xf] %v516
      %533 = vst [vmem:[%s202 + $0x4] sm:$0xf] %v517
      %534 = vst [vmem:[%s202 + $0x8] sm:$0xf] %v518
      %535 = vst [vmem:[%s202 + $0xc] sm:$0xf] %v519
      %536 = vst [vmem:[%s202 + $0x10] sm:$0xf] %v520
      %537 = vst [vmem:[%s202 + $0x14] sm:$0xf] %v521
      %538 = vst [vmem:[%s202 + $0x18] sm:$0xf] %v522
      %539 = vst [vmem:[%s202 + $0x1c] sm:$0xf] %v523
      %s540 = smul.u32 8, %s15
      %p541 = scmp.lt.s32.totalorder %s540, 15
      %s542 = scalar_select %p541, %s540, 15
      %s543 = smul.addr %s542, 4
      %s544 = scalar_lea.vmem %s4, %s543
      // Predicated region
      $region37: #{patch_discriminator_forward.12} parent=35 // pred_check
        %p545 = pneg %p122
      $region38: #{patch_discriminator_forward.12} parent=35 // pred_check_branch
        %547 = sbr.rel (%p545) target = $region40
      $region39: #{patch_discriminator_forward.12} parent=35 // pred_region
        %s548 = smul.u32 8, %s15
      $region40: #{patch_discriminator_forward.12} parent=35 // pred_fallthru
        _
    $region36: #{patch_discriminator_forward.12} parent=5 // pred_fallthru
      _
    %p549 = scmp.le.s32.totalorder 2, %s10
    // Predicated region
    $region41: #{patch_discriminator_forward.12} parent=5 // pred_check
      %p550 = pneg %p549
    $region42: #{patch_discriminator_forward.12} parent=5 // pred_check_branch
      %552 = sbr.rel (%p550) target = $region44
    $region43: #{patch_discriminator_forward.12} parent=5 // pred_region
      %s553 = ssub.s32 %s10, 2
      // Predicated region
      $region45: #{patch_discriminator_forward.12} parent=43 // pred_check
        %p554 = pneg %p128
      $region46: #{patch_discriminator_forward.12} parent=43 // pred_check_branch
        %556 = sbr.rel (%p554) target = $region48
      $region47: #{patch_discriminator_forward.12} parent=43 // pred_region
        %s557 = smul.u32 8, %s16
        %p558 = scmp.lt.s32.totalorder %s557, 15
        %s559 = scalar_select %p558, %s557, 15
        %s560 = smul.addr %s559, 4
        %s561 = scalar_lea.vmem %s4, %s560
      $region48: #{patch_discriminator_forward.12} parent=43 // pred_fallthru
        _
    $region44: #{patch_discriminator_forward.12} parent=5 // pred_fallthru
      _
  $region6: #{patch_discriminator_forward.12} parent=0 // loop_footer
    %s14 = sadd.s32 1, %s10
  $region7: #{patch_discriminator_forward.12} parent=0 // loop_footer_branch
    %9 = sbr.rel target = $region3
  $region8: #{patch_discriminator_forward.12} parent=0 // loop_exit
    _

// kernel: patch_discriminator_forward.13
$region0: #{patch_discriminator_forward.13}
  #allocation0 [shape = 'u32[]', space=smem, size = 0x4, offset = 0x4, fixed_abs, tag = 'smem constant byte address 0x4 - core index']
  #allocation1 [shape = 'u32[144,128]{1,0:T(1,128)}', space=vmem, size = 0x12000, scoped, tag = 'internal scratch']
  %s0 = inlined_call_operand.vmem [shape: bf16[32,512], index: 0, kind: input, shape index: {}]
  %s1 = inlined_call_operand.vmem [shape: bf16[512,128], index: 1, kind: input, shape index: {}]
  %s2 = inlined_call_operand.vmem [shape: bf16[32,128], index: 2, kind: output, shape index: {0}]
  %s3 = inlined_call_operand.vmem [shape: f32[2,1,128], index: 3, kind: output, shape index: {1}]
  %s4 = inlined_call_operand.vmem [shape: f32[2,1,128], index: 4, kind: output, shape index: {2}]
  %5 = xla_tuple %s2, %s3, %s4
  %s6 = sld [smem:[#allocation0]]
  $region57: #{patch_discriminator_forward.13} parent=0
    _
  %s8 = ssub.s32 1, %s6
  %s9 = scalar_select 0, %s8, %s6
  loop: start=0, step=1, limit=4
  $region2: #{patch_discriminator_forward.13} parent=0 // loop_pre_header
    _
  $region3: #{patch_discriminator_forward.13} parent=0 // loop_header
    %s11 = sphi 0, %s15
    %p12 = scmp.ge.s32.totalorder %s11, 4
    %s21 = sphi 0, %s23
    %s24 = sphi 0, %s21
    %s25 = sphi 0, %s24
    %s41 = sphi 0, %s25
    %s45 = sphi 0, %s45
    %s47 = sphi 0, %s45
    %s48 = sphi 0, %s47
    %s62 = sphi 0, %s48
    %s68 = sphi 0, %s70
    %s71 = sphi 0, %s68
    %s72 = sphi 0, %s71
    %s88 = sphi 0, %s72
    %s94 = sphi 0, %s96
    %s97 = sphi 0, %s94
    %s98 = sphi 0, %s97
    %s114 = sphi 0, %s98
    %s120 = sphi 0, %s122
    %s123 = sphi 0, %s120
    %s124 = sphi 0, %s123
    %s140 = sphi 0, %s124
  $region4: #{patch_discriminator_forward.13} parent=0 // loop_header_branch
    %14 = sbr.rel (%p12) target = $region8
  $region5: #{patch_discriminator_forward.13} parent=0 // loop_body
    %s16 = ssub.s32 %s11, 1
    %s17 = ssub.s32 %s11, 2
    %s18 = sadd.s32 %s11, 1
    %s19 = ssub.s32 %s11, %s18
    %p20 = scmp.eq.s32.totalorder %s19, 0
    %s22 = sadd.s32 %s21, 1
    %s23 = scalar_select %p20, %s21, %s22
    %p26 = pneg %p20
    %p27 = scmp.eq.s32.totalorder %s11, 1
    %p28 = por %p26, %p27
    %p29 = scmp.ne.s32.totalorder %s21, %s24
    %p30 = scmp.eq.s32.totalorder %s11, 0
    %p31 = por %p29, %p30
    %p32 = scmp.ne.s32.totalorder %s21, %s24
    %p33 = scmp.eq.s32.totalorder %s16, 1
    %p34 = por %p32, %p33
    %p35 = scmp.ne.s32.totalorder %s24, %s25
    %p36 = scmp.eq.s32.totalorder %s16, 0
    %p37 = por %p35, %p36
    %p38 = scmp.ne.s32.totalorder %s24, %s25
    %p39 = scmp.eq.s32.totalorder %s17, 1
    %p40 = por %p38, %p39
    %p42 = scmp.ne.s32.totalorder %s25, %s41
    %p43 = scmp.eq.s32.totalorder %s17, 0
    %p44 = por %p42, %p43
    %s46 = sadd.s32 %s45, 1
    %p49 = scmp.eq.s32.totalorder %s11, 1
    %p50 = scmp.ne.s32.totalorder %s45, %s47
    %p51 = scmp.eq.s32.totalorder %s11, 0
    %p52 = por %p50, %p51
    %p53 = scmp.ne.s32.totalorder %s45, %s47
    %p54 = scmp.eq.s32.totalorder %s16, 1
    %p55 = por %p53, %p54
    %p56 = scmp.ne.s32.totalorder %s47, %s48
    %p57 = scmp.eq.s32.totalorder %s16, 0
    %p58 = por %p56, %p57
    %p59 = scmp.ne.s32.totalorder %s47, %s48
    %p60 = scmp.eq.s32.totalorder %s17, 1
    %p61 = por %p59, %p60
    %p63 = scmp.ne.s32.totalorder %s48, %s62
    %p64 = scmp.eq.s32.totalorder %s17, 0
    %p65 = por %p63, %p64
    %s66 = ssub.s32 %s11, %s18
    %p67 = scmp.eq.s32.totalorder %s66, 0
    %s69 = sadd.s32 %s68, 1
    %s70 = scalar_select %p67, %s68, %s69
    %p73 = pneg %p67
    %p74 = scmp.eq.s32.totalorder %s11, 1
    %p75 = por %p73, %p74
    %p76 = scmp.ne.s32.totalorder %s68, %s71
    %p77 = scmp.eq.s32.totalorder %s11, 0
    %p78 = por %p76, %p77
    %p79 = scmp.ne.s32.totalorder %s68, %s71
    %p80 = scmp.eq.s32.totalorder %s16, 1
    %p81 = por %p79, %p80
    %p82 = scmp.ne.s32.totalorder %s71, %s72
    %p83 = scmp.eq.s32.totalorder %s16, 0
    %p84 = por %p82, %p83
    %p85 = scmp.ne.s32.totalorder %s71, %s72
    %p86 = scmp.eq.s32.totalorder %s17, 1
    %p87 = por %p85, %p86
    %p89 = scmp.ne.s32.totalorder %s72, %s88
    %p90 = scmp.eq.s32.totalorder %s17, 0
    %p91 = por %p89, %p90
    %s92 = ssub.s32 %s11, %s18
    %p93 = scmp.eq.s32.totalorder %s92, 0
    %s95 = sadd.s32 %s94, 1
    %s96 = scalar_select %p93, %s94, %s95
    %p99 = pneg %p93
    %p100 = scmp.eq.s32.totalorder %s11, 1
    %p101 = por %p99, %p100
    %p102 = scmp.ne.s32.totalorder %s94, %s97
    %p103 = scmp.eq.s32.totalorder %s11, 0
    %p104 = por %p102, %p103
    %p105 = scmp.ne.s32.totalorder %s94, %s97
    %p106 = scmp.eq.s32.totalorder %s16, 1
    %p107 = por %p105, %p106
    %p108 = scmp.ne.s32.totalorder %s97, %s98
    %p109 = scmp.eq.s32.totalorder %s16, 0
    %p110 = por %p108, %p109
    %p111 = scmp.ne.s32.totalorder %s97, %s98
    %p112 = scmp.eq.s32.totalorder %s17, 1
    %p113 = por %p111, %p112
    %p115 = scmp.ne.s32.totalorder %s98, %s114
    %p116 = scmp.eq.s32.totalorder %s17, 0
    %p117 = por %p115, %p116
    %s118 = ssub.s32 %s11, %s18
    %p119 = scmp.eq.s32.totalorder %s118, 0
    %s121 = sadd.s32 %s120, 1
    %s122 = scalar_select %p119, %s120, %s121
    %p125 = pneg %p119
    %p126 = scmp.eq.s32.totalorder %s11, 1
    %p127 = por %p125, %p126
    %p128 = scmp.ne.s32.totalorder %s120, %s123
    %p129 = scmp.eq.s32.totalorder %s11, 0
    %p130 = por %p128, %p129
    %p131 = scmp.ne.s32.totalorder %s120, %s123
    %p132 = scmp.eq.s32.totalorder %s16, 1
    %p133 = por %p131, %p132
    %p134 = scmp.ne.s32.totalorder %s123, %s124
    %p135 = scmp.eq.s32.totalorder %s16, 0
    %p136 = por %p134, %p135
    %p137 = scmp.ne.s32.totalorder %s123, %s124
    %p138 = scmp.eq.s32.totalorder %s17, 1
    %p139 = por %p137, %p138
    %p141 = scmp.ne.s32.totalorder %s124, %s140
    %p142 = scmp.eq.s32.totalorder %s17, 0
    %p143 = por %p141, %p142
    %p144 = scmp.le.s32.totalorder 1, %s11
    %p145 = scmp.lt.s32.totalorder %s11, 3
    %p146 = pnand %p144, %p145
    %p147 = pneg %p146
    // Predicated region
    $region9: #{patch_discriminator_forward.13} parent=5 // pred_check
      _
    $region10: #{patch_discriminator_forward.13} parent=5 // pred_check_branch
      %149 = sbr.rel (%p146) target = $region12
    $region11: #{patch_discriminator_forward.13} parent=5 // pred_region
      %s150 = ssub.s32 %s11, 1
      // Predicated region
      $region13: #{patch_discriminator_forward.13} parent=11 // pred_check
        %p151 = pneg %p58
      $region14: #{patch_discriminator_forward.13} parent=11 // pred_check_branch
        %153 = sbr.rel (%p151) target = $region16
      $region15: #{patch_discriminator_forward.13} parent=11 // pred_region
        _
      $region16: #{patch_discriminator_forward.13} parent=11 // pred_fallthru
        _
    $region12: #{patch_discriminator_forward.13} parent=5 // pred_fallthru
      _
    %p154 = scmp.lt.s32.totalorder %s11, 2
    // Predicated region
    $region17: #{patch_discriminator_forward.13} parent=5 // pred_check
      %p155 = pneg %p154
    $region18: #{patch_discriminator_forward.13} parent=5 // pred_check_branch
      %157 = sbr.rel (%p155) target = $region20
    $region19: #{patch_discriminator_forward.13} parent=5 // pred_region
      // Predicated region
      $region21: #{patch_discriminator_forward.13} parent=19 // pred_check
        %p158 = pneg %p31
      $region22: #{patch_discriminator_forward.13} parent=19 // pred_check_branch
        %160 = sbr.rel (%p158) target = $region24
      $region23: #{patch_discriminator_forward.13} parent=19 // pred_region
        %s161 = smul.u32 2, %s11
        %p162 = scmp.lt.s32.totalorder %s161, 3
        %s163 = scalar_select %p162, %s161, 3
        %s164 = smul.addr %s163, 4
        %s165 = smul.addr %s164, 4
        %s166 = scalar_lea.vmem %s0, %s165
        %s167 = smul.u32 2, %s11
      $region24: #{patch_discriminator_forward.13} parent=19 // pred_fallthru
        _
    $region20: #{patch_discriminator_forward.13} parent=5 // pred_fallthru
      _
    %p168 = scmp.le.s32.totalorder 1, %s11
    %p169 = scmp.lt.s32.totalorder %s11, 3
    %p170 = pnand %p168, %p169
    %p171 = pneg %p170
    // Predicated region
    $region25: #{patch_discriminator_forward.13} parent=5 // pred_check
      _
    $region26: #{patch_discriminator_forward.13} parent=5 // pred_check_branch
      %173 = sbr.rel (%p170) target = $region28
    $region27: #{patch_discriminator_forward.13} parent=5 // pred_region
      %s174 = ssub.s32 %s11, 1
      %s175 = smul.u32 2, %s16
      %p176 = scmp.lt.s32.totalorder %s175, 3
      %s177 = scalar_select %p176, %s175, 3
      %s178 = smul.addr %s177, 4
      %s179 = smul.addr %s178, 4
      %s180 = scalar_lea.vmem %s0, %s179
      %p181 = pneg %p37
      %p182 = pneg %p34
      %p183 = pneg %p58
      %p184 = pneg %p55
      %p185 = pneg %p84
      %p186 = pneg %p81
      %s187 = smul.u32 2, %s16
      %p188 = scmp.lt.s32.totalorder %s187, 3
      %s189 = scalar_select %p188, %s187, 3
      %s190 = smul.addr %s189, 4
      %s191 = scalar_lea.vmem %s2, %s190
      %p192 = pneg %p110
      %p193 = pneg %p107
      %p194 = scmp.lt.s32.totalorder %s16, 1
      %s195 = scalar_select %p194, %s16, 1
      %s196 = scalar_lea.vmem %s3, %s195
      %p197 = pneg %p136
      %p198 = pneg %p133
      %p199 = scmp.lt.s32.totalorder %s16, 1
      %s200 = scalar_select %p199, %s16, 1
      %s201 = scalar_lea.vmem %s4, %s200
      %s202 = smul.u32 2, %s16
      %p203 = scmp.lt.s32.totalorder %s202, 3
      %s204 = scalar_select %p203, %s202, 3
      %s205 = smul.addr %s204, 4
      %s206 = smul.addr %s205, 4
      %s207 = scalar_lea.vmem %s0, %s206
      %s208 = smul.u32 2, %s16
      %s209 = smul.u32 2, %s16
      %p210 = scmp.lt.s32.totalorder %s209, 3
      %s211 = scalar_select %p210, %s209, 3
      %s212 = smul.addr %s211, 4
      %s213 = scalar_lea.vmem %s2, %s212
      %s214 = smul.u32 2, %s16
      %p215 = scmp.lt.s32.totalorder %s16, 1
      %s216 = scalar_select %p215, %s16, 1
      %s217 = scalar_lea.vmem %s3, %s216
      %p218 = scmp.lt.s32.totalorder %s16, 1
      %s219 = scalar_select %p218, %s16, 1
      %s220 = scalar_lea.vmem %s4, %s219
      %v222 = vld [vmem:[%s207] sm:$0xff]
      %v223 = vld [vmem:[%s207 + $0x8] sm:$0xff]
      %v224 = vld [vmem:[%s207 + $0x10] sm:$0xff]
      %v225 = vld [vmem:[%s207 + $0x18] sm:$0xff]
      %v226 = vld [vmem:[%s1] sm:$0xf]
      %v227 = vld [vmem:[%s1 + $0x4] sm:$0xf]
      %v228 = vld [vmem:[%s1 + $0x8] sm:$0xf]
      %v229 = vld [vmem:[%s1 + $0xc] sm:$0xf]
      %v230 = vld [vmem:[%s1 + $0x10] sm:$0xf]
      %v231 = vld [vmem:[%s1 + $0x14] sm:$0xf]
      %v232 = vld [vmem:[%s1 + $0x18] sm:$0xf]
      %v233 = vld [vmem:[%s1 + $0x1c] sm:$0xf]
      %v234 = vld [vmem:[%s1 + $0x20] sm:$0xf]
      %v235 = vld [vmem:[%s1 + $0x24] sm:$0xf]
      %v236 = vld [vmem:[%s1 + $0x28] sm:$0xf]
      %v237 = vld [vmem:[%s1 + $0x2c] sm:$0xf]
      %v238 = vld [vmem:[%s1 + $0x30] sm:$0xf]
      %v239 = vld [vmem:[%s1 + $0x34] sm:$0xf]
      %v240 = vld [vmem:[%s1 + $0x38] sm:$0xf]
      %v241 = vld [vmem:[%s1 + $0x3c] sm:$0xf]
      %v242 = vld [vmem:[%s1 + $0x40] sm:$0xf]
      %v243 = vld [vmem:[%s1 + $0x44] sm:$0xf]
      %v244 = vld [vmem:[%s1 + $0x48] sm:$0xf]
      %v245 = vld [vmem:[%s1 + $0x4c] sm:$0xf]
      %v246 = vld [vmem:[%s1 + $0x50] sm:$0xf]
      %v247 = vld [vmem:[%s1 + $0x54] sm:$0xf]
      %v248 = vld [vmem:[%s1 + $0x58] sm:$0xf]
      %v249 = vld [vmem:[%s1 + $0x5c] sm:$0xf]
      %v250 = vld [vmem:[%s1 + $0x60] sm:$0xf]
      %v251 = vld [vmem:[%s1 + $0x64] sm:$0xf]
      %v252 = vld [vmem:[%s1 + $0x68] sm:$0xf]
      %v253 = vld [vmem:[%s1 + $0x6c] sm:$0xf]
      %v254 = vld [vmem:[%s1 + $0x70] sm:$0xf]
      %v255 = vld [vmem:[%s1 + $0x74] sm:$0xf]
      %v256 = vld [vmem:[%s1 + $0x78] sm:$0xf]
      %v257 = vld [vmem:[%s1 + $0x7c] sm:$0xf]
      %v258 = vld [vmem:[%s1 + $0x80] sm:$0xf]
      %v259 = vld [vmem:[%s1 + $0x84] sm:$0xf]
      %v260 = vld [vmem:[%s1 + $0x88] sm:$0xf]
      %v261 = vld [vmem:[%s1 + $0x8c] sm:$0xf]
      %v262 = vld [vmem:[%s1 + $0x90] sm:$0xf]
      %v263 = vld [vmem:[%s1 + $0x94] sm:$0xf]
      %v264 = vld [vmem:[%s1 + $0x98] sm:$0xf]
      %v265 = vld [vmem:[%s1 + $0x9c] sm:$0xf]
      %v266 = vld [vmem:[%s1 + $0xa0] sm:$0xf]
      %v267 = vld [vmem:[%s1 + $0xa4] sm:$0xf]
      %v268 = vld [vmem:[%s1 + $0xa8] sm:$0xf]
      %v269 = vld [vmem:[%s1 + $0xac] sm:$0xf]
      %v270 = vld [vmem:[%s1 + $0xb0] sm:$0xf]
      %v271 = vld [vmem:[%s1 + $0xb4] sm:$0xf]
      %v272 = vld [vmem:[%s1 + $0xb8] sm:$0xf]
      %v273 = vld [vmem:[%s1 + $0xbc] sm:$0xf]
      %v274 = vld [vmem:[%s1 + $0xc0] sm:$0xf]
      %v275 = vld [vmem:[%s1 + $0xc4] sm:$0xf]
      %v276 = vld [vmem:[%s1 + $0xc8] sm:$0xf]
      %v277 = vld [vmem:[%s1 + $0xcc] sm:$0xf]
      %v278 = vld [vmem:[%s1 + $0xd0] sm:$0xf]
      %v279 = vld [vmem:[%s1 + $0xd4] sm:$0xf]
      %v280 = vld [vmem:[%s1 + $0xd8] sm:$0xf]
      %v281 = vld [vmem:[%s1 + $0xdc] sm:$0xf]
      %v282 = vld [vmem:[%s1 + $0xe0] sm:$0xf]
      %v283 = vld [vmem:[%s1 + $0xe4] sm:$0xf]
      %v284 = vld [vmem:[%s1 + $0xe8] sm:$0xf]
      %v285 = vld [vmem:[%s1 + $0xec] sm:$0xf]
      %v286 = vld [vmem:[%s1 + $0xf0] sm:$0xf]
      %v287 = vld [vmem:[%s1 + $0xf4] sm:$0xf]
      %v288 = vld [vmem:[%s1 + $0xf8] sm:$0xf]
      %v289 = vld [vmem:[%s1 + $0xfc] sm:$0xf]
      %v294 = vunpack.c.l.b16 %v222
      %v295 = vunpack.c.h.b16 %v222
      %v296 = vunpack.c.l.b16 %v223
      %v297 = vunpack.c.h.b16 %v223
      %v298 = vunpack.c.l.b16 %v224
      %v299 = vunpack.c.h.b16 %v224
      %v300 = vunpack.c.l.b16 %v225
      %v301 = vunpack.c.h.b16 %v225
      %v302 = vpack.c.b16 %v298, %v294
      %v303 = vpack.c.b16 %v299, %v295
      %v304 = vpack.c.b16 %v300, %v296
      %v305 = vpack.c.b16 %v301, %v297
      %v374 = vunpack.c.l.b16 %v226
      %v375 = vunpack.c.l.b16 %v227
      %v376 = vunpack.c.l.b16 %v228
      %v377 = vunpack.c.l.b16 %v229
      %v378 = vunpack.c.l.b16 %v230
      %v379 = vunpack.c.l.b16 %v231
      %v380 = vunpack.c.l.b16 %v232
      %v381 = vunpack.c.l.b16 %v233
      %v382 = vunpack.c.l.b16 %v234
      %v383 = vunpack.c.l.b16 %v235
      %v384 = vunpack.c.l.b16 %v236
      %v385 = vunpack.c.l.b16 %v237
      %v386 = vunpack.c.l.b16 %v238
      %v387 = vunpack.c.l.b16 %v239
      %v388 = vunpack.c.l.b16 %v240
      %v389 = vunpack.c.l.b16 %v241
      %v390 = vunpack.c.l.b16 %v242
      %v391 = vunpack.c.l.b16 %v243
      %v392 = vunpack.c.l.b16 %v244
      %v393 = vunpack.c.l.b16 %v245
      %v394 = vunpack.c.l.b16 %v246
      %v395 = vunpack.c.l.b16 %v247
      %v396 = vunpack.c.l.b16 %v248
      %v397 = vunpack.c.l.b16 %v249
      %v398 = vunpack.c.l.b16 %v250
      %v399 = vunpack.c.l.b16 %v251
      %v400 = vunpack.c.l.b16 %v252
      %v401 = vunpack.c.l.b16 %v253
      %v402 = vunpack.c.l.b16 %v254
      %v403 = vunpack.c.l.b16 %v255
      %v404 = vunpack.c.l.b16 %v256
      %v405 = vunpack.c.l.b16 %v257
      %v406 = vunpack.c.l.b16 %v258
      %v407 = vunpack.c.l.b16 %v259
      %v408 = vunpack.c.l.b16 %v260
      %v409 = vunpack.c.l.b16 %v261
      %v410 = vunpack.c.l.b16 %v262
      %v411 = vunpack.c.l.b16 %v263
      %v412 = vunpack.c.l.b16 %v264
      %v413 = vunpack.c.l.b16 %v265
      %v414 = vunpack.c.l.b16 %v266
      %v415 = vunpack.c.l.b16 %v267
      %v416 = vunpack.c.l.b16 %v268
      %v417 = vunpack.c.l.b16 %v269
      %v418 = vunpack.c.l.b16 %v270
      %v419 = vunpack.c.l.b16 %v271
      %v420 = vunpack.c.l.b16 %v272
      %v421 = vunpack.c.l.b16 %v273
      %v422 = vunpack.c.l.b16 %v274
      %v423 = vunpack.c.l.b16 %v275
      %v424 = vunpack.c.l.b16 %v276
      %v425 = vunpack.c.l.b16 %v277
      %v426 = vunpack.c.l.b16 %v278
      %v427 = vunpack.c.l.b16 %v279
      %v428 = vunpack.c.l.b16 %v280
      %v429 = vunpack.c.l.b16 %v281
      %v430 = vunpack.c.l.b16 %v282
      %v431 = vunpack.c.l.b16 %v283
      %v432 = vunpack.c.l.b16 %v284
      %v433 = vunpack.c.l.b16 %v285
      %v434 = vunpack.c.l.b16 %v286
      %v435 = vunpack.c.l.b16 %v287
      %v436 = vunpack.c.l.b16 %v288
      %v437 = vunpack.c.l.b16 %v289
      %v438 = vpack.c.b16 %v375, %v374
      %v439 = vpack.c.b16 %v377, %v376
      %v440 = vpack.c.b16 %v379, %v378
      %v441 = vpack.c.b16 %v381, %v380
      %v442 = vpack.c.b16 %v383, %v382
      %v443 = vpack.c.b16 %v385, %v384
      %v444 = vpack.c.b16 %v387, %v386
      %v445 = vpack.c.b16 %v389, %v388
      %v446 = vpack.c.b16 %v391, %v390
      %v447 = vpack.c.b16 %v393, %v392
      %v448 = vpack.c.b16 %v395, %v394
      %v449 = vpack.c.b16 %v397, %v396
      %v450 = vpack.c.b16 %v399, %v398
      %v451 = vpack.c.b16 %v401, %v400
      %v452 = vpack.c.b16 %v403, %v402
      %v453 = vpack.c.b16 %v405, %v404
      %v454 = vpack.c.b16 %v407, %v406
      %v455 = vpack.c.b16 %v409, %v408
      %v456 = vpack.c.b16 %v411, %v410
      %v457 = vpack.c.b16 %v413, %v412
      %v458 = vpack.c.b16 %v415, %v414
      %v459 = vpack.c.b16 %v417, %v416
      %v460 = vpack.c.b16 %v419, %v418
      %v461 = vpack.c.b16 %v421, %v420
      %v462 = vpack.c.b16 %v423, %v422
      %v463 = vpack.c.b16 %v425, %v424
      %v464 = vpack.c.b16 %v427, %v426
      %v465 = vpack.c.b16 %v429, %v428
      %v466 = vpack.c.b16 %v431, %v430
      %v467 = vpack.c.b16 %v433, %v432
      %v468 = vpack.c.b16 %v435, %v434
      %v469 = vpack.c.b16 %v437, %v436
      %502 = vmatprep.subr.bf16.mxu0 0
      %503 = vmatpush1.bf16.msra.mxu0 %v438
      %504 = vmatprep.subr.bf16.mxu0 0
      %505 = vmatpush1.bf16.msra.mxu0 %v439
      %506 = vmatprep.subr.bf16.mxu0 0
      %507 = vmatpush1.bf16.msra.mxu0 %v440
      %508 = vmatprep.subr.bf16.mxu0 0
      %509 = vmatpush1.bf16.msra.mxu0 %v441
      %510 = vmatprep.subr.bf16.mxu0 0
      %511 = vmatpush1.bf16.msra.mxu0 %v442
      %512 = vmatprep.subr.bf16.mxu0 0
      %513 = vmatpush1.bf16.msra.mxu0 %v443
      %514 = vmatprep.subr.bf16.mxu0 0
      %515 = vmatpush1.bf16.msra.mxu0 %v444
      %516 = vmatprep.subr.bf16.mxu0 0
      %517 = vmatpush1.bf16.msra.mxu0 %v445
      %518 = vmatprep.subr.bf16.mxu0 0
      %519 = vmatpush1.bf16.msra.mxu0 %v446
      %520 = vmatprep.subr.bf16.mxu0 0
      %521 = vmatpush1.bf16.msra.mxu0 %v447
      %522 = vmatprep.subr.bf16.mxu0 0
      %523 = vmatpush1.bf16.msra.mxu0 %v448
      %524 = vmatprep.subr.bf16.mxu0 0
      %525 = vmatpush1.bf16.msra.mxu0 %v449
      %526 = vmatprep.subr.bf16.mxu0 0
      %527 = vmatpush1.bf16.msra.mxu0 %v450
      %528 = vmatprep.subr.bf16.mxu0 0
      %529 = vmatpush1.bf16.msra.mxu0 %v451
      %530 = vmatprep.subr.bf16.mxu0 0
      %531 = vmatpush1.bf16.msra.mxu0 %v452
      %532 = vmatprep.subr.bf16.mxu0 0
      %533 = vmatpush1.bf16.msra.mxu0 %v453
      %534 = vmatprep.mubr.bf16.mxu0 %v303
      %535 = vmatmul.mubr.bf16.gmra.mrb[0].mxu0 %v302
      %v536 = vpop.f32.mrb[0].mxu0
      %v537 = vadd.f32 0.0, %v536
      %v538 = vpop.f32.mrb[0].mxu0
      %v539 = vpop.f32.mrb[0].mxu0
      %v540 = vadd.f32 0.0, %v539
      %v541 = vpop.f32.mrb[0].mxu0
      %542 = vdwg.mxu0
      %543 = vmatprep.subr.bf16.mxu0 0
      %544 = vmatpush1.bf16.msra.mxu0 %v454
      %545 = vmatprep.subr.bf16.mxu0 0
      %546 = vmatpush1.bf16.msra.mxu0 %v455
      %547 = vmatprep.subr.bf16.mxu0 0
      %548 = vmatpush1.bf16.msra.mxu0 %v456
      %549 = vmatprep.subr.bf16.mxu0 0
      %550 = vmatpush1.bf16.msra.mxu0 %v457
      %551 = vmatprep.subr.bf16.mxu0 0
      %552 = vmatpush1.bf16.msra.mxu0 %v458
      %553 = vmatprep.subr.bf16.mxu0 0
      %554 = vmatpush1.bf16.msra.mxu0 %v459
      %555 = vmatprep.subr.bf16.mxu0 0
      %556 = vmatpush1.bf16.msra.mxu0 %v460
      %557 = vmatprep.subr.bf16.mxu0 0
      %558 = vmatpush1.bf16.msra.mxu0 %v461
      %559 = vmatprep.subr.bf16.mxu0 0
      %560 = vmatpush1.bf16.msra.mxu0 %v462
      %561 = vmatprep.subr.bf16.mxu0 0
      %562 = vmatpush1.bf16.msra.mxu0 %v463
      %563 = vmatprep.subr.bf16.mxu0 0
      %564 = vmatpush1.bf16.msra.mxu0 %v464
      %565 = vmatprep.subr.bf16.mxu0 0
      %566 = vmatpush1.bf16.msra.mxu0 %v465
      %567 = vmatprep.subr.bf16.mxu0 0
      %568 = vmatpush1.bf16.msra.mxu0 %v466
      %569 = vmatprep.subr.bf16.mxu0 0
      %570 = vmatpush1.bf16.msra.mxu0 %v467
      %571 = vmatprep.subr.bf16.mxu0 0
      %572 = vmatpush1.bf16.msra.mxu0 %v468
      %573 = vmatprep.subr.bf16.mxu0 0
      %574 = vmatpush1.bf16.msra.mxu0 %v469
      %575 = vmatprep.mubr.bf16.mxu0 %v305
      %576 = vmatmul.mubr.bf16.gmra.mrb[0].mxu0 %v304
      %v577 = vpop.f32.mrb[0].mxu0
      %v578 = vadd.f32 %v537, %v577
      %v579 = vpop.f32.mrb[0].mxu0
      %v580 = vpop.f32.mrb[0].mxu0
      %v581 = vadd.f32 %v540, %v580
      %v582 = vpop.f32.mrb[0].mxu0
      %583 = vdwg.mxu0
      %v584 = vpack.c.bf16 %v581, %v578
      %v586 = vunpack.c.l.b16 %v584
      %v587 = vunpack.c.h.b16 %v584
      %v588 = vpack.c.b16 %v586, %v586
      %v589 = vpack.c.b16 %v587, %v587
      %592 = vst [vmem:[%s213] sm:$0xf] %v588
      %593 = vst [vmem:[%s213 + $0x4] sm:$0xf] %v589
      %v594 = vadd.f32 %v578, %v581
      %v595 = vrot.slane %v594, 4
      %v596 = vadd.f32 %v594, %v595
      %v597 = vrot.slane %v596, 2
      %v598 = vadd.f32 %v596, %v597
      %v599 = vrot.slane %v598, 1
      %v600 = vadd.f32 %v598, %v599
      %601 = vst [vmem:[%s217] sm:$0x1] %v600
      %v602 = vmul.f32 %v578, %v578
      %v603 = vmul.f32 %v581, %v581
      %v604 = vadd.f32 %v602, %v603
      %v605 = vrot.slane %v604, 4
      %v606 = vadd.f32 %v604, %v605
      %v607 = vrot.slane %v606, 2
      %v608 = vadd.f32 %v606, %v607
      %v609 = vrot.slane %v608, 1
      %v610 = vadd.f32 %v608, %v609
      %611 = vst [vmem:[%s220] sm:$0x1] %v610
      %s612 = smul.u32 2, %s16
      %p613 = scmp.lt.s32.totalorder %s612, 3
      %s614 = scalar_select %p613, %s612, 3
      %s615 = smul.addr %s614, 4
      %s616 = scalar_lea.vmem %s2, %s615
      %p617 = scmp.lt.s32.totalorder %s16, 1
      %s618 = scalar_select %p617, %s16, 1
      %s619 = scalar_lea.vmem %s3, %s618
      %p620 = scmp.lt.s32.totalorder %s16, 1
      %s621 = scalar_select %p620, %s16, 1
      %s622 = scalar_lea.vmem %s4, %s621
      // Predicated region
      $region29: #{patch_discriminator_forward.13} parent=27 // pred_check
        %p623 = pneg %p81
      $region30: #{patch_discriminator_forward.13} parent=27 // pred_check_branch
        %625 = sbr.rel (%p623) target = $region32
      $region31: #{patch_discriminator_forward.13} parent=27 // pred_region
        %s626 = smul.u32 2, %s16
      $region32: #{patch_discriminator_forward.13} parent=27 // pred_fallthru
        _
      // Predicated region
      $region33: #{patch_discriminator_forward.13} parent=27 // pred_check
        %p627 = pneg %p107
      $region34: #{patch_discriminator_forward.13} parent=27 // pred_check_branch
        %629 = sbr.rel (%p627) target = $region36
      $region35: #{patch_discriminator_forward.13} parent=27 // pred_region
        _
      $region36: #{patch_discriminator_forward.13} parent=27 // pred_fallthru
        _
      // Predicated region
      $region37: #{patch_discriminator_forward.13} parent=27 // pred_check
        %p630 = pneg %p133
      $region38: #{patch_discriminator_forward.13} parent=27 // pred_check_branch
        %632 = sbr.rel (%p630) target = $region40
      $region39: #{patch_discriminator_forward.13} parent=27 // pred_region
        _
      $region40: #{patch_discriminator_forward.13} parent=27 // pred_fallthru
        _
    $region28: #{patch_discriminator_forward.13} parent=5 // pred_fallthru
      _
    %p633 = scmp.le.s32.totalorder 2, %s11
    // Predicated region
    $region41: #{patch_discriminator_forward.13} parent=5 // pred_check
      %p634 = pneg %p633
    $region42: #{patch_discriminator_forward.13} parent=5 // pred_check_branch
      %636 = sbr.rel (%p634) target = $region44
    $region43: #{patch_discriminator_forward.13} parent=5 // pred_region
      %s637 = ssub.s32 %s11, 2
      // Predicated region
      $region45: #{patch_discriminator_forward.13} parent=43 // pred_check
        %p638 = pneg %p87
      $region46: #{patch_discriminator_forward.13} parent=43 // pred_check_branch
        %640 = sbr.rel (%p638) target = $region48
      $region47: #{patch_discriminator_forward.13} parent=43 // pred_region
        %s641 = smul.u32 2, %s17
        %p642 = scmp.lt.s32.totalorder %s641, 3
        %s643 = scalar_select %p642, %s641, 3
        %s644 = smul.addr %s643, 4
        %s645 = scalar_lea.vmem %s2, %s644
      $region48: #{patch_discriminator_forward.13} parent=43 // pred_fallthru
        _
      // Predicated region
      $region49: #{patch_discriminator_forward.13} parent=43 // pred_check
        %p646 = pneg %p113
      $region50: #{patch_discriminator_forward.13} parent=43 // pred_check_branch
        %648 = sbr.rel (%p646) target = $region52
      $region51: #{patch_discriminator_forward.13} parent=43 // pred_region
        %p649 = scmp.lt.s32.totalorder %s17, 1
        %s650 = scalar_select %p649, %s17, 1
        %s651 = scalar_lea.vmem %s3, %s650
      $region52: #{patch_discriminator_forward.13} parent=43 // pred_fallthru
        _
      // Predicated region
      $region53: #{patch_discriminator_forward.13} parent=43 // pred_check
        %p652 = pneg %p139
      $region54: #{patch_discriminator_forward.13} parent=43 // pred_check_branch
        %654 = sbr.rel (%p652) target = $region56
      $region55: #{patch_discriminator_forward.13} parent=43 // pred_region
        %p655 = scmp.lt.s32.totalorder %s17, 1
        %s656 = scalar_select %p655, %s17, 1
        %s657 = scalar_lea.vmem %s4, %s656
      $region56: #{patch_discriminator_forward.13} parent=43 // pred_fallthru
        _
    $region44: #{patch_discriminator_forward.13} parent=5 // pred_fallthru
      _
  $region6: #{patch_discriminator_forward.13} parent=0 // loop_footer
    %s15 = sadd.s32 1, %s11
  $region7: #{patch_discriminator_forward.13} parent=0 // loop_footer_branch
    %10 = sbr.rel target = $region3
  $region8: #{patch_discriminator_forward.13} parent=0 // loop_exit
    _

// kernel: patch_discriminator_forward.14
$region0: #{patch_discriminator_forward.14}
  #allocation0 [shape = 'u32[]', space=smem, size = 0x4, offset = 0x4, fixed_abs, tag = 'smem constant byte address 0x4 - core index']
  #allocation1 [shape = 'u32[144,128]{1,0:T(1,128)}', space=vmem, size = 0x12000, scoped, tag = 'internal scratch']
  %s0 = inlined_call_operand.vmem [shape: bf16[32,128], index: 0, kind: input, shape index: {}]
  %s1 = inlined_call_operand.vmem [shape: f32[1,128], index: 1, kind: input, shape index: {}]
  %s2 = inlined_call_operand.vmem [shape: f32[1,128], index: 2, kind: input, shape index: {}]
  %s3 = inlined_call_operand.vmem [shape: bf16[32,128], index: 3, kind: output, shape index: {}]
  %s4 = sld [smem:[#allocation0]]
  $region45: #{patch_discriminator_forward.14} parent=0
    _
  %s6 = ssub.s32 1, %s4
  %s7 = scalar_select 0, %s6, %s4
  loop: start=0, step=1, limit=4
  $region2: #{patch_discriminator_forward.14} parent=0 // loop_pre_header
    _
  $region3: #{patch_discriminator_forward.14} parent=0 // loop_header
    %s9 = sphi 0, %s13
    %p10 = scmp.ge.s32.totalorder %s9, 4
    %s19 = sphi 0, %s21
    %s22 = sphi 0, %s19
    %s23 = sphi 0, %s22
    %s39 = sphi 0, %s23
    %s43 = sphi 0, %s43
    %s45 = sphi 0, %s43
    %s46 = sphi 0, %s45
    %s60 = sphi 0, %s46
    %s64 = sphi 0, %s64
    %s66 = sphi 0, %s64
    %s67 = sphi 0, %s66
    %s81 = sphi 0, %s67
    %s87 = sphi 0, %s89
    %s90 = sphi 0, %s87
    %s91 = sphi 0, %s90
    %s107 = sphi 0, %s91
  $region4: #{patch_discriminator_forward.14} parent=0 // loop_header_branch
    %12 = sbr.rel (%p10) target = $region8
  $region5: #{patch_discriminator_forward.14} parent=0 // loop_body
    %s14 = ssub.s32 %s9, 1
    %s15 = ssub.s32 %s9, 2
    %s16 = sadd.s32 %s9, 1
    %s17 = ssub.s32 %s9, %s16
    %p18 = scmp.eq.s32.totalorder %s17, 0
    %s20 = sadd.s32 %s19, 1
    %s21 = scalar_select %p18, %s19, %s20
    %p24 = pneg %p18
    %p25 = scmp.eq.s32.totalorder %s9, 1
    %p26 = por %p24, %p25
    %p27 = scmp.ne.s32.totalorder %s19, %s22
    %p28 = scmp.eq.s32.totalorder %s9, 0
    %p29 = por %p27, %p28
    %p30 = scmp.ne.s32.totalorder %s19, %s22
    %p31 = scmp.eq.s32.totalorder %s14, 1
    %p32 = por %p30, %p31
    %p33 = scmp.ne.s32.totalorder %s22, %s23
    %p34 = scmp.eq.s32.totalorder %s14, 0
    %p35 = por %p33, %p34
    %p36 = scmp.ne.s32.totalorder %s22, %s23
    %p37 = scmp.eq.s32.totalorder %s15, 1
    %p38 = por %p36, %p37
    %p40 = scmp.ne.s32.totalorder %s23, %s39
    %p41 = scmp.eq.s32.totalorder %s15, 0
    %p42 = por %p40, %p41
    %s44 = sadd.s32 %s43, 1
    %p47 = scmp.eq.s32.totalorder %s9, 1
    %p48 = scmp.ne.s32.totalorder %s43, %s45
    %p49 = scmp.eq.s32.totalorder %s9, 0
    %p50 = por %p48, %p49
    %p51 = scmp.ne.s32.totalorder %s43, %s45
    %p52 = scmp.eq.s32.totalorder %s14, 1
    %p53 = por %p51, %p52
    %p54 = scmp.ne.s32.totalorder %s45, %s46
    %p55 = scmp.eq.s32.totalorder %s14, 0
    %p56 = por %p54, %p55
    %p57 = scmp.ne.s32.totalorder %s45, %s46
    %p58 = scmp.eq.s32.totalorder %s15, 1
    %p59 = por %p57, %p58
    %p61 = scmp.ne.s32.totalorder %s46, %s60
    %p62 = scmp.eq.s32.totalorder %s15, 0
    %p63 = por %p61, %p62
    %s65 = sadd.s32 %s64, 1
    %p68 = scmp.eq.s32.totalorder %s9, 1
    %p69 = scmp.ne.s32.totalorder %s64, %s66
    %p70 = scmp.eq.s32.totalorder %s9, 0
    %p71 = por %p69, %p70
    %p72 = scmp.ne.s32.totalorder %s64, %s66
    %p73 = scmp.eq.s32.totalorder %s14, 1
    %p74 = por %p72, %p73
    %p75 = scmp.ne.s32.totalorder %s66, %s67
    %p76 = scmp.eq.s32.totalorder %s14, 0
    %p77 = por %p75, %p76
    %p78 = scmp.ne.s32.totalorder %s66, %s67
    %p79 = scmp.eq.s32.totalorder %s15, 1
    %p80 = por %p78, %p79
    %p82 = scmp.ne.s32.totalorder %s67, %s81
    %p83 = scmp.eq.s32.totalorder %s15, 0
    %p84 = por %p82, %p83
    %s85 = ssub.s32 %s9, %s16
    %p86 = scmp.eq.s32.totalorder %s85, 0
    %s88 = sadd.s32 %s87, 1
    %s89 = scalar_select %p86, %s87, %s88
    %p92 = pneg %p86
    %p93 = scmp.eq.s32.totalorder %s9, 1
    %p94 = por %p92, %p93
    %p95 = scmp.ne.s32.totalorder %s87, %s90
    %p96 = scmp.eq.s32.totalorder %s9, 0
    %p97 = por %p95, %p96
    %p98 = scmp.ne.s32.totalorder %s87, %s90
    %p99 = scmp.eq.s32.totalorder %s14, 1
    %p100 = por %p98, %p99
    %p101 = scmp.ne.s32.totalorder %s90, %s91
    %p102 = scmp.eq.s32.totalorder %s14, 0
    %p103 = por %p101, %p102
    %p104 = scmp.ne.s32.totalorder %s90, %s91
    %p105 = scmp.eq.s32.totalorder %s15, 1
    %p106 = por %p104, %p105
    %p108 = scmp.ne.s32.totalorder %s91, %s107
    %p109 = scmp.eq.s32.totalorder %s15, 0
    %p110 = por %p108, %p109
    %p111 = scmp.le.s32.totalorder 1, %s9
    %p112 = scmp.lt.s32.totalorder %s9, 3
    %p113 = pnand %p111, %p112
    %p114 = pneg %p113
    // Predicated region
    $region9: #{patch_discriminator_forward.14} parent=5 // pred_check
      _
    $region10: #{patch_discriminator_forward.14} parent=5 // pred_check_branch
      %116 = sbr.rel (%p113) target = $region12
    $region11: #{patch_discriminator_forward.14} parent=5 // pred_region
      %s117 = ssub.s32 %s9, 1
      // Predicated region
      $region13: #{patch_discriminator_forward.14} parent=11 // pred_check
        %p118 = pneg %p56
      $region14: #{patch_discriminator_forward.14} parent=11 // pred_check_branch
        %120 = sbr.rel (%p118) target = $region16
      $region15: #{patch_discriminator_forward.14} parent=11 // pred_region
        _
      $region16: #{patch_discriminator_forward.14} parent=11 // pred_fallthru
        _
      // Predicated region
      $region17: #{patch_discriminator_forward.14} parent=11 // pred_check
        %p121 = pneg %p77
      $region18: #{patch_discriminator_forward.14} parent=11 // pred_check_branch
        %123 = sbr.rel (%p121) target = $region20
      $region19: #{patch_discriminator_forward.14} parent=11 // pred_region
        _
      $region20: #{patch_discriminator_forward.14} parent=11 // pred_fallthru
        _
    $region12: #{patch_discriminator_forward.14} parent=5 // pred_fallthru
      _
    %p124 = scmp.lt.s32.totalorder %s9, 2
    // Predicated region
    $region21: #{patch_discriminator_forward.14} parent=5 // pred_check
      %p125 = pneg %p124
    $region22: #{patch_discriminator_forward.14} parent=5 // pred_check_branch
      %127 = sbr.rel (%p125) target = $region24
    $region23: #{patch_discriminator_forward.14} parent=5 // pred_region
      // Predicated region
      $region25: #{patch_discriminator_forward.14} parent=23 // pred_check
        %p128 = pneg %p29
      $region26: #{patch_discriminator_forward.14} parent=23 // pred_check_branch
        %130 = sbr.rel (%p128) target = $region28
      $region27: #{patch_discriminator_forward.14} parent=23 // pred_region
        %s131 = smul.u32 2, %s9
        %p132 = scmp.lt.s32.totalorder %s131, 3
        %s133 = scalar_select %p132, %s131, 3
        %s134 = smul.addr %s133, 4
        %s135 = scalar_lea.vmem %s0, %s134
        %s136 = smul.u32 2, %s9
      $region28: #{patch_discriminator_forward.14} parent=23 // pred_fallthru
        _
    $region24: #{patch_discriminator_forward.14} parent=5 // pred_fallthru
      _
    %p137 = scmp.le.s32.totalorder 1, %s9
    %p138 = scmp.lt.s32.totalorder %s9, 3
    %p139 = pnand %p137, %p138
    %p140 = pneg %p139
    // Predicated region
    $region29: #{patch_discriminator_forward.14} parent=5 // pred_check
      _
    $region30: #{patch_discriminator_forward.14} parent=5 // pred_check_branch
      %142 = sbr.rel (%p139) target = $region32
    $region31: #{patch_discriminator_forward.14} parent=5 // pred_region
      %s143 = ssub.s32 %s9, 1
      %s144 = smul.u32 2, %s14
      %p145 = scmp.lt.s32.totalorder %s144, 3
      %s146 = scalar_select %p145, %s144, 3
      %s147 = smul.addr %s146, 4
      %s148 = scalar_lea.vmem %s0, %s147
      %p149 = pneg %p35
      %p150 = pneg %p32
      %p151 = pneg %p56
      %p152 = pneg %p53
      %p153 = pneg %p77
      %p154 = pneg %p74
      %p155 = pneg %p103
      %p156 = pneg %p100
      %s157 = smul.u32 2, %s14
      %p158 = scmp.lt.s32.totalorder %s157, 3
      %s159 = scalar_select %p158, %s157, 3
      %s160 = smul.addr %s159, 4
      %s161 = scalar_lea.vmem %s3, %s160
      %s162 = smul.u32 2, %s14
      %p163 = scmp.lt.s32.totalorder %s162, 3
      %s164 = scalar_select %p163, %s162, 3
      %s165 = smul.addr %s164, 4
      %s166 = scalar_lea.vmem %s0, %s165
      %s167 = smul.u32 2, %s14
      %s168 = smul.u32 2, %s14
      %p169 = scmp.lt.s32.totalorder %s168, 3
      %s170 = scalar_select %p169, %s168, 3
      %s171 = smul.addr %s170, 4
      %s172 = scalar_lea.vmem %s3, %s171
      %s173 = smul.u32 2, %s14
      %v174 = vld [vmem:[%s166] sm:$0xf]
      %v175 = vld [vmem:[%s166 + $0x4] sm:$0xf]
      %v176 = vunpack.c.l.bf16 %v174
      %v177 = vunpack.c.l.bf16 %v175
      %v178 = vld [vmem:[%s1] sm:$0x1]
      %v180 = vlaneseq
      %v181 = vshrl.u32 %v180, 7
      %v182 = vsub.s32 0, %v181
      %v183 = vrot.slane %v178, %v182
      %v185 = vmul.f32 %v176, %v183
      %v186 = vmul.f32 %v177, %v183
      %v187 = vld [vmem:[%s2] sm:$0x1]
      %v189 = vlaneseq
      %v190 = vshrl.u32 %v189, 7
      %v191 = vsub.s32 0, %v190
      %v192 = vrot.slane %v187, %v191
      %v194 = vadd.f32 %v185, %v192
      %v195 = vadd.f32 %v186, %v192
      %vm196 = vcmp.ge.f32.partialorder %v194, 0.0
      %vm197 = vcmp.ge.f32.partialorder %v195, 0.0
      %v198 = vmul.f32 %v194, 0.2
      %v199 = vmul.f32 %v195, 0.2
      %v200 = vsel %vm196, %v194, %v198
      %v201 = vsel %vm197, %v195, %v199
      %v202 = vpack.c.bf16 %v201, %v200
      %v204 = vunpack.c.l.b16 %v202
      %v205 = vunpack.c.h.b16 %v202
      %v206 = vpack.c.b16 %v204, %v204
      %v207 = vpack.c.b16 %v205, %v205
      %210 = vst [vmem:[%s172] sm:$0xf] %v206
      %211 = vst [vmem:[%s172 + $0x4] sm:$0xf] %v207
      %s212 = smul.u32 2, %s14
      %p213 = scmp.lt.s32.totalorder %s212, 3
      %s214 = scalar_select %p213, %s212, 3
      %s215 = smul.addr %s214, 4
      %s216 = scalar_lea.vmem %s3, %s215
      // Predicated region
      $region33: #{patch_discriminator_forward.14} parent=31 // pred_check
        %p217 = pneg %p100
      $region34: #{patch_discriminator_forward.14} parent=31 // pred_check_branch
        %219 = sbr.rel (%p217) target = $region36
      $region35: #{patch_discriminator_forward.14} parent=31 // pred_region
        %s220 = smul.u32 2, %s14
      $region36: #{patch_discriminator_forward.14} parent=31 // pred_fallthru
        _
    $region32: #{patch_discriminator_forward.14} parent=5 // pred_fallthru
      _
    %p221 = scmp.le.s32.totalorder 2, %s9
    // Predicated region
    $region37: #{patch_discriminator_forward.14} parent=5 // pred_check
      %p222 = pneg %p221
    $region38: #{patch_discriminator_forward.14} parent=5 // pred_check_branch
      %224 = sbr.rel (%p222) target = $region40
    $region39: #{patch_discriminator_forward.14} parent=5 // pred_region
      %s225 = ssub.s32 %s9, 2
      // Predicated region
      $region41: #{patch_discriminator_forward.14} parent=39 // pred_check
        %p226 = pneg %p106
      $region42: #{patch_discriminator_forward.14} parent=39 // pred_check_branch
        %228 = sbr.rel (%p226) target = $region44
      $region43: #{patch_discriminator_forward.14} parent=39 // pred_region
        %s229 = smul.u32 2, %s15
        %p230 = scmp.lt.s32.totalorder %s229, 3
        %s231 = scalar_select %p230, %s229, 3
        %s232 = smul.addr %s231, 4
        %s233 = scalar_lea.vmem %s3, %s232
      $region44: #{patch_discriminator_forward.14} parent=39 // pred_fallthru
        _
    $region40: #{patch_discriminator_forward.14} parent=5 // pred_fallthru
      _
  $region6: #{patch_discriminator_forward.14} parent=0 // loop_footer
    %s13 = sadd.s32 1, %s9
  $region7: #{patch_discriminator_forward.14} parent=0 // loop_footer_branch
    %8 = sbr.rel target = $region3
  $region8: #{patch_discriminator_forward.14} parent=0 // loop_exit
    _

// kernel: patch_discriminator_forward.15
$region0: #{patch_discriminator_forward.15}
  #allocation0 [shape = 'u32[]', space=smem, size = 0x4, offset = 0x4, fixed_abs, tag = 'smem constant byte address 0x4 - core index']
  #allocation1 [shape = 'u32[144,128]{1,0:T(1,128)}', space=vmem, size = 0x12000, scoped, tag = 'internal scratch']
  %s0 = inlined_call_operand.vmem [shape: bf16[2,60,64], index: 0, kind: input, shape index: {}]
  %s1 = inlined_call_operand.vmem [shape: bf16[16,64,128], index: 1, kind: input, shape index: {}]
  %s2 = inlined_call_operand.vmem [shape: f32[36,1], index: 2, kind: input, shape index: {}]
  %s3 = inlined_call_operand.vmem [shape: f32[2,1,128], index: 3, kind: output, shape index: {0}]
  %s4 = inlined_call_operand.vmem [shape: f32[2,1,128], index: 4, kind: output, shape index: {1}]
  %5 = xla_tuple %s3, %s4
  %s6 = sld [smem:[#allocation0]]
  $region53: #{patch_discriminator_forward.15} parent=0
    _
  %s8 = ssub.s32 1, %s6
  %s9 = scalar_select 0, %s8, %s6
  loop: start=0, step=1, limit=4
  $region2: #{patch_discriminator_forward.15} parent=0 // loop_pre_header
    _
  $region3: #{patch_discriminator_forward.15} parent=0 // loop_header
    %s11 = sphi 0, %s15
    %p12 = scmp.ge.s32.totalorder %s11, 4
    %s21 = sphi 0, %s23
    %s24 = sphi 0, %s21
    %s25 = sphi 0, %s24
    %s41 = sphi 0, %s25
    %s45 = sphi 0, %s45
    %s47 = sphi 0, %s45
    %s48 = sphi 0, %s47
    %s62 = sphi 0, %s48
    %s66 = sphi 0, %s66
    %s68 = sphi 0, %s66
    %s69 = sphi 0, %s68
    %s83 = sphi 0, %s69
    %s89 = sphi 0, %s91
    %s92 = sphi 0, %s89
    %s93 = sphi 0, %s92
    %s109 = sphi 0, %s93
    %s115 = sphi 0, %s117
    %s118 = sphi 0, %s115
    %s119 = sphi 0, %s118
    %s135 = sphi 0, %s119
  $region4: #{patch_discriminator_forward.15} parent=0 // loop_header_branch
    %14 = sbr.rel (%p12) target = $region8
  $region5: #{patch_discriminator_forward.15} parent=0 // loop_body
    %s16 = ssub.s32 %s11, 1
    %s17 = ssub.s32 %s11, 2
    %s18 = sadd.s32 %s11, 1
    %s19 = ssub.s32 %s11, %s18
    %p20 = scmp.eq.s32.totalorder %s19, 0
    %s22 = sadd.s32 %s21, 1
    %s23 = scalar_select %p20, %s21, %s22
    %p26 = pneg %p20
    %p27 = scmp.eq.s32.totalorder %s11, 1
    %p28 = por %p26, %p27
    %p29 = scmp.ne.s32.totalorder %s21, %s24
    %p30 = scmp.eq.s32.totalorder %s11, 0
    %p31 = por %p29, %p30
    %p32 = scmp.ne.s32.totalorder %s21, %s24
    %p33 = scmp.eq.s32.totalorder %s16, 1
    %p34 = por %p32, %p33
    %p35 = scmp.ne.s32.totalorder %s24, %s25
    %p36 = scmp.eq.s32.totalorder %s16, 0
    %p37 = por %p35, %p36
    %p38 = scmp.ne.s32.totalorder %s24, %s25
    %p39 = scmp.eq.s32.totalorder %s17, 1
    %p40 = por %p38, %p39
    %p42 = scmp.ne.s32.totalorder %s25, %s41
    %p43 = scmp.eq.s32.totalorder %s17, 0
    %p44 = por %p42, %p43
    %s46 = sadd.s32 %s45, 1
    %p49 = scmp.eq.s32.totalorder %s11, 1
    %p50 = scmp.ne.s32.totalorder %s45, %s47
    %p51 = scmp.eq.s32.totalorder %s11, 0
    %p52 = por %p50, %p51
    %p53 = scmp.ne.s32.totalorder %s45, %s47
    %p54 = scmp.eq.s32.totalorder %s16, 1
    %p55 = por %p53, %p54
    %p56 = scmp.ne.s32.totalorder %s47, %s48
    %p57 = scmp.eq.s32.totalorder %s16, 0
    %p58 = por %p56, %p57
    %p59 = scmp.ne.s32.totalorder %s47, %s48
    %p60 = scmp.eq.s32.totalorder %s17, 1
    %p61 = por %p59, %p60
    %p63 = scmp.ne.s32.totalorder %s48, %s62
    %p64 = scmp.eq.s32.totalorder %s17, 0
    %p65 = por %p63, %p64
    %s67 = sadd.s32 %s66, 1
    %p70 = scmp.eq.s32.totalorder %s11, 1
    %p71 = scmp.ne.s32.totalorder %s66, %s68
    %p72 = scmp.eq.s32.totalorder %s11, 0
    %p73 = por %p71, %p72
    %p74 = scmp.ne.s32.totalorder %s66, %s68
    %p75 = scmp.eq.s32.totalorder %s16, 1
    %p76 = por %p74, %p75
    %p77 = scmp.ne.s32.totalorder %s68, %s69
    %p78 = scmp.eq.s32.totalorder %s16, 0
    %p79 = por %p77, %p78
    %p80 = scmp.ne.s32.totalorder %s68, %s69
    %p81 = scmp.eq.s32.totalorder %s17, 1
    %p82 = por %p80, %p81
    %p84 = scmp.ne.s32.totalorder %s69, %s83
    %p85 = scmp.eq.s32.totalorder %s17, 0
    %p86 = por %p84, %p85
    %s87 = ssub.s32 %s11, %s18
    %p88 = scmp.eq.s32.totalorder %s87, 0
    %s90 = sadd.s32 %s89, 1
    %s91 = scalar_select %p88, %s89, %s90
    %p94 = pneg %p88
    %p95 = scmp.eq.s32.totalorder %s11, 1
    %p96 = por %p94, %p95
    %p97 = scmp.ne.s32.totalorder %s89, %s92
    %p98 = scmp.eq.s32.totalorder %s11, 0
    %p99 = por %p97, %p98
    %p100 = scmp.ne.s32.totalorder %s89, %s92
    %p101 = scmp.eq.s32.totalorder %s16, 1
    %p102 = por %p100, %p101
    %p103 = scmp.ne.s32.totalorder %s92, %s93
    %p104 = scmp.eq.s32.totalorder %s16, 0
    %p105 = por %p103, %p104
    %p106 = scmp.ne.s32.totalorder %s92, %s93
    %p107 = scmp.eq.s32.totalorder %s17, 1
    %p108 = por %p106, %p107
    %p110 = scmp.ne.s32.totalorder %s93, %s109
    %p111 = scmp.eq.s32.totalorder %s17, 0
    %p112 = por %p110, %p111
    %s113 = ssub.s32 %s11, %s18
    %p114 = scmp.eq.s32.totalorder %s113, 0
    %s116 = sadd.s32 %s115, 1
    %s117 = scalar_select %p114, %s115, %s116
    %p120 = pneg %p114
    %p121 = scmp.eq.s32.totalorder %s11, 1
    %p122 = por %p120, %p121
    %p123 = scmp.ne.s32.totalorder %s115, %s118
    %p124 = scmp.eq.s32.totalorder %s11, 0
    %p125 = por %p123, %p124
    %p126 = scmp.ne.s32.totalorder %s115, %s118
    %p127 = scmp.eq.s32.totalorder %s16, 1
    %p128 = por %p126, %p127
    %p129 = scmp.ne.s32.totalorder %s118, %s119
    %p130 = scmp.eq.s32.totalorder %s16, 0
    %p131 = por %p129, %p130
    %p132 = scmp.ne.s32.totalorder %s118, %s119
    %p133 = scmp.eq.s32.totalorder %s17, 1
    %p134 = por %p132, %p133
    %p136 = scmp.ne.s32.totalorder %s119, %s135
    %p137 = scmp.eq.s32.totalorder %s17, 0
    %p138 = por %p136, %p137
    %p139 = scmp.le.s32.totalorder 1, %s11
    %p140 = scmp.lt.s32.totalorder %s11, 3
    %p141 = pnand %p139, %p140
    %p142 = pneg %p141
    // Predicated region
    $region9: #{patch_discriminator_forward.15} parent=5 // pred_check
      _
    $region10: #{patch_discriminator_forward.15} parent=5 // pred_check_branch
      %144 = sbr.rel (%p141) target = $region12
    $region11: #{patch_discriminator_forward.15} parent=5 // pred_region
      %s145 = ssub.s32 %s11, 1
      // Predicated region
      $region13: #{patch_discriminator_forward.15} parent=11 // pred_check
        %p146 = pneg %p58
      $region14: #{patch_discriminator_forward.15} parent=11 // pred_check_branch
        %148 = sbr.rel (%p146) target = $region16
      $region15: #{patch_discriminator_forward.15} parent=11 // pred_region
        _
      $region16: #{patch_discriminator_forward.15} parent=11 // pred_fallthru
        _
      // Predicated region
      $region17: #{patch_discriminator_forward.15} parent=11 // pred_check
        %p149 = pneg %p79
      $region18: #{patch_discriminator_forward.15} parent=11 // pred_check_branch
        %151 = sbr.rel (%p149) target = $region20
      $region19: #{patch_discriminator_forward.15} parent=11 // pred_region
        _
      $region20: #{patch_discriminator_forward.15} parent=11 // pred_fallthru
        _
    $region12: #{patch_discriminator_forward.15} parent=5 // pred_fallthru
      _
    %p152 = scmp.lt.s32.totalorder %s11, 2
    // Predicated region
    $region21: #{patch_discriminator_forward.15} parent=5 // pred_check
      %p153 = pneg %p152
    $region22: #{patch_discriminator_forward.15} parent=5 // pred_check_branch
      %155 = sbr.rel (%p153) target = $region24
    $region23: #{patch_discriminator_forward.15} parent=5 // pred_region
      // Predicated region
      $region25: #{patch_discriminator_forward.15} parent=23 // pred_check
        %p156 = pneg %p31
      $region26: #{patch_discriminator_forward.15} parent=23 // pred_check_branch
        %158 = sbr.rel (%p156) target = $region28
      $region27: #{patch_discriminator_forward.15} parent=23 // pred_region
        %p159 = scmp.lt.s32.totalorder %s11, 1
        %s160 = scalar_select %p159, %s11, 1
        %s161 = smul.addr %s160, 8
        %s162 = smul.addr %s161, 4
        %s163 = scalar_lea.vmem %s0, %s162
      $region28: #{patch_discriminator_forward.15} parent=23 // pred_fallthru
        _
    $region24: #{patch_discriminator_forward.15} parent=5 // pred_fallthru
      _
    %p164 = scmp.le.s32.totalorder 1, %s11
    %p165 = scmp.lt.s32.totalorder %s11, 3
    %p166 = pnand %p164, %p165
    %p167 = pneg %p166
    // Predicated region
    $region29: #{patch_discriminator_forward.15} parent=5 // pred_check
      _
    $region30: #{patch_discriminator_forward.15} parent=5 // pred_check_branch
      %169 = sbr.rel (%p166) target = $region32
    $region31: #{patch_discriminator_forward.15} parent=5 // pred_region
      %s170 = ssub.s32 %s11, 1
      %p171 = scmp.lt.s32.totalorder %s16, 1
      %s172 = scalar_select %p171, %s16, 1
      %s173 = smul.addr %s172, 8
      %s174 = smul.addr %s173, 4
      %s175 = scalar_lea.vmem %s0, %s174
      %p176 = pneg %p37
      %p177 = pneg %p34
      %p178 = pneg %p58
      %p179 = pneg %p55
      %p180 = pneg %p79
      %p181 = pneg %p76
      %p182 = pneg %p105
      %p183 = pneg %p102
      %p184 = scmp.lt.s32.totalorder %s16, 1
      %s185 = scalar_select %p184, %s16, 1
      %s186 = scalar_lea.vmem %s3, %s185
      %p187 = pneg %p131
      %p188 = pneg %p128
      %p189 = scmp.lt.s32.totalorder %s16, 1
      %s190 = scalar_select %p189, %s16, 1
      %s191 = scalar_lea.vmem %s4, %s190
      %p192 = scmp.lt.s32.totalorder %s16, 1
      %s193 = scalar_select %p192, %s16, 1
      %s194 = smul.addr %s193, 8
      %s195 = smul.addr %s194, 4
      %s196 = scalar_lea.vmem %s0, %s195
      %p197 = scmp.lt.s32.totalorder %s16, 1
      %s198 = scalar_select %p197, %s16, 1
      %s199 = scalar_lea.vmem %s3, %s198
      %p200 = scmp.lt.s32.totalorder %s16, 1
      %s201 = scalar_select %p200, %s16, 1
      %s202 = scalar_lea.vmem %s4, %s201
      %v204 = vld [vmem:[%s196] sm:$0xf]
      %v205 = vld [vmem:[%s196 + $0x4] sm:$0xf]
      %v206 = vld [vmem:[%s196 + $0x8] sm:$0xf]
      %v207 = vld [vmem:[%s196 + $0xc] sm:$0xf]
      %v208 = vld [vmem:[%s196 + $0x10] sm:$0x3]
      %v209 = vld [vmem:[%s1] sm:$0xf]
      %v210 = vld [vmem:[%s1 + $0x4] sm:$0xf]
      %v211 = vld [vmem:[%s1 + $0x8] sm:$0xf]
      %v212 = vld [vmem:[%s1 + $0xc] sm:$0xf]
      %v213 = vld [vmem:[%s1 + $0x10] sm:$0xf]
      %v214 = vld [vmem:[%s1 + $0x14] sm:$0xf]
      %v215 = vld [vmem:[%s1 + $0x18] sm:$0xf]
      %v216 = vld [vmem:[%s1 + $0x1c] sm:$0xf]
      %v217 = vld [vmem:[%s196 + $0x10] sm:$0x7]
      %s218 = scalar_lea.vmem %s1, 32
      %v219 = vld [vmem:[%s218] sm:$0xf]
      %v220 = vld [vmem:[%s218 + $0x4] sm:$0xf]
      %v221 = vld [vmem:[%s218 + $0x8] sm:$0xf]
      %v222 = vld [vmem:[%s218 + $0xc] sm:$0xf]
      %v223 = vld [vmem:[%s218 + $0x10] sm:$0xf]
      %v224 = vld [vmem:[%s218 + $0x14] sm:$0xf]
      %v225 = vld [vmem:[%s218 + $0x18] sm:$0xf]
      %v226 = vld [vmem:[%s218 + $0x1c] sm:$0xf]
      %v232 = vunpack.c.l.b16 %v204
      %v233 = vunpack.c.l.b16 %v205
      %v234 = vunpack.c.l.b16 %v206
      %v235 = vunpack.c.l.b16 %v207
      %v236 = vunpack.c.l.b16 %v217
      %v237 = vpack.c.b16 %v233, %v232
      %v238 = vpack.c.b16 %v235, %v234
      %v239 = vpack.c.b16 %v236, %v236
      %vm240 = vsmask.f32 7424
      %v242 = vshrl.u32 %v237, 16
      %v244 = vshll.u32 %v237, 16
      %v246 = vrot.slane %v244, 1
      %v247 = vor.u32 %v242, %v246
      %v249 = vshll.u32 %v238, 16
      %v251 = vrot.slane %v249, 1
      %v252 = vsel %vm240, %v247, %v251
      %v253 = vshrl.u32 %v238, 16
      %v255 = vor.u32 %v253, %v251
      %v257 = vshll.u32 %v239, 16
      %v259 = vrot.slane %v257, 1
      %v260 = vsel %vm240, %v255, %v259
      %v261 = vshrl.u32 %v239, 16
      %v263 = vor.u32 %v261, %v259
      %v272 = vunpack.c.l.b16 %v219
      %v273 = vunpack.c.l.b16 %v220
      %v274 = vunpack.c.l.b16 %v221
      %v275 = vunpack.c.l.b16 %v222
      %v276 = vunpack.c.l.b16 %v223
      %v277 = vunpack.c.l.b16 %v224
      %v278 = vunpack.c.l.b16 %v225
      %v279 = vunpack.c.l.b16 %v226
      %v280 = vpack.c.b16 %v273, %v272
      %v281 = vpack.c.b16 %v275, %v274
      %v282 = vpack.c.b16 %v277, %v276
      %v283 = vpack.c.b16 %v279, %v278
      %vm288 = vcmask 523264
      %v290 = vsel %vm288, %v252, 0
      %v293 = vsel %vm288, %v260, 0
      %v296 = vsel %vm288, %v263, 0
      %298 = vmatprep.subr.bf16.mxu0 0
      %299 = vmatpush1.bf16.msra.mxu0 %v280
      %300 = vmatprep.subr.bf16.mxu0 0
      %301 = vmatpush1.bf16.msra.mxu0 %v281
      %302 = vmatprep.subr.bf16.mxu0 0
      %303 = vmatpush1.bf16.msra.mxu0 %v282
      %304 = vmatprep.subr.bf16.mxu0 0
      %305 = vmatpush1.bf16.msra.mxu0 %v283
      %306 = vmatprep.subr.bf16.mxu0 0
      %307 = vmatpush1.bf16.msra.mxu0 0
      %308 = vmatprep.subr.bf16.mxu0 0
      %309 = vmatpush1.bf16.msra.mxu0 0
      %310 = vmatprep.subr.bf16.mxu0 0
      %311 = vmatpush1.bf16.msra.mxu0 0
      %312 = vmatprep.subr.bf16.mxu0 0
      %313 = vmatpush1.bf16.msra.mxu0 0
      %314 = vmatprep.subr.bf16.mxu0 0
      %315 = vmatpush1.bf16.msra.mxu0 0
      %316 = vmatprep.subr.bf16.mxu0 0
      %317 = vmatpush1.bf16.msra.mxu0 0
      %318 = vmatprep.subr.bf16.mxu0 0
      %319 = vmatpush1.bf16.msra.mxu0 0
      %320 = vmatprep.subr.bf16.mxu0 0
      %321 = vmatpush1.bf16.msra.mxu0 0
      %322 = vmatprep.subr.bf16.mxu0 0
      %323 = vmatpush1.bf16.msra.mxu0 0
      %324 = vmatprep.subr.bf16.mxu0 0
      %325 = vmatpush1.bf16.msra.mxu0 0
      %326 = vmatprep.subr.bf16.mxu0 0
      %327 = vmatpush1.bf16.msra.mxu0 0
      %328 = vmatprep.subr.bf16.mxu0 0
      %329 = vmatpush1.bf16.msra.mxu0 0
      %330 = vmatprep.mubr.bf16.mxu0 0
      %331 = vmatmul.mubr.bf16.gmra.mrb[0].mxu0 %v290
      %v332 = vpop.f32.mrb[0].mxu0
      %v333 = vadd.f32 0.0, %v332
      %v334 = vpop.f32.mrb[0].mxu0
      %v335 = vpop.f32.mrb[0].mxu0
      %v336 = vadd.f32 0.0, %v335
      %v337 = vpop.f32.mrb[0].mxu0
      %338 = vmatprep.mubr.bf16.mxu0 0
      %339 = vmatmul.mubr.bf16.gmra.mrb[0].mxu0 %v293
      %v340 = vpop.f32.mrb[0].mxu0
      %v341 = vadd.f32 0.0, %v340
      %v342 = vpop.f32.mrb[0].mxu0
      %v343 = vpop.f32.mrb[0].mxu0
      %v344 = vadd.f32 0.0, %v343
      %v345 = vpop.f32.mrb[0].mxu0
      %346 = vmatprep.mubr.bf16.mxu0 0
      %347 = vmatmul.mubr.bf16.gmra.mrb[0].mxu0 %v296
      %v348 = vpop.f32.mrb[0].mxu0
      %v349 = vadd.f32 0.0, %v348
      %v350 = vpop.f32.mrb[0].mxu0
      %v351 = vpop.f32.mrb[0].mxu0
      %v352 = vpop.f32.mrb[0].mxu0
      %353 = vdwg.mxu0
      %v355 = vunpack.c.l.b16 %v208
      %v356 = vpack.c.b16 %v355, %v355
      %v365 = vunpack.c.l.b16 %v209
      %v366 = vunpack.c.l.b16 %v210
      %v367 = vunpack.c.l.b16 %v211
      %v368 = vunpack.c.l.b16 %v212
      %v369 = vunpack.c.l.b16 %v213
      %v370 = vunpack.c.l.b16 %v214
      %v371 = vunpack.c.l.b16 %v215
      %v372 = vunpack.c.l.b16 %v216
      %v373 = vpack.c.b16 %v366, %v365
      %v374 = vpack.c.b16 %v368, %v367
      %v375 = vpack.c.b16 %v370, %v369
      %v376 = vpack.c.b16 %v372, %v371
      %v381 = vsel %vm288, %v237, 0
      %v383 = vsel %vm288, %v238, 0
      %v386 = vsel %vm288, %v356, 0
      %388 = vmatprep.subr.bf16.mxu0 0
      %389 = vmatpush1.bf16.msra.mxu0 %v373
      %390 = vmatprep.subr.bf16.mxu0 0
      %391 = vmatpush1.bf16.msra.mxu0 %v374
      %392 = vmatprep.subr.bf16.mxu0 0
      %393 = vmatpush1.bf16.msra.mxu0 %v375
      %394 = vmatprep.subr.bf16.mxu0 0
      %395 = vmatpush1.bf16.msra.mxu0 %v376
      %396 = vmatprep.subr.bf16.mxu0 0
      %397 = vmatpush1.bf16.msra.mxu0 0
      %398 = vmatprep.subr.bf16.mxu0 0
      %399 = vmatpush1.bf16.msra.mxu0 0
      %400 = vmatprep.subr.bf16.mxu0 0
      %401 = vmatpush1.bf16.msra.mxu0 0
      %402 = vmatprep.subr.bf16.mxu0 0
      %403 = vmatpush1.bf16.msra.mxu0 0
      %404 = vmatprep.subr.bf16.mxu0 0
      %405 = vmatpush1.bf16.msra.mxu0 0
      %406 = vmatprep.subr.bf16.mxu0 0
      %407 = vmatpush1.bf16.msra.mxu0 0
      %408 = vmatprep.subr.bf16.mxu0 0
      %409 = vmatpush1.bf16.msra.mxu0 0
      %410 = vmatprep.subr.bf16.mxu0 0
      %411 = vmatpush1.bf16.msra.mxu0 0
      %412 = vmatprep.subr.bf16.mxu0 0
      %413 = vmatpush1.bf16.msra.mxu0 0
      %414 = vmatprep.subr.bf16.mxu0 0
      %415 = vmatpush1.bf16.msra.mxu0 0
      %416 = vmatprep.subr.bf16.mxu0 0
      %417 = vmatpush1.bf16.msra.mxu0 0
      %418 = vmatprep.subr.bf16.mxu0 0
      %419 = vmatpush1.bf16.msra.mxu0 0
      %420 = vmatprep.mubr.bf16.mxu0 0
      %421 = vmatmul.mubr.bf16.gmra.mrb[0].mxu0 %v381
      %v422 = vpop.f32.mrb[0].mxu0
      %v423 = vadd.f32 %v333, %v422
      %v424 = vpop.f32.mrb[0].mxu0
      %v425 = vpop.f32.mrb[0].mxu0
      %v426 = vadd.f32 %v336, %v425
      %v427 = vpop.f32.mrb[0].mxu0
      %428 = vmatprep.mubr.bf16.mxu0 0
      %429 = vmatmul.mubr.bf16.gmra.mrb[0].mxu0 %v383
      %v430 = vpop.f32.mrb[0].mxu0
      %v431 = vadd.f32 %v341, %v430
      %v432 = vpop.f32.mrb[0].mxu0
      %v433 = vpop.f32.mrb[0].mxu0
      %v434 = vadd.f32 %v344, %v433
      %v435 = vpop.f32.mrb[0].mxu0
      %436 = vmatprep.mubr.bf16.mxu0 0
      %437 = vmatmul.mubr.bf16.gmra.mrb[0].mxu0 %v386
      %v438 = vpop.f32.mrb[0].mxu0
      %v439 = vadd.f32 %v349, %v438
      %v440 = vpop.f32.mrb[0].mxu0
      %v441 = vpop.f32.mrb[0].mxu0
      %v442 = vpop.f32.mrb[0].mxu0
      %443 = vdwg.mxu0
      %v444 = vld [vmem:[%s196] sm:$0xe]
      %s445 = scalar_lea.vmem %s1, 64
      %v446 = vld [vmem:[%s445] sm:$0xf]
      %v447 = vld [vmem:[%s445 + $0x4] sm:$0xf]
      %v448 = vld [vmem:[%s445 + $0x8] sm:$0xf]
      %v449 = vld [vmem:[%s445 + $0xc] sm:$0xf]
      %v450 = vld [vmem:[%s445 + $0x10] sm:$0xf]
      %v451 = vld [vmem:[%s445 + $0x14] sm:$0xf]
      %v452 = vld [vmem:[%s445 + $0x18] sm:$0xf]
      %v453 = vld [vmem:[%s445 + $0x1c] sm:$0xf]
      %v455 = vunpack.c.l.b16 %v444
      %v456 = vpack.c.b16 %v233, %v455
      %vm457 = vcmask 1046528
      %v458 = vrot.slane %v456, 1
      %v459 = vrot.slane %v238, 1
      %v460 = vsel %vm457, %v458, %v459
      %v461 = vrot.slane %v239, 1
      %v462 = vsel %vm457, %v459, %v461
      %v471 = vunpack.c.l.b16 %v446
      %v472 = vunpack.c.l.b16 %v447
      %v473 = vunpack.c.l.b16 %v448
      %v474 = vunpack.c.l.b16 %v449
      %v475 = vunpack.c.l.b16 %v450
      %v476 = vunpack.c.l.b16 %v451
      %v477 = vunpack.c.l.b16 %v452
      %v478 = vunpack.c.l.b16 %v453
      %v479 = vpack.c.b16 %v472, %v471
      %v480 = vpack.c.b16 %v474, %v473
      %v481 = vpack.c.b16 %v476, %v475
      %v482 = vpack.c.b16 %v478, %v477
      %v488 = vsel %vm288, %v460, 0
      %v491 = vsel %vm288, %v462, 0
      %v494 = vsel %vm288, %v461, 0
      %496 = vmatprep.subr.bf16.mxu0 0
      %497 = vmatpush1.bf16.msra.mxu0 %v479
      %498 = vmatprep.subr.bf16.mxu0 0
      %499 = vmatpush1.bf16.msra.mxu0 %v480
      %500 = vmatprep.subr.bf16.mxu0 0
      %501 = vmatpush1.bf16.msra.mxu0 %v481
      %502 = vmatprep.subr.bf16.mxu0 0
      %503 = vmatpush1.bf16.msra.mxu0 %v482
      %504 = vmatprep.subr.bf16.mxu0 0
      %505 = vmatpush1.bf16.msra.mxu0 0
      %506 = vmatprep.subr.bf16.mxu0 0
      %507 = vmatpush1.bf16.msra.mxu0 0
      %508 = vmatprep.subr.bf16.mxu0 0
      %509 = vmatpush1.bf16.msra.mxu0 0
      %510 = vmatprep.subr.bf16.mxu0 0
      %511 = vmatpush1.bf16.msra.mxu0 0
      %512 = vmatprep.subr.bf16.mxu0 0
      %513 = vmatpush1.bf16.msra.mxu0 0
      %514 = vmatprep.subr.bf16.mxu0 0
      %515 = vmatpush1.bf16.msra.mxu0 0
      %516 = vmatprep.subr.bf16.mxu0 0
      %517 = vmatpush1.bf16.msra.mxu0 0
      %518 = vmatprep.subr.bf16.mxu0 0
      %519 = vmatpush1.bf16.msra.mxu0 0
      %520 = vmatprep.subr.bf16.mxu0 0
      %521 = vmatpush1.bf16.msra.mxu0 0
      %522 = vmatprep.subr.bf16.mxu0 0
      %523 = vmatpush1.bf16.msra.mxu0 0
      %524 = vmatprep.subr.bf16.mxu0 0
      %525 = vmatpush1.bf16.msra.mxu0 0
      %526 = vmatprep.subr.bf16.mxu0 0
      %527 = vmatpush1.bf16.msra.mxu0 0
      %528 = vmatprep.mubr.bf16.mxu0 0
      %529 = vmatmul.mubr.bf16.gmra.mrb[0].mxu0 %v488
      %v530 = vpop.f32.mrb[0].mxu0
      %v531 = vadd.f32 0.0, %v530
      %v532 = vpop.f32.mrb[0].mxu0
      %v533 = vpop.f32.mrb[0].mxu0
      %v534 = vadd.f32 0.0, %v533
      %v535 = vpop.f32.mrb[0].mxu0
      %536 = vmatprep.mubr.bf16.mxu0 0
      %537 = vmatmul.mubr.bf16.gmra.mrb[0].mxu0 %v491
      %v538 = vpop.f32.mrb[0].mxu0
      %v539 = vadd.f32 0.0, %v538
      %v540 = vpop.f32.mrb[0].mxu0
      %v541 = vpop.f32.mrb[0].mxu0
      %v542 = vadd.f32 0.0, %v541
      %v543 = vpop.f32.mrb[0].mxu0
      %544 = vmatprep.mubr.bf16.mxu0 0
      %545 = vmatmul.mubr.bf16.gmra.mrb[0].mxu0 %v494
      %v546 = vpop.f32.mrb[0].mxu0
      %v547 = vadd.f32 0.0, %v546
      %v548 = vpop.f32.mrb[0].mxu0
      %v549 = vpop.f32.mrb[0].mxu0
      %v550 = vpop.f32.mrb[0].mxu0
      %551 = vdwg.mxu0
      %v552 = vadd.f32 %v423, %v531
      %v553 = vadd.f32 %v426, %v534
      %v554 = vadd.f32 %v431, %v539
      %v555 = vadd.f32 %v434, %v542
      %v556 = vadd.f32 %v439, %v547
      %v557 = vld [vmem:[%s196 + $0x10] sm:$0xf]
      %s558 = scalar_lea.vmem %s1, 96
      %v559 = vld [vmem:[%s558] sm:$0xf]
      %v560 = vld [vmem:[%s558 + $0x4] sm:$0xf]
      %v561 = vld [vmem:[%s558 + $0x8] sm:$0xf]
      %v562 = vld [vmem:[%s558 + $0xc] sm:$0xf]
      %v563 = vld [vmem:[%s558 + $0x10] sm:$0xf]
      %v564 = vld [vmem:[%s558 + $0x14] sm:$0xf]
      %v565 = vld [vmem:[%s558 + $0x18] sm:$0xf]
      %v566 = vld [vmem:[%s558 + $0x1c] sm:$0xf]
      %v568 = vunpack.c.l.b16 %v557
      %v569 = vpack.c.b16 %v568, %v568
      %vm570 = vsmask.f32 6400
      %v572 = vshrl.u32 %v456, 16
      %v574 = vrot.slane %v572, 1
      %v575 = vshll.u32 %v456, 16
      %v577 = vrot.slane %v575, 2
      %v578 = vor.u32 %v574, %v577
      %v579 = vrot.slane %v253, 1
      %v580 = vrot.slane %v249, 2
      %v581 = vor.u32 %v579, %v580
      %v582 = vsel %vm570, %v578, %v581
      %v584 = vshrl.u32 %v569, 16
      %v586 = vrot.slane %v584, 1
      %v587 = vshll.u32 %v569, 16
      %v589 = vrot.slane %v587, 2
      %v590 = vor.u32 %v586, %v589
      %v591 = vsel %vm570, %v581, %v590
      %v600 = vunpack.c.l.b16 %v559
      %v601 = vunpack.c.l.b16 %v560
      %v602 = vunpack.c.l.b16 %v561
      %v603 = vunpack.c.l.b16 %v562
      %v604 = vunpack.c.l.b16 %v563
      %v605 = vunpack.c.l.b16 %v564
      %v606 = vunpack.c.l.b16 %v565
      %v607 = vunpack.c.l.b16 %v566
      %v608 = vpack.c.b16 %v601, %v600
      %v609 = vpack.c.b16 %v603, %v602
      %v610 = vpack.c.b16 %v605, %v604
      %v611 = vpack.c.b16 %v607, %v606
      %v617 = vsel %vm288, %v582, 0
      %v620 = vsel %vm288, %v591, 0
      %v623 = vsel %vm288, %v590, 0
      %625 = vmatprep.subr.bf16.mxu0 0
      %626 = vmatpush1.bf16.msra.mxu0 %v608
      %627 = vmatprep.subr.bf16.mxu0 0
      %628 = vmatpush1.bf16.msra.mxu0 %v609
      %629 = vmatprep.subr.bf16.mxu0 0
      %630 = vmatpush1.bf16.msra.mxu0 %v610
      %631 = vmatprep.subr.bf16.mxu0 0
      %632 = vmatpush1.bf16.msra.mxu0 %v611
      %633 = vmatprep.subr.bf16.mxu0 0
      %634 = vmatpush1.bf16.msra.mxu0 0
      %635 = vmatprep.subr.bf16.mxu0 0
      %636 = vmatpush1.bf16.msra.mxu0 0
      %637 = vmatprep.subr.bf16.mxu0 0
      %638 = vmatpush1.bf16.msra.mxu0 0
      %639 = vmatprep.subr.bf16.mxu0 0
      %640 = vmatpush1.bf16.msra.mxu0 0
      %641 = vmatprep.subr.bf16.mxu0 0
      %642 = vmatpush1.bf16.msra.mxu0 0
      %643 = vmatprep.subr.bf16.mxu0 0
      %644 = vmatpush1.bf16.msra.mxu0 0
      %645 = vmatprep.subr.bf16.mxu0 0
      %646 = vmatpush1.bf16.msra.mxu0 0
      %647 = vmatprep.subr.bf16.mxu0 0
      %648 = vmatpush1.bf16.msra.mxu0 0
      %649 = vmatprep.subr.bf16.mxu0 0
      %650 = vmatpush1.bf16.msra.mxu0 0
      %651 = vmatprep.subr.bf16.mxu0 0
      %652 = vmatpush1.bf16.msra.mxu0 0
      %653 = vmatprep.subr.bf16.mxu0 0
      %654 = vmatpush1.bf16.msra.mxu0 0
      %655 = vmatprep.subr.bf16.mxu0 0
      %656 = vmatpush1.bf16.msra.mxu0 0
      %657 = vmatprep.mubr.bf16.mxu0 0
      %658 = vmatmul.mubr.bf16.gmra.mrb[0].mxu0 %v617
      %v659 = vpop.f32.mrb[0].mxu0
      %v660 = vadd.f32 0.0, %v659
      %v661 = vpop.f32.mrb[0].mxu0
      %v662 = vpop.f32.mrb[0].mxu0
      %v663 = vadd.f32 0.0, %v662
      %v664 = vpop.f32.mrb[0].mxu0
      %665 = vmatprep.mubr.bf16.mxu0 0
      %666 = vmatmul.mubr.bf16.gmra.mrb[0].mxu0 %v620
      %v667 = vpop.f32.mrb[0].mxu0
      %v668 = vadd.f32 0.0, %v667
      %v669 = vpop.f32.mrb[0].mxu0
      %v670 = vpop.f32.mrb[0].mxu0
      %v671 = vadd.f32 0.0, %v670
      %v672 = vpop.f32.mrb[0].mxu0
      %673 = vmatprep.mubr.bf16.mxu0 0
      %674 = vmatmul.mubr.bf16.gmra.mrb[0].mxu0 %v623
      %v675 = vpop.f32.mrb[0].mxu0
      %v676 = vadd.f32 0.0, %v675
      %v677 = vpop.f32.mrb[0].mxu0
      %v678 = vpop.f32.mrb[0].mxu0
      %v679 = vpop.f32.mrb[0].mxu0
      %680 = vdwg.mxu0
      %v681 = vadd.f32 %v552, %v660
      %v682 = vadd.f32 %v553, %v663
      %v683 = vadd.f32 %v554, %v668
      %v684 = vadd.f32 %v555, %v671
      %v685 = vadd.f32 %v556, %v676
      %v686 = vld [vmem:[%s196] sm:$0x8]
      %v687 = vld [vmem:[%s196 + $0x4] sm:$0xf]
      %v688 = vld [vmem:[%s196 + $0x8] sm:$0xf]
      %v689 = vld [vmem:[%s196 + $0xc] sm:$0xf]
      %v690 = vld [vmem:[%s196 + $0x10] sm:$0xf]
      %v691 = vld [vmem:[%s196 + $0x14] sm:$0x1]
      %s692 = scalar_lea.vmem %s1, 128
      %v693 = vld [vmem:[%s692] sm:$0xf]
      %v694 = vld [vmem:[%s692 + $0x4] sm:$0xf]
      %v695 = vld [vmem:[%s692 + $0x8] sm:$0xf]
      %v696 = vld [vmem:[%s692 + $0xc] sm:$0xf]
      %v697 = vld [vmem:[%s692 + $0x10] sm:$0xf]
      %v698 = vld [vmem:[%s692 + $0x14] sm:$0xf]
      %v699 = vld [vmem:[%s692 + $0x18] sm:$0xf]
      %v700 = vld [vmem:[%s692 + $0x1c] sm:$0xf]
      %v707 = vunpack.c.l.b16 %v686
      %v708 = vunpack.c.l.b16 %v687
      %v709 = vunpack.c.l.b16 %v688
      %v710 = vunpack.c.l.b16 %v689
      %v711 = vunpack.c.l.b16 %v690
      %v712 = vunpack.c.l.b16 %v691
      %v713 = vpack.c.b16 %v708, %v707
      %v714 = vpack.c.b16 %v710, %v709
      %v715 = vpack.c.b16 %v712, %v711
      %vm716 = vcmask 1044480
      %v717 = vrot.slane %v713, 3
      %v718 = vrot.slane %v714, 3
      %v719 = vsel %vm716, %v717, %v718
      %v720 = vrot.slane %v715, 3
      %v721 = vsel %vm716, %v718, %v720
      %v730 = vunpack.c.l.b16 %v693
      %v731 = vunpack.c.l.b16 %v694
      %v732 = vunpack.c.l.b16 %v695
      %v733 = vunpack.c.l.b16 %v696
      %v734 = vunpack.c.l.b16 %v697
      %v735 = vunpack.c.l.b16 %v698
      %v736 = vunpack.c.l.b16 %v699
      %v737 = vunpack.c.l.b16 %v700
      %v738 = vpack.c.b16 %v731, %v730
      %v739 = vpack.c.b16 %v733, %v732
      %v740 = vpack.c.b16 %v735, %v734
      %v741 = vpack.c.b16 %v737, %v736
      %v747 = vsel %vm288, %v719, 0
      %v750 = vsel %vm288, %v721, 0
      %v753 = vsel %vm288, %v720, 0
      %755 = vmatprep.subr.bf16.mxu0 0
      %756 = vmatpush1.bf16.msra.mxu0 %v738
      %757 = vmatprep.subr.bf16.mxu0 0
      %758 = vmatpush1.bf16.msra.mxu0 %v739
      %759 = vmatprep.subr.bf16.mxu0 0
      %760 = vmatpush1.bf16.msra.mxu0 %v740
      %761 = vmatprep.subr.bf16.mxu0 0
      %762 = vmatpush1.bf16.msra.mxu0 %v741
      %763 = vmatprep.subr.bf16.mxu0 0
      %764 = vmatpush1.bf16.msra.mxu0 0
      %765 = vmatprep.subr.bf16.mxu0 0
      %766 = vmatpush1.bf16.msra.mxu0 0
      %767 = vmatprep.subr.bf16.mxu0 0
      %768 = vmatpush1.bf16.msra.mxu0 0
      %769 = vmatprep.subr.bf16.mxu0 0
      %770 = vmatpush1.bf16.msra.mxu0 0
      %771 = vmatprep.subr.bf16.mxu0 0
      %772 = vmatpush1.bf16.msra.mxu0 0
      %773 = vmatprep.subr.bf16.mxu0 0
      %774 = vmatpush1.bf16.msra.mxu0 0
      %775 = vmatprep.subr.bf16.mxu0 0
      %776 = vmatpush1.bf16.msra.mxu0 0
      %777 = vmatprep.subr.bf16.mxu0 0
      %778 = vmatpush1.bf16.msra.mxu0 0
      %779 = vmatprep.subr.bf16.mxu0 0
      %780 = vmatpush1.bf16.msra.mxu0 0
      %781 = vmatprep.subr.bf16.mxu0 0
      %782 = vmatpush1.bf16.msra.mxu0 0
      %783 = vmatprep.subr.bf16.mxu0 0
      %784 = vmatpush1.bf16.msra.mxu0 0
      %785 = vmatprep.subr.bf16.mxu0 0
      %786 = vmatpush1.bf16.msra.mxu0 0
      %787 = vmatprep.mubr.bf16.mxu0 0
      %788 = vmatmul.mubr.bf16.gmra.mrb[0].mxu0 %v747
      %v789 = vpop.f32.mrb[0].mxu0
      %v790 = vadd.f32 0.0, %v789
      %v791 = vpop.f32.mrb[0].mxu0
      %v792 = vpop.f32.mrb[0].mxu0
      %v793 = vadd.f32 0.0, %v792
      %v794 = vpop.f32.mrb[0].mxu0
      %795 = vmatprep.mubr.bf16.mxu0 0
      %796 = vmatmul.mubr.bf16.gmra.mrb[0].mxu0 %v750
      %v797 = vpop.f32.mrb[0].mxu0
      %v798 = vadd.f32 0.0, %v797
      %v799 = vpop.f32.mrb[0].mxu0
      %v800 = vpop.f32.mrb[0].mxu0
      %v801 = vadd.f32 0.0, %v800
      %v802 = vpop.f32.mrb[0].mxu0
      %803 = vmatprep.mubr.bf16.mxu0 0
      %804 = vmatmul.mubr.bf16.gmra.mrb[0].mxu0 %v753
      %v805 = vpop.f32.mrb[0].mxu0
      %v806 = vadd.f32 0.0, %v805
      %v807 = vpop.f32.mrb[0].mxu0
      %v808 = vpop.f32.mrb[0].mxu0
      %v809 = vpop.f32.mrb[0].mxu0
      %810 = vdwg.mxu0
      %v811 = vadd.f32 %v681, %v790
      %v812 = vadd.f32 %v682, %v793
      %v813 = vadd.f32 %v683, %v798
      %v814 = vadd.f32 %v684, %v801
      %v815 = vadd.f32 %v685, %v806
      %v816 = vld [vmem:[%s196 + $0x14] sm:$0x3]
      %s817 = scalar_lea.vmem %s1, 160
      %v818 = vld [vmem:[%s817] sm:$0xf]
      %v819 = vld [vmem:[%s817 + $0x4] sm:$0xf]
      %v820 = vld [vmem:[%s817 + $0x8] sm:$0xf]
      %v821 = vld [vmem:[%s817 + $0xc] sm:$0xf]
      %v822 = vld [vmem:[%s817 + $0x10] sm:$0xf]
      %v823 = vld [vmem:[%s817 + $0x14] sm:$0xf]
      %v824 = vld [vmem:[%s817 + $0x18] sm:$0xf]
      %v825 = vld [vmem:[%s817 + $0x1c] sm:$0xf]
      %v827 = vunpack.c.l.b16 %v816
      %v828 = vpack.c.b16 %v827, %v711
      %vm829 = vsmask.f32 4352
      %v831 = vshrl.u32 %v713, 16
      %v833 = vrot.slane %v831, 3
      %v834 = vshll.u32 %v713, 16
      %v836 = vrot.slane %v834, 4
      %v837 = vor.u32 %v833, %v836
      %v839 = vshrl.u32 %v714, 16
      %v841 = vrot.slane %v839, 3
      %v842 = vshll.u32 %v714, 16
      %v844 = vrot.slane %v842, 4
      %v845 = vor.u32 %v841, %v844
      %v846 = vsel %vm829, %v837, %v845
      %v848 = vshrl.u32 %v828, 16
      %v850 = vrot.slane %v848, 3
      %v851 = vshll.u32 %v828, 16
      %v853 = vrot.slane %v851, 4
      %v854 = vor.u32 %v850, %v853
      %v855 = vsel %vm829, %v845, %v854
      %v864 = vunpack.c.l.b16 %v818
      %v865 = vunpack.c.l.b16 %v819
      %v866 = vunpack.c.l.b16 %v820
      %v867 = vunpack.c.l.b16 %v821
      %v868 = vunpack.c.l.b16 %v822
      %v869 = vunpack.c.l.b16 %v823
      %v870 = vunpack.c.l.b16 %v824
      %v871 = vunpack.c.l.b16 %v825
      %v872 = vpack.c.b16 %v865, %v864
      %v873 = vpack.c.b16 %v867, %v866
      %v874 = vpack.c.b16 %v869, %v868
      %v875 = vpack.c.b16 %v871, %v870
      %v881 = vsel %vm288, %v846, 0
      %v884 = vsel %vm288, %v855, 0
      %v887 = vsel %vm288, %v854, 0
      %889 = vmatprep.subr.bf16.mxu0 0
      %890 = vmatpush1.bf16.msra.mxu0 %v872
      %891 = vmatprep.subr.bf16.mxu0 0
      %892 = vmatpush1.bf16.msra.mxu0 %v873
      %893 = vmatprep.subr.bf16.mxu0 0
      %894 = vmatpush1.bf16.msra.mxu0 %v874
      %895 = vmatprep.subr.bf16.mxu0 0
      %896 = vmatpush1.bf16.msra.mxu0 %v875
      %897 = vmatprep.subr.bf16.mxu0 0
      %898 = vmatpush1.bf16.msra.mxu0 0
      %899 = vmatprep.subr.bf16.mxu0 0
      %900 = vmatpush1.bf16.msra.mxu0 0
      %901 = vmatprep.subr.bf16.mxu0 0
      %902 = vmatpush1.bf16.msra.mxu0 0
      %903 = vmatprep.subr.bf16.mxu0 0
      %904 = vmatpush1.bf16.msra.mxu0 0
      %905 = vmatprep.subr.bf16.mxu0 0
      %906 = vmatpush1.bf16.msra.mxu0 0
      %907 = vmatprep.subr.bf16.mxu0 0
      %908 = vmatpush1.bf16.msra.mxu0 0
      %909 = vmatprep.subr.bf16.mxu0 0
      %910 = vmatpush1.bf16.msra.mxu0 0
      %911 = vmatprep.subr.bf16.mxu0 0
      %912 = vmatpush1.bf16.msra.mxu0 0
      %913 = vmatprep.subr.bf16.mxu0 0
      %914 = vmatpush1.bf16.msra.mxu0 0
      %915 = vmatprep.subr.bf16.mxu0 0
      %916 = vmatpush1.bf16.msra.mxu0 0
      %917 = vmatprep.subr.bf16.mxu0 0
      %918 = vmatpush1.bf16.msra.mxu0 0
      %919 = vmatprep.subr.bf16.mxu0 0
      %920 = vmatpush1.bf16.msra.mxu0 0
      %921 = vmatprep.mubr.bf16.mxu0 0
      %922 = vmatmul.mubr.bf16.gmra.mrb[0].mxu0 %v881
      %v923 = vpop.f32.mrb[0].mxu0
      %v924 = vadd.f32 0.0, %v923
      %v925 = vpop.f32.mrb[0].mxu0
      %v926 = vpop.f32.mrb[0].mxu0
      %v927 = vadd.f32 0.0, %v926
      %v928 = vpop.f32.mrb[0].mxu0
      %929 = vmatprep.mubr.bf16.mxu0 0
      %930 = vmatmul.mubr.bf16.gmra.mrb[0].mxu0 %v884
      %v931 = vpop.f32.mrb[0].mxu0
      %v932 = vadd.f32 0.0, %v931
      %v933 = vpop.f32.mrb[0].mxu0
      %v934 = vpop.f32.mrb[0].mxu0
      %v935 = vadd.f32 0.0, %v934
      %v936 = vpop.f32.mrb[0].mxu0
      %937 = vmatprep.mubr.bf16.mxu0 0
      %938 = vmatmul.mubr.bf16.gmra.mrb[0].mxu0 %v887
      %v939 = vpop.f32.mrb[0].mxu0
      %v940 = vadd.f32 0.0, %v939
      %v941 = vpop.f32.mrb[0].mxu0
      %v942 = vpop.f32.mrb[0].mxu0
      %v943 = vpop.f32.mrb[0].mxu0
      %944 = vdwg.mxu0
      %v945 = vadd.f32 %v811, %v924
      %v946 = vadd.f32 %v812, %v927
      %v947 = vadd.f32 %v813, %v932
      %v948 = vadd.f32 %v814, %v935
      %v949 = vadd.f32 %v815, %v940
      %s950 = scalar_lea.vmem %s1, 192
      %v951 = vld [vmem:[%s950] sm:$0xf]
      %v952 = vld [vmem:[%s950 + $0x4] sm:$0xf]
      %v953 = vld [vmem:[%s950 + $0x8] sm:$0xf]
      %v954 = vld [vmem:[%s950 + $0xc] sm:$0xf]
      %v955 = vld [vmem:[%s950 + $0x10] sm:$0xf]
      %v956 = vld [vmem:[%s950 + $0x14] sm:$0xf]
      %v957 = vld [vmem:[%s950 + $0x18] sm:$0xf]
      %v958 = vld [vmem:[%s950 + $0x1c] sm:$0xf]
      %v959 = vpack.c.b16 %v709, %v708
      %v960 = vpack.c.b16 %v711, %v710
      %v961 = vpack.c.b16 %v827, %v827
      %v970 = vunpack.c.l.b16 %v951
      %v971 = vunpack.c.l.b16 %v952
      %v972 = vunpack.c.l.b16 %v953
      %v973 = vunpack.c.l.b16 %v954
      %v974 = vunpack.c.l.b16 %v955
      %v975 = vunpack.c.l.b16 %v956
      %v976 = vunpack.c.l.b16 %v957
      %v977 = vunpack.c.l.b16 %v958
      %v978 = vpack.c.b16 %v971, %v970
      %v979 = vpack.c.b16 %v973, %v972
      %v980 = vpack.c.b16 %v975, %v974
      %v981 = vpack.c.b16 %v977, %v976
      %v987 = vsel %vm288, %v959, 0
      %v990 = vsel %vm288, %v960, 0
      %v993 = vsel %vm288, %v961, 0
      %995 = vmatprep.subr.bf16.mxu0 0
      %996 = vmatpush1.bf16.msra.mxu0 %v978
      %997 = vmatprep.subr.bf16.mxu0 0
      %998 = vmatpush1.bf16.msra.mxu0 %v979
      %999 = vmatprep.subr.bf16.mxu0 0
      %1000 = vmatpush1.bf16.msra.mxu0 %v980
      %1001 = vmatprep.subr.bf16.mxu0 0
      %1002 = vmatpush1.bf16.msra.mxu0 %v981
      %1003 = vmatprep.subr.bf16.mxu0 0
      %1004 = vmatpush1.bf16.msra.mxu0 0
      %1005 = vmatprep.subr.bf16.mxu0 0
      %1006 = vmatpush1.bf16.msra.mxu0 0
      %1007 = vmatprep.subr.bf16.mxu0 0
      %1008 = vmatpush1.bf16.msra.mxu0 0
      %1009 = vmatprep.subr.bf16.mxu0 0
      %1010 = vmatpush1.bf16.msra.mxu0 0
      %1011 = vmatprep.subr.bf16.mxu0 0
      %1012 = vmatpush1.bf16.msra.mxu0 0
      %1013 = vmatprep.subr.bf16.mxu0 0
      %1014 = vmatpush1.bf16.msra.mxu0 0
      %1015 = vmatprep.subr.bf16.mxu0 0
      %1016 = vmatpush1.bf16.msra.mxu0 0
      %1017 = vmatprep.subr.bf16.mxu0 0
      %1018 = vmatpush1.bf16.msra.mxu0 0
      %1019 = vmatprep.subr.bf16.mxu0 0
      %1020 = vmatpush1.bf16.msra.mxu0 0
      %1021 = vmatprep.subr.bf16.mxu0 0
      %1022 = vmatpush1.bf16.msra.mxu0 0
      %1023 = vmatprep.subr.bf16.mxu0 0
      %1024 = vmatpush1.bf16.msra.mxu0 0
      %1025 = vmatprep.subr.bf16.mxu0 0
      %1026 = vmatpush1.bf16.msra.mxu0 0
      %1027 = vmatprep.mubr.bf16.mxu0 0
      %1028 = vmatmul.mubr.bf16.gmra.mrb[0].mxu0 %v987
      %v1029 = vpop.f32.mrb[0].mxu0
      %v1030 = vadd.f32 0.0, %v1029
      %v1031 = vpop.f32.mrb[0].mxu0
      %v1032 = vpop.f32.mrb[0].mxu0
      %v1033 = vadd.f32 0.0, %v1032
      %v1034 = vpop.f32.mrb[0].mxu0
      %1035 = vmatprep.mubr.bf16.mxu0 0
      %1036 = vmatmul.mubr.bf16.gmra.mrb[0].mxu0 %v990
      %v1037 = vpop.f32.mrb[0].mxu0
      %v1038 = vadd.f32 0.0, %v1037
      %v1039 = vpop.f32.mrb[0].mxu0
      %v1040 = vpop.f32.mrb[0].mxu0
      %v1041 = vadd.f32 0.0, %v1040
      %v1042 = vpop.f32.mrb[0].mxu0
      %1043 = vmatprep.mubr.bf16.mxu0 0
      %1044 = vmatmul.mubr.bf16.gmra.mrb[0].mxu0 %v993
      %v1045 = vpop.f32.mrb[0].mxu0
      %v1046 = vadd.f32 0.0, %v1045
      %v1047 = vpop.f32.mrb[0].mxu0
      %v1048 = vpop.f32.mrb[0].mxu0
      %v1049 = vpop.f32.mrb[0].mxu0
      %1050 = vdwg.mxu0
      %v1051 = vadd.f32 %v945, %v1030
      %v1052 = vadd.f32 %v946, %v1033
      %v1053 = vadd.f32 %v947, %v1038
      %v1054 = vadd.f32 %v948, %v1041
      %v1055 = vadd.f32 %v949, %v1046
      %v1056 = vld [vmem:[%s196 + $0x14] sm:$0x7]
      %s1057 = scalar_lea.vmem %s1, 224
      %v1058 = vld [vmem:[%s1057] sm:$0xf]
      %v1059 = vld [vmem:[%s1057 + $0x4] sm:$0xf]
      %v1060 = vld [vmem:[%s1057 + $0x8] sm:$0xf]
      %v1061 = vld [vmem:[%s1057 + $0xc] sm:$0xf]
      %v1062 = vld [vmem:[%s1057 + $0x10] sm:$0xf]
      %v1063 = vld [vmem:[%s1057 + $0x14] sm:$0xf]
      %v1064 = vld [vmem:[%s1057 + $0x18] sm:$0xf]
      %v1065 = vld [vmem:[%s1057 + $0x1c] sm:$0xf]
      %v1067 = vunpack.c.l.b16 %v1056
      %v1068 = vpack.c.b16 %v1067, %v1067
      %v1069 = vshrl.u32 %v959, 16
      %v1071 = vshll.u32 %v959, 16
      %v1073 = vrot.slane %v1071, 1
      %v1074 = vor.u32 %v1069, %v1073
      %v1075 = vshll.u32 %v960, 16
      %v1077 = vrot.slane %v1075, 1
      %v1078 = vsel %vm240, %v1074, %v1077
      %v1079 = vshrl.u32 %v960, 16
      %v1081 = vor.u32 %v1079, %v1077
      %v1083 = vshll.u32 %v1068, 16
      %v1085 = vrot.slane %v1083, 1
      %v1086 = vsel %vm240, %v1081, %v1085
      %v1087 = vshrl.u32 %v1068, 16
      %v1089 = vor.u32 %v1087, %v1085
      %v1098 = vunpack.c.l.b16 %v1058
      %v1099 = vunpack.c.l.b16 %v1059
      %v1100 = vunpack.c.l.b16 %v1060
      %v1101 = vunpack.c.l.b16 %v1061
      %v1102 = vunpack.c.l.b16 %v1062
      %v1103 = vunpack.c.l.b16 %v1063
      %v1104 = vunpack.c.l.b16 %v1064
      %v1105 = vunpack.c.l.b16 %v1065
      %v1106 = vpack.c.b16 %v1099, %v1098
      %v1107 = vpack.c.b16 %v1101, %v1100
      %v1108 = vpack.c.b16 %v1103, %v1102
      %v1109 = vpack.c.b16 %v1105, %v1104
      %v1115 = vsel %vm288, %v1078, 0
      %v1118 = vsel %vm288, %v1086, 0
      %v1121 = vsel %vm288, %v1089, 0
      %1123 = vmatprep.subr.bf16.mxu0 0
      %1124 = vmatpush1.bf16.msra.mxu0 %v1106
      %1125 = vmatprep.subr.bf16.mxu0 0
      %1126 = vmatpush1.bf16.msra.mxu0 %v1107
      %1127 = vmatprep.subr.bf16.mxu0 0
      %1128 = vmatpush1.bf16.msra.mxu0 %v1108
      %1129 = vmatprep.subr.bf16.mxu0 0
      %1130 = vmatpush1.bf16.msra.mxu0 %v1109
      %1131 = vmatprep.subr.bf16.mxu0 0
      %1132 = vmatpush1.bf16.msra.mxu0 0
      %1133 = vmatprep.subr.bf16.mxu0 0
      %1134 = vmatpush1.bf16.msra.mxu0 0
      %1135 = vmatprep.subr.bf16.mxu0 0
      %1136 = vmatpush1.bf16.msra.mxu0 0
      %1137 = vmatprep.subr.bf16.mxu0 0
      %1138 = vmatpush1.bf16.msra.mxu0 0
      %1139 = vmatprep.subr.bf16.mxu0 0
      %1140 = vmatpush1.bf16.msra.mxu0 0
      %1141 = vmatprep.subr.bf16.mxu0 0
      %1142 = vmatpush1.bf16.msra.mxu0 0
      %1143 = vmatprep.subr.bf16.mxu0 0
      %1144 = vmatpush1.bf16.msra.mxu0 0
      %1145 = vmatprep.subr.bf16.mxu0 0
      %1146 = vmatpush1.bf16.msra.mxu0 0
      %1147 = vmatprep.subr.bf16.mxu0 0
      %1148 = vmatpush1.bf16.msra.mxu0 0
      %1149 = vmatprep.subr.bf16.mxu0 0
      %1150 = vmatpush1.bf16.msra.mxu0 0
      %1151 = vmatprep.subr.bf16.mxu0 0
      %1152 = vmatpush1.bf16.msra.mxu0 0
      %1153 = vmatprep.subr.bf16.mxu0 0
      %1154 = vmatpush1.bf16.msra.mxu0 0
      %1155 = vmatprep.mubr.bf16.mxu0 0
      %1156 = vmatmul.mubr.bf16.gmra.mrb[0].mxu0 %v1115
      %v1157 = vpop.f32.mrb[0].mxu0
      %v1158 = vadd.f32 0.0, %v1157
      %v1159 = vpop.f32.mrb[0].mxu0
      %v1160 = vpop.f32.mrb[0].mxu0
      %v1161 = vadd.f32 0.0, %v1160
      %v1162 = vpop.f32.mrb[0].mxu0
      %1163 = vmatprep.mubr.bf16.mxu0 0
      %1164 = vmatmul.mubr.bf16.gmra.mrb[0].mxu0 %v1118
      %v1165 = vpop.f32.mrb[0].mxu0
      %v1166 = vadd.f32 0.0, %v1165
      %v1167 = vpop.f32.mrb[0].mxu0
      %v1168 = vpop.f32.mrb[0].mxu0
      %v1169 = vadd.f32 0.0, %v1168
      %v1170 = vpop.f32.mrb[0].mxu0
      %1171 = vmatprep.mubr.bf16.mxu0 0
      %1172 = vmatmul.mubr.bf16.gmra.mrb[0].mxu0 %v1121
      %v1173 = vpop.f32.mrb[0].mxu0
      %v1174 = vadd.f32 0.0, %v1173
      %v1175 = vpop.f32.mrb[0].mxu0
      %v1176 = vpop.f32.mrb[0].mxu0
      %v1177 = vpop.f32.mrb[0].mxu0
      %1178 = vdwg.mxu0
      %v1179 = vadd.f32 %v1051, %v1158
      %v1180 = vadd.f32 %v1052, %v1161
      %v1181 = vadd.f32 %v1053, %v1166
      %v1182 = vadd.f32 %v1054, %v1169
      %v1183 = vadd.f32 %v1055, %v1174
      %v1184 = vld [vmem:[%s196 + $0x4] sm:$0xc]
      %v1185 = vld [vmem:[%s196 + $0x14] sm:$0xf]
      %s1186 = scalar_lea.vmem %s1, 256
      %v1187 = vld [vmem:[%s1186] sm:$0xf]
      %v1188 = vld [vmem:[%s1186 + $0x4] sm:$0xf]
      %v1189 = vld [vmem:[%s1186 + $0x8] sm:$0xf]
      %v1190 = vld [vmem:[%s1186 + $0xc] sm:$0xf]
      %v1191 = vld [vmem:[%s1186 + $0x10] sm:$0xf]
      %v1192 = vld [vmem:[%s1186 + $0x14] sm:$0xf]
      %v1193 = vld [vmem:[%s1186 + $0x18] sm:$0xf]
      %v1194 = vld [vmem:[%s1186 + $0x1c] sm:$0xf]
      %v1197 = vunpack.c.l.b16 %v1184
      %v1198 = vunpack.c.l.b16 %v1185
      %v1199 = vpack.c.b16 %v709, %v1197
      %v1200 = vpack.c.b16 %v1198, %v1198
      %vm1201 = vcmask 1045504
      %v1202 = vrot.slane %v1199, 2
      %v1203 = vrot.slane %v960, 2
      %v1204 = vsel %vm1201, %v1202, %v1203
      %v1205 = vrot.slane %v1200, 2
      %v1206 = vsel %vm1201, %v1203, %v1205
      %v1215 = vunpack.c.l.b16 %v1187
      %v1216 = vunpack.c.l.b16 %v1188
      %v1217 = vunpack.c.l.b16 %v1189
      %v1218 = vunpack.c.l.b16 %v1190
      %v1219 = vunpack.c.l.b16 %v1191
      %v1220 = vunpack.c.l.b16 %v1192
      %v1221 = vunpack.c.l.b16 %v1193
      %v1222 = vunpack.c.l.b16 %v1194
      %v1223 = vpack.c.b16 %v1216, %v1215
      %v1224 = vpack.c.b16 %v1218, %v1217
      %v1225 = vpack.c.b16 %v1220, %v1219
      %v1226 = vpack.c.b16 %v1222, %v1221
      %v1232 = vsel %vm288, %v1204, 0
      %v1235 = vsel %vm288, %v1206, 0
      %v1238 = vsel %vm288, %v1205, 0
      %1240 = vmatprep.subr.bf16.mxu0 0
      %1241 = vmatpush1.bf16.msra.mxu0 %v1223
      %1242 = vmatprep.subr.bf16.mxu0 0
      %1243 = vmatpush1.bf16.msra.mxu0 %v1224
      %1244 = vmatprep.subr.bf16.mxu0 0
      %1245 = vmatpush1.bf16.msra.mxu0 %v1225
      %1246 = vmatprep.subr.bf16.mxu0 0
      %1247 = vmatpush1.bf16.msra.mxu0 %v1226
      %1248 = vmatprep.subr.bf16.mxu0 0
      %1249 = vmatpush1.bf16.msra.mxu0 0
      %1250 = vmatprep.subr.bf16.mxu0 0
      %1251 = vmatpush1.bf16.msra.mxu0 0
      %1252 = vmatprep.subr.bf16.mxu0 0
      %1253 = vmatpush1.bf16.msra.mxu0 0
      %1254 = vmatprep.subr.bf16.mxu0 0
      %1255 = vmatpush1.bf16.msra.mxu0 0
      %1256 = vmatprep.subr.bf16.mxu0 0
      %1257 = vmatpush1.bf16.msra.mxu0 0
      %1258 = vmatprep.subr.bf16.mxu0 0
      %1259 = vmatpush1.bf16.msra.mxu0 0
      %1260 = vmatprep.subr.bf16.mxu0 0
      %1261 = vmatpush1.bf16.msra.mxu0 0
      %1262 = vmatprep.subr.bf16.mxu0 0
      %1263 = vmatpush1.bf16.msra.mxu0 0
      %1264 = vmatprep.subr.bf16.mxu0 0
      %1265 = vmatpush1.bf16.msra.mxu0 0
      %1266 = vmatprep.subr.bf16.mxu0 0
      %1267 = vmatpush1.bf16.msra.mxu0 0
      %1268 = vmatprep.subr.bf16.mxu0 0
      %1269 = vmatpush1.bf16.msra.mxu0 0
      %1270 = vmatprep.subr.bf16.mxu0 0
      %1271 = vmatpush1.bf16.msra.mxu0 0
      %1272 = vmatprep.mubr.bf16.mxu0 0
      %1273 = vmatmul.mubr.bf16.gmra.mrb[0].mxu0 %v1232
      %v1274 = vpop.f32.mrb[0].mxu0
      %v1275 = vadd.f32 0.0, %v1274
      %v1276 = vpop.f32.mrb[0].mxu0
      %v1277 = vpop.f32.mrb[0].mxu0
      %v1278 = vadd.f32 0.0, %v1277
      %v1279 = vpop.f32.mrb[0].mxu0
      %1280 = vmatprep.mubr.bf16.mxu0 0
      %1281 = vmatmul.mubr.bf16.gmra.mrb[0].mxu0 %v1235
      %v1282 = vpop.f32.mrb[0].mxu0
      %v1283 = vadd.f32 0.0, %v1282
      %v1284 = vpop.f32.mrb[0].mxu0
      %v1285 = vpop.f32.mrb[0].mxu0
      %v1286 = vadd.f32 0.0, %v1285
      %v1287 = vpop.f32.mrb[0].mxu0
      %1288 = vmatprep.mubr.bf16.mxu0 0
      %1289 = vmatmul.mubr.bf16.gmra.mrb[0].mxu0 %v1238
      %v1290 = vpop.f32.mrb[0].mxu0
      %v1291 = vadd.f32 0.0, %v1290
      %v1292 = vpop.f32.mrb[0].mxu0
      %v1293 = vpop.f32.mrb[0].mxu0
      %v1294 = vpop.f32.mrb[0].mxu0
      %1295 = vdwg.mxu0
      %v1296 = vadd.f32 %v1179, %v1275
      %v1297 = vadd.f32 %v1180, %v1278
      %v1298 = vadd.f32 %v1181, %v1283
      %v1299 = vadd.f32 %v1182, %v1286
      %v1300 = vadd.f32 %v1183, %v1291
      %v1301 = vld [vmem:[%s196 + $0x4] sm:$0xc]
      %v1302 = vld [vmem:[%s196 + $0x8] sm:$0xf]
      %v1303 = vld [vmem:[%s196 + $0xc] sm:$0xf]
      %v1304 = vld [vmem:[%s196 + $0x10] sm:$0xf]
      %v1305 = vld [vmem:[%s196 + $0x14] sm:$0xf]
      %v1306 = vld [vmem:[%s196 + $0x18] sm:$0x1]
      %s1307 = scalar_lea.vmem %s1, 288
      %v1308 = vld [vmem:[%s1307] sm:$0xf]
      %v1309 = vld [vmem:[%s1307 + $0x4] sm:$0xf]
      %v1310 = vld [vmem:[%s1307 + $0x8] sm:$0xf]
      %v1311 = vld [vmem:[%s1307 + $0xc] sm:$0xf]
      %v1312 = vld [vmem:[%s1307 + $0x10] sm:$0xf]
      %v1313 = vld [vmem:[%s1307 + $0x14] sm:$0xf]
      %v1314 = vld [vmem:[%s1307 + $0x18] sm:$0xf]
      %v1315 = vld [vmem:[%s1307 + $0x1c] sm:$0xf]
      %v1322 = vunpack.c.l.b16 %v1301
      %v1323 = vunpack.c.l.b16 %v1302
      %v1324 = vunpack.c.l.b16 %v1303
      %v1325 = vunpack.c.l.b16 %v1304
      %v1326 = vunpack.c.l.b16 %v1305
      %v1327 = vunpack.c.l.b16 %v1306
      %v1328 = vpack.c.b16 %v1323, %v1322
      %v1329 = vpack.c.b16 %v1325, %v1324
      %v1330 = vpack.c.b16 %v1327, %v1326
      %vm1331 = vsmask.f32 5376
      %v1333 = vshrl.u32 %v1328, 16
      %v1335 = vrot.slane %v1333, 2
      %v1336 = vshll.u32 %v1328, 16
      %v1338 = vrot.slane %v1336, 3
      %v1339 = vor.u32 %v1335, %v1338
      %v1341 = vshrl.u32 %v1329, 16
      %v1343 = vrot.slane %v1341, 2
      %v1344 = vshll.u32 %v1329, 16
      %v1346 = vrot.slane %v1344, 3
      %v1347 = vor.u32 %v1343, %v1346
      %v1348 = vsel %vm1331, %v1339, %v1347
      %v1350 = vshrl.u32 %v1330, 16
      %v1352 = vrot.slane %v1350, 2
      %v1353 = vshll.u32 %v1330, 16
      %v1355 = vrot.slane %v1353, 3
      %v1356 = vor.u32 %v1352, %v1355
      %v1357 = vsel %vm1331, %v1347, %v1356
      %v1366 = vunpack.c.l.b16 %v1308
      %v1367 = vunpack.c.l.b16 %v1309
      %v1368 = vunpack.c.l.b16 %v1310
      %v1369 = vunpack.c.l.b16 %v1311
      %v1370 = vunpack.c.l.b16 %v1312
      %v1371 = vunpack.c.l.b16 %v1313
      %v1372 = vunpack.c.l.b16 %v1314
      %v1373 = vunpack.c.l.b16 %v1315
      %v1374 = vpack.c.b16 %v1367, %v1366
      %v1375 = vpack.c.b16 %v1369, %v1368
      %v1376 = vpack.c.b16 %v1371, %v1370
      %v1377 = vpack.c.b16 %v1373, %v1372
      %v1383 = vsel %vm288, %v1348, 0
      %v1386 = vsel %vm288, %v1357, 0
      %v1389 = vsel %vm288, %v1356, 0
      %1391 = vmatprep.subr.bf16.mxu0 0
      %1392 = vmatpush1.bf16.msra.mxu0 %v1374
      %1393 = vmatprep.subr.bf16.mxu0 0
      %1394 = vmatpush1.bf16.msra.mxu0 %v1375
      %1395 = vmatprep.subr.bf16.mxu0 0
      %1396 = vmatpush1.bf16.msra.mxu0 %v1376
      %1397 = vmatprep.subr.bf16.mxu0 0
      %1398 = vmatpush1.bf16.msra.mxu0 %v1377
      %1399 = vmatprep.subr.bf16.mxu0 0
      %1400 = vmatpush1.bf16.msra.mxu0 0
      %1401 = vmatprep.subr.bf16.mxu0 0
      %1402 = vmatpush1.bf16.msra.mxu0 0
      %1403 = vmatprep.subr.bf16.mxu0 0
      %1404 = vmatpush1.bf16.msra.mxu0 0
      %1405 = vmatprep.subr.bf16.mxu0 0
      %1406 = vmatpush1.bf16.msra.mxu0 0
      %1407 = vmatprep.subr.bf16.mxu0 0
      %1408 = vmatpush1.bf16.msra.mxu0 0
      %1409 = vmatprep.subr.bf16.mxu0 0
      %1410 = vmatpush1.bf16.msra.mxu0 0
      %1411 = vmatprep.subr.bf16.mxu0 0
      %1412 = vmatpush1.bf16.msra.mxu0 0
      %1413 = vmatprep.subr.bf16.mxu0 0
      %1414 = vmatpush1.bf16.msra.mxu0 0
      %1415 = vmatprep.subr.bf16.mxu0 0
      %1416 = vmatpush1.bf16.msra.mxu0 0
      %1417 = vmatprep.subr.bf16.mxu0 0
      %1418 = vmatpush1.bf16.msra.mxu0 0
      %1419 = vmatprep.subr.bf16.mxu0 0
      %1420 = vmatpush1.bf16.msra.mxu0 0
      %1421 = vmatprep.subr.bf16.mxu0 0
      %1422 = vmatpush1.bf16.msra.mxu0 0
      %1423 = vmatprep.mubr.bf16.mxu0 0
      %1424 = vmatmul.mubr.bf16.gmra.mrb[0].mxu0 %v1383
      %v1425 = vpop.f32.mrb[0].mxu0
      %v1426 = vadd.f32 0.0, %v1425
      %v1427 = vpop.f32.mrb[0].mxu0
      %v1428 = vpop.f32.mrb[0].mxu0
      %v1429 = vadd.f32 0.0, %v1428
      %v1430 = vpop.f32.mrb[0].mxu0
      %1431 = vmatprep.mubr.bf16.mxu0 0
      %1432 = vmatmul.mubr.bf16.gmra.mrb[0].mxu0 %v1386
      %v1433 = vpop.f32.mrb[0].mxu0
      %v1434 = vadd.f32 0.0, %v1433
      %v1435 = vpop.f32.mrb[0].mxu0
      %v1436 = vpop.f32.mrb[0].mxu0
      %v1437 = vadd.f32 0.0, %v1436
      %v1438 = vpop.f32.mrb[0].mxu0
      %1439 = vmatprep.mubr.bf16.mxu0 0
      %1440 = vmatmul.mubr.bf16.gmra.mrb[0].mxu0 %v1389
      %v1441 = vpop.f32.mrb[0].mxu0
      %v1442 = vadd.f32 0.0, %v1441
      %v1443 = vpop.f32.mrb[0].mxu0
      %v1444 = vpop.f32.mrb[0].mxu0
      %v1445 = vpop.f32.mrb[0].mxu0
      %1446 = vdwg.mxu0
      %v1447 = vadd.f32 %v1296, %v1426
      %v1448 = vadd.f32 %v1297, %v1429
      %v1449 = vadd.f32 %v1298, %v1434
      %v1450 = vadd.f32 %v1299, %v1437
      %v1451 = vadd.f32 %v1300, %v1442
      %v1452 = vld [vmem:[%s196 + $0x4] sm:$0x8]
      %s1453 = scalar_lea.vmem %s1, 320
      %v1454 = vld [vmem:[%s1453] sm:$0xf]
      %v1455 = vld [vmem:[%s1453 + $0x4] sm:$0xf]
      %v1456 = vld [vmem:[%s1453 + $0x8] sm:$0xf]
      %v1457 = vld [vmem:[%s1453 + $0xc] sm:$0xf]
      %v1458 = vld [vmem:[%s1453 + $0x10] sm:$0xf]
      %v1459 = vld [vmem:[%s1453 + $0x14] sm:$0xf]
      %v1460 = vld [vmem:[%s1453 + $0x18] sm:$0xf]
      %v1461 = vld [vmem:[%s1453 + $0x1c] sm:$0xf]
      %v1463 = vunpack.c.l.b16 %v1452
      %v1464 = vpack.c.b16 %v1323, %v1463
      %v1465 = vrot.slane %v1464, 3
      %v1466 = vrot.slane %v1329, 3
      %v1467 = vsel %vm716, %v1465, %v1466
      %v1468 = vrot.slane %v1330, 3
      %v1469 = vsel %vm716, %v1466, %v1468
      %v1478 = vunpack.c.l.b16 %v1454
      %v1479 = vunpack.c.l.b16 %v1455
      %v1480 = vunpack.c.l.b16 %v1456
      %v1481 = vunpack.c.l.b16 %v1457
      %v1482 = vunpack.c.l.b16 %v1458
      %v1483 = vunpack.c.l.b16 %v1459
      %v1484 = vunpack.c.l.b16 %v1460
      %v1485 = vunpack.c.l.b16 %v1461
      %v1486 = vpack.c.b16 %v1479, %v1478
      %v1487 = vpack.c.b16 %v1481, %v1480
      %v1488 = vpack.c.b16 %v1483, %v1482
      %v1489 = vpack.c.b16 %v1485, %v1484
      %v1495 = vsel %vm288, %v1467, 0
      %v1498 = vsel %vm288, %v1469, 0
      %v1501 = vsel %vm288, %v1468, 0
      %1503 = vmatprep.subr.bf16.mxu0 0
      %1504 = vmatpush1.bf16.msra.mxu0 %v1486
      %1505 = vmatprep.subr.bf16.mxu0 0
      %1506 = vmatpush1.bf16.msra.mxu0 %v1487
      %1507 = vmatprep.subr.bf16.mxu0 0
      %1508 = vmatpush1.bf16.msra.mxu0 %v1488
      %1509 = vmatprep.subr.bf16.mxu0 0
      %1510 = vmatpush1.bf16.msra.mxu0 %v1489
      %1511 = vmatprep.subr.bf16.mxu0 0
      %1512 = vmatpush1.bf16.msra.mxu0 0
      %1513 = vmatprep.subr.bf16.mxu0 0
      %1514 = vmatpush1.bf16.msra.mxu0 0
      %1515 = vmatprep.subr.bf16.mxu0 0
      %1516 = vmatpush1.bf16.msra.mxu0 0
      %1517 = vmatprep.subr.bf16.mxu0 0
      %1518 = vmatpush1.bf16.msra.mxu0 0
      %1519 = vmatprep.subr.bf16.mxu0 0
      %1520 = vmatpush1.bf16.msra.mxu0 0
      %1521 = vmatprep.subr.bf16.mxu0 0
      %1522 = vmatpush1.bf16.msra.mxu0 0
      %1523 = vmatprep.subr.bf16.mxu0 0
      %1524 = vmatpush1.bf16.msra.mxu0 0
      %1525 = vmatprep.subr.bf16.mxu0 0
      %1526 = vmatpush1.bf16.msra.mxu0 0
      %1527 = vmatprep.subr.bf16.mxu0 0
      %1528 = vmatpush1.bf16.msra.mxu0 0
      %1529 = vmatprep.subr.bf16.mxu0 0
      %1530 = vmatpush1.bf16.msra.mxu0 0
      %1531 = vmatprep.subr.bf16.mxu0 0
      %1532 = vmatpush1.bf16.msra.mxu0 0
      %1533 = vmatprep.subr.bf16.mxu0 0
      %1534 = vmatpush1.bf16.msra.mxu0 0
      %1535 = vmatprep.mubr.bf16.mxu0 0
      %1536 = vmatmul.mubr.bf16.gmra.mrb[0].mxu0 %v1495
      %v1537 = vpop.f32.mrb[0].mxu0
      %v1538 = vadd.f32 0.0, %v1537
      %v1539 = vpop.f32.mrb[0].mxu0
      %v1540 = vpop.f32.mrb[0].mxu0
      %v1541 = vadd.f32 0.0, %v1540
      %v1542 = vpop.f32.mrb[0].mxu0
      %1543 = vmatprep.mubr.bf16.mxu0 0
      %1544 = vmatmul.mubr.bf16.gmra.mrb[0].mxu0 %v1498
      %v1545 = vpop.f32.mrb[0].mxu0
      %v1546 = vadd.f32 0.0, %v1545
      %v1547 = vpop.f32.mrb[0].mxu0
      %v1548 = vpop.f32.mrb[0].mxu0
      %v1549 = vadd.f32 0.0, %v1548
      %v1550 = vpop.f32.mrb[0].mxu0
      %1551 = vmatprep.mubr.bf16.mxu0 0
      %1552 = vmatmul.mubr.bf16.gmra.mrb[0].mxu0 %v1501
      %v1553 = vpop.f32.mrb[0].mxu0
      %v1554 = vadd.f32 0.0, %v1553
      %v1555 = vpop.f32.mrb[0].mxu0
      %v1556 = vpop.f32.mrb[0].mxu0
      %v1557 = vpop.f32.mrb[0].mxu0
      %1558 = vdwg.mxu0
      %v1559 = vadd.f32 %v1447, %v1538
      %v1560 = vadd.f32 %v1448, %v1541
      %v1561 = vadd.f32 %v1449, %v1546
      %v1562 = vadd.f32 %v1450, %v1549
      %v1563 = vadd.f32 %v1451, %v1554
      %v1564 = vld [vmem:[%s196 + $0x18] sm:$0x3]
      %s1565 = scalar_lea.vmem %s1, 352
      %v1566 = vld [vmem:[%s1565] sm:$0xf]
      %v1567 = vld [vmem:[%s1565 + $0x4] sm:$0xf]
      %v1568 = vld [vmem:[%s1565 + $0x8] sm:$0xf]
      %v1569 = vld [vmem:[%s1565 + $0xc] sm:$0xf]
      %v1570 = vld [vmem:[%s1565 + $0x10] sm:$0xf]
      %v1571 = vld [vmem:[%s1565 + $0x14] sm:$0xf]
      %v1572 = vld [vmem:[%s1565 + $0x18] sm:$0xf]
      %v1573 = vld [vmem:[%s1565 + $0x1c] sm:$0xf]
      %v1575 = vunpack.c.l.b16 %v1564
      %v1576 = vpack.c.b16 %v1575, %v1326
      %v1578 = vshrl.u32 %v1464, 16
      %v1580 = vrot.slane %v1578, 3
      %v1581 = vshll.u32 %v1464, 16
      %v1583 = vrot.slane %v1581, 4
      %v1584 = vor.u32 %v1580, %v1583
      %v1585 = vrot.slane %v1341, 3
      %v1586 = vrot.slane %v1344, 4
      %v1587 = vor.u32 %v1585, %v1586
      %v1588 = vsel %vm829, %v1584, %v1587
      %v1590 = vshrl.u32 %v1576, 16
      %v1592 = vrot.slane %v1590, 3
      %v1593 = vshll.u32 %v1576, 16
      %v1595 = vrot.slane %v1593, 4
      %v1596 = vor.u32 %v1592, %v1595
      %v1597 = vsel %vm829, %v1587, %v1596
      %v1606 = vunpack.c.l.b16 %v1566
      %v1607 = vunpack.c.l.b16 %v1567
      %v1608 = vunpack.c.l.b16 %v1568
      %v1609 = vunpack.c.l.b16 %v1569
      %v1610 = vunpack.c.l.b16 %v1570
      %v1611 = vunpack.c.l.b16 %v1571
      %v1612 = vunpack.c.l.b16 %v1572
      %v1613 = vunpack.c.l.b16 %v1573
      %v1614 = vpack.c.b16 %v1607, %v1606
      %v1615 = vpack.c.b16 %v1609, %v1608
      %v1616 = vpack.c.b16 %v1611, %v1610
      %v1617 = vpack.c.b16 %v1613, %v1612
      %v1623 = vsel %vm288, %v1588, 0
      %v1626 = vsel %vm288, %v1597, 0
      %v1629 = vsel %vm288, %v1596, 0
      %1631 = vmatprep.subr.bf16.mxu0 0
      %1632 = vmatpush1.bf16.msra.mxu0 %v1614
      %1633 = vmatprep.subr.bf16.mxu0 0
      %1634 = vmatpush1.bf16.msra.mxu0 %v1615
      %1635 = vmatprep.subr.bf16.mxu0 0
      %1636 = vmatpush1.bf16.msra.mxu0 %v1616
      %1637 = vmatprep.subr.bf16.mxu0 0
      %1638 = vmatpush1.bf16.msra.mxu0 %v1617
      %1639 = vmatprep.subr.bf16.mxu0 0
      %1640 = vmatpush1.bf16.msra.mxu0 0
      %1641 = vmatprep.subr.bf16.mxu0 0
      %1642 = vmatpush1.bf16.msra.mxu0 0
      %1643 = vmatprep.subr.bf16.mxu0 0
      %1644 = vmatpush1.bf16.msra.mxu0 0
      %1645 = vmatprep.subr.bf16.mxu0 0
      %1646 = vmatpush1.bf16.msra.mxu0 0
      %1647 = vmatprep.subr.bf16.mxu0 0
      %1648 = vmatpush1.bf16.msra.mxu0 0
      %1649 = vmatprep.subr.bf16.mxu0 0
      %1650 = vmatpush1.bf16.msra.mxu0 0
      %1651 = vmatprep.subr.bf16.mxu0 0
      %1652 = vmatpush1.bf16.msra.mxu0 0
      %1653 = vmatprep.subr.bf16.mxu0 0
      %1654 = vmatpush1.bf16.msra.mxu0 0
      %1655 = vmatprep.subr.bf16.mxu0 0
      %1656 = vmatpush1.bf16.msra.mxu0 0
      %1657 = vmatprep.subr.bf16.mxu0 0
      %1658 = vmatpush1.bf16.msra.mxu0 0
      %1659 = vmatprep.subr.bf16.mxu0 0
      %1660 = vmatpush1.bf16.msra.mxu0 0
      %1661 = vmatprep.subr.bf16.mxu0 0
      %1662 = vmatpush1.bf16.msra.mxu0 0
      %1663 = vmatprep.mubr.bf16.mxu0 0
      %1664 = vmatmul.mubr.bf16.gmra.mrb[0].mxu0 %v1623
      %v1665 = vpop.f32.mrb[0].mxu0
      %v1666 = vadd.f32 0.0, %v1665
      %v1667 = vpop.f32.mrb[0].mxu0
      %v1668 = vpop.f32.mrb[0].mxu0
      %v1669 = vadd.f32 0.0, %v1668
      %v1670 = vpop.f32.mrb[0].mxu0
      %1671 = vmatprep.mubr.bf16.mxu0 0
      %1672 = vmatmul.mubr.bf16.gmra.mrb[0].mxu0 %v1626
      %v1673 = vpop.f32.mrb[0].mxu0
      %v1674 = vadd.f32 0.0, %v1673
      %v1675 = vpop.f32.mrb[0].mxu0
      %v1676 = vpop.f32.mrb[0].mxu0
      %v1677 = vadd.f32 0.0, %v1676
      %v1678 = vpop.f32.mrb[0].mxu0
      %1679 = vmatprep.mubr.bf16.mxu0 0
      %1680 = vmatmul.mubr.bf16.gmra.mrb[0].mxu0 %v1629
      %v1681 = vpop.f32.mrb[0].mxu0
      %v1682 = vadd.f32 0.0, %v1681
      %v1683 = vpop.f32.mrb[0].mxu0
      %v1684 = vpop.f32.mrb[0].mxu0
      %v1685 = vpop.f32.mrb[0].mxu0
      %1686 = vdwg.mxu0
      %v1687 = vadd.f32 %v1559, %v1666
      %v1688 = vadd.f32 %v1560, %v1669
      %v1689 = vadd.f32 %v1561, %v1674
      %v1690 = vadd.f32 %v1562, %v1677
      %v1691 = vadd.f32 %v1563, %v1682
      %v1692 = vld [vmem:[%s196 + $0x8] sm:$0xe]
      %v1693 = vld [vmem:[%s196 + $0x18] sm:$0x7]
      %s1694 = scalar_lea.vmem %s1, 384
      %v1695 = vld [vmem:[%s1694] sm:$0xf]
      %v1696 = vld [vmem:[%s1694 + $0x4] sm:$0xf]
      %v1697 = vld [vmem:[%s1694 + $0x8] sm:$0xf]
      %v1698 = vld [vmem:[%s1694 + $0xc] sm:$0xf]
      %v1699 = vld [vmem:[%s1694 + $0x10] sm:$0xf]
      %v1700 = vld [vmem:[%s1694 + $0x14] sm:$0xf]
      %v1701 = vld [vmem:[%s1694 + $0x18] sm:$0xf]
      %v1702 = vld [vmem:[%s1694 + $0x1c] sm:$0xf]
      %v1705 = vunpack.c.l.b16 %v1692
      %v1706 = vunpack.c.l.b16 %v1693
      %v1707 = vpack.c.b16 %v1324, %v1705
      %v1708 = vpack.c.b16 %v1326, %v1325
      %v1709 = vpack.c.b16 %v1706, %v1706
      %v1710 = vrot.slane %v1707, 1
      %v1711 = vrot.slane %v1708, 1
      %v1712 = vsel %vm457, %v1710, %v1711
      %v1713 = vrot.slane %v1709, 1
      %v1714 = vsel %vm457, %v1711, %v1713
      %v1723 = vunpack.c.l.b16 %v1695
      %v1724 = vunpack.c.l.b16 %v1696
      %v1725 = vunpack.c.l.b16 %v1697
      %v1726 = vunpack.c.l.b16 %v1698
      %v1727 = vunpack.c.l.b16 %v1699
      %v1728 = vunpack.c.l.b16 %v1700
      %v1729 = vunpack.c.l.b16 %v1701
      %v1730 = vunpack.c.l.b16 %v1702
      %v1731 = vpack.c.b16 %v1724, %v1723
      %v1732 = vpack.c.b16 %v1726, %v1725
      %v1733 = vpack.c.b16 %v1728, %v1727
      %v1734 = vpack.c.b16 %v1730, %v1729
      %v1740 = vsel %vm288, %v1712, 0
      %v1743 = vsel %vm288, %v1714, 0
      %v1746 = vsel %vm288, %v1713, 0
      %1748 = vmatprep.subr.bf16.mxu0 0
      %1749 = vmatpush1.bf16.msra.mxu0 %v1731
      %1750 = vmatprep.subr.bf16.mxu0 0
      %1751 = vmatpush1.bf16.msra.mxu0 %v1732
      %1752 = vmatprep.subr.bf16.mxu0 0
      %1753 = vmatpush1.bf16.msra.mxu0 %v1733
      %1754 = vmatprep.subr.bf16.mxu0 0
      %1755 = vmatpush1.bf16.msra.mxu0 %v1734
      %1756 = vmatprep.subr.bf16.mxu0 0
      %1757 = vmatpush1.bf16.msra.mxu0 0
      %1758 = vmatprep.subr.bf16.mxu0 0
      %1759 = vmatpush1.bf16.msra.mxu0 0
      %1760 = vmatprep.subr.bf16.mxu0 0
      %1761 = vmatpush1.bf16.msra.mxu0 0
      %1762 = vmatprep.subr.bf16.mxu0 0
      %1763 = vmatpush1.bf16.msra.mxu0 0
      %1764 = vmatprep.subr.bf16.mxu0 0
      %1765 = vmatpush1.bf16.msra.mxu0 0
      %1766 = vmatprep.subr.bf16.mxu0 0
      %1767 = vmatpush1.bf16.msra.mxu0 0
      %1768 = vmatprep.subr.bf16.mxu0 0
      %1769 = vmatpush1.bf16.msra.mxu0 0
      %1770 = vmatprep.subr.bf16.mxu0 0
      %1771 = vmatpush1.bf16.msra.mxu0 0
      %1772 = vmatprep.subr.bf16.mxu0 0
      %1773 = vmatpush1.bf16.msra.mxu0 0
      %1774 = vmatprep.subr.bf16.mxu0 0
      %1775 = vmatpush1.bf16.msra.mxu0 0
      %1776 = vmatprep.subr.bf16.mxu0 0
      %1777 = vmatpush1.bf16.msra.mxu0 0
      %1778 = vmatprep.subr.bf16.mxu0 0
      %1779 = vmatpush1.bf16.msra.mxu0 0
      %1780 = vmatprep.mubr.bf16.mxu0 0
      %1781 = vmatmul.mubr.bf16.gmra.mrb[0].mxu0 %v1740
      %v1782 = vpop.f32.mrb[0].mxu0
      %v1783 = vadd.f32 0.0, %v1782
      %v1784 = vpop.f32.mrb[0].mxu0
      %v1785 = vpop.f32.mrb[0].mxu0
      %v1786 = vadd.f32 0.0, %v1785
      %v1787 = vpop.f32.mrb[0].mxu0
      %1788 = vmatprep.mubr.bf16.mxu0 0
      %1789 = vmatmul.mubr.bf16.gmra.mrb[0].mxu0 %v1743
      %v1790 = vpop.f32.mrb[0].mxu0
      %v1791 = vadd.f32 0.0, %v1790
      %v1792 = vpop.f32.mrb[0].mxu0
      %v1793 = vpop.f32.mrb[0].mxu0
      %v1794 = vadd.f32 0.0, %v1793
      %v1795 = vpop.f32.mrb[0].mxu0
      %1796 = vmatprep.mubr.bf16.mxu0 0
      %1797 = vmatmul.mubr.bf16.gmra.mrb[0].mxu0 %v1746
      %v1798 = vpop.f32.mrb[0].mxu0
      %v1799 = vadd.f32 0.0, %v1798
      %v1800 = vpop.f32.mrb[0].mxu0
      %v1801 = vpop.f32.mrb[0].mxu0
      %v1802 = vpop.f32.mrb[0].mxu0
      %1803 = vdwg.mxu0
      %v1804 = vadd.f32 %v1687, %v1783
      %v1805 = vadd.f32 %v1688, %v1786
      %v1806 = vadd.f32 %v1689, %v1791
      %v1807 = vadd.f32 %v1690, %v1794
      %v1808 = vadd.f32 %v1691, %v1799
      %v1809 = vld [vmem:[%s196 + $0x18] sm:$0xf]
      %s1810 = scalar_lea.vmem %s1, 416
      %v1811 = vld [vmem:[%s1810] sm:$0xf]
      %v1812 = vld [vmem:[%s1810 + $0x4] sm:$0xf]
      %v1813 = vld [vmem:[%s1810 + $0x8] sm:$0xf]
      %v1814 = vld [vmem:[%s1810 + $0xc] sm:$0xf]
      %v1815 = vld [vmem:[%s1810 + $0x10] sm:$0xf]
      %v1816 = vld [vmem:[%s1810 + $0x14] sm:$0xf]
      %v1817 = vld [vmem:[%s1810 + $0x18] sm:$0xf]
      %v1818 = vld [vmem:[%s1810 + $0x1c] sm:$0xf]
      %v1820 = vunpack.c.l.b16 %v1809
      %v1821 = vpack.c.b16 %v1820, %v1820
      %v1823 = vshrl.u32 %v1707, 16
      %v1825 = vrot.slane %v1823, 1
      %v1826 = vshll.u32 %v1707, 16
      %v1828 = vrot.slane %v1826, 2
      %v1829 = vor.u32 %v1825, %v1828
      %v1831 = vshrl.u32 %v1708, 16
      %v1833 = vrot.slane %v1831, 1
      %v1834 = vshll.u32 %v1708, 16
      %v1836 = vrot.slane %v1834, 2
      %v1837 = vor.u32 %v1833, %v1836
      %v1838 = vsel %vm570, %v1829, %v1837
      %v1840 = vshrl.u32 %v1821, 16
      %v1842 = vrot.slane %v1840, 1
      %v1843 = vshll.u32 %v1821, 16
      %v1845 = vrot.slane %v1843, 2
      %v1846 = vor.u32 %v1842, %v1845
      %v1847 = vsel %vm570, %v1837, %v1846
      %v1856 = vunpack.c.l.b16 %v1811
      %v1857 = vunpack.c.l.b16 %v1812
      %v1858 = vunpack.c.l.b16 %v1813
      %v1859 = vunpack.c.l.b16 %v1814
      %v1860 = vunpack.c.l.b16 %v1815
      %v1861 = vunpack.c.l.b16 %v1816
      %v1862 = vunpack.c.l.b16 %v1817
      %v1863 = vunpack.c.l.b16 %v1818
      %v1864 = vpack.c.b16 %v1857, %v1856
      %v1865 = vpack.c.b16 %v1859, %v1858
      %v1866 = vpack.c.b16 %v1861, %v1860
      %v1867 = vpack.c.b16 %v1863, %v1862
      %v1873 = vsel %vm288, %v1838, 0
      %v1876 = vsel %vm288, %v1847, 0
      %v1879 = vsel %vm288, %v1846, 0
      %1881 = vmatprep.subr.bf16.mxu0 0
      %1882 = vmatpush1.bf16.msra.mxu0 %v1864
      %1883 = vmatprep.subr.bf16.mxu0 0
      %1884 = vmatpush1.bf16.msra.mxu0 %v1865
      %1885 = vmatprep.subr.bf16.mxu0 0
      %1886 = vmatpush1.bf16.msra.mxu0 %v1866
      %1887 = vmatprep.subr.bf16.mxu0 0
      %1888 = vmatpush1.bf16.msra.mxu0 %v1867
      %1889 = vmatprep.subr.bf16.mxu0 0
      %1890 = vmatpush1.bf16.msra.mxu0 0
      %1891 = vmatprep.subr.bf16.mxu0 0
      %1892 = vmatpush1.bf16.msra.mxu0 0
      %1893 = vmatprep.subr.bf16.mxu0 0
      %1894 = vmatpush1.bf16.msra.mxu0 0
      %1895 = vmatprep.subr.bf16.mxu0 0
      %1896 = vmatpush1.bf16.msra.mxu0 0
      %1897 = vmatprep.subr.bf16.mxu0 0
      %1898 = vmatpush1.bf16.msra.mxu0 0
      %1899 = vmatprep.subr.bf16.mxu0 0
      %1900 = vmatpush1.bf16.msra.mxu0 0
      %1901 = vmatprep.subr.bf16.mxu0 0
      %1902 = vmatpush1.bf16.msra.mxu0 0
      %1903 = vmatprep.subr.bf16.mxu0 0
      %1904 = vmatpush1.bf16.msra.mxu0 0
      %1905 = vmatprep.subr.bf16.mxu0 0
      %1906 = vmatpush1.bf16.msra.mxu0 0
      %1907 = vmatprep.subr.bf16.mxu0 0
      %1908 = vmatpush1.bf16.msra.mxu0 0
      %1909 = vmatprep.subr.bf16.mxu0 0
      %1910 = vmatpush1.bf16.msra.mxu0 0
      %1911 = vmatprep.subr.bf16.mxu0 0
      %1912 = vmatpush1.bf16.msra.mxu0 0
      %1913 = vmatprep.mubr.bf16.mxu0 0
      %1914 = vmatmul.mubr.bf16.gmra.mrb[0].mxu0 %v1873
      %v1915 = vpop.f32.mrb[0].mxu0
      %v1916 = vadd.f32 0.0, %v1915
      %v1917 = vpop.f32.mrb[0].mxu0
      %v1918 = vpop.f32.mrb[0].mxu0
      %v1919 = vadd.f32 0.0, %v1918
      %v1920 = vpop.f32.mrb[0].mxu0
      %1921 = vmatprep.mubr.bf16.mxu0 0
      %1922 = vmatmul.mubr.bf16.gmra.mrb[0].mxu0 %v1876
      %v1923 = vpop.f32.mrb[0].mxu0
      %v1924 = vadd.f32 0.0, %v1923
      %v1925 = vpop.f32.mrb[0].mxu0
      %v1926 = vpop.f32.mrb[0].mxu0
      %v1927 = vadd.f32 0.0, %v1926
      %v1928 = vpop.f32.mrb[0].mxu0
      %1929 = vmatprep.mubr.bf16.mxu0 0
      %1930 = vmatmul.mubr.bf16.gmra.mrb[0].mxu0 %v1879
      %v1931 = vpop.f32.mrb[0].mxu0
      %v1932 = vadd.f32 0.0, %v1931
      %v1933 = vpop.f32.mrb[0].mxu0
      %v1934 = vpop.f32.mrb[0].mxu0
      %v1935 = vpop.f32.mrb[0].mxu0
      %1936 = vdwg.mxu0
      %v1937 = vadd.f32 %v1804, %v1916
      %v1938 = vadd.f32 %v1805, %v1919
      %v1939 = vadd.f32 %v1806, %v1924
      %v1940 = vadd.f32 %v1807, %v1927
      %v1941 = vadd.f32 %v1808, %v1932
      %v1942 = vld [vmem:[%s196 + $0x8] sm:$0xc]
      %s1943 = scalar_lea.vmem %s1, 448
      %v1944 = vld [vmem:[%s1943] sm:$0xf]
      %v1945 = vld [vmem:[%s1943 + $0x4] sm:$0xf]
      %v1946 = vld [vmem:[%s1943 + $0x8] sm:$0xf]
      %v1947 = vld [vmem:[%s1943 + $0xc] sm:$0xf]
      %v1948 = vld [vmem:[%s1943 + $0x10] sm:$0xf]
      %v1949 = vld [vmem:[%s1943 + $0x14] sm:$0xf]
      %v1950 = vld [vmem:[%s1943 + $0x18] sm:$0xf]
      %v1951 = vld [vmem:[%s1943 + $0x1c] sm:$0xf]
      %v1953 = vunpack.c.l.b16 %v1942
      %v1954 = vpack.c.b16 %v1324, %v1953
      %v1955 = vrot.slane %v1954, 2
      %v1956 = vrot.slane %v1708, 2
      %v1957 = vsel %vm1201, %v1955, %v1956
      %v1958 = vrot.slane %v1821, 2
      %v1959 = vsel %vm1201, %v1956, %v1958
      %v1968 = vunpack.c.l.b16 %v1944
      %v1969 = vunpack.c.l.b16 %v1945
      %v1970 = vunpack.c.l.b16 %v1946
      %v1971 = vunpack.c.l.b16 %v1947
      %v1972 = vunpack.c.l.b16 %v1948
      %v1973 = vunpack.c.l.b16 %v1949
      %v1974 = vunpack.c.l.b16 %v1950
      %v1975 = vunpack.c.l.b16 %v1951
      %v1976 = vpack.c.b16 %v1969, %v1968
      %v1977 = vpack.c.b16 %v1971, %v1970
      %v1978 = vpack.c.b16 %v1973, %v1972
      %v1979 = vpack.c.b16 %v1975, %v1974
      %v1985 = vsel %vm288, %v1957, 0
      %v1988 = vsel %vm288, %v1959, 0
      %v1991 = vsel %vm288, %v1958, 0
      %1993 = vmatprep.subr.bf16.mxu0 0
      %1994 = vmatpush1.bf16.msra.mxu0 %v1976
      %1995 = vmatprep.subr.bf16.mxu0 0
      %1996 = vmatpush1.bf16.msra.mxu0 %v1977
      %1997 = vmatprep.subr.bf16.mxu0 0
      %1998 = vmatpush1.bf16.msra.mxu0 %v1978
      %1999 = vmatprep.subr.bf16.mxu0 0
      %2000 = vmatpush1.bf16.msra.mxu0 %v1979
      %2001 = vmatprep.subr.bf16.mxu0 0
      %2002 = vmatpush1.bf16.msra.mxu0 0
      %2003 = vmatprep.subr.bf16.mxu0 0
      %2004 = vmatpush1.bf16.msra.mxu0 0
      %2005 = vmatprep.subr.bf16.mxu0 0
      %2006 = vmatpush1.bf16.msra.mxu0 0
      %2007 = vmatprep.subr.bf16.mxu0 0
      %2008 = vmatpush1.bf16.msra.mxu0 0
      %2009 = vmatprep.subr.bf16.mxu0 0
      %2010 = vmatpush1.bf16.msra.mxu0 0
      %2011 = vmatprep.subr.bf16.mxu0 0
      %2012 = vmatpush1.bf16.msra.mxu0 0
      %2013 = vmatprep.subr.bf16.mxu0 0
      %2014 = vmatpush1.bf16.msra.mxu0 0
      %2015 = vmatprep.subr.bf16.mxu0 0
      %2016 = vmatpush1.bf16.msra.mxu0 0
      %2017 = vmatprep.subr.bf16.mxu0 0
      %2018 = vmatpush1.bf16.msra.mxu0 0
      %2019 = vmatprep.subr.bf16.mxu0 0
      %2020 = vmatpush1.bf16.msra.mxu0 0
      %2021 = vmatprep.subr.bf16.mxu0 0
      %2022 = vmatpush1.bf16.msra.mxu0 0
      %2023 = vmatprep.subr.bf16.mxu0 0
      %2024 = vmatpush1.bf16.msra.mxu0 0
      %2025 = vmatprep.mubr.bf16.mxu0 0
      %2026 = vmatmul.mubr.bf16.gmra.mrb[0].mxu0 %v1985
      %v2027 = vpop.f32.mrb[0].mxu0
      %v2028 = vadd.f32 0.0, %v2027
      %v2029 = vpop.f32.mrb[0].mxu0
      %v2030 = vpop.f32.mrb[0].mxu0
      %v2031 = vadd.f32 0.0, %v2030
      %v2032 = vpop.f32.mrb[0].mxu0
      %2033 = vmatprep.mubr.bf16.mxu0 0
      %2034 = vmatmul.mubr.bf16.gmra.mrb[0].mxu0 %v1988
      %v2035 = vpop.f32.mrb[0].mxu0
      %v2036 = vadd.f32 0.0, %v2035
      %v2037 = vpop.f32.mrb[0].mxu0
      %v2038 = vpop.f32.mrb[0].mxu0
      %v2039 = vadd.f32 0.0, %v2038
      %v2040 = vpop.f32.mrb[0].mxu0
      %2041 = vmatprep.mubr.bf16.mxu0 0
      %2042 = vmatmul.mubr.bf16.gmra.mrb[0].mxu0 %v1991
      %v2043 = vpop.f32.mrb[0].mxu0
      %v2044 = vadd.f32 0.0, %v2043
      %v2045 = vpop.f32.mrb[0].mxu0
      %v2046 = vpop.f32.mrb[0].mxu0
      %v2047 = vpop.f32.mrb[0].mxu0
      %2048 = vdwg.mxu0
      %v2049 = vadd.f32 %v1937, %v2028
      %v2050 = vadd.f32 %v1938, %v2031
      %v2051 = vadd.f32 %v1939, %v2036
      %v2052 = vadd.f32 %v1940, %v2039
      %v2053 = vadd.f32 %v1941, %v2044
      %v2054 = vld [vmem:[%s196 + $0x8] sm:$0xc]
      %v2055 = vld [vmem:[%s196 + $0xc] sm:$0xf]
      %v2056 = vld [vmem:[%s196 + $0x10] sm:$0xf]
      %v2057 = vld [vmem:[%s196 + $0x14] sm:$0xf]
      %v2058 = vld [vmem:[%s196 + $0x18] sm:$0xf]
      %v2059 = vld [vmem:[%s196 + $0x1c] sm:$0x1]
      %s2060 = scalar_lea.vmem %s1, 480
      %v2061 = vld [vmem:[%s2060] sm:$0xf]
      %v2062 = vld [vmem:[%s2060 + $0x4] sm:$0xf]
      %v2063 = vld [vmem:[%s2060 + $0x8] sm:$0xf]
      %v2064 = vld [vmem:[%s2060 + $0xc] sm:$0xf]
      %v2065 = vld [vmem:[%s2060 + $0x10] sm:$0xf]
      %v2066 = vld [vmem:[%s2060 + $0x14] sm:$0xf]
      %v2067 = vld [vmem:[%s2060 + $0x18] sm:$0xf]
      %v2068 = vld [vmem:[%s2060 + $0x1c] sm:$0xf]
      %v2075 = vunpack.c.l.b16 %v2054
      %v2076 = vunpack.c.l.b16 %v2055
      %v2077 = vunpack.c.l.b16 %v2056
      %v2078 = vunpack.c.l.b16 %v2057
      %v2079 = vunpack.c.l.b16 %v2058
      %v2080 = vunpack.c.l.b16 %v2059
      %v2081 = vpack.c.b16 %v2076, %v2075
      %v2082 = vpack.c.b16 %v2078, %v2077
      %v2083 = vpack.c.b16 %v2080, %v2079
      %v2085 = vshrl.u32 %v2081, 16
      %v2087 = vrot.slane %v2085, 2
      %v2088 = vshll.u32 %v2081, 16
      %v2090 = vrot.slane %v2088, 3
      %v2091 = vor.u32 %v2087, %v2090
      %v2093 = vshrl.u32 %v2082, 16
      %v2095 = vrot.slane %v2093, 2
      %v2096 = vshll.u32 %v2082, 16
      %v2098 = vrot.slane %v2096, 3
      %v2099 = vor.u32 %v2095, %v2098
      %v2100 = vsel %vm1331, %v2091, %v2099
      %v2102 = vshrl.u32 %v2083, 16
      %v2104 = vrot.slane %v2102, 2
      %v2105 = vshll.u32 %v2083, 16
      %v2107 = vrot.slane %v2105, 3
      %v2108 = vor.u32 %v2104, %v2107
      %v2109 = vsel %vm1331, %v2099, %v2108
      %v2118 = vunpack.c.l.b16 %v2061
      %v2119 = vunpack.c.l.b16 %v2062
      %v2120 = vunpack.c.l.b16 %v2063
      %v2121 = vunpack.c.l.b16 %v2064
      %v2122 = vunpack.c.l.b16 %v2065
      %v2123 = vunpack.c.l.b16 %v2066
      %v2124 = vunpack.c.l.b16 %v2067
      %v2125 = vunpack.c.l.b16 %v2068
      %v2126 = vpack.c.b16 %v2119, %v2118
      %v2127 = vpack.c.b16 %v2121, %v2120
      %v2128 = vpack.c.b16 %v2123, %v2122
      %v2129 = vpack.c.b16 %v2125, %v2124
      %v2135 = vsel %vm288, %v2100, 0
      %v2138 = vsel %vm288, %v2109, 0
      %v2141 = vsel %vm288, %v2108, 0
      %2143 = vmatprep.subr.bf16.mxu0 0
      %2144 = vmatpush1.bf16.msra.mxu0 %v2126
      %2145 = vmatprep.subr.bf16.mxu0 0
      %2146 = vmatpush1.bf16.msra.mxu0 %v2127
      %2147 = vmatprep.subr.bf16.mxu0 0
      %2148 = vmatpush1.bf16.msra.mxu0 %v2128
      %2149 = vmatprep.subr.bf16.mxu0 0
      %2150 = vmatpush1.bf16.msra.mxu0 %v2129
      %2151 = vmatprep.subr.bf16.mxu0 0
      %2152 = vmatpush1.bf16.msra.mxu0 0
      %2153 = vmatprep.subr.bf16.mxu0 0
      %2154 = vmatpush1.bf16.msra.mxu0 0
      %2155 = vmatprep.subr.bf16.mxu0 0
      %2156 = vmatpush1.bf16.msra.mxu0 0
      %2157 = vmatprep.subr.bf16.mxu0 0
      %2158 = vmatpush1.bf16.msra.mxu0 0
      %2159 = vmatprep.subr.bf16.mxu0 0
      %2160 = vmatpush1.bf16.msra.mxu0 0
      %2161 = vmatprep.subr.bf16.mxu0 0
      %2162 = vmatpush1.bf16.msra.mxu0 0
      %2163 = vmatprep.subr.bf16.mxu0 0
      %2164 = vmatpush1.bf16.msra.mxu0 0
      %2165 = vmatprep.subr.bf16.mxu0 0
      %2166 = vmatpush1.bf16.msra.mxu0 0
      %2167 = vmatprep.subr.bf16.mxu0 0
      %2168 = vmatpush1.bf16.msra.mxu0 0
      %2169 = vmatprep.subr.bf16.mxu0 0
      %2170 = vmatpush1.bf16.msra.mxu0 0
      %2171 = vmatprep.subr.bf16.mxu0 0
      %2172 = vmatpush1.bf16.msra.mxu0 0
      %2173 = vmatprep.subr.bf16.mxu0 0
      %2174 = vmatpush1.bf16.msra.mxu0 0
      %2175 = vmatprep.mubr.bf16.mxu0 0
      %2176 = vmatmul.mubr.bf16.gmra.mrb[0].mxu0 %v2135
      %v2177 = vpop.f32.mrb[0].mxu0
      %v2178 = vadd.f32 0.0, %v2177
      %v2179 = vpop.f32.mrb[0].mxu0
      %v2180 = vpop.f32.mrb[0].mxu0
      %v2181 = vadd.f32 0.0, %v2180
      %v2182 = vpop.f32.mrb[0].mxu0
      %2183 = vmatprep.mubr.bf16.mxu0 0
      %2184 = vmatmul.mubr.bf16.gmra.mrb[0].mxu0 %v2138
      %v2185 = vpop.f32.mrb[0].mxu0
      %v2186 = vadd.f32 0.0, %v2185
      %v2187 = vpop.f32.mrb[0].mxu0
      %v2188 = vpop.f32.mrb[0].mxu0
      %v2189 = vadd.f32 0.0, %v2188
      %v2190 = vpop.f32.mrb[0].mxu0
      %2191 = vmatprep.mubr.bf16.mxu0 0
      %2192 = vmatmul.mubr.bf16.gmra.mrb[0].mxu0 %v2141
      %v2193 = vpop.f32.mrb[0].mxu0
      %v2194 = vadd.f32 0.0, %v2193
      %v2195 = vpop.f32.mrb[0].mxu0
      %v2196 = vpop.f32.mrb[0].mxu0
      %v2197 = vpop.f32.mrb[0].mxu0
      %2198 = vdwg.mxu0
      %v2199 = vadd.f32 %v2049, %v2178
      %v2200 = vadd.f32 %v2050, %v2181
      %v2201 = vadd.f32 %v2051, %v2186
      %v2202 = vadd.f32 %v2052, %v2189
      %v2203 = vadd.f32 %v2053, %v2194
      %v2204 = vld [vmem:[%s2] sm:$0xff]
      %v2205 = vld [vmem:[%s2 + $0x8] sm:$0xff]
      %v2206 = vld [vmem:[%s2 + $0x10] sm:$0xff]
      %v2207 = vld [vmem:[%s2 + $0x18] sm:$0xff]
      %v2208 = vld [vmem:[%s2 + $0x20] sm:$0xf]
      %2210 = vset.pattern.permute.xlu0 0
      %2211 = vperm.xlu0 %2210, %v2204
      %v2212 = vpop.permute.xlu0 %2211
      %2215 = vset.pattern.permute.xlu0 0
      %2216 = vperm.xlu0 %2215, %v2205
      %v2217 = vpop.permute.xlu0 %2216
      %2220 = vset.pattern.permute.xlu0 0
      %2221 = vperm.xlu0 %2220, %v2206
      %v2222 = vpop.permute.xlu0 %2221
      %2225 = vset.pattern.permute.xlu0 0
      %2226 = vperm.xlu0 %2225, %v2207
      %v2227 = vpop.permute.xlu0 %2226
      %2230 = vset.pattern.permute.xlu0 0
      %2231 = vperm.xlu0 %2230, %v2208
      %v2232 = vpop.permute.xlu0 %2231
      %v2234 = vmul.f32 %v2199, %v2212
      %v2235 = vmul.f32 %v2200, %v2217
      %v2236 = vmul.f32 %v2201, %v2222
      %v2237 = vmul.f32 %v2202, %v2227
      %v2238 = vmul.f32 %v2203, %v2232
      %v2239 = vadd.f32 %v2234, %v2235
      %v2240 = vadd.f32 %v2239, %v2236
      %v2241 = vadd.f32 %v2240, %v2237
      %vm2242 = vcmask 1043456
      %v2243 = vsel %vm2242, %v2238, 0.0
      %v2244 = vadd.f32 %v2241, %v2243
      %v2245 = vrot.slane %v2244, 4
      %v2246 = vadd.f32 %v2244, %v2245
      %v2247 = vrot.slane %v2246, 2
      %v2248 = vadd.f32 %v2246, %v2247
      %v2249 = vrot.slane %v2248, 1
      %v2250 = vadd.f32 %v2248, %v2249
      %2251 = vst [vmem:[%s199] sm:$0x1] %v2250
      %v2252 = vmul.f32 %v2234, %v2234
      %v2253 = vmul.f32 %v2235, %v2235
      %v2254 = vmul.f32 %v2236, %v2236
      %v2255 = vmul.f32 %v2237, %v2237
      %v2256 = vmul.f32 %v2238, %v2238
      %v2257 = vadd.f32 %v2252, %v2253
      %v2258 = vadd.f32 %v2257, %v2254
      %v2259 = vadd.f32 %v2258, %v2255
      %v2260 = vsel %vm2242, %v2256, 0.0
      %v2261 = vadd.f32 %v2259, %v2260
      %v2262 = vrot.slane %v2261, 4
      %v2263 = vadd.f32 %v2261, %v2262
      %v2264 = vrot.slane %v2263, 2
      %v2265 = vadd.f32 %v2263, %v2264
      %v2266 = vrot.slane %v2265, 1
      %v2267 = vadd.f32 %v2265, %v2266
      %2268 = vst [vmem:[%s202] sm:$0x1] %v2267
      %p2269 = scmp.lt.s32.totalorder %s16, 1
      %s2270 = scalar_select %p2269, %s16, 1
      %s2271 = scalar_lea.vmem %s3, %s2270
      %p2272 = scmp.lt.s32.totalorder %s16, 1
      %s2273 = scalar_select %p2272, %s16, 1
      %s2274 = scalar_lea.vmem %s4, %s2273
      // Predicated region
      $region33: #{patch_discriminator_forward.15} parent=31 // pred_check
        %p2275 = pneg %p102
      $region34: #{patch_discriminator_forward.15} parent=31 // pred_check_branch
        %2277 = sbr.rel (%p2275) target = $region36
      $region35: #{patch_discriminator_forward.15} parent=31 // pred_region
        _
      $region36: #{patch_discriminator_forward.15} parent=31 // pred_fallthru
        _
      // Predicated region
      $region37: #{patch_discriminator_forward.15} parent=31 // pred_check
        %p2278 = pneg %p128
      $region38: #{patch_discriminator_forward.15} parent=31 // pred_check_branch
        %2280 = sbr.rel (%p2278) target = $region40
      $region39: #{patch_discriminator_forward.15} parent=31 // pred_region
        _
      $region40: #{patch_discriminator_forward.15} parent=31 // pred_fallthru
        _
    $region32: #{patch_discriminator_forward.15} parent=5 // pred_fallthru
      _
    %p2281 = scmp.le.s32.totalorder 2, %s11
    // Predicated region
    $region41: #{patch_discriminator_forward.15} parent=5 // pred_check
      %p2282 = pneg %p2281
    $region42: #{patch_discriminator_forward.15} parent=5 // pred_check_branch
      %2284 = sbr.rel (%p2282) target = $region44
    $region43: #{patch_discriminator_forward.15} parent=5 // pred_region
      %s2285 = ssub.s32 %s11, 2
      // Predicated region
      $region45: #{patch_discriminator_forward.15} parent=43 // pred_check
        %p2286 = pneg %p108
      $region46: #{patch_discriminator_forward.15} parent=43 // pred_check_branch
        %2288 = sbr.rel (%p2286) target = $region48
      $region47: #{patch_discriminator_forward.15} parent=43 // pred_region
        %p2289 = scmp.lt.s32.totalorder %s17, 1
        %s2290 = scalar_select %p2289, %s17, 1
        %s2291 = scalar_lea.vmem %s3, %s2290
      $region48: #{patch_discriminator_forward.15} parent=43 // pred_fallthru
        _
      // Predicated region
      $region49: #{patch_discriminator_forward.15} parent=43 // pred_check
        %p2292 = pneg %p134
      $region50: #{patch_discriminator_forward.15} parent=43 // pred_check_branch
        %2294 = sbr.rel (%p2292) target = $region52
      $region51: #{patch_discriminator_forward.15} parent=43 // pred_region
        %p2295 = scmp.lt.s32.totalorder %s17, 1
        %s2296 = scalar_select %p2295, %s17, 1
        %s2297 = scalar_lea.vmem %s4, %s2296
      $region52: #{patch_discriminator_forward.15} parent=43 // pred_fallthru
        _
    $region44: #{patch_discriminator_forward.15} parent=5 // pred_fallthru
      _
  $region6: #{patch_discriminator_forward.15} parent=0 // loop_footer
    %s15 = sadd.s32 1, %s11
  $region7: #{patch_discriminator_forward.15} parent=0 // loop_footer_branch
    %10 = sbr.rel target = $region3
  $region8: #{patch_discriminator_forward.15} parent=0 // loop_exit
    _

// kernel: patch_discriminator_forward.16
$region0: #{patch_discriminator_forward.16}
  #allocation0 [shape = 'u32[]', space=smem, size = 0x4, offset = 0x4, fixed_abs, tag = 'smem constant byte address 0x4 - core index']
  #allocation1 [shape = 'u32[144,128]{1,0:T(1,128)}', space=vmem, size = 0x12000, scoped, tag = 'internal scratch']
  %s0 = inlined_call_operand.vmem [shape: bf16[2,60,64], index: 0, kind: input, shape index: {}]
  %s1 = inlined_call_operand.vmem [shape: bf16[16,64,128], index: 1, kind: input, shape index: {}]
  %s2 = inlined_call_operand.vmem [shape: f32[1,128], index: 2, kind: input, shape index: {}]
  %s3 = inlined_call_operand.vmem [shape: f32[1,128], index: 3, kind: input, shape index: {}]
  %s4 = inlined_call_operand.vmem [shape: bf16[2,36,128], index: 4, kind: output, shape index: {}]
  %s5 = sld [smem:[#allocation0]]
  $region49: #{patch_discriminator_forward.16} parent=0
    _
  %s7 = ssub.s32 1, %s5
  %s8 = scalar_select 0, %s7, %s5
  loop: start=0, step=1, limit=4
  $region2: #{patch_discriminator_forward.16} parent=0 // loop_pre_header
    _
  $region3: #{patch_discriminator_forward.16} parent=0 // loop_header
    %s10 = sphi 0, %s14
    %p11 = scmp.ge.s32.totalorder %s10, 4
    %s20 = sphi 0, %s22
    %s23 = sphi 0, %s20
    %s24 = sphi 0, %s23
    %s40 = sphi 0, %s24
    %s44 = sphi 0, %s44
    %s46 = sphi 0, %s44
    %s47 = sphi 0, %s46
    %s61 = sphi 0, %s47
    %s65 = sphi 0, %s65
    %s67 = sphi 0, %s65
    %s68 = sphi 0, %s67
    %s82 = sphi 0, %s68
    %s86 = sphi 0, %s86
    %s88 = sphi 0, %s86
    %s89 = sphi 0, %s88
    %s103 = sphi 0, %s89
    %s109 = sphi 0, %s111
    %s112 = sphi 0, %s109
    %s113 = sphi 0, %s112
    %s129 = sphi 0, %s113
  $region4: #{patch_discriminator_forward.16} parent=0 // loop_header_branch
    %13 = sbr.rel (%p11) target = $region8
  $region5: #{patch_discriminator_forward.16} parent=0 // loop_body
    %s15 = ssub.s32 %s10, 1
    %s16 = ssub.s32 %s10, 2
    %s17 = sadd.s32 %s10, 1
    %s18 = ssub.s32 %s10, %s17
    %p19 = scmp.eq.s32.totalorder %s18, 0
    %s21 = sadd.s32 %s20, 1
    %s22 = scalar_select %p19, %s20, %s21
    %p25 = pneg %p19
    %p26 = scmp.eq.s32.totalorder %s10, 1
    %p27 = por %p25, %p26
    %p28 = scmp.ne.s32.totalorder %s20, %s23
    %p29 = scmp.eq.s32.totalorder %s10, 0
    %p30 = por %p28, %p29
    %p31 = scmp.ne.s32.totalorder %s20, %s23
    %p32 = scmp.eq.s32.totalorder %s15, 1
    %p33 = por %p31, %p32
    %p34 = scmp.ne.s32.totalorder %s23, %s24
    %p35 = scmp.eq.s32.totalorder %s15, 0
    %p36 = por %p34, %p35
    %p37 = scmp.ne.s32.totalorder %s23, %s24
    %p38 = scmp.eq.s32.totalorder %s16, 1
    %p39 = por %p37, %p38
    %p41 = scmp.ne.s32.totalorder %s24, %s40
    %p42 = scmp.eq.s32.totalorder %s16, 0
    %p43 = por %p41, %p42
    %s45 = sadd.s32 %s44, 1
    %p48 = scmp.eq.s32.totalorder %s10, 1
    %p49 = scmp.ne.s32.totalorder %s44, %s46
    %p50 = scmp.eq.s32.totalorder %s10, 0
    %p51 = por %p49, %p50
    %p52 = scmp.ne.s32.totalorder %s44, %s46
    %p53 = scmp.eq.s32.totalorder %s15, 1
    %p54 = por %p52, %p53
    %p55 = scmp.ne.s32.totalorder %s46, %s47
    %p56 = scmp.eq.s32.totalorder %s15, 0
    %p57 = por %p55, %p56
    %p58 = scmp.ne.s32.totalorder %s46, %s47
    %p59 = scmp.eq.s32.totalorder %s16, 1
    %p60 = por %p58, %p59
    %p62 = scmp.ne.s32.totalorder %s47, %s61
    %p63 = scmp.eq.s32.totalorder %s16, 0
    %p64 = por %p62, %p63
    %s66 = sadd.s32 %s65, 1
    %p69 = scmp.eq.s32.totalorder %s10, 1
    %p70 = scmp.ne.s32.totalorder %s65, %s67
    %p71 = scmp.eq.s32.totalorder %s10, 0
    %p72 = por %p70, %p71
    %p73 = scmp.ne.s32.totalorder %s65, %s67
    %p74 = scmp.eq.s32.totalorder %s15, 1
    %p75 = por %p73, %p74
    %p76 = scmp.ne.s32.totalorder %s67, %s68
    %p77 = scmp.eq.s32.totalorder %s15, 0
    %p78 = por %p76, %p77
    %p79 = scmp.ne.s32.totalorder %s67, %s68
    %p80 = scmp.eq.s32.totalorder %s16, 1
    %p81 = por %p79, %p80
    %p83 = scmp.ne.s32.totalorder %s68, %s82
    %p84 = scmp.eq.s32.totalorder %s16, 0
    %p85 = por %p83, %p84
    %s87 = sadd.s32 %s86, 1
    %p90 = scmp.eq.s32.totalorder %s10, 1
    %p91 = scmp.ne.s32.totalorder %s86, %s88
    %p92 = scmp.eq.s32.totalorder %s10, 0
    %p93 = por %p91, %p92
    %p94 = scmp.ne.s32.totalorder %s86, %s88
    %p95 = scmp.eq.s32.totalorder %s15, 1
    %p96 = por %p94, %p95
    %p97 = scmp.ne.s32.totalorder %s88, %s89
    %p98 = scmp.eq.s32.totalorder %s15, 0
    %p99 = por %p97, %p98
    %p100 = scmp.ne.s32.totalorder %s88, %s89
    %p101 = scmp.eq.s32.totalorder %s16, 1
    %p102 = por %p100, %p101
    %p104 = scmp.ne.s32.totalorder %s89, %s103
    %p105 = scmp.eq.s32.totalorder %s16, 0
    %p106 = por %p104, %p105
    %s107 = ssub.s32 %s10, %s17
    %p108 = scmp.eq.s32.totalorder %s107, 0
    %s110 = sadd.s32 %s109, 1
    %s111 = scalar_select %p108, %s109, %s110
    %p114 = pneg %p108
    %p115 = scmp.eq.s32.totalorder %s10, 1
    %p116 = por %p114, %p115
    %p117 = scmp.ne.s32.totalorder %s109, %s112
    %p118 = scmp.eq.s32.totalorder %s10, 0
    %p119 = por %p117, %p118
    %p120 = scmp.ne.s32.totalorder %s109, %s112
    %p121 = scmp.eq.s32.totalorder %s15, 1
    %p122 = por %p120, %p121
    %p123 = scmp.ne.s32.totalorder %s112, %s113
    %p124 = scmp.eq.s32.totalorder %s15, 0
    %p125 = por %p123, %p124
    %p126 = scmp.ne.s32.totalorder %s112, %s113
    %p127 = scmp.eq.s32.totalorder %s16, 1
    %p128 = por %p126, %p127
    %p130 = scmp.ne.s32.totalorder %s113, %s129
    %p131 = scmp.eq.s32.totalorder %s16, 0
    %p132 = por %p130, %p131
    %p133 = scmp.le.s32.totalorder 1, %s10
    %p134 = scmp.lt.s32.totalorder %s10, 3
    %p135 = pnand %p133, %p134
    %p136 = pneg %p135
    // Predicated region
    $region9: #{patch_discriminator_forward.16} parent=5 // pred_check
      _
    $region10: #{patch_discriminator_forward.16} parent=5 // pred_check_branch
      %138 = sbr.rel (%p135) target = $region12
    $region11: #{patch_discriminator_forward.16} parent=5 // pred_region
      %s139 = ssub.s32 %s10, 1
      // Predicated region
      $region13: #{patch_discriminator_forward.16} parent=11 // pred_check
        %p140 = pneg %p57
      $region14: #{patch_discriminator_forward.16} parent=11 // pred_check_branch
        %142 = sbr.rel (%p140) target = $region16
      $region15: #{patch_discriminator_forward.16} parent=11 // pred_region
        _
      $region16: #{patch_discriminator_forward.16} parent=11 // pred_fallthru
        _
      // Predicated region
      $region17: #{patch_discriminator_forward.16} parent=11 // pred_check
        %p143 = pneg %p78
      $region18: #{patch_discriminator_forward.16} parent=11 // pred_check_branch
        %145 = sbr.rel (%p143) target = $region20
      $region19: #{patch_discriminator_forward.16} parent=11 // pred_region
        _
      $region20: #{patch_discriminator_forward.16} parent=11 // pred_fallthru
        _
      // Predicated region
      $region21: #{patch_discriminator_forward.16} parent=11 // pred_check
        %p146 = pneg %p99
      $region22: #{patch_discriminator_forward.16} parent=11 // pred_check_branch
        %148 = sbr.rel (%p146) target = $region24
      $region23: #{patch_discriminator_forward.16} parent=11 // pred_region
        _
      $region24: #{patch_discriminator_forward.16} parent=11 // pred_fallthru
        _
    $region12: #{patch_discriminator_forward.16} parent=5 // pred_fallthru
      _
    %p149 = scmp.lt.s32.totalorder %s10, 2
    // Predicated region
    $region25: #{patch_discriminator_forward.16} parent=5 // pred_check
      %p150 = pneg %p149
    $region26: #{patch_discriminator_forward.16} parent=5 // pred_check_branch
      %152 = sbr.rel (%p150) target = $region28
    $region27: #{patch_discriminator_forward.16} parent=5 // pred_region
      // Predicated region
      $region29: #{patch_discriminator_forward.16} parent=27 // pred_check
        %p153 = pneg %p30
      $region30: #{patch_discriminator_forward.16} parent=27 // pred_check_branch
        %155 = sbr.rel (%p153) target = $region32
      $region31: #{patch_discriminator_forward.16} parent=27 // pred_region
        %p156 = scmp.lt.s32.totalorder %s10, 1
        %s157 = scalar_select %p156, %s10, 1
        %s158 = smul.addr %s157, 8
        %s159 = smul.addr %s158, 4
        %s160 = scalar_lea.vmem %s0, %s159
      $region32: #{patch_discriminator_forward.16} parent=27 // pred_fallthru
        _
    $region28: #{patch_discriminator_forward.16} parent=5 // pred_fallthru
      _
    %p161 = scmp.le.s32.totalorder 1, %s10
    %p162 = scmp.lt.s32.totalorder %s10, 3
    %p163 = pnand %p161, %p162
    %p164 = pneg %p163
    // Predicated region
    $region33: #{patch_discriminator_forward.16} parent=5 // pred_check
      _
    $region34: #{patch_discriminator_forward.16} parent=5 // pred_check_branch
      %166 = sbr.rel (%p163) target = $region36
    $region35: #{patch_discriminator_forward.16} parent=5 // pred_region
      %s167 = ssub.s32 %s10, 1
      %p168 = scmp.lt.s32.totalorder %s15, 1
      %s169 = scalar_select %p168, %s15, 1
      %s170 = smul.addr %s169, 8
      %s171 = smul.addr %s170, 4
      %s172 = scalar_lea.vmem %s0, %s171
      %p173 = pneg %p36
      %p174 = pneg %p33
      %p175 = pneg %p57
      %p176 = pneg %p54
      %p177 = pneg %p78
      %p178 = pneg %p75
      %p179 = pneg %p99
      %p180 = pneg %p96
      %p181 = pneg %p125
      %p182 = pneg %p122
      %p183 = scmp.lt.s32.totalorder %s15, 1
      %s184 = scalar_select %p183, %s15, 1
      %s185 = smul.addr %s184, 5
      %s186 = smul.addr %s185, 4
      %s187 = scalar_lea.vmem %s4, %s186
      %p188 = scmp.lt.s32.totalorder %s15, 1
      %s189 = scalar_select %p188, %s15, 1
      %s190 = smul.addr %s189, 8
      %s191 = smul.addr %s190, 4
      %s192 = scalar_lea.vmem %s0, %s191
      %p193 = scmp.lt.s32.totalorder %s15, 1
      %s194 = scalar_select %p193, %s15, 1
      %s195 = smul.addr %s194, 5
      %s196 = smul.addr %s195, 4
      %s197 = scalar_lea.vmem %s4, %s196
      %v199 = vld [vmem:[%s192] sm:$0xf]
      %v200 = vld [vmem:[%s192 + $0x4] sm:$0xf]
      %v201 = vld [vmem:[%s192 + $0x8] sm:$0xf]
      %v202 = vld [vmem:[%s192 + $0xc] sm:$0xf]
      %v203 = vld [vmem:[%s192 + $0x10] sm:$0x3]
      %v204 = vld [vmem:[%s1] sm:$0xf]
      %v205 = vld [vmem:[%s1 + $0x4] sm:$0xf]
      %v206 = vld [vmem:[%s1 + $0x8] sm:$0xf]
      %v207 = vld [vmem:[%s1 + $0xc] sm:$0xf]
      %v208 = vld [vmem:[%s1 + $0x10] sm:$0xf]
      %v209 = vld [vmem:[%s1 + $0x14] sm:$0xf]
      %v210 = vld [vmem:[%s1 + $0x18] sm:$0xf]
      %v211 = vld [vmem:[%s1 + $0x1c] sm:$0xf]
      %v212 = vld [vmem:[%s192 + $0x10] sm:$0x7]
      %s213 = scalar_lea.vmem %s1, 32
      %v214 = vld [vmem:[%s213] sm:$0xf]
      %v215 = vld [vmem:[%s213 + $0x4] sm:$0xf]
      %v216 = vld [vmem:[%s213 + $0x8] sm:$0xf]
      %v217 = vld [vmem:[%s213 + $0xc] sm:$0xf]
      %v218 = vld [vmem:[%s213 + $0x10] sm:$0xf]
      %v219 = vld [vmem:[%s213 + $0x14] sm:$0xf]
      %v220 = vld [vmem:[%s213 + $0x18] sm:$0xf]
      %v221 = vld [vmem:[%s213 + $0x1c] sm:$0xf]
      %v227 = vunpack.c.l.b16 %v199
      %v228 = vunpack.c.l.b16 %v200
      %v229 = vunpack.c.l.b16 %v201
      %v230 = vunpack.c.l.b16 %v202
      %v231 = vunpack.c.l.b16 %v212
      %v232 = vpack.c.b16 %v228, %v227
      %v233 = vpack.c.b16 %v230, %v229
      %v234 = vpack.c.b16 %v231, %v231
      %vm235 = vsmask.f32 7424
      %v237 = vshrl.u32 %v232, 16
      %v239 = vshll.u32 %v232, 16
      %v241 = vrot.slane %v239, 1
      %v242 = vor.u32 %v237, %v241
      %v244 = vshll.u32 %v233, 16
      %v246 = vrot.slane %v244, 1
      %v247 = vsel %vm235, %v242, %v246
      %v248 = vshrl.u32 %v233, 16
      %v250 = vor.u32 %v248, %v246
      %v252 = vshll.u32 %v234, 16
      %v254 = vrot.slane %v252, 1
      %v255 = vsel %vm235, %v250, %v254
      %v256 = vshrl.u32 %v234, 16
      %v258 = vor.u32 %v256, %v254
      %v267 = vunpack.c.l.b16 %v214
      %v268 = vunpack.c.l.b16 %v215
      %v269 = vunpack.c.l.b16 %v216
      %v270 = vunpack.c.l.b16 %v217
      %v271 = vunpack.c.l.b16 %v218
      %v272 = vunpack.c.l.b16 %v219
      %v273 = vunpack.c.l.b16 %v220
      %v274 = vunpack.c.l.b16 %v221
      %v275 = vpack.c.b16 %v268, %v267
      %v276 = vpack.c.b16 %v270, %v269
      %v277 = vpack.c.b16 %v272, %v271
      %v278 = vpack.c.b16 %v274, %v273
      %vm283 = vcmask 523264
      %v285 = vsel %vm283, %v247, 0
      %v288 = vsel %vm283, %v255, 0
      %v291 = vsel %vm283, %v258, 0
      %293 = vmatprep.subr.bf16.mxu0 0
      %294 = vmatpush1.bf16.msra.mxu0 %v275
      %295 = vmatprep.subr.bf16.mxu0 0
      %296 = vmatpush1.bf16.msra.mxu0 %v276
      %297 = vmatprep.subr.bf16.mxu0 0
      %298 = vmatpush1.bf16.msra.mxu0 %v277
      %299 = vmatprep.subr.bf16.mxu0 0
      %300 = vmatpush1.bf16.msra.mxu0 %v278
      %301 = vmatprep.subr.bf16.mxu0 0
      %302 = vmatpush1.bf16.msra.mxu0 0
      %303 = vmatprep.subr.bf16.mxu0 0
      %304 = vmatpush1.bf16.msra.mxu0 0
      %305 = vmatprep.subr.bf16.mxu0 0
      %306 = vmatpush1.bf16.msra.mxu0 0
      %307 = vmatprep.subr.bf16.mxu0 0
      %308 = vmatpush1.bf16.msra.mxu0 0
      %309 = vmatprep.subr.bf16.mxu0 0
      %310 = vmatpush1.bf16.msra.mxu0 0
      %311 = vmatprep.subr.bf16.mxu0 0
      %312 = vmatpush1.bf16.msra.mxu0 0
      %313 = vmatprep.subr.bf16.mxu0 0
      %314 = vmatpush1.bf16.msra.mxu0 0
      %315 = vmatprep.subr.bf16.mxu0 0
      %316 = vmatpush1.bf16.msra.mxu0 0
      %317 = vmatprep.subr.bf16.mxu0 0
      %318 = vmatpush1.bf16.msra.mxu0 0
      %319 = vmatprep.subr.bf16.mxu0 0
      %320 = vmatpush1.bf16.msra.mxu0 0
      %321 = vmatprep.subr.bf16.mxu0 0
      %322 = vmatpush1.bf16.msra.mxu0 0
      %323 = vmatprep.subr.bf16.mxu0 0
      %324 = vmatpush1.bf16.msra.mxu0 0
      %325 = vmatprep.mubr.bf16.mxu0 0
      %326 = vmatmul.mubr.bf16.gmra.mrb[0].mxu0 %v285
      %v327 = vpop.f32.mrb[0].mxu0
      %v328 = vadd.f32 0.0, %v327
      %v329 = vpop.f32.mrb[0].mxu0
      %v330 = vpop.f32.mrb[0].mxu0
      %v331 = vadd.f32 0.0, %v330
      %v332 = vpop.f32.mrb[0].mxu0
      %333 = vmatprep.mubr.bf16.mxu0 0
      %334 = vmatmul.mubr.bf16.gmra.mrb[0].mxu0 %v288
      %v335 = vpop.f32.mrb[0].mxu0
      %v336 = vadd.f32 0.0, %v335
      %v337 = vpop.f32.mrb[0].mxu0
      %v338 = vpop.f32.mrb[0].mxu0
      %v339 = vadd.f32 0.0, %v338
      %v340 = vpop.f32.mrb[0].mxu0
      %341 = vmatprep.mubr.bf16.mxu0 0
      %342 = vmatmul.mubr.bf16.gmra.mrb[0].mxu0 %v291
      %v343 = vpop.f32.mrb[0].mxu0
      %v344 = vadd.f32 0.0, %v343
      %v345 = vpop.f32.mrb[0].mxu0
      %v346 = vpop.f32.mrb[0].mxu0
      %v347 = vpop.f32.mrb[0].mxu0
      %348 = vdwg.mxu0
      %v350 = vunpack.c.l.b16 %v203
      %v351 = vpack.c.b16 %v350, %v350
      %v360 = vunpack.c.l.b16 %v204
      %v361 = vunpack.c.l.b16 %v205
      %v362 = vunpack.c.l.b16 %v206
      %v363 = vunpack.c.l.b16 %v207
      %v364 = vunpack.c.l.b16 %v208
      %v365 = vunpack.c.l.b16 %v209
      %v366 = vunpack.c.l.b16 %v210
      %v367 = vunpack.c.l.b16 %v211
      %v368 = vpack.c.b16 %v361, %v360
      %v369 = vpack.c.b16 %v363, %v362
      %v370 = vpack.c.b16 %v365, %v364
      %v371 = vpack.c.b16 %v367, %v366
      %v376 = vsel %vm283, %v232, 0
      %v378 = vsel %vm283, %v233, 0
      %v381 = vsel %vm283, %v351, 0
      %383 = vmatprep.subr.bf16.mxu0 0
      %384 = vmatpush1.bf16.msra.mxu0 %v368
      %385 = vmatprep.subr.bf16.mxu0 0
      %386 = vmatpush1.bf16.msra.mxu0 %v369
      %387 = vmatprep.subr.bf16.mxu0 0
      %388 = vmatpush1.bf16.msra.mxu0 %v370
      %389 = vmatprep.subr.bf16.mxu0 0
      %390 = vmatpush1.bf16.msra.mxu0 %v371
      %391 = vmatprep.subr.bf16.mxu0 0
      %392 = vmatpush1.bf16.msra.mxu0 0
      %393 = vmatprep.subr.bf16.mxu0 0
      %394 = vmatpush1.bf16.msra.mxu0 0
      %395 = vmatprep.subr.bf16.mxu0 0
      %396 = vmatpush1.bf16.msra.mxu0 0
      %397 = vmatprep.subr.bf16.mxu0 0
      %398 = vmatpush1.bf16.msra.mxu0 0
      %399 = vmatprep.subr.bf16.mxu0 0
      %400 = vmatpush1.bf16.msra.mxu0 0
      %401 = vmatprep.subr.bf16.mxu0 0
      %402 = vmatpush1.bf16.msra.mxu0 0
      %403 = vmatprep.subr.bf16.mxu0 0
      %404 = vmatpush1.bf16.msra.mxu0 0
      %405 = vmatprep.subr.bf16.mxu0 0
      %406 = vmatpush1.bf16.msra.mxu0 0
      %407 = vmatprep.subr.bf16.mxu0 0
      %408 = vmatpush1.bf16.msra.mxu0 0
      %409 = vmatprep.subr.bf16.mxu0 0
      %410 = vmatpush1.bf16.msra.mxu0 0
      %411 = vmatprep.subr.bf16.mxu0 0
      %412 = vmatpush1.bf16.msra.mxu0 0
      %413 = vmatprep.subr.bf16.mxu0 0
      %414 = vmatpush1.bf16.msra.mxu0 0
      %415 = vmatprep.mubr.bf16.mxu0 0
      %416 = vmatmul.mubr.bf16.gmra.mrb[0].mxu0 %v376
      %v417 = vpop.f32.mrb[0].mxu0
      %v418 = vadd.f32 %v328, %v417
      %v419 = vpop.f32.mrb[0].mxu0
      %v420 = vpop.f32.mrb[0].mxu0
      %v421 = vadd.f32 %v331, %v420
      %v422 = vpop.f32.mrb[0].mxu0
      %423 = vmatprep.mubr.bf16.mxu0 0
      %424 = vmatmul.mubr.bf16.gmra.mrb[0].mxu0 %v378
      %v425 = vpop.f32.mrb[0].mxu0
      %v426 = vadd.f32 %v336, %v425
      %v427 = vpop.f32.mrb[0].mxu0
      %v428 = vpop.f32.mrb[0].mxu0
      %v429 = vadd.f32 %v339, %v428
      %v430 = vpop.f32.mrb[0].mxu0
      %431 = vmatprep.mubr.bf16.mxu0 0
      %432 = vmatmul.mubr.bf16.gmra.mrb[0].mxu0 %v381
      %v433 = vpop.f32.mrb[0].mxu0
      %v434 = vadd.f32 %v344, %v433
      %v435 = vpop.f32.mrb[0].mxu0
      %v436 = vpop.f32.mrb[0].mxu0
      %v437 = vpop.f32.mrb[0].mxu0
      %438 = vdwg.mxu0
      %v439 = vld [vmem:[%s192] sm:$0xe]
      %s440 = scalar_lea.vmem %s1, 64
      %v441 = vld [vmem:[%s440] sm:$0xf]
      %v442 = vld [vmem:[%s440 + $0x4] sm:$0xf]
      %v443 = vld [vmem:[%s440 + $0x8] sm:$0xf]
      %v444 = vld [vmem:[%s440 + $0xc] sm:$0xf]
      %v445 = vld [vmem:[%s440 + $0x10] sm:$0xf]
      %v446 = vld [vmem:[%s440 + $0x14] sm:$0xf]
      %v447 = vld [vmem:[%s440 + $0x18] sm:$0xf]
      %v448 = vld [vmem:[%s440 + $0x1c] sm:$0xf]
      %v450 = vunpack.c.l.b16 %v439
      %v451 = vpack.c.b16 %v228, %v450
      %vm452 = vcmask 1046528
      %v453 = vrot.slane %v451, 1
      %v454 = vrot.slane %v233, 1
      %v455 = vsel %vm452, %v453, %v454
      %v456 = vrot.slane %v234, 1
      %v457 = vsel %vm452, %v454, %v456
      %v466 = vunpack.c.l.b16 %v441
      %v467 = vunpack.c.l.b16 %v442
      %v468 = vunpack.c.l.b16 %v443
      %v469 = vunpack.c.l.b16 %v444
      %v470 = vunpack.c.l.b16 %v445
      %v471 = vunpack.c.l.b16 %v446
      %v472 = vunpack.c.l.b16 %v447
      %v473 = vunpack.c.l.b16 %v448
      %v474 = vpack.c.b16 %v467, %v466
      %v475 = vpack.c.b16 %v469, %v468
      %v476 = vpack.c.b16 %v471, %v470
      %v477 = vpack.c.b16 %v473, %v472
      %v483 = vsel %vm283, %v455, 0
      %v486 = vsel %vm283, %v457, 0
      %v489 = vsel %vm283, %v456, 0
      %491 = vmatprep.subr.bf16.mxu0 0
      %492 = vmatpush1.bf16.msra.mxu0 %v474
      %493 = vmatprep.subr.bf16.mxu0 0
      %494 = vmatpush1.bf16.msra.mxu0 %v475
      %495 = vmatprep.subr.bf16.mxu0 0
      %496 = vmatpush1.bf16.msra.mxu0 %v476
      %497 = vmatprep.subr.bf16.mxu0 0
      %498 = vmatpush1.bf16.msra.mxu0 %v477
      %499 = vmatprep.subr.bf16.mxu0 0
      %500 = vmatpush1.bf16.msra.mxu0 0
      %501 = vmatprep.subr.bf16.mxu0 0
      %502 = vmatpush1.bf16.msra.mxu0 0
      %503 = vmatprep.subr.bf16.mxu0 0
      %504 = vmatpush1.bf16.msra.mxu0 0
      %505 = vmatprep.subr.bf16.mxu0 0
      %506 = vmatpush1.bf16.msra.mxu0 0
      %507 = vmatprep.subr.bf16.mxu0 0
      %508 = vmatpush1.bf16.msra.mxu0 0
      %509 = vmatprep.subr.bf16.mxu0 0
      %510 = vmatpush1.bf16.msra.mxu0 0
      %511 = vmatprep.subr.bf16.mxu0 0
      %512 = vmatpush1.bf16.msra.mxu0 0
      %513 = vmatprep.subr.bf16.mxu0 0
      %514 = vmatpush1.bf16.msra.mxu0 0
      %515 = vmatprep.subr.bf16.mxu0 0
      %516 = vmatpush1.bf16.msra.mxu0 0
      %517 = vmatprep.subr.bf16.mxu0 0
      %518 = vmatpush1.bf16.msra.mxu0 0
      %519 = vmatprep.subr.bf16.mxu0 0
      %520 = vmatpush1.bf16.msra.mxu0 0
      %521 = vmatprep.subr.bf16.mxu0 0
      %522 = vmatpush1.bf16.msra.mxu0 0
      %523 = vmatprep.mubr.bf16.mxu0 0
      %524 = vmatmul.mubr.bf16.gmra.mrb[0].mxu0 %v483
      %v525 = vpop.f32.mrb[0].mxu0
      %v526 = vadd.f32 0.0, %v525
      %v527 = vpop.f32.mrb[0].mxu0
      %v528 = vpop.f32.mrb[0].mxu0
      %v529 = vadd.f32 0.0, %v528
      %v530 = vpop.f32.mrb[0].mxu0
      %531 = vmatprep.mubr.bf16.mxu0 0
      %532 = vmatmul.mubr.bf16.gmra.mrb[0].mxu0 %v486
      %v533 = vpop.f32.mrb[0].mxu0
      %v534 = vadd.f32 0.0, %v533
      %v535 = vpop.f32.mrb[0].mxu0
      %v536 = vpop.f32.mrb[0].mxu0
      %v537 = vadd.f32 0.0, %v536
      %v538 = vpop.f32.mrb[0].mxu0
      %539 = vmatprep.mubr.bf16.mxu0 0
      %540 = vmatmul.mubr.bf16.gmra.mrb[0].mxu0 %v489
      %v541 = vpop.f32.mrb[0].mxu0
      %v542 = vadd.f32 0.0, %v541
      %v543 = vpop.f32.mrb[0].mxu0
      %v544 = vpop.f32.mrb[0].mxu0
      %v545 = vpop.f32.mrb[0].mxu0
      %546 = vdwg.mxu0
      %v547 = vadd.f32 %v418, %v526
      %v548 = vadd.f32 %v421, %v529
      %v549 = vadd.f32 %v426, %v534
      %v550 = vadd.f32 %v429, %v537
      %v551 = vadd.f32 %v434, %v542
      %v552 = vld [vmem:[%s192 + $0x10] sm:$0xf]
      %s553 = scalar_lea.vmem %s1, 96
      %v554 = vld [vmem:[%s553] sm:$0xf]
      %v555 = vld [vmem:[%s553 + $0x4] sm:$0xf]
      %v556 = vld [vmem:[%s553 + $0x8] sm:$0xf]
      %v557 = vld [vmem:[%s553 + $0xc] sm:$0xf]
      %v558 = vld [vmem:[%s553 + $0x10] sm:$0xf]
      %v559 = vld [vmem:[%s553 + $0x14] sm:$0xf]
      %v560 = vld [vmem:[%s553 + $0x18] sm:$0xf]
      %v561 = vld [vmem:[%s553 + $0x1c] sm:$0xf]
      %v563 = vunpack.c.l.b16 %v552
      %v564 = vpack.c.b16 %v563, %v563
      %vm565 = vsmask.f32 6400
      %v567 = vshrl.u32 %v451, 16
      %v569 = vrot.slane %v567, 1
      %v570 = vshll.u32 %v451, 16
      %v572 = vrot.slane %v570, 2
      %v573 = vor.u32 %v569, %v572
      %v574 = vrot.slane %v248, 1
      %v575 = vrot.slane %v244, 2
      %v576 = vor.u32 %v574, %v575
      %v577 = vsel %vm565, %v573, %v576
      %v579 = vshrl.u32 %v564, 16
      %v581 = vrot.slane %v579, 1
      %v582 = vshll.u32 %v564, 16
      %v584 = vrot.slane %v582, 2
      %v585 = vor.u32 %v581, %v584
      %v586 = vsel %vm565, %v576, %v585
      %v595 = vunpack.c.l.b16 %v554
      %v596 = vunpack.c.l.b16 %v555
      %v597 = vunpack.c.l.b16 %v556
      %v598 = vunpack.c.l.b16 %v557
      %v599 = vunpack.c.l.b16 %v558
      %v600 = vunpack.c.l.b16 %v559
      %v601 = vunpack.c.l.b16 %v560
      %v602 = vunpack.c.l.b16 %v561
      %v603 = vpack.c.b16 %v596, %v595
      %v604 = vpack.c.b16 %v598, %v597
      %v605 = vpack.c.b16 %v600, %v599
      %v606 = vpack.c.b16 %v602, %v601
      %v612 = vsel %vm283, %v577, 0
      %v615 = vsel %vm283, %v586, 0
      %v618 = vsel %vm283, %v585, 0
      %620 = vmatprep.subr.bf16.mxu0 0
      %621 = vmatpush1.bf16.msra.mxu0 %v603
      %622 = vmatprep.subr.bf16.mxu0 0
      %623 = vmatpush1.bf16.msra.mxu0 %v604
      %624 = vmatprep.subr.bf16.mxu0 0
      %625 = vmatpush1.bf16.msra.mxu0 %v605
      %626 = vmatprep.subr.bf16.mxu0 0
      %627 = vmatpush1.bf16.msra.mxu0 %v606
      %628 = vmatprep.subr.bf16.mxu0 0
      %629 = vmatpush1.bf16.msra.mxu0 0
      %630 = vmatprep.subr.bf16.mxu0 0
      %631 = vmatpush1.bf16.msra.mxu0 0
      %632 = vmatprep.subr.bf16.mxu0 0
      %633 = vmatpush1.bf16.msra.mxu0 0
      %634 = vmatprep.subr.bf16.mxu0 0
      %635 = vmatpush1.bf16.msra.mxu0 0
      %636 = vmatprep.subr.bf16.mxu0 0
      %637 = vmatpush1.bf16.msra.mxu0 0
      %638 = vmatprep.subr.bf16.mxu0 0
      %639 = vmatpush1.bf16.msra.mxu0 0
      %640 = vmatprep.subr.bf16.mxu0 0
      %641 = vmatpush1.bf16.msra.mxu0 0
      %642 = vmatprep.subr.bf16.mxu0 0
      %643 = vmatpush1.bf16.msra.mxu0 0
      %644 = vmatprep.subr.bf16.mxu0 0
      %645 = vmatpush1.bf16.msra.mxu0 0
      %646 = vmatprep.subr.bf16.mxu0 0
      %647 = vmatpush1.bf16.msra.mxu0 0
      %648 = vmatprep.subr.bf16.mxu0 0
      %649 = vmatpush1.bf16.msra.mxu0 0
      %650 = vmatprep.subr.bf16.mxu0 0
      %651 = vmatpush1.bf16.msra.mxu0 0
      %652 = vmatprep.mubr.bf16.mxu0 0
      %653 = vmatmul.mubr.bf16.gmra.mrb[0].mxu0 %v612
      %v654 = vpop.f32.mrb[0].mxu0
      %v655 = vadd.f32 0.0, %v654
      %v656 = vpop.f32.mrb[0].mxu0
      %v657 = vpop.f32.mrb[0].mxu0
      %v658 = vadd.f32 0.0, %v657
      %v659 = vpop.f32.mrb[0].mxu0
      %660 = vmatprep.mubr.bf16.mxu0 0
      %661 = vmatmul.mubr.bf16.gmra.mrb[0].mxu0 %v615
      %v662 = vpop.f32.mrb[0].mxu0
      %v663 = vadd.f32 0.0, %v662
      %v664 = vpop.f32.mrb[0].mxu0
      %v665 = vpop.f32.mrb[0].mxu0
      %v666 = vadd.f32 0.0, %v665
      %v667 = vpop.f32.mrb[0].mxu0
      %668 = vmatprep.mubr.bf16.mxu0 0
      %669 = vmatmul.mubr.bf16.gmra.mrb[0].mxu0 %v618
      %v670 = vpop.f32.mrb[0].mxu0
      %v671 = vadd.f32 0.0, %v670
      %v672 = vpop.f32.mrb[0].mxu0
      %v673 = vpop.f32.mrb[0].mxu0
      %v674 = vpop.f32.mrb[0].mxu0
      %675 = vdwg.mxu0
      %v676 = vadd.f32 %v547, %v655
      %v677 = vadd.f32 %v548, %v658
      %v678 = vadd.f32 %v549, %v663
      %v679 = vadd.f32 %v550, %v666
      %v680 = vadd.f32 %v551, %v671
      %v681 = vld [vmem:[%s192] sm:$0x8]
      %v682 = vld [vmem:[%s192 + $0x4] sm:$0xf]
      %v683 = vld [vmem:[%s192 + $0x8] sm:$0xf]
      %v684 = vld [vmem:[%s192 + $0xc] sm:$0xf]
      %v685 = vld [vmem:[%s192 + $0x10] sm:$0xf]
      %v686 = vld [vmem:[%s192 + $0x14] sm:$0x1]
      %s687 = scalar_lea.vmem %s1, 128
      %v688 = vld [vmem:[%s687] sm:$0xf]
      %v689 = vld [vmem:[%s687 + $0x4] sm:$0xf]
      %v690 = vld [vmem:[%s687 + $0x8] sm:$0xf]
      %v691 = vld [vmem:[%s687 + $0xc] sm:$0xf]
      %v692 = vld [vmem:[%s687 + $0x10] sm:$0xf]
      %v693 = vld [vmem:[%s687 + $0x14] sm:$0xf]
      %v694 = vld [vmem:[%s687 + $0x18] sm:$0xf]
      %v695 = vld [vmem:[%s687 + $0x1c] sm:$0xf]
      %v702 = vunpack.c.l.b16 %v681
      %v703 = vunpack.c.l.b16 %v682
      %v704 = vunpack.c.l.b16 %v683
      %v705 = vunpack.c.l.b16 %v684
      %v706 = vunpack.c.l.b16 %v685
      %v707 = vunpack.c.l.b16 %v686
      %v708 = vpack.c.b16 %v703, %v702
      %v709 = vpack.c.b16 %v705, %v704
      %v710 = vpack.c.b16 %v707, %v706
      %vm711 = vcmask 1044480
      %v712 = vrot.slane %v708, 3
      %v713 = vrot.slane %v709, 3
      %v714 = vsel %vm711, %v712, %v713
      %v715 = vrot.slane %v710, 3
      %v716 = vsel %vm711, %v713, %v715
      %v725 = vunpack.c.l.b16 %v688
      %v726 = vunpack.c.l.b16 %v689
      %v727 = vunpack.c.l.b16 %v690
      %v728 = vunpack.c.l.b16 %v691
      %v729 = vunpack.c.l.b16 %v692
      %v730 = vunpack.c.l.b16 %v693
      %v731 = vunpack.c.l.b16 %v694
      %v732 = vunpack.c.l.b16 %v695
      %v733 = vpack.c.b16 %v726, %v725
      %v734 = vpack.c.b16 %v728, %v727
      %v735 = vpack.c.b16 %v730, %v729
      %v736 = vpack.c.b16 %v732, %v731
      %v742 = vsel %vm283, %v714, 0
      %v745 = vsel %vm283, %v716, 0
      %v748 = vsel %vm283, %v715, 0
      %750 = vmatprep.subr.bf16.mxu0 0
      %751 = vmatpush1.bf16.msra.mxu0 %v733
      %752 = vmatprep.subr.bf16.mxu0 0
      %753 = vmatpush1.bf16.msra.mxu0 %v734
      %754 = vmatprep.subr.bf16.mxu0 0
      %755 = vmatpush1.bf16.msra.mxu0 %v735
      %756 = vmatprep.subr.bf16.mxu0 0
      %757 = vmatpush1.bf16.msra.mxu0 %v736
      %758 = vmatprep.subr.bf16.mxu0 0
      %759 = vmatpush1.bf16.msra.mxu0 0
      %760 = vmatprep.subr.bf16.mxu0 0
      %761 = vmatpush1.bf16.msra.mxu0 0
      %762 = vmatprep.subr.bf16.mxu0 0
      %763 = vmatpush1.bf16.msra.mxu0 0
      %764 = vmatprep.subr.bf16.mxu0 0
      %765 = vmatpush1.bf16.msra.mxu0 0
      %766 = vmatprep.subr.bf16.mxu0 0
      %767 = vmatpush1.bf16.msra.mxu0 0
      %768 = vmatprep.subr.bf16.mxu0 0
      %769 = vmatpush1.bf16.msra.mxu0 0
      %770 = vmatprep.subr.bf16.mxu0 0
      %771 = vmatpush1.bf16.msra.mxu0 0
      %772 = vmatprep.subr.bf16.mxu0 0
      %773 = vmatpush1.bf16.msra.mxu0 0
      %774 = vmatprep.subr.bf16.mxu0 0
      %775 = vmatpush1.bf16.msra.mxu0 0
      %776 = vmatprep.subr.bf16.mxu0 0
      %777 = vmatpush1.bf16.msra.mxu0 0
      %778 = vmatprep.subr.bf16.mxu0 0
      %779 = vmatpush1.bf16.msra.mxu0 0
      %780 = vmatprep.subr.bf16.mxu0 0
      %781 = vmatpush1.bf16.msra.mxu0 0
      %782 = vmatprep.mubr.bf16.mxu0 0
      %783 = vmatmul.mubr.bf16.gmra.mrb[0].mxu0 %v742
      %v784 = vpop.f32.mrb[0].mxu0
      %v785 = vadd.f32 0.0, %v784
      %v786 = vpop.f32.mrb[0].mxu0
      %v787 = vpop.f32.mrb[0].mxu0
      %v788 = vadd.f32 0.0, %v787
      %v789 = vpop.f32.mrb[0].mxu0
      %790 = vmatprep.mubr.bf16.mxu0 0
      %791 = vmatmul.mubr.bf16.gmra.mrb[0].mxu0 %v745
      %v792 = vpop.f32.mrb[0].mxu0
      %v793 = vadd.f32 0.0, %v792
      %v794 = vpop.f32.mrb[0].mxu0
      %v795 = vpop.f32.mrb[0].mxu0
      %v796 = vadd.f32 0.0, %v795
      %v797 = vpop.f32.mrb[0].mxu0
      %798 = vmatprep.mubr.bf16.mxu0 0
      %799 = vmatmul.mubr.bf16.gmra.mrb[0].mxu0 %v748
      %v800 = vpop.f32.mrb[0].mxu0
      %v801 = vadd.f32 0.0, %v800
      %v802 = vpop.f32.mrb[0].mxu0
      %v803 = vpop.f32.mrb[0].mxu0
      %v804 = vpop.f32.mrb[0].mxu0
      %805 = vdwg.mxu0
      %v806 = vadd.f32 %v676, %v785
      %v807 = vadd.f32 %v677, %v788
      %v808 = vadd.f32 %v678, %v793
      %v809 = vadd.f32 %v679, %v796
      %v810 = vadd.f32 %v680, %v801
      %v811 = vld [vmem:[%s192 + $0x14] sm:$0x3]
      %s812 = scalar_lea.vmem %s1, 160
      %v813 = vld [vmem:[%s812] sm:$0xf]
      %v814 = vld [vmem:[%s812 + $0x4] sm:$0xf]
      %v815 = vld [vmem:[%s812 + $0x8] sm:$0xf]
      %v816 = vld [vmem:[%s812 + $0xc] sm:$0xf]
      %v817 = vld [vmem:[%s812 + $0x10] sm:$0xf]
      %v818 = vld [vmem:[%s812 + $0x14] sm:$0xf]
      %v819 = vld [vmem:[%s812 + $0x18] sm:$0xf]
      %v820 = vld [vmem:[%s812 + $0x1c] sm:$0xf]
      %v822 = vunpack.c.l.b16 %v811
      %v823 = vpack.c.b16 %v822, %v706
      %vm824 = vsmask.f32 4352
      %v826 = vshrl.u32 %v708, 16
      %v828 = vrot.slane %v826, 3
      %v829 = vshll.u32 %v708, 16
      %v831 = vrot.slane %v829, 4
      %v832 = vor.u32 %v828, %v831
      %v834 = vshrl.u32 %v709, 16
      %v836 = vrot.slane %v834, 3
      %v837 = vshll.u32 %v709, 16
      %v839 = vrot.slane %v837, 4
      %v840 = vor.u32 %v836, %v839
      %v841 = vsel %vm824, %v832, %v840
      %v843 = vshrl.u32 %v823, 16
      %v845 = vrot.slane %v843, 3
      %v846 = vshll.u32 %v823, 16
      %v848 = vrot.slane %v846, 4
      %v849 = vor.u32 %v845, %v848
      %v850 = vsel %vm824, %v840, %v849
      %v859 = vunpack.c.l.b16 %v813
      %v860 = vunpack.c.l.b16 %v814
      %v861 = vunpack.c.l.b16 %v815
      %v862 = vunpack.c.l.b16 %v816
      %v863 = vunpack.c.l.b16 %v817
      %v864 = vunpack.c.l.b16 %v818
      %v865 = vunpack.c.l.b16 %v819
      %v866 = vunpack.c.l.b16 %v820
      %v867 = vpack.c.b16 %v860, %v859
      %v868 = vpack.c.b16 %v862, %v861
      %v869 = vpack.c.b16 %v864, %v863
      %v870 = vpack.c.b16 %v866, %v865
      %v876 = vsel %vm283, %v841, 0
      %v879 = vsel %vm283, %v850, 0
      %v882 = vsel %vm283, %v849, 0
      %884 = vmatprep.subr.bf16.mxu0 0
      %885 = vmatpush1.bf16.msra.mxu0 %v867
      %886 = vmatprep.subr.bf16.mxu0 0
      %887 = vmatpush1.bf16.msra.mxu0 %v868
      %888 = vmatprep.subr.bf16.mxu0 0
      %889 = vmatpush1.bf16.msra.mxu0 %v869
      %890 = vmatprep.subr.bf16.mxu0 0
      %891 = vmatpush1.bf16.msra.mxu0 %v870
      %892 = vmatprep.subr.bf16.mxu0 0
      %893 = vmatpush1.bf16.msra.mxu0 0
      %894 = vmatprep.subr.bf16.mxu0 0
      %895 = vmatpush1.bf16.msra.mxu0 0
      %896 = vmatprep.subr.bf16.mxu0 0
      %897 = vmatpush1.bf16.msra.mxu0 0
      %898 = vmatprep.subr.bf16.mxu0 0
      %899 = vmatpush1.bf16.msra.mxu0 0
      %900 = vmatprep.subr.bf16.mxu0 0
      %901 = vmatpush1.bf16.msra.mxu0 0
      %902 = vmatprep.subr.bf16.mxu0 0
      %903 = vmatpush1.bf16.msra.mxu0 0
      %904 = vmatprep.subr.bf16.mxu0 0
      %905 = vmatpush1.bf16.msra.mxu0 0
      %906 = vmatprep.subr.bf16.mxu0 0
      %907 = vmatpush1.bf16.msra.mxu0 0
      %908 = vmatprep.subr.bf16.mxu0 0
      %909 = vmatpush1.bf16.msra.mxu0 0
      %910 = vmatprep.subr.bf16.mxu0 0
      %911 = vmatpush1.bf16.msra.mxu0 0
      %912 = vmatprep.subr.bf16.mxu0 0
      %913 = vmatpush1.bf16.msra.mxu0 0
      %914 = vmatprep.subr.bf16.mxu0 0
      %915 = vmatpush1.bf16.msra.mxu0 0
      %916 = vmatprep.mubr.bf16.mxu0 0
      %917 = vmatmul.mubr.bf16.gmra.mrb[0].mxu0 %v876
      %v918 = vpop.f32.mrb[0].mxu0
      %v919 = vadd.f32 0.0, %v918
      %v920 = vpop.f32.mrb[0].mxu0
      %v921 = vpop.f32.mrb[0].mxu0
      %v922 = vadd.f32 0.0, %v921
      %v923 = vpop.f32.mrb[0].mxu0
      %924 = vmatprep.mubr.bf16.mxu0 0
      %925 = vmatmul.mubr.bf16.gmra.mrb[0].mxu0 %v879
      %v926 = vpop.f32.mrb[0].mxu0
      %v927 = vadd.f32 0.0, %v926
      %v928 = vpop.f32.mrb[0].mxu0
      %v929 = vpop.f32.mrb[0].mxu0
      %v930 = vadd.f32 0.0, %v929
      %v931 = vpop.f32.mrb[0].mxu0
      %932 = vmatprep.mubr.bf16.mxu0 0
      %933 = vmatmul.mubr.bf16.gmra.mrb[0].mxu0 %v882
      %v934 = vpop.f32.mrb[0].mxu0
      %v935 = vadd.f32 0.0, %v934
      %v936 = vpop.f32.mrb[0].mxu0
      %v937 = vpop.f32.mrb[0].mxu0
      %v938 = vpop.f32.mrb[0].mxu0
      %939 = vdwg.mxu0
      %v940 = vadd.f32 %v806, %v919
      %v941 = vadd.f32 %v807, %v922
      %v942 = vadd.f32 %v808, %v927
      %v943 = vadd.f32 %v809, %v930
      %v944 = vadd.f32 %v810, %v935
      %s945 = scalar_lea.vmem %s1, 192
      %v946 = vld [vmem:[%s945] sm:$0xf]
      %v947 = vld [vmem:[%s945 + $0x4] sm:$0xf]
      %v948 = vld [vmem:[%s945 + $0x8] sm:$0xf]
      %v949 = vld [vmem:[%s945 + $0xc] sm:$0xf]
      %v950 = vld [vmem:[%s945 + $0x10] sm:$0xf]
      %v951 = vld [vmem:[%s945 + $0x14] sm:$0xf]
      %v952 = vld [vmem:[%s945 + $0x18] sm:$0xf]
      %v953 = vld [vmem:[%s945 + $0x1c] sm:$0xf]
      %v954 = vpack.c.b16 %v704, %v703
      %v955 = vpack.c.b16 %v706, %v705
      %v956 = vpack.c.b16 %v822, %v822
      %v965 = vunpack.c.l.b16 %v946
      %v966 = vunpack.c.l.b16 %v947
      %v967 = vunpack.c.l.b16 %v948
      %v968 = vunpack.c.l.b16 %v949
      %v969 = vunpack.c.l.b16 %v950
      %v970 = vunpack.c.l.b16 %v951
      %v971 = vunpack.c.l.b16 %v952
      %v972 = vunpack.c.l.b16 %v953
      %v973 = vpack.c.b16 %v966, %v965
      %v974 = vpack.c.b16 %v968, %v967
      %v975 = vpack.c.b16 %v970, %v969
      %v976 = vpack.c.b16 %v972, %v971
      %v982 = vsel %vm283, %v954, 0
      %v985 = vsel %vm283, %v955, 0
      %v988 = vsel %vm283, %v956, 0
      %990 = vmatprep.subr.bf16.mxu0 0
      %991 = vmatpush1.bf16.msra.mxu0 %v973
      %992 = vmatprep.subr.bf16.mxu0 0
      %993 = vmatpush1.bf16.msra.mxu0 %v974
      %994 = vmatprep.subr.bf16.mxu0 0
      %995 = vmatpush1.bf16.msra.mxu0 %v975
      %996 = vmatprep.subr.bf16.mxu0 0
      %997 = vmatpush1.bf16.msra.mxu0 %v976
      %998 = vmatprep.subr.bf16.mxu0 0
      %999 = vmatpush1.bf16.msra.mxu0 0
      %1000 = vmatprep.subr.bf16.mxu0 0
      %1001 = vmatpush1.bf16.msra.mxu0 0
      %1002 = vmatprep.subr.bf16.mxu0 0
      %1003 = vmatpush1.bf16.msra.mxu0 0
      %1004 = vmatprep.subr.bf16.mxu0 0
      %1005 = vmatpush1.bf16.msra.mxu0 0
      %1006 = vmatprep.subr.bf16.mxu0 0
      %1007 = vmatpush1.bf16.msra.mxu0 0
      %1008 = vmatprep.subr.bf16.mxu0 0
      %1009 = vmatpush1.bf16.msra.mxu0 0
      %1010 = vmatprep.subr.bf16.mxu0 0
      %1011 = vmatpush1.bf16.msra.mxu0 0
      %1012 = vmatprep.subr.bf16.mxu0 0
      %1013 = vmatpush1.bf16.msra.mxu0 0
      %1014 = vmatprep.subr.bf16.mxu0 0
      %1015 = vmatpush1.bf16.msra.mxu0 0
      %1016 = vmatprep.subr.bf16.mxu0 0
      %1017 = vmatpush1.bf16.msra.mxu0 0
      %1018 = vmatprep.subr.bf16.mxu0 0
      %1019 = vmatpush1.bf16.msra.mxu0 0
      %1020 = vmatprep.subr.bf16.mxu0 0
      %1021 = vmatpush1.bf16.msra.mxu0 0
      %1022 = vmatprep.mubr.bf16.mxu0 0
      %1023 = vmatmul.mubr.bf16.gmra.mrb[0].mxu0 %v982
      %v1024 = vpop.f32.mrb[0].mxu0
      %v1025 = vadd.f32 0.0, %v1024
      %v1026 = vpop.f32.mrb[0].mxu0
      %v1027 = vpop.f32.mrb[0].mxu0
      %v1028 = vadd.f32 0.0, %v1027
      %v1029 = vpop.f32.mrb[0].mxu0
      %1030 = vmatprep.mubr.bf16.mxu0 0
      %1031 = vmatmul.mubr.bf16.gmra.mrb[0].mxu0 %v985
      %v1032 = vpop.f32.mrb[0].mxu0
      %v1033 = vadd.f32 0.0, %v1032
      %v1034 = vpop.f32.mrb[0].mxu0
      %v1035 = vpop.f32.mrb[0].mxu0
      %v1036 = vadd.f32 0.0, %v1035
      %v1037 = vpop.f32.mrb[0].mxu0
      %1038 = vmatprep.mubr.bf16.mxu0 0
      %1039 = vmatmul.mubr.bf16.gmra.mrb[0].mxu0 %v988
      %v1040 = vpop.f32.mrb[0].mxu0
      %v1041 = vadd.f32 0.0, %v1040
      %v1042 = vpop.f32.mrb[0].mxu0
      %v1043 = vpop.f32.mrb[0].mxu0
      %v1044 = vpop.f32.mrb[0].mxu0
      %1045 = vdwg.mxu0
      %v1046 = vadd.f32 %v940, %v1025
      %v1047 = vadd.f32 %v941, %v1028
      %v1048 = vadd.f32 %v942, %v1033
      %v1049 = vadd.f32 %v943, %v1036
      %v1050 = vadd.f32 %v944, %v1041
      %v1051 = vld [vmem:[%s192 + $0x14] sm:$0x7]
      %s1052 = scalar_lea.vmem %s1, 224
      %v1053 = vld [vmem:[%s1052] sm:$0xf]
      %v1054 = vld [vmem:[%s1052 + $0x4] sm:$0xf]
      %v1055 = vld [vmem:[%s1052 + $0x8] sm:$0xf]
      %v1056 = vld [vmem:[%s1052 + $0xc] sm:$0xf]
      %v1057 = vld [vmem:[%s1052 + $0x10] sm:$0xf]
      %v1058 = vld [vmem:[%s1052 + $0x14] sm:$0xf]
      %v1059 = vld [vmem:[%s1052 + $0x18] sm:$0xf]
      %v1060 = vld [vmem:[%s1052 + $0x1c] sm:$0xf]
      %v1062 = vunpack.c.l.b16 %v1051
      %v1063 = vpack.c.b16 %v1062, %v1062
      %v1064 = vshrl.u32 %v954, 16
      %v1066 = vshll.u32 %v954, 16
      %v1068 = vrot.slane %v1066, 1
      %v1069 = vor.u32 %v1064, %v1068
      %v1070 = vshll.u32 %v955, 16
      %v1072 = vrot.slane %v1070, 1
      %v1073 = vsel %vm235, %v1069, %v1072
      %v1074 = vshrl.u32 %v955, 16
      %v1076 = vor.u32 %v1074, %v1072
      %v1078 = vshll.u32 %v1063, 16
      %v1080 = vrot.slane %v1078, 1
      %v1081 = vsel %vm235, %v1076, %v1080
      %v1082 = vshrl.u32 %v1063, 16
      %v1084 = vor.u32 %v1082, %v1080
      %v1093 = vunpack.c.l.b16 %v1053
      %v1094 = vunpack.c.l.b16 %v1054
      %v1095 = vunpack.c.l.b16 %v1055
      %v1096 = vunpack.c.l.b16 %v1056
      %v1097 = vunpack.c.l.b16 %v1057
      %v1098 = vunpack.c.l.b16 %v1058
      %v1099 = vunpack.c.l.b16 %v1059
      %v1100 = vunpack.c.l.b16 %v1060
      %v1101 = vpack.c.b16 %v1094, %v1093
      %v1102 = vpack.c.b16 %v1096, %v1095
      %v1103 = vpack.c.b16 %v1098, %v1097
      %v1104 = vpack.c.b16 %v1100, %v1099
      %v1110 = vsel %vm283, %v1073, 0
      %v1113 = vsel %vm283, %v1081, 0
      %v1116 = vsel %vm283, %v1084, 0
      %1118 = vmatprep.subr.bf16.mxu0 0
      %1119 = vmatpush1.bf16.msra.mxu0 %v1101
      %1120 = vmatprep.subr.bf16.mxu0 0
      %1121 = vmatpush1.bf16.msra.mxu0 %v1102
      %1122 = vmatprep.subr.bf16.mxu0 0
      %1123 = vmatpush1.bf16.msra.mxu0 %v1103
      %1124 = vmatprep.subr.bf16.mxu0 0
      %1125 = vmatpush1.bf16.msra.mxu0 %v1104
      %1126 = vmatprep.subr.bf16.mxu0 0
      %1127 = vmatpush1.bf16.msra.mxu0 0
      %1128 = vmatprep.subr.bf16.mxu0 0
      %1129 = vmatpush1.bf16.msra.mxu0 0
      %1130 = vmatprep.subr.bf16.mxu0 0
      %1131 = vmatpush1.bf16.msra.mxu0 0
      %1132 = vmatprep.subr.bf16.mxu0 0
      %1133 = vmatpush1.bf16.msra.mxu0 0
      %1134 = vmatprep.subr.bf16.mxu0 0
      %1135 = vmatpush1.bf16.msra.mxu0 0
      %1136 = vmatprep.subr.bf16.mxu0 0
      %1137 = vmatpush1.bf16.msra.mxu0 0
      %1138 = vmatprep.subr.bf16.mxu0 0
      %1139 = vmatpush1.bf16.msra.mxu0 0
      %1140 = vmatprep.subr.bf16.mxu0 0
      %1141 = vmatpush1.bf16.msra.mxu0 0
      %1142 = vmatprep.subr.bf16.mxu0 0
      %1143 = vmatpush1.bf16.msra.mxu0 0
      %1144 = vmatprep.subr.bf16.mxu0 0
      %1145 = vmatpush1.bf16.msra.mxu0 0
      %1146 = vmatprep.subr.bf16.mxu0 0
      %1147 = vmatpush1.bf16.msra.mxu0 0
      %1148 = vmatprep.subr.bf16.mxu0 0
      %1149 = vmatpush1.bf16.msra.mxu0 0
      %1150 = vmatprep.mubr.bf16.mxu0 0
      %1151 = vmatmul.mubr.bf16.gmra.mrb[0].mxu0 %v1110
      %v1152 = vpop.f32.mrb[0].mxu0
      %v1153 = vadd.f32 0.0, %v1152
      %v1154 = vpop.f32.mrb[0].mxu0
      %v1155 = vpop.f32.mrb[0].mxu0
      %v1156 = vadd.f32 0.0, %v1155
      %v1157 = vpop.f32.mrb[0].mxu0
      %1158 = vmatprep.mubr.bf16.mxu0 0
      %1159 = vmatmul.mubr.bf16.gmra.mrb[0].mxu0 %v1113
      %v1160 = vpop.f32.mrb[0].mxu0
      %v1161 = vadd.f32 0.0, %v1160
      %v1162 = vpop.f32.mrb[0].mxu0
      %v1163 = vpop.f32.mrb[0].mxu0
      %v1164 = vadd.f32 0.0, %v1163
      %v1165 = vpop.f32.mrb[0].mxu0
      %1166 = vmatprep.mubr.bf16.mxu0 0
      %1167 = vmatmul.mubr.bf16.gmra.mrb[0].mxu0 %v1116
      %v1168 = vpop.f32.mrb[0].mxu0
      %v1169 = vadd.f32 0.0, %v1168
      %v1170 = vpop.f32.mrb[0].mxu0
      %v1171 = vpop.f32.mrb[0].mxu0
      %v1172 = vpop.f32.mrb[0].mxu0
      %1173 = vdwg.mxu0
      %v1174 = vadd.f32 %v1046, %v1153
      %v1175 = vadd.f32 %v1047, %v1156
      %v1176 = vadd.f32 %v1048, %v1161
      %v1177 = vadd.f32 %v1049, %v1164
      %v1178 = vadd.f32 %v1050, %v1169
      %v1179 = vld [vmem:[%s192 + $0x4] sm:$0xc]
      %v1180 = vld [vmem:[%s192 + $0x14] sm:$0xf]
      %s1181 = scalar_lea.vmem %s1, 256
      %v1182 = vld [vmem:[%s1181] sm:$0xf]
      %v1183 = vld [vmem:[%s1181 + $0x4] sm:$0xf]
      %v1184 = vld [vmem:[%s1181 + $0x8] sm:$0xf]
      %v1185 = vld [vmem:[%s1181 + $0xc] sm:$0xf]
      %v1186 = vld [vmem:[%s1181 + $0x10] sm:$0xf]
      %v1187 = vld [vmem:[%s1181 + $0x14] sm:$0xf]
      %v1188 = vld [vmem:[%s1181 + $0x18] sm:$0xf]
      %v1189 = vld [vmem:[%s1181 + $0x1c] sm:$0xf]
      %v1192 = vunpack.c.l.b16 %v1179
      %v1193 = vunpack.c.l.b16 %v1180
      %v1194 = vpack.c.b16 %v704, %v1192
      %v1195 = vpack.c.b16 %v1193, %v1193
      %vm1196 = vcmask 1045504
      %v1197 = vrot.slane %v1194, 2
      %v1198 = vrot.slane %v955, 2
      %v1199 = vsel %vm1196, %v1197, %v1198
      %v1200 = vrot.slane %v1195, 2
      %v1201 = vsel %vm1196, %v1198, %v1200
      %v1210 = vunpack.c.l.b16 %v1182
      %v1211 = vunpack.c.l.b16 %v1183
      %v1212 = vunpack.c.l.b16 %v1184
      %v1213 = vunpack.c.l.b16 %v1185
      %v1214 = vunpack.c.l.b16 %v1186
      %v1215 = vunpack.c.l.b16 %v1187
      %v1216 = vunpack.c.l.b16 %v1188
      %v1217 = vunpack.c.l.b16 %v1189
      %v1218 = vpack.c.b16 %v1211, %v1210
      %v1219 = vpack.c.b16 %v1213, %v1212
      %v1220 = vpack.c.b16 %v1215, %v1214
      %v1221 = vpack.c.b16 %v1217, %v1216
      %v1227 = vsel %vm283, %v1199, 0
      %v1230 = vsel %vm283, %v1201, 0
      %v1233 = vsel %vm283, %v1200, 0
      %1235 = vmatprep.subr.bf16.mxu0 0
      %1236 = vmatpush1.bf16.msra.mxu0 %v1218
      %1237 = vmatprep.subr.bf16.mxu0 0
      %1238 = vmatpush1.bf16.msra.mxu0 %v1219
      %1239 = vmatprep.subr.bf16.mxu0 0
      %1240 = vmatpush1.bf16.msra.mxu0 %v1220
      %1241 = vmatprep.subr.bf16.mxu0 0
      %1242 = vmatpush1.bf16.msra.mxu0 %v1221
      %1243 = vmatprep.subr.bf16.mxu0 0
      %1244 = vmatpush1.bf16.msra.mxu0 0
      %1245 = vmatprep.subr.bf16.mxu0 0
      %1246 = vmatpush1.bf16.msra.mxu0 0
      %1247 = vmatprep.subr.bf16.mxu0 0
      %1248 = vmatpush1.bf16.msra.mxu0 0
      %1249 = vmatprep.subr.bf16.mxu0 0
      %1250 = vmatpush1.bf16.msra.mxu0 0
      %1251 = vmatprep.subr.bf16.mxu0 0
      %1252 = vmatpush1.bf16.msra.mxu0 0
      %1253 = vmatprep.subr.bf16.mxu0 0
      %1254 = vmatpush1.bf16.msra.mxu0 0
      %1255 = vmatprep.subr.bf16.mxu0 0
      %1256 = vmatpush1.bf16.msra.mxu0 0
      %1257 = vmatprep.subr.bf16.mxu0 0
      %1258 = vmatpush1.bf16.msra.mxu0 0
      %1259 = vmatprep.subr.bf16.mxu0 0
      %1260 = vmatpush1.bf16.msra.mxu0 0
      %1261 = vmatprep.subr.bf16.mxu0 0
      %1262 = vmatpush1.bf16.msra.mxu0 0
      %1263 = vmatprep.subr.bf16.mxu0 0
      %1264 = vmatpush1.bf16.msra.mxu0 0
      %1265 = vmatprep.subr.bf16.mxu0 0
      %1266 = vmatpush1.bf16.msra.mxu0 0
      %1267 = vmatprep.mubr.bf16.mxu0 0
      %1268 = vmatmul.mubr.bf16.gmra.mrb[0].mxu0 %v1227
      %v1269 = vpop.f32.mrb[0].mxu0
      %v1270 = vadd.f32 0.0, %v1269
      %v1271 = vpop.f32.mrb[0].mxu0
      %v1272 = vpop.f32.mrb[0].mxu0
      %v1273 = vadd.f32 0.0, %v1272
      %v1274 = vpop.f32.mrb[0].mxu0
      %1275 = vmatprep.mubr.bf16.mxu0 0
      %1276 = vmatmul.mubr.bf16.gmra.mrb[0].mxu0 %v1230
      %v1277 = vpop.f32.mrb[0].mxu0
      %v1278 = vadd.f32 0.0, %v1277
      %v1279 = vpop.f32.mrb[0].mxu0
      %v1280 = vpop.f32.mrb[0].mxu0
      %v1281 = vadd.f32 0.0, %v1280
      %v1282 = vpop.f32.mrb[0].mxu0
      %1283 = vmatprep.mubr.bf16.mxu0 0
      %1284 = vmatmul.mubr.bf16.gmra.mrb[0].mxu0 %v1233
      %v1285 = vpop.f32.mrb[0].mxu0
      %v1286 = vadd.f32 0.0, %v1285
      %v1287 = vpop.f32.mrb[0].mxu0
      %v1288 = vpop.f32.mrb[0].mxu0
      %v1289 = vpop.f32.mrb[0].mxu0
      %1290 = vdwg.mxu0
      %v1291 = vadd.f32 %v1174, %v1270
      %v1292 = vadd.f32 %v1175, %v1273
      %v1293 = vadd.f32 %v1176, %v1278
      %v1294 = vadd.f32 %v1177, %v1281
      %v1295 = vadd.f32 %v1178, %v1286
      %v1296 = vld [vmem:[%s192 + $0x4] sm:$0xc]
      %v1297 = vld [vmem:[%s192 + $0x8] sm:$0xf]
      %v1298 = vld [vmem:[%s192 + $0xc] sm:$0xf]
      %v1299 = vld [vmem:[%s192 + $0x10] sm:$0xf]
      %v1300 = vld [vmem:[%s192 + $0x14] sm:$0xf]
      %v1301 = vld [vmem:[%s192 + $0x18] sm:$0x1]
      %s1302 = scalar_lea.vmem %s1, 288
      %v1303 = vld [vmem:[%s1302] sm:$0xf]
      %v1304 = vld [vmem:[%s1302 + $0x4] sm:$0xf]
      %v1305 = vld [vmem:[%s1302 + $0x8] sm:$0xf]
      %v1306 = vld [vmem:[%s1302 + $0xc] sm:$0xf]
      %v1307 = vld [vmem:[%s1302 + $0x10] sm:$0xf]
      %v1308 = vld [vmem:[%s1302 + $0x14] sm:$0xf]
      %v1309 = vld [vmem:[%s1302 + $0x18] sm:$0xf]
      %v1310 = vld [vmem:[%s1302 + $0x1c] sm:$0xf]
      %v1317 = vunpack.c.l.b16 %v1296
      %v1318 = vunpack.c.l.b16 %v1297
      %v1319 = vunpack.c.l.b16 %v1298
      %v1320 = vunpack.c.l.b16 %v1299
      %v1321 = vunpack.c.l.b16 %v1300
      %v1322 = vunpack.c.l.b16 %v1301
      %v1323 = vpack.c.b16 %v1318, %v1317
      %v1324 = vpack.c.b16 %v1320, %v1319
      %v1325 = vpack.c.b16 %v1322, %v1321
      %vm1326 = vsmask.f32 5376
      %v1328 = vshrl.u32 %v1323, 16
      %v1330 = vrot.slane %v1328, 2
      %v1331 = vshll.u32 %v1323, 16
      %v1333 = vrot.slane %v1331, 3
      %v1334 = vor.u32 %v1330, %v1333
      %v1336 = vshrl.u32 %v1324, 16
      %v1338 = vrot.slane %v1336, 2
      %v1339 = vshll.u32 %v1324, 16
      %v1341 = vrot.slane %v1339, 3
      %v1342 = vor.u32 %v1338, %v1341
      %v1343 = vsel %vm1326, %v1334, %v1342
      %v1345 = vshrl.u32 %v1325, 16
      %v1347 = vrot.slane %v1345, 2
      %v1348 = vshll.u32 %v1325, 16
      %v1350 = vrot.slane %v1348, 3
      %v1351 = vor.u32 %v1347, %v1350
      %v1352 = vsel %vm1326, %v1342, %v1351
      %v1361 = vunpack.c.l.b16 %v1303
      %v1362 = vunpack.c.l.b16 %v1304
      %v1363 = vunpack.c.l.b16 %v1305
      %v1364 = vunpack.c.l.b16 %v1306
      %v1365 = vunpack.c.l.b16 %v1307
      %v1366 = vunpack.c.l.b16 %v1308
      %v1367 = vunpack.c.l.b16 %v1309
      %v1368 = vunpack.c.l.b16 %v1310
      %v1369 = vpack.c.b16 %v1362, %v1361
      %v1370 = vpack.c.b16 %v1364, %v1363
      %v1371 = vpack.c.b16 %v1366, %v1365
      %v1372 = vpack.c.b16 %v1368, %v1367
      %v1378 = vsel %vm283, %v1343, 0
      %v1381 = vsel %vm283, %v1352, 0
      %v1384 = vsel %vm283, %v1351, 0
      %1386 = vmatprep.subr.bf16.mxu0 0
      %1387 = vmatpush1.bf16.msra.mxu0 %v1369
      %1388 = vmatprep.subr.bf16.mxu0 0
      %1389 = vmatpush1.bf16.msra.mxu0 %v1370
      %1390 = vmatprep.subr.bf16.mxu0 0
      %1391 = vmatpush1.bf16.msra.mxu0 %v1371
      %1392 = vmatprep.subr.bf16.mxu0 0
      %1393 = vmatpush1.bf16.msra.mxu0 %v1372
      %1394 = vmatprep.subr.bf16.mxu0 0
      %1395 = vmatpush1.bf16.msra.mxu0 0
      %1396 = vmatprep.subr.bf16.mxu0 0
      %1397 = vmatpush1.bf16.msra.mxu0 0
      %1398 = vmatprep.subr.bf16.mxu0 0
      %1399 = vmatpush1.bf16.msra.mxu0 0
      %1400 = vmatprep.subr.bf16.mxu0 0
      %1401 = vmatpush1.bf16.msra.mxu0 0
      %1402 = vmatprep.subr.bf16.mxu0 0
      %1403 = vmatpush1.bf16.msra.mxu0 0
      %1404 = vmatprep.subr.bf16.mxu0 0
      %1405 = vmatpush1.bf16.msra.mxu0 0
      %1406 = vmatprep.subr.bf16.mxu0 0
      %1407 = vmatpush1.bf16.msra.mxu0 0
      %1408 = vmatprep.subr.bf16.mxu0 0
      %1409 = vmatpush1.bf16.msra.mxu0 0
      %1410 = vmatprep.subr.bf16.mxu0 0
      %1411 = vmatpush1.bf16.msra.mxu0 0
      %1412 = vmatprep.subr.bf16.mxu0 0
      %1413 = vmatpush1.bf16.msra.mxu0 0
      %1414 = vmatprep.subr.bf16.mxu0 0
      %1415 = vmatpush1.bf16.msra.mxu0 0
      %1416 = vmatprep.subr.bf16.mxu0 0
      %1417 = vmatpush1.bf16.msra.mxu0 0
      %1418 = vmatprep.mubr.bf16.mxu0 0
      %1419 = vmatmul.mubr.bf16.gmra.mrb[0].mxu0 %v1378
      %v1420 = vpop.f32.mrb[0].mxu0
      %v1421 = vadd.f32 0.0, %v1420
      %v1422 = vpop.f32.mrb[0].mxu0
      %v1423 = vpop.f32.mrb[0].mxu0
      %v1424 = vadd.f32 0.0, %v1423
      %v1425 = vpop.f32.mrb[0].mxu0
      %1426 = vmatprep.mubr.bf16.mxu0 0
      %1427 = vmatmul.mubr.bf16.gmra.mrb[0].mxu0 %v1381
      %v1428 = vpop.f32.mrb[0].mxu0
      %v1429 = vadd.f32 0.0, %v1428
      %v1430 = vpop.f32.mrb[0].mxu0
      %v1431 = vpop.f32.mrb[0].mxu0
      %v1432 = vadd.f32 0.0, %v1431
      %v1433 = vpop.f32.mrb[0].mxu0
      %1434 = vmatprep.mubr.bf16.mxu0 0
      %1435 = vmatmul.mubr.bf16.gmra.mrb[0].mxu0 %v1384
      %v1436 = vpop.f32.mrb[0].mxu0
      %v1437 = vadd.f32 0.0, %v1436
      %v1438 = vpop.f32.mrb[0].mxu0
      %v1439 = vpop.f32.mrb[0].mxu0
      %v1440 = vpop.f32.mrb[0].mxu0
      %1441 = vdwg.mxu0
      %v1442 = vadd.f32 %v1291, %v1421
      %v1443 = vadd.f32 %v1292, %v1424
      %v1444 = vadd.f32 %v1293, %v1429
      %v1445 = vadd.f32 %v1294, %v1432
      %v1446 = vadd.f32 %v1295, %v1437
      %v1447 = vld [vmem:[%s192 + $0x4] sm:$0x8]
      %s1448 = scalar_lea.vmem %s1, 320
      %v1449 = vld [vmem:[%s1448] sm:$0xf]
      %v1450 = vld [vmem:[%s1448 + $0x4] sm:$0xf]
      %v1451 = vld [vmem:[%s1448 + $0x8] sm:$0xf]
      %v1452 = vld [vmem:[%s1448 + $0xc] sm:$0xf]
      %v1453 = vld [vmem:[%s1448 + $0x10] sm:$0xf]
      %v1454 = vld [vmem:[%s1448 + $0x14] sm:$0xf]
      %v1455 = vld [vmem:[%s1448 + $0x18] sm:$0xf]
      %v1456 = vld [vmem:[%s1448 + $0x1c] sm:$0xf]
      %v1458 = vunpack.c.l.b16 %v1447
      %v1459 = vpack.c.b16 %v1318, %v1458
      %v1460 = vrot.slane %v1459, 3
      %v1461 = vrot.slane %v1324, 3
      %v1462 = vsel %vm711, %v1460, %v1461
      %v1463 = vrot.slane %v1325, 3
      %v1464 = vsel %vm711, %v1461, %v1463
      %v1473 = vunpack.c.l.b16 %v1449
      %v1474 = vunpack.c.l.b16 %v1450
      %v1475 = vunpack.c.l.b16 %v1451
      %v1476 = vunpack.c.l.b16 %v1452
      %v1477 = vunpack.c.l.b16 %v1453
      %v1478 = vunpack.c.l.b16 %v1454
      %v1479 = vunpack.c.l.b16 %v1455
      %v1480 = vunpack.c.l.b16 %v1456
      %v1481 = vpack.c.b16 %v1474, %v1473
      %v1482 = vpack.c.b16 %v1476, %v1475
      %v1483 = vpack.c.b16 %v1478, %v1477
      %v1484 = vpack.c.b16 %v1480, %v1479
      %v1490 = vsel %vm283, %v1462, 0
      %v1493 = vsel %vm283, %v1464, 0
      %v1496 = vsel %vm283, %v1463, 0
      %1498 = vmatprep.subr.bf16.mxu0 0
      %1499 = vmatpush1.bf16.msra.mxu0 %v1481
      %1500 = vmatprep.subr.bf16.mxu0 0
      %1501 = vmatpush1.bf16.msra.mxu0 %v1482
      %1502 = vmatprep.subr.bf16.mxu0 0
      %1503 = vmatpush1.bf16.msra.mxu0 %v1483
      %1504 = vmatprep.subr.bf16.mxu0 0
      %1505 = vmatpush1.bf16.msra.mxu0 %v1484
      %1506 = vmatprep.subr.bf16.mxu0 0
      %1507 = vmatpush1.bf16.msra.mxu0 0
      %1508 = vmatprep.subr.bf16.mxu0 0
      %1509 = vmatpush1.bf16.msra.mxu0 0
      %1510 = vmatprep.subr.bf16.mxu0 0
      %1511 = vmatpush1.bf16.msra.mxu0 0
      %1512 = vmatprep.subr.bf16.mxu0 0
      %1513 = vmatpush1.bf16.msra.mxu0 0
      %1514 = vmatprep.subr.bf16.mxu0 0
      %1515 = vmatpush1.bf16.msra.mxu0 0
      %1516 = vmatprep.subr.bf16.mxu0 0
      %1517 = vmatpush1.bf16.msra.mxu0 0
      %1518 = vmatprep.subr.bf16.mxu0 0
      %1519 = vmatpush1.bf16.msra.mxu0 0
      %1520 = vmatprep.subr.bf16.mxu0 0
      %1521 = vmatpush1.bf16.msra.mxu0 0
      %1522 = vmatprep.subr.bf16.mxu0 0
      %1523 = vmatpush1.bf16.msra.mxu0 0
      %1524 = vmatprep.subr.bf16.mxu0 0
      %1525 = vmatpush1.bf16.msra.mxu0 0
      %1526 = vmatprep.subr.bf16.mxu0 0
      %1527 = vmatpush1.bf16.msra.mxu0 0
      %1528 = vmatprep.subr.bf16.mxu0 0
      %1529 = vmatpush1.bf16.msra.mxu0 0
      %1530 = vmatprep.mubr.bf16.mxu0 0
      %1531 = vmatmul.mubr.bf16.gmra.mrb[0].mxu0 %v1490
      %v1532 = vpop.f32.mrb[0].mxu0
      %v1533 = vadd.f32 0.0, %v1532
      %v1534 = vpop.f32.mrb[0].mxu0
      %v1535 = vpop.f32.mrb[0].mxu0
      %v1536 = vadd.f32 0.0, %v1535
      %v1537 = vpop.f32.mrb[0].mxu0
      %1538 = vmatprep.mubr.bf16.mxu0 0
      %1539 = vmatmul.mubr.bf16.gmra.mrb[0].mxu0 %v1493
      %v1540 = vpop.f32.mrb[0].mxu0
      %v1541 = vadd.f32 0.0, %v1540
      %v1542 = vpop.f32.mrb[0].mxu0
      %v1543 = vpop.f32.mrb[0].mxu0
      %v1544 = vadd.f32 0.0, %v1543
      %v1545 = vpop.f32.mrb[0].mxu0
      %1546 = vmatprep.mubr.bf16.mxu0 0
      %1547 = vmatmul.mubr.bf16.gmra.mrb[0].mxu0 %v1496
      %v1548 = vpop.f32.mrb[0].mxu0
      %v1549 = vadd.f32 0.0, %v1548
      %v1550 = vpop.f32.mrb[0].mxu0
      %v1551 = vpop.f32.mrb[0].mxu0
      %v1552 = vpop.f32.mrb[0].mxu0
      %1553 = vdwg.mxu0
      %v1554 = vadd.f32 %v1442, %v1533
      %v1555 = vadd.f32 %v1443, %v1536
      %v1556 = vadd.f32 %v1444, %v1541
      %v1557 = vadd.f32 %v1445, %v1544
      %v1558 = vadd.f32 %v1446, %v1549
      %v1559 = vld [vmem:[%s192 + $0x18] sm:$0x3]
      %s1560 = scalar_lea.vmem %s1, 352
      %v1561 = vld [vmem:[%s1560] sm:$0xf]
      %v1562 = vld [vmem:[%s1560 + $0x4] sm:$0xf]
      %v1563 = vld [vmem:[%s1560 + $0x8] sm:$0xf]
      %v1564 = vld [vmem:[%s1560 + $0xc] sm:$0xf]
      %v1565 = vld [vmem:[%s1560 + $0x10] sm:$0xf]
      %v1566 = vld [vmem:[%s1560 + $0x14] sm:$0xf]
      %v1567 = vld [vmem:[%s1560 + $0x18] sm:$0xf]
      %v1568 = vld [vmem:[%s1560 + $0x1c] sm:$0xf]
      %v1570 = vunpack.c.l.b16 %v1559
      %v1571 = vpack.c.b16 %v1570, %v1321
      %v1573 = vshrl.u32 %v1459, 16
      %v1575 = vrot.slane %v1573, 3
      %v1576 = vshll.u32 %v1459, 16
      %v1578 = vrot.slane %v1576, 4
      %v1579 = vor.u32 %v1575, %v1578
      %v1580 = vrot.slane %v1336, 3
      %v1581 = vrot.slane %v1339, 4
      %v1582 = vor.u32 %v1580, %v1581
      %v1583 = vsel %vm824, %v1579, %v1582
      %v1585 = vshrl.u32 %v1571, 16
      %v1587 = vrot.slane %v1585, 3
      %v1588 = vshll.u32 %v1571, 16
      %v1590 = vrot.slane %v1588, 4
      %v1591 = vor.u32 %v1587, %v1590
      %v1592 = vsel %vm824, %v1582, %v1591
      %v1601 = vunpack.c.l.b16 %v1561
      %v1602 = vunpack.c.l.b16 %v1562
      %v1603 = vunpack.c.l.b16 %v1563
      %v1604 = vunpack.c.l.b16 %v1564
      %v1605 = vunpack.c.l.b16 %v1565
      %v1606 = vunpack.c.l.b16 %v1566
      %v1607 = vunpack.c.l.b16 %v1567
      %v1608 = vunpack.c.l.b16 %v1568
      %v1609 = vpack.c.b16 %v1602, %v1601
      %v1610 = vpack.c.b16 %v1604, %v1603
      %v1611 = vpack.c.b16 %v1606, %v1605
      %v1612 = vpack.c.b16 %v1608, %v1607
      %v1618 = vsel %vm283, %v1583, 0
      %v1621 = vsel %vm283, %v1592, 0
      %v1624 = vsel %vm283, %v1591, 0
      %1626 = vmatprep.subr.bf16.mxu0 0
      %1627 = vmatpush1.bf16.msra.mxu0 %v1609
      %1628 = vmatprep.subr.bf16.mxu0 0
      %1629 = vmatpush1.bf16.msra.mxu0 %v1610
      %1630 = vmatprep.subr.bf16.mxu0 0
      %1631 = vmatpush1.bf16.msra.mxu0 %v1611
      %1632 = vmatprep.subr.bf16.mxu0 0
      %1633 = vmatpush1.bf16.msra.mxu0 %v1612
      %1634 = vmatprep.subr.bf16.mxu0 0
      %1635 = vmatpush1.bf16.msra.mxu0 0
      %1636 = vmatprep.subr.bf16.mxu0 0
      %1637 = vmatpush1.bf16.msra.mxu0 0
      %1638 = vmatprep.subr.bf16.mxu0 0
      %1639 = vmatpush1.bf16.msra.mxu0 0
      %1640 = vmatprep.subr.bf16.mxu0 0
      %1641 = vmatpush1.bf16.msra.mxu0 0
      %1642 = vmatprep.subr.bf16.mxu0 0
      %1643 = vmatpush1.bf16.msra.mxu0 0
      %1644 = vmatprep.subr.bf16.mxu0 0
      %1645 = vmatpush1.bf16.msra.mxu0 0
      %1646 = vmatprep.subr.bf16.mxu0 0
      %1647 = vmatpush1.bf16.msra.mxu0 0
      %1648 = vmatprep.subr.bf16.mxu0 0
      %1649 = vmatpush1.bf16.msra.mxu0 0
      %1650 = vmatprep.subr.bf16.mxu0 0
      %1651 = vmatpush1.bf16.msra.mxu0 0
      %1652 = vmatprep.subr.bf16.mxu0 0
      %1653 = vmatpush1.bf16.msra.mxu0 0
      %1654 = vmatprep.subr.bf16.mxu0 0
      %1655 = vmatpush1.bf16.msra.mxu0 0
      %1656 = vmatprep.subr.bf16.mxu0 0
      %1657 = vmatpush1.bf16.msra.mxu0 0
      %1658 = vmatprep.mubr.bf16.mxu0 0
      %1659 = vmatmul.mubr.bf16.gmra.mrb[0].mxu0 %v1618
      %v1660 = vpop.f32.mrb[0].mxu0
      %v1661 = vadd.f32 0.0, %v1660
      %v1662 = vpop.f32.mrb[0].mxu0
      %v1663 = vpop.f32.mrb[0].mxu0
      %v1664 = vadd.f32 0.0, %v1663
      %v1665 = vpop.f32.mrb[0].mxu0
      %1666 = vmatprep.mubr.bf16.mxu0 0
      %1667 = vmatmul.mubr.bf16.gmra.mrb[0].mxu0 %v1621
      %v1668 = vpop.f32.mrb[0].mxu0
      %v1669 = vadd.f32 0.0, %v1668
      %v1670 = vpop.f32.mrb[0].mxu0
      %v1671 = vpop.f32.mrb[0].mxu0
      %v1672 = vadd.f32 0.0, %v1671
      %v1673 = vpop.f32.mrb[0].mxu0
      %1674 = vmatprep.mubr.bf16.mxu0 0
      %1675 = vmatmul.mubr.bf16.gmra.mrb[0].mxu0 %v1624
      %v1676 = vpop.f32.mrb[0].mxu0
      %v1677 = vadd.f32 0.0, %v1676
      %v1678 = vpop.f32.mrb[0].mxu0
      %v1679 = vpop.f32.mrb[0].mxu0
      %v1680 = vpop.f32.mrb[0].mxu0
      %1681 = vdwg.mxu0
      %v1682 = vadd.f32 %v1554, %v1661
      %v1683 = vadd.f32 %v1555, %v1664
      %v1684 = vadd.f32 %v1556, %v1669
      %v1685 = vadd.f32 %v1557, %v1672
      %v1686 = vadd.f32 %v1558, %v1677
      %v1687 = vld [vmem:[%s192 + $0x8] sm:$0xe]
      %v1688 = vld [vmem:[%s192 + $0x18] sm:$0x7]
      %s1689 = scalar_lea.vmem %s1, 384
      %v1690 = vld [vmem:[%s1689] sm:$0xf]
      %v1691 = vld [vmem:[%s1689 + $0x4] sm:$0xf]
      %v1692 = vld [vmem:[%s1689 + $0x8] sm:$0xf]
      %v1693 = vld [vmem:[%s1689 + $0xc] sm:$0xf]
      %v1694 = vld [vmem:[%s1689 + $0x10] sm:$0xf]
      %v1695 = vld [vmem:[%s1689 + $0x14] sm:$0xf]
      %v1696 = vld [vmem:[%s1689 + $0x18] sm:$0xf]
      %v1697 = vld [vmem:[%s1689 + $0x1c] sm:$0xf]
      %v1700 = vunpack.c.l.b16 %v1687
      %v1701 = vunpack.c.l.b16 %v1688
      %v1702 = vpack.c.b16 %v1319, %v1700
      %v1703 = vpack.c.b16 %v1321, %v1320
      %v1704 = vpack.c.b16 %v1701, %v1701
      %v1705 = vrot.slane %v1702, 1
      %v1706 = vrot.slane %v1703, 1
      %v1707 = vsel %vm452, %v1705, %v1706
      %v1708 = vrot.slane %v1704, 1
      %v1709 = vsel %vm452, %v1706, %v1708
      %v1718 = vunpack.c.l.b16 %v1690
      %v1719 = vunpack.c.l.b16 %v1691
      %v1720 = vunpack.c.l.b16 %v1692
      %v1721 = vunpack.c.l.b16 %v1693
      %v1722 = vunpack.c.l.b16 %v1694
      %v1723 = vunpack.c.l.b16 %v1695
      %v1724 = vunpack.c.l.b16 %v1696
      %v1725 = vunpack.c.l.b16 %v1697
      %v1726 = vpack.c.b16 %v1719, %v1718
      %v1727 = vpack.c.b16 %v1721, %v1720
      %v1728 = vpack.c.b16 %v1723, %v1722
      %v1729 = vpack.c.b16 %v1725, %v1724
      %v1735 = vsel %vm283, %v1707, 0
      %v1738 = vsel %vm283, %v1709, 0
      %v1741 = vsel %vm283, %v1708, 0
      %1743 = vmatprep.subr.bf16.mxu0 0
      %1744 = vmatpush1.bf16.msra.mxu0 %v1726
      %1745 = vmatprep.subr.bf16.mxu0 0
      %1746 = vmatpush1.bf16.msra.mxu0 %v1727
      %1747 = vmatprep.subr.bf16.mxu0 0
      %1748 = vmatpush1.bf16.msra.mxu0 %v1728
      %1749 = vmatprep.subr.bf16.mxu0 0
      %1750 = vmatpush1.bf16.msra.mxu0 %v1729
      %1751 = vmatprep.subr.bf16.mxu0 0
      %1752 = vmatpush1.bf16.msra.mxu0 0
      %1753 = vmatprep.subr.bf16.mxu0 0
      %1754 = vmatpush1.bf16.msra.mxu0 0
      %1755 = vmatprep.subr.bf16.mxu0 0
      %1756 = vmatpush1.bf16.msra.mxu0 0
      %1757 = vmatprep.subr.bf16.mxu0 0
      %1758 = vmatpush1.bf16.msra.mxu0 0
      %1759 = vmatprep.subr.bf16.mxu0 0
      %1760 = vmatpush1.bf16.msra.mxu0 0
      %1761 = vmatprep.subr.bf16.mxu0 0
      %1762 = vmatpush1.bf16.msra.mxu0 0
      %1763 = vmatprep.subr.bf16.mxu0 0
      %1764 = vmatpush1.bf16.msra.mxu0 0
      %1765 = vmatprep.subr.bf16.mxu0 0
      %1766 = vmatpush1.bf16.msra.mxu0 0
      %1767 = vmatprep.subr.bf16.mxu0 0
      %1768 = vmatpush1.bf16.msra.mxu0 0
      %1769 = vmatprep.subr.bf16.mxu0 0
      %1770 = vmatpush1.bf16.msra.mxu0 0
      %1771 = vmatprep.subr.bf16.mxu0 0
      %1772 = vmatpush1.bf16.msra.mxu0 0
      %1773 = vmatprep.subr.bf16.mxu0 0
      %1774 = vmatpush1.bf16.msra.mxu0 0
      %1775 = vmatprep.mubr.bf16.mxu0 0
      %1776 = vmatmul.mubr.bf16.gmra.mrb[0].mxu0 %v1735
      %v1777 = vpop.f32.mrb[0].mxu0
      %v1778 = vadd.f32 0.0, %v1777
      %v1779 = vpop.f32.mrb[0].mxu0
      %v1780 = vpop.f32.mrb[0].mxu0
      %v1781 = vadd.f32 0.0, %v1780
      %v1782 = vpop.f32.mrb[0].mxu0
      %1783 = vmatprep.mubr.bf16.mxu0 0
      %1784 = vmatmul.mubr.bf16.gmra.mrb[0].mxu0 %v1738
      %v1785 = vpop.f32.mrb[0].mxu0
      %v1786 = vadd.f32 0.0, %v1785
      %v1787 = vpop.f32.mrb[0].mxu0
      %v1788 = vpop.f32.mrb[0].mxu0
      %v1789 = vadd.f32 0.0, %v1788
      %v1790 = vpop.f32.mrb[0].mxu0
      %1791 = vmatprep.mubr.bf16.mxu0 0
      %1792 = vmatmul.mubr.bf16.gmra.mrb[0].mxu0 %v1741
      %v1793 = vpop.f32.mrb[0].mxu0
      %v1794 = vadd.f32 0.0, %v1793
      %v1795 = vpop.f32.mrb[0].mxu0
      %v1796 = vpop.f32.mrb[0].mxu0
      %v1797 = vpop.f32.mrb[0].mxu0
      %1798 = vdwg.mxu0
      %v1799 = vadd.f32 %v1682, %v1778
      %v1800 = vadd.f32 %v1683, %v1781
      %v1801 = vadd.f32 %v1684, %v1786
      %v1802 = vadd.f32 %v1685, %v1789
      %v1803 = vadd.f32 %v1686, %v1794
      %v1804 = vld [vmem:[%s192 + $0x18] sm:$0xf]
      %s1805 = scalar_lea.vmem %s1, 416
      %v1806 = vld [vmem:[%s1805] sm:$0xf]
      %v1807 = vld [vmem:[%s1805 + $0x4] sm:$0xf]
      %v1808 = vld [vmem:[%s1805 + $0x8] sm:$0xf]
      %v1809 = vld [vmem:[%s1805 + $0xc] sm:$0xf]
      %v1810 = vld [vmem:[%s1805 + $0x10] sm:$0xf]
      %v1811 = vld [vmem:[%s1805 + $0x14] sm:$0xf]
      %v1812 = vld [vmem:[%s1805 + $0x18] sm:$0xf]
      %v1813 = vld [vmem:[%s1805 + $0x1c] sm:$0xf]
      %v1815 = vunpack.c.l.b16 %v1804
      %v1816 = vpack.c.b16 %v1815, %v1815
      %v1818 = vshrl.u32 %v1702, 16
      %v1820 = vrot.slane %v1818, 1
      %v1821 = vshll.u32 %v1702, 16
      %v1823 = vrot.slane %v1821, 2
      %v1824 = vor.u32 %v1820, %v1823
      %v1826 = vshrl.u32 %v1703, 16
      %v1828 = vrot.slane %v1826, 1
      %v1829 = vshll.u32 %v1703, 16
      %v1831 = vrot.slane %v1829, 2
      %v1832 = vor.u32 %v1828, %v1831
      %v1833 = vsel %vm565, %v1824, %v1832
      %v1835 = vshrl.u32 %v1816, 16
      %v1837 = vrot.slane %v1835, 1
      %v1838 = vshll.u32 %v1816, 16
      %v1840 = vrot.slane %v1838, 2
      %v1841 = vor.u32 %v1837, %v1840
      %v1842 = vsel %vm565, %v1832, %v1841
      %v1851 = vunpack.c.l.b16 %v1806
      %v1852 = vunpack.c.l.b16 %v1807
      %v1853 = vunpack.c.l.b16 %v1808
      %v1854 = vunpack.c.l.b16 %v1809
      %v1855 = vunpack.c.l.b16 %v1810
      %v1856 = vunpack.c.l.b16 %v1811
      %v1857 = vunpack.c.l.b16 %v1812
      %v1858 = vunpack.c.l.b16 %v1813
      %v1859 = vpack.c.b16 %v1852, %v1851
      %v1860 = vpack.c.b16 %v1854, %v1853
      %v1861 = vpack.c.b16 %v1856, %v1855
      %v1862 = vpack.c.b16 %v1858, %v1857
      %v1868 = vsel %vm283, %v1833, 0
      %v1871 = vsel %vm283, %v1842, 0
      %v1874 = vsel %vm283, %v1841, 0
      %1876 = vmatprep.subr.bf16.mxu0 0
      %1877 = vmatpush1.bf16.msra.mxu0 %v1859
      %1878 = vmatprep.subr.bf16.mxu0 0
      %1879 = vmatpush1.bf16.msra.mxu0 %v1860
      %1880 = vmatprep.subr.bf16.mxu0 0
      %1881 = vmatpush1.bf16.msra.mxu0 %v1861
      %1882 = vmatprep.subr.bf16.mxu0 0
      %1883 = vmatpush1.bf16.msra.mxu0 %v1862
      %1884 = vmatprep.subr.bf16.mxu0 0
      %1885 = vmatpush1.bf16.msra.mxu0 0
      %1886 = vmatprep.subr.bf16.mxu0 0
      %1887 = vmatpush1.bf16.msra.mxu0 0
      %1888 = vmatprep.subr.bf16.mxu0 0
      %1889 = vmatpush1.bf16.msra.mxu0 0
      %1890 = vmatprep.subr.bf16.mxu0 0
      %1891 = vmatpush1.bf16.msra.mxu0 0
      %1892 = vmatprep.subr.bf16.mxu0 0
      %1893 = vmatpush1.bf16.msra.mxu0 0
      %1894 = vmatprep.subr.bf16.mxu0 0
      %1895 = vmatpush1.bf16.msra.mxu0 0
      %1896 = vmatprep.subr.bf16.mxu0 0
      %1897 = vmatpush1.bf16.msra.mxu0 0
      %1898 = vmatprep.subr.bf16.mxu0 0
      %1899 = vmatpush1.bf16.msra.mxu0 0
      %1900 = vmatprep.subr.bf16.mxu0 0
      %1901 = vmatpush1.bf16.msra.mxu0 0
      %1902 = vmatprep.subr.bf16.mxu0 0
      %1903 = vmatpush1.bf16.msra.mxu0 0
      %1904 = vmatprep.subr.bf16.mxu0 0
      %1905 = vmatpush1.bf16.msra.mxu0 0
      %1906 = vmatprep.subr.bf16.mxu0 0
      %1907 = vmatpush1.bf16.msra.mxu0 0
      %1908 = vmatprep.mubr.bf16.mxu0 0
      %1909 = vmatmul.mubr.bf16.gmra.mrb[0].mxu0 %v1868
      %v1910 = vpop.f32.mrb[0].mxu0
      %v1911 = vadd.f32 0.0, %v1910
      %v1912 = vpop.f32.mrb[0].mxu0
      %v1913 = vpop.f32.mrb[0].mxu0
      %v1914 = vadd.f32 0.0, %v1913
      %v1915 = vpop.f32.mrb[0].mxu0
      %1916 = vmatprep.mubr.bf16.mxu0 0
      %1917 = vmatmul.mubr.bf16.gmra.mrb[0].mxu0 %v1871
      %v1918 = vpop.f32.mrb[0].mxu0
      %v1919 = vadd.f32 0.0, %v1918
      %v1920 = vpop.f32.mrb[0].mxu0
      %v1921 = vpop.f32.mrb[0].mxu0
      %v1922 = vadd.f32 0.0, %v1921
      %v1923 = vpop.f32.mrb[0].mxu0
      %1924 = vmatprep.mubr.bf16.mxu0 0
      %1925 = vmatmul.mubr.bf16.gmra.mrb[0].mxu0 %v1874
      %v1926 = vpop.f32.mrb[0].mxu0
      %v1927 = vadd.f32 0.0, %v1926
      %v1928 = vpop.f32.mrb[0].mxu0
      %v1929 = vpop.f32.mrb[0].mxu0
      %v1930 = vpop.f32.mrb[0].mxu0
      %1931 = vdwg.mxu0
      %v1932 = vadd.f32 %v1799, %v1911
      %v1933 = vadd.f32 %v1800, %v1914
      %v1934 = vadd.f32 %v1801, %v1919
      %v1935 = vadd.f32 %v1802, %v1922
      %v1936 = vadd.f32 %v1803, %v1927
      %v1937 = vld [vmem:[%s192 + $0x8] sm:$0xc]
      %s1938 = scalar_lea.vmem %s1, 448
      %v1939 = vld [vmem:[%s1938] sm:$0xf]
      %v1940 = vld [vmem:[%s1938 + $0x4] sm:$0xf]
      %v1941 = vld [vmem:[%s1938 + $0x8] sm:$0xf]
      %v1942 = vld [vmem:[%s1938 + $0xc] sm:$0xf]
      %v1943 = vld [vmem:[%s1938 + $0x10] sm:$0xf]
      %v1944 = vld [vmem:[%s1938 + $0x14] sm:$0xf]
      %v1945 = vld [vmem:[%s1938 + $0x18] sm:$0xf]
      %v1946 = vld [vmem:[%s1938 + $0x1c] sm:$0xf]
      %v1948 = vunpack.c.l.b16 %v1937
      %v1949 = vpack.c.b16 %v1319, %v1948
      %v1950 = vrot.slane %v1949, 2
      %v1951 = vrot.slane %v1703, 2
      %v1952 = vsel %vm1196, %v1950, %v1951
      %v1953 = vrot.slane %v1816, 2
      %v1954 = vsel %vm1196, %v1951, %v1953
      %v1963 = vunpack.c.l.b16 %v1939
      %v1964 = vunpack.c.l.b16 %v1940
      %v1965 = vunpack.c.l.b16 %v1941
      %v1966 = vunpack.c.l.b16 %v1942
      %v1967 = vunpack.c.l.b16 %v1943
      %v1968 = vunpack.c.l.b16 %v1944
      %v1969 = vunpack.c.l.b16 %v1945
      %v1970 = vunpack.c.l.b16 %v1946
      %v1971 = vpack.c.b16 %v1964, %v1963
      %v1972 = vpack.c.b16 %v1966, %v1965
      %v1973 = vpack.c.b16 %v1968, %v1967
      %v1974 = vpack.c.b16 %v1970, %v1969
      %v1980 = vsel %vm283, %v1952, 0
      %v1983 = vsel %vm283, %v1954, 0
      %v1986 = vsel %vm283, %v1953, 0
      %1988 = vmatprep.subr.bf16.mxu0 0
      %1989 = vmatpush1.bf16.msra.mxu0 %v1971
      %1990 = vmatprep.subr.bf16.mxu0 0
      %1991 = vmatpush1.bf16.msra.mxu0 %v1972
      %1992 = vmatprep.subr.bf16.mxu0 0
      %1993 = vmatpush1.bf16.msra.mxu0 %v1973
      %1994 = vmatprep.subr.bf16.mxu0 0
      %1995 = vmatpush1.bf16.msra.mxu0 %v1974
      %1996 = vmatprep.subr.bf16.mxu0 0
      %1997 = vmatpush1.bf16.msra.mxu0 0
      %1998 = vmatprep.subr.bf16.mxu0 0
      %1999 = vmatpush1.bf16.msra.mxu0 0
      %2000 = vmatprep.subr.bf16.mxu0 0
      %2001 = vmatpush1.bf16.msra.mxu0 0
      %2002 = vmatprep.subr.bf16.mxu0 0
      %2003 = vmatpush1.bf16.msra.mxu0 0
      %2004 = vmatprep.subr.bf16.mxu0 0
      %2005 = vmatpush1.bf16.msra.mxu0 0
      %2006 = vmatprep.subr.bf16.mxu0 0
      %2007 = vmatpush1.bf16.msra.mxu0 0
      %2008 = vmatprep.subr.bf16.mxu0 0
      %2009 = vmatpush1.bf16.msra.mxu0 0
      %2010 = vmatprep.subr.bf16.mxu0 0
      %2011 = vmatpush1.bf16.msra.mxu0 0
      %2012 = vmatprep.subr.bf16.mxu0 0
      %2013 = vmatpush1.bf16.msra.mxu0 0
      %2014 = vmatprep.subr.bf16.mxu0 0
      %2015 = vmatpush1.bf16.msra.mxu0 0
      %2016 = vmatprep.subr.bf16.mxu0 0
      %2017 = vmatpush1.bf16.msra.mxu0 0
      %2018 = vmatprep.subr.bf16.mxu0 0
      %2019 = vmatpush1.bf16.msra.mxu0 0
      %2020 = vmatprep.mubr.bf16.mxu0 0
      %2021 = vmatmul.mubr.bf16.gmra.mrb[0].mxu0 %v1980
      %v2022 = vpop.f32.mrb[0].mxu0
      %v2023 = vadd.f32 0.0, %v2022
      %v2024 = vpop.f32.mrb[0].mxu0
      %v2025 = vpop.f32.mrb[0].mxu0
      %v2026 = vadd.f32 0.0, %v2025
      %v2027 = vpop.f32.mrb[0].mxu0
      %2028 = vmatprep.mubr.bf16.mxu0 0
      %2029 = vmatmul.mubr.bf16.gmra.mrb[0].mxu0 %v1983
      %v2030 = vpop.f32.mrb[0].mxu0
      %v2031 = vadd.f32 0.0, %v2030
      %v2032 = vpop.f32.mrb[0].mxu0
      %v2033 = vpop.f32.mrb[0].mxu0
      %v2034 = vadd.f32 0.0, %v2033
      %v2035 = vpop.f32.mrb[0].mxu0
      %2036 = vmatprep.mubr.bf16.mxu0 0
      %2037 = vmatmul.mubr.bf16.gmra.mrb[0].mxu0 %v1986
      %v2038 = vpop.f32.mrb[0].mxu0
      %v2039 = vadd.f32 0.0, %v2038
      %v2040 = vpop.f32.mrb[0].mxu0
      %v2041 = vpop.f32.mrb[0].mxu0
      %v2042 = vpop.f32.mrb[0].mxu0
      %2043 = vdwg.mxu0
      %v2044 = vadd.f32 %v1932, %v2023
      %v2045 = vadd.f32 %v1933, %v2026
      %v2046 = vadd.f32 %v1934, %v2031
      %v2047 = vadd.f32 %v1935, %v2034
      %v2048 = vadd.f32 %v1936, %v2039
      %v2049 = vld [vmem:[%s192 + $0x8] sm:$0xc]
      %v2050 = vld [vmem:[%s192 + $0xc] sm:$0xf]
      %v2051 = vld [vmem:[%s192 + $0x10] sm:$0xf]
      %v2052 = vld [vmem:[%s192 + $0x14] sm:$0xf]
      %v2053 = vld [vmem:[%s192 + $0x18] sm:$0xf]
      %v2054 = vld [vmem:[%s192 + $0x1c] sm:$0x1]
      %s2055 = scalar_lea.vmem %s1, 480
      %v2056 = vld [vmem:[%s2055] sm:$0xf]
      %v2057 = vld [vmem:[%s2055 + $0x4] sm:$0xf]
      %v2058 = vld [vmem:[%s2055 + $0x8] sm:$0xf]
      %v2059 = vld [vmem:[%s2055 + $0xc] sm:$0xf]
      %v2060 = vld [vmem:[%s2055 + $0x10] sm:$0xf]
      %v2061 = vld [vmem:[%s2055 + $0x14] sm:$0xf]
      %v2062 = vld [vmem:[%s2055 + $0x18] sm:$0xf]
      %v2063 = vld [vmem:[%s2055 + $0x1c] sm:$0xf]
      %v2070 = vunpack.c.l.b16 %v2049
      %v2071 = vunpack.c.l.b16 %v2050
      %v2072 = vunpack.c.l.b16 %v2051
      %v2073 = vunpack.c.l.b16 %v2052
      %v2074 = vunpack.c.l.b16 %v2053
      %v2075 = vunpack.c.l.b16 %v2054
      %v2076 = vpack.c.b16 %v2071, %v2070
      %v2077 = vpack.c.b16 %v2073, %v2072
      %v2078 = vpack.c.b16 %v2075, %v2074
      %v2080 = vshrl.u32 %v2076, 16
      %v2082 = vrot.slane %v2080, 2
      %v2083 = vshll.u32 %v2076, 16
      %v2085 = vrot.slane %v2083, 3
      %v2086 = vor.u32 %v2082, %v2085
      %v2088 = vshrl.u32 %v2077, 16
      %v2090 = vrot.slane %v2088, 2
      %v2091 = vshll.u32 %v2077, 16
      %v2093 = vrot.slane %v2091, 3
      %v2094 = vor.u32 %v2090, %v2093
      %v2095 = vsel %vm1326, %v2086, %v2094
      %v2097 = vshrl.u32 %v2078, 16
      %v2099 = vrot.slane %v2097, 2
      %v2100 = vshll.u32 %v2078, 16
      %v2102 = vrot.slane %v2100, 3
      %v2103 = vor.u32 %v2099, %v2102
      %v2104 = vsel %vm1326, %v2094, %v2103
      %v2113 = vunpack.c.l.b16 %v2056
      %v2114 = vunpack.c.l.b16 %v2057
      %v2115 = vunpack.c.l.b16 %v2058
      %v2116 = vunpack.c.l.b16 %v2059
      %v2117 = vunpack.c.l.b16 %v2060
      %v2118 = vunpack.c.l.b16 %v2061
      %v2119 = vunpack.c.l.b16 %v2062
      %v2120 = vunpack.c.l.b16 %v2063
      %v2121 = vpack.c.b16 %v2114, %v2113
      %v2122 = vpack.c.b16 %v2116, %v2115
      %v2123 = vpack.c.b16 %v2118, %v2117
      %v2124 = vpack.c.b16 %v2120, %v2119
      %v2130 = vsel %vm283, %v2095, 0
      %v2133 = vsel %vm283, %v2104, 0
      %v2136 = vsel %vm283, %v2103, 0
      %2138 = vmatprep.subr.bf16.mxu0 0
      %2139 = vmatpush1.bf16.msra.mxu0 %v2121
      %2140 = vmatprep.subr.bf16.mxu0 0
      %2141 = vmatpush1.bf16.msra.mxu0 %v2122
      %2142 = vmatprep.subr.bf16.mxu0 0
      %2143 = vmatpush1.bf16.msra.mxu0 %v2123
      %2144 = vmatprep.subr.bf16.mxu0 0
      %2145 = vmatpush1.bf16.msra.mxu0 %v2124
      %2146 = vmatprep.subr.bf16.mxu0 0
      %2147 = vmatpush1.bf16.msra.mxu0 0
      %2148 = vmatprep.subr.bf16.mxu0 0
      %2149 = vmatpush1.bf16.msra.mxu0 0
      %2150 = vmatprep.subr.bf16.mxu0 0
      %2151 = vmatpush1.bf16.msra.mxu0 0
      %2152 = vmatprep.subr.bf16.mxu0 0
      %2153 = vmatpush1.bf16.msra.mxu0 0
      %2154 = vmatprep.subr.bf16.mxu0 0
      %2155 = vmatpush1.bf16.msra.mxu0 0
      %2156 = vmatprep.subr.bf16.mxu0 0
      %2157 = vmatpush1.bf16.msra.mxu0 0
      %2158 = vmatprep.subr.bf16.mxu0 0
      %2159 = vmatpush1.bf16.msra.mxu0 0
      %2160 = vmatprep.subr.bf16.mxu0 0
      %2161 = vmatpush1.bf16.msra.mxu0 0
      %2162 = vmatprep.subr.bf16.mxu0 0
      %2163 = vmatpush1.bf16.msra.mxu0 0
      %2164 = vmatprep.subr.bf16.mxu0 0
      %2165 = vmatpush1.bf16.msra.mxu0 0
      %2166 = vmatprep.subr.bf16.mxu0 0
      %2167 = vmatpush1.bf16.msra.mxu0 0
      %2168 = vmatprep.subr.bf16.mxu0 0
      %2169 = vmatpush1.bf16.msra.mxu0 0
      %2170 = vmatprep.mubr.bf16.mxu0 0
      %2171 = vmatmul.mubr.bf16.gmra.mrb[0].mxu0 %v2130
      %v2172 = vpop.f32.mrb[0].mxu0
      %v2173 = vadd.f32 0.0, %v2172
      %v2174 = vpop.f32.mrb[0].mxu0
      %v2175 = vpop.f32.mrb[0].mxu0
      %v2176 = vadd.f32 0.0, %v2175
      %v2177 = vpop.f32.mrb[0].mxu0
      %2178 = vmatprep.mubr.bf16.mxu0 0
      %2179 = vmatmul.mubr.bf16.gmra.mrb[0].mxu0 %v2133
      %v2180 = vpop.f32.mrb[0].mxu0
      %v2181 = vadd.f32 0.0, %v2180
      %v2182 = vpop.f32.mrb[0].mxu0
      %v2183 = vpop.f32.mrb[0].mxu0
      %v2184 = vadd.f32 0.0, %v2183
      %v2185 = vpop.f32.mrb[0].mxu0
      %2186 = vmatprep.mubr.bf16.mxu0 0
      %2187 = vmatmul.mubr.bf16.gmra.mrb[0].mxu0 %v2136
      %v2188 = vpop.f32.mrb[0].mxu0
      %v2189 = vadd.f32 0.0, %v2188
      %v2190 = vpop.f32.mrb[0].mxu0
      %v2191 = vpop.f32.mrb[0].mxu0
      %v2192 = vpop.f32.mrb[0].mxu0
      %2193 = vdwg.mxu0
      %v2194 = vadd.f32 %v2044, %v2173
      %v2195 = vadd.f32 %v2045, %v2176
      %v2196 = vadd.f32 %v2046, %v2181
      %v2197 = vadd.f32 %v2047, %v2184
      %v2198 = vadd.f32 %v2048, %v2189
      %v2199 = vld [vmem:[%s2] sm:$0x1]
      %v2201 = vlaneseq
      %v2202 = vshrl.u32 %v2201, 7
      %v2203 = vsub.s32 0, %v2202
      %v2204 = vrot.slane %v2199, %v2203
      %v2206 = vmul.f32 %v2194, %v2204
      %v2207 = vmul.f32 %v2195, %v2204
      %v2208 = vmul.f32 %v2196, %v2204
      %v2209 = vmul.f32 %v2197, %v2204
      %v2210 = vmul.f32 %v2198, %v2204
      %v2211 = vld [vmem:[%s3] sm:$0x1]
      %v2213 = vlaneseq
      %v2214 = vshrl.u32 %v2213, 7
      %v2215 = vsub.s32 0, %v2214
      %v2216 = vrot.slane %v2211, %v2215
      %v2218 = vadd.f32 %v2206, %v2216
      %v2219 = vadd.f32 %v2207, %v2216
      %v2220 = vadd.f32 %v2208, %v2216
      %v2221 = vadd.f32 %v2209, %v2216
      %v2222 = vadd.f32 %v2210, %v2216
      %vm2223 = vcmp.ge.f32.partialorder %v2218, 0.0
      %vm2224 = vcmp.ge.f32.partialorder %v2219, 0.0
      %vm2225 = vcmp.ge.f32.partialorder %v2220, 0.0
      %vm2226 = vcmp.ge.f32.partialorder %v2221, 0.0
      %vm2227 = vcmp.ge.f32.partialorder %v2222, 0.0
      %v2228 = vmul.f32 %v2218, 0.2
      %v2229 = vmul.f32 %v2219, 0.2
      %v2230 = vmul.f32 %v2220, 0.2
      %v2231 = vmul.f32 %v2221, 0.2
      %v2232 = vmul.f32 %v2222, 0.2
      %v2233 = vsel %vm2223, %v2218, %v2228
      %v2234 = vsel %vm2224, %v2219, %v2229
      %v2235 = vsel %vm2225, %v2220, %v2230
      %v2236 = vsel %vm2226, %v2221, %v2231
      %v2237 = vsel %vm2227, %v2222, %v2232
      %v2238 = vpack.c.bf16 %v2234, %v2233
      %v2239 = vpack.c.bf16 %v2236, %v2235
      %v2240 = vpack.c.bf16 %v2237, %v2237
      %v2244 = vunpack.c.l.b16 %v2238
      %v2245 = vunpack.c.h.b16 %v2238
      %v2246 = vunpack.c.l.b16 %v2239
      %v2247 = vunpack.c.h.b16 %v2239
      %v2248 = vunpack.c.l.b16 %v2240
      %v2249 = vpack.c.b16 %v2244, %v2244
      %v2250 = vpack.c.b16 %v2245, %v2245
      %v2251 = vpack.c.b16 %v2246, %v2246
      %v2252 = vpack.c.b16 %v2247, %v2247
      %v2253 = vpack.c.b16 %v2248, %v2248
      %2259 = vst [vmem:[%s197] sm:$0xf] %v2249
      %2260 = vst [vmem:[%s197 + $0x4] sm:$0xf] %v2250
      %2261 = vst [vmem:[%s197 + $0x8] sm:$0xf] %v2251
      %2262 = vst [vmem:[%s197 + $0xc] sm:$0xf] %v2252
      %2263 = vst [vmem:[%s197 + $0x10] sm:$0x3] %v2253
      %p2264 = scmp.lt.s32.totalorder %s15, 1
      %s2265 = scalar_select %p2264, %s15, 1
      %s2266 = smul.addr %s2265, 5
      %s2267 = smul.addr %s2266, 4
      %s2268 = scalar_lea.vmem %s4, %s2267
      // Predicated region
      $region37: #{patch_discriminator_forward.16} parent=35 // pred_check
        %p2269 = pneg %p122
      $region38: #{patch_discriminator_forward.16} parent=35 // pred_check_branch
        %2271 = sbr.rel (%p2269) target = $region40
      $region39: #{patch_discriminator_forward.16} parent=35 // pred_region
        _
      $region40: #{patch_discriminator_forward.16} parent=35 // pred_fallthru
        _
    $region36: #{patch_discriminator_forward.16} parent=5 // pred_fallthru
      _
    %p2272 = scmp.le.s32.totalorder 2, %s10
    // Predicated region
    $region41: #{patch_discriminator_forward.16} parent=5 // pred_check
      %p2273 = pneg %p2272
    $region42: #{patch_discriminator_forward.16} parent=5 // pred_check_branch
      %2275 = sbr.rel (%p2273) target = $region44
    $region43: #{patch_discriminator_forward.16} parent=5 // pred_region
      %s2276 = ssub.s32 %s10, 2
      // Predicated region
      $region45: #{patch_discriminator_forward.16} parent=43 // pred_check
        %p2277 = pneg %p128
      $region46: #{patch_discriminator_forward.16} parent=43 // pred_check_branch
        %2279 = sbr.rel (%p2277) target = $region48
      $region47: #{patch_discriminator_forward.16} parent=43 // pred_region
        %p2280 = scmp.lt.s32.totalorder %s16, 1
        %s2281 = scalar_select %p2280, %s16, 1
        %s2282 = smul.addr %s2281, 5
        %s2283 = smul.addr %s2282, 4
        %s2284 = scalar_lea.vmem %s4, %s2283
      $region48: #{patch_discriminator_forward.16} parent=43 // pred_fallthru
        _
    $region44: #{patch_discriminator_forward.16} parent=5 // pred_fallthru
      _
  $region6: #{patch_discriminator_forward.16} parent=0 // loop_footer
    %s14 = sadd.s32 1, %s10
  $region7: #{patch_discriminator_forward.16} parent=0 // loop_footer_branch
    %9 = sbr.rel target = $region3
  $region8: #{patch_discriminator_forward.16} parent=0 // loop_exit
    _

// kernel: patch_discriminator_forward.17
$region0: #{patch_discriminator_forward.17}
  #allocation0 [shape = 'u32[]', space=smem, size = 0x4, offset = 0x4, fixed_abs, tag = 'smem constant byte address 0x4 - core index']
  #allocation1 [shape = 'u32[144,128]{1,0:T(1,128)}', space=vmem, size = 0x12000, scoped, tag = 'internal scratch']
  %s0 = inlined_call_operand.vmem [shape: bf16[2,45,128], index: 0, kind: input, shape index: {}]
  %s1 = inlined_call_operand.vmem [shape: bf16[16,128,128], index: 1, kind: input, shape index: {}]
  %s2 = inlined_call_operand.vmem [shape: f32[1,128], index: 2, kind: input, shape index: {}]
  %s3 = inlined_call_operand.vmem [shape: f32[2,25,128], index: 3, kind: output, shape index: {}]
  %s4 = sld [smem:[#allocation0]]
  $region45: #{patch_discriminator_forward.17} parent=0
    _
  %s6 = ssub.s32 1, %s4
  %s7 = scalar_select 0, %s6, %s4
  loop: start=0, step=1, limit=4
  $region2: #{patch_discriminator_forward.17} parent=0 // loop_pre_header
    _
  $region3: #{patch_discriminator_forward.17} parent=0 // loop_header
    %s9 = sphi 0, %s13
    %p10 = scmp.ge.s32.totalorder %s9, 4
    %s19 = sphi 0, %s21
    %s22 = sphi 0, %s19
    %s23 = sphi 0, %s22
    %s39 = sphi 0, %s23
    %s43 = sphi 0, %s43
    %s45 = sphi 0, %s43
    %s46 = sphi 0, %s45
    %s60 = sphi 0, %s46
    %s64 = sphi 0, %s64
    %s66 = sphi 0, %s64
    %s67 = sphi 0, %s66
    %s81 = sphi 0, %s67
    %s87 = sphi 0, %s89
    %s90 = sphi 0, %s87
    %s91 = sphi 0, %s90
    %s107 = sphi 0, %s91
  $region4: #{patch_discriminator_forward.17} parent=0 // loop_header_branch
    %12 = sbr.rel (%p10) target = $region8
  $region5: #{patch_discriminator_forward.17} parent=0 // loop_body
    %s14 = ssub.s32 %s9, 1
    %s15 = ssub.s32 %s9, 2
    %s16 = sadd.s32 %s9, 1
    %s17 = ssub.s32 %s9, %s16
    %p18 = scmp.eq.s32.totalorder %s17, 0
    %s20 = sadd.s32 %s19, 1
    %s21 = scalar_select %p18, %s19, %s20
    %p24 = pneg %p18
    %p25 = scmp.eq.s32.totalorder %s9, 1
    %p26 = por %p24, %p25
    %p27 = scmp.ne.s32.totalorder %s19, %s22
    %p28 = scmp.eq.s32.totalorder %s9, 0
    %p29 = por %p27, %p28
    %p30 = scmp.ne.s32.totalorder %s19, %s22
    %p31 = scmp.eq.s32.totalorder %s14, 1
    %p32 = por %p30, %p31
    %p33 = scmp.ne.s32.totalorder %s22, %s23
    %p34 = scmp.eq.s32.totalorder %s14, 0
    %p35 = por %p33, %p34
    %p36 = scmp.ne.s32.totalorder %s22, %s23
    %p37 = scmp.eq.s32.totalorder %s15, 1
    %p38 = por %p36, %p37
    %p40 = scmp.ne.s32.totalorder %s23, %s39
    %p41 = scmp.eq.s32.totalorder %s15, 0
    %p42 = por %p40, %p41
    %s44 = sadd.s32 %s43, 1
    %p47 = scmp.eq.s32.totalorder %s9, 1
    %p48 = scmp.ne.s32.totalorder %s43, %s45
    %p49 = scmp.eq.s32.totalorder %s9, 0
    %p50 = por %p48, %p49
    %p51 = scmp.ne.s32.totalorder %s43, %s45
    %p52 = scmp.eq.s32.totalorder %s14, 1
    %p53 = por %p51, %p52
    %p54 = scmp.ne.s32.totalorder %s45, %s46
    %p55 = scmp.eq.s32.totalorder %s14, 0
    %p56 = por %p54, %p55
    %p57 = scmp.ne.s32.totalorder %s45, %s46
    %p58 = scmp.eq.s32.totalorder %s15, 1
    %p59 = por %p57, %p58
    %p61 = scmp.ne.s32.totalorder %s46, %s60
    %p62 = scmp.eq.s32.totalorder %s15, 0
    %p63 = por %p61, %p62
    %s65 = sadd.s32 %s64, 1
    %p68 = scmp.eq.s32.totalorder %s9, 1
    %p69 = scmp.ne.s32.totalorder %s64, %s66
    %p70 = scmp.eq.s32.totalorder %s9, 0
    %p71 = por %p69, %p70
    %p72 = scmp.ne.s32.totalorder %s64, %s66
    %p73 = scmp.eq.s32.totalorder %s14, 1
    %p74 = por %p72, %p73
    %p75 = scmp.ne.s32.totalorder %s66, %s67
    %p76 = scmp.eq.s32.totalorder %s14, 0
    %p77 = por %p75, %p76
    %p78 = scmp.ne.s32.totalorder %s66, %s67
    %p79 = scmp.eq.s32.totalorder %s15, 1
    %p80 = por %p78, %p79
    %p82 = scmp.ne.s32.totalorder %s67, %s81
    %p83 = scmp.eq.s32.totalorder %s15, 0
    %p84 = por %p82, %p83
    %s85 = ssub.s32 %s9, %s16
    %p86 = scmp.eq.s32.totalorder %s85, 0
    %s88 = sadd.s32 %s87, 1
    %s89 = scalar_select %p86, %s87, %s88
    %p92 = pneg %p86
    %p93 = scmp.eq.s32.totalorder %s9, 1
    %p94 = por %p92, %p93
    %p95 = scmp.ne.s32.totalorder %s87, %s90
    %p96 = scmp.eq.s32.totalorder %s9, 0
    %p97 = por %p95, %p96
    %p98 = scmp.ne.s32.totalorder %s87, %s90
    %p99 = scmp.eq.s32.totalorder %s14, 1
    %p100 = por %p98, %p99
    %p101 = scmp.ne.s32.totalorder %s90, %s91
    %p102 = scmp.eq.s32.totalorder %s14, 0
    %p103 = por %p101, %p102
    %p104 = scmp.ne.s32.totalorder %s90, %s91
    %p105 = scmp.eq.s32.totalorder %s15, 1
    %p106 = por %p104, %p105
    %p108 = scmp.ne.s32.totalorder %s91, %s107
    %p109 = scmp.eq.s32.totalorder %s15, 0
    %p110 = por %p108, %p109
    %p111 = scmp.le.s32.totalorder 1, %s9
    %p112 = scmp.lt.s32.totalorder %s9, 3
    %p113 = pnand %p111, %p112
    %p114 = pneg %p113
    // Predicated region
    $region9: #{patch_discriminator_forward.17} parent=5 // pred_check
      _
    $region10: #{patch_discriminator_forward.17} parent=5 // pred_check_branch
      %116 = sbr.rel (%p113) target = $region12
    $region11: #{patch_discriminator_forward.17} parent=5 // pred_region
      %s117 = ssub.s32 %s9, 1
      // Predicated region
      $region13: #{patch_discriminator_forward.17} parent=11 // pred_check
        %p118 = pneg %p56
      $region14: #{patch_discriminator_forward.17} parent=11 // pred_check_branch
        %120 = sbr.rel (%p118) target = $region16
      $region15: #{patch_discriminator_forward.17} parent=11 // pred_region
        _
      $region16: #{patch_discriminator_forward.17} parent=11 // pred_fallthru
        _
      // Predicated region
      $region17: #{patch_discriminator_forward.17} parent=11 // pred_check
        %p121 = pneg %p77
      $region18: #{patch_discriminator_forward.17} parent=11 // pred_check_branch
        %123 = sbr.rel (%p121) target = $region20
      $region19: #{patch_discriminator_forward.17} parent=11 // pred_region
        _
      $region20: #{patch_discriminator_forward.17} parent=11 // pred_fallthru
        _
    $region12: #{patch_discriminator_forward.17} parent=5 // pred_fallthru
      _
    %p124 = scmp.lt.s32.totalorder %s9, 2
    // Predicated region
    $region21: #{patch_discriminator_forward.17} parent=5 // pred_check
      %p125 = pneg %p124
    $region22: #{patch_discriminator_forward.17} parent=5 // pred_check_branch
      %127 = sbr.rel (%p125) target = $region24
    $region23: #{patch_discriminator_forward.17} parent=5 // pred_region
      // Predicated region
      $region25: #{patch_discriminator_forward.17} parent=23 // pred_check
        %p128 = pneg %p29
      $region26: #{patch_discriminator_forward.17} parent=23 // pred_check_branch
        %130 = sbr.rel (%p128) target = $region28
      $region27: #{patch_discriminator_forward.17} parent=23 // pred_region
        %p131 = scmp.lt.s32.totalorder %s9, 1
        %s132 = scalar_select %p131, %s9, 1
        %s133 = smul.addr %s132, 6
        %s134 = smul.addr %s133, 4
        %s135 = scalar_lea.vmem %s0, %s134
      $region28: #{patch_discriminator_forward.17} parent=23 // pred_fallthru
        _
    $region24: #{patch_discriminator_forward.17} parent=5 // pred_fallthru
      _
    %p136 = scmp.le.s32.totalorder 1, %s9
    %p137 = scmp.lt.s32.totalorder %s9, 3
    %p138 = pnand %p136, %p137
    %p139 = pneg %p138
    // Predicated region
    $region29: #{patch_discriminator_forward.17} parent=5 // pred_check
      _
    $region30: #{patch_discriminator_forward.17} parent=5 // pred_check_branch
      %141 = sbr.rel (%p138) target = $region32
    $region31: #{patch_discriminator_forward.17} parent=5 // pred_region
      %s142 = ssub.s32 %s9, 1
      %p143 = scmp.lt.s32.totalorder %s14, 1
      %s144 = scalar_select %p143, %s14, 1
      %s145 = smul.addr %s144, 6
      %s146 = smul.addr %s145, 4
      %s147 = scalar_lea.vmem %s0, %s146
      %p148 = pneg %p35
      %p149 = pneg %p32
      %p150 = pneg %p56
      %p151 = pneg %p53
      %p152 = pneg %p77
      %p153 = pneg %p74
      %p154 = pneg %p103
      %p155 = pneg %p100
      %p156 = scmp.lt.s32.totalorder %s14, 1
      %s157 = scalar_select %p156, %s14, 1
      %s158 = smul.addr %s157, 4
      %s159 = smul.addr %s158, 8
      %s160 = scalar_lea.vmem %s3, %s159
      %p161 = scmp.lt.s32.totalorder %s14, 1
      %s162 = scalar_select %p161, %s14, 1
      %s163 = smul.addr %s162, 6
      %s164 = smul.addr %s163, 4
      %s165 = scalar_lea.vmem %s0, %s164
      %p166 = scmp.lt.s32.totalorder %s14, 1
      %s167 = scalar_select %p166, %s14, 1
      %s168 = smul.addr %s167, 4
      %s169 = smul.addr %s168, 8
      %s170 = scalar_lea.vmem %s3, %s169
      %v172 = vld [vmem:[%s165] sm:$0xf]
      %v173 = vld [vmem:[%s165 + $0x4] sm:$0xf]
      %v174 = vld [vmem:[%s165 + $0x8] sm:$0xf]
      %v175 = vld [vmem:[%s165 + $0xc] sm:$0x1]
      %v176 = vld [vmem:[%s1] sm:$0xf]
      %v177 = vld [vmem:[%s1 + $0x4] sm:$0xf]
      %v178 = vld [vmem:[%s1 + $0x8] sm:$0xf]
      %v179 = vld [vmem:[%s1 + $0xc] sm:$0xf]
      %v180 = vld [vmem:[%s1 + $0x10] sm:$0xf]
      %v181 = vld [vmem:[%s1 + $0x14] sm:$0xf]
      %v182 = vld [vmem:[%s1 + $0x18] sm:$0xf]
      %v183 = vld [vmem:[%s1 + $0x1c] sm:$0xf]
      %v184 = vld [vmem:[%s1 + $0x20] sm:$0xf]
      %v185 = vld [vmem:[%s1 + $0x24] sm:$0xf]
      %v186 = vld [vmem:[%s1 + $0x28] sm:$0xf]
      %v187 = vld [vmem:[%s1 + $0x2c] sm:$0xf]
      %v188 = vld [vmem:[%s1 + $0x30] sm:$0xf]
      %v189 = vld [vmem:[%s1 + $0x34] sm:$0xf]
      %v190 = vld [vmem:[%s1 + $0x38] sm:$0xf]
      %v191 = vld [vmem:[%s1 + $0x3c] sm:$0xf]
      %s192 = scalar_lea.vmem %s1, 64
      %v193 = vld [vmem:[%s192] sm:$0xf]
      %v194 = vld [vmem:[%s192 + $0x4] sm:$0xf]
      %v195 = vld [vmem:[%s192 + $0x8] sm:$0xf]
      %v196 = vld [vmem:[%s192 + $0xc] sm:$0xf]
      %v197 = vld [vmem:[%s192 + $0x10] sm:$0xf]
      %v198 = vld [vmem:[%s192 + $0x14] sm:$0xf]
      %v199 = vld [vmem:[%s192 + $0x18] sm:$0xf]
      %v200 = vld [vmem:[%s192 + $0x1c] sm:$0xf]
      %v201 = vld [vmem:[%s192 + $0x20] sm:$0xf]
      %v202 = vld [vmem:[%s192 + $0x24] sm:$0xf]
      %v203 = vld [vmem:[%s192 + $0x28] sm:$0xf]
      %v204 = vld [vmem:[%s192 + $0x2c] sm:$0xf]
      %v205 = vld [vmem:[%s192 + $0x30] sm:$0xf]
      %v206 = vld [vmem:[%s192 + $0x34] sm:$0xf]
      %v207 = vld [vmem:[%s192 + $0x38] sm:$0xf]
      %v208 = vld [vmem:[%s192 + $0x3c] sm:$0xf]
      %v213 = vunpack.c.l.b16 %v172
      %v214 = vunpack.c.l.b16 %v173
      %v215 = vunpack.c.l.b16 %v174
      %v216 = vunpack.c.l.b16 %v175
      %v217 = vpack.c.b16 %v214, %v213
      %v218 = vpack.c.b16 %v216, %v215
      %vm219 = vsmask.f32 7424
      %v221 = vshrl.u32 %v217, 16
      %v223 = vshll.u32 %v217, 16
      %v225 = vrot.slane %v223, 1
      %v226 = vor.u32 %v221, %v225
      %v228 = vshll.u32 %v218, 16
      %v230 = vrot.slane %v228, 1
      %v231 = vsel %vm219, %v226, %v230
      %v232 = vshrl.u32 %v218, 16
      %v234 = vor.u32 %v232, %v230
      %v253 = vunpack.c.l.b16 %v193
      %v254 = vunpack.c.l.b16 %v194
      %v255 = vunpack.c.l.b16 %v195
      %v256 = vunpack.c.l.b16 %v196
      %v257 = vunpack.c.l.b16 %v197
      %v258 = vunpack.c.l.b16 %v198
      %v259 = vunpack.c.l.b16 %v199
      %v260 = vunpack.c.l.b16 %v200
      %v261 = vunpack.c.l.b16 %v201
      %v262 = vunpack.c.l.b16 %v202
      %v263 = vunpack.c.l.b16 %v203
      %v264 = vunpack.c.l.b16 %v204
      %v265 = vunpack.c.l.b16 %v205
      %v266 = vunpack.c.l.b16 %v206
      %v267 = vunpack.c.l.b16 %v207
      %v268 = vunpack.c.l.b16 %v208
      %v269 = vpack.c.b16 %v254, %v253
      %v270 = vpack.c.b16 %v256, %v255
      %v271 = vpack.c.b16 %v258, %v257
      %v272 = vpack.c.b16 %v260, %v259
      %v273 = vpack.c.b16 %v262, %v261
      %v274 = vpack.c.b16 %v264, %v263
      %v275 = vpack.c.b16 %v266, %v265
      %v276 = vpack.c.b16 %v268, %v267
      %285 = vmatprep.subr.bf16.mxu0 0
      %286 = vmatpush1.bf16.msra.mxu0 %v269
      %287 = vmatprep.subr.bf16.mxu0 0
      %288 = vmatpush1.bf16.msra.mxu0 %v270
      %289 = vmatprep.subr.bf16.mxu0 0
      %290 = vmatpush1.bf16.msra.mxu0 %v271
      %291 = vmatprep.subr.bf16.mxu0 0
      %292 = vmatpush1.bf16.msra.mxu0 %v272
      %293 = vmatprep.subr.bf16.mxu0 0
      %294 = vmatpush1.bf16.msra.mxu0 %v273
      %295 = vmatprep.subr.bf16.mxu0 0
      %296 = vmatpush1.bf16.msra.mxu0 %v274
      %297 = vmatprep.subr.bf16.mxu0 0
      %298 = vmatpush1.bf16.msra.mxu0 %v275
      %299 = vmatprep.subr.bf16.mxu0 0
      %300 = vmatpush1.bf16.msra.mxu0 %v276
      %301 = vmatprep.subr.bf16.mxu0 0
      %302 = vmatpush1.bf16.msra.mxu0 0
      %303 = vmatprep.subr.bf16.mxu0 0
      %304 = vmatpush1.bf16.msra.mxu0 0
      %305 = vmatprep.subr.bf16.mxu0 0
      %306 = vmatpush1.bf16.msra.mxu0 0
      %307 = vmatprep.subr.bf16.mxu0 0
      %308 = vmatpush1.bf16.msra.mxu0 0
      %309 = vmatprep.subr.bf16.mxu0 0
      %310 = vmatpush1.bf16.msra.mxu0 0
      %311 = vmatprep.subr.bf16.mxu0 0
      %312 = vmatpush1.bf16.msra.mxu0 0
      %313 = vmatprep.subr.bf16.mxu0 0
      %314 = vmatpush1.bf16.msra.mxu0 0
      %315 = vmatprep.subr.bf16.mxu0 0
      %316 = vmatpush1.bf16.msra.mxu0 0
      %317 = vmatprep.mubr.bf16.mxu0 0
      %318 = vmatmul.mubr.bf16.gmra.mrb[0].mxu0 %v231
      %v319 = vpop.f32.mrb[0].mxu0
      %v320 = vadd.f32 0.0, %v319
      %v321 = vpop.f32.mrb[0].mxu0
      %v322 = vpop.f32.mrb[0].mxu0
      %v323 = vadd.f32 0.0, %v322
      %v324 = vpop.f32.mrb[0].mxu0
      %325 = vmatprep.mubr.bf16.mxu0 0
      %326 = vmatmul.mubr.bf16.gmra.mrb[0].mxu0 %v234
      %v327 = vpop.f32.mrb[0].mxu0
      %v328 = vadd.f32 0.0, %v327
      %v329 = vpop.f32.mrb[0].mxu0
      %v330 = vpop.f32.mrb[0].mxu0
      %v331 = vadd.f32 0.0, %v330
      %v332 = vpop.f32.mrb[0].mxu0
      %333 = vdwg.mxu0
      %v352 = vunpack.c.l.b16 %v176
      %v353 = vunpack.c.l.b16 %v177
      %v354 = vunpack.c.l.b16 %v178
      %v355 = vunpack.c.l.b16 %v179
      %v356 = vunpack.c.l.b16 %v180
      %v357 = vunpack.c.l.b16 %v181
      %v358 = vunpack.c.l.b16 %v182
      %v359 = vunpack.c.l.b16 %v183
      %v360 = vunpack.c.l.b16 %v184
      %v361 = vunpack.c.l.b16 %v185
      %v362 = vunpack.c.l.b16 %v186
      %v363 = vunpack.c.l.b16 %v187
      %v364 = vunpack.c.l.b16 %v188
      %v365 = vunpack.c.l.b16 %v189
      %v366 = vunpack.c.l.b16 %v190
      %v367 = vunpack.c.l.b16 %v191
      %v368 = vpack.c.b16 %v353, %v352
      %v369 = vpack.c.b16 %v355, %v354
      %v370 = vpack.c.b16 %v357, %v356
      %v371 = vpack.c.b16 %v359, %v358
      %v372 = vpack.c.b16 %v361, %v360
      %v373 = vpack.c.b16 %v363, %v362
      %v374 = vpack.c.b16 %v365, %v364
      %v375 = vpack.c.b16 %v367, %v366
      %384 = vmatprep.subr.bf16.mxu0 0
      %385 = vmatpush1.bf16.msra.mxu0 %v368
      %386 = vmatprep.subr.bf16.mxu0 0
      %387 = vmatpush1.bf16.msra.mxu0 %v369
      %388 = vmatprep.subr.bf16.mxu0 0
      %389 = vmatpush1.bf16.msra.mxu0 %v370
      %390 = vmatprep.subr.bf16.mxu0 0
      %391 = vmatpush1.bf16.msra.mxu0 %v371
      %392 = vmatprep.subr.bf16.mxu0 0
      %393 = vmatpush1.bf16.msra.mxu0 %v372
      %394 = vmatprep.subr.bf16.mxu0 0
      %395 = vmatpush1.bf16.msra.mxu0 %v373
      %396 = vmatprep.subr.bf16.mxu0 0
      %397 = vmatpush1.bf16.msra.mxu0 %v374
      %398 = vmatprep.subr.bf16.mxu0 0
      %399 = vmatpush1.bf16.msra.mxu0 %v375
      %400 = vmatprep.subr.bf16.mxu0 0
      %401 = vmatpush1.bf16.msra.mxu0 0
      %402 = vmatprep.subr.bf16.mxu0 0
      %403 = vmatpush1.bf16.msra.mxu0 0
      %404 = vmatprep.subr.bf16.mxu0 0
      %405 = vmatpush1.bf16.msra.mxu0 0
      %406 = vmatprep.subr.bf16.mxu0 0
      %407 = vmatpush1.bf16.msra.mxu0 0
      %408 = vmatprep.subr.bf16.mxu0 0
      %409 = vmatpush1.bf16.msra.mxu0 0
      %410 = vmatprep.subr.bf16.mxu0 0
      %411 = vmatpush1.bf16.msra.mxu0 0
      %412 = vmatprep.subr.bf16.mxu0 0
      %413 = vmatpush1.bf16.msra.mxu0 0
      %414 = vmatprep.subr.bf16.mxu0 0
      %415 = vmatpush1.bf16.msra.mxu0 0
      %416 = vmatprep.mubr.bf16.mxu0 0
      %417 = vmatmul.mubr.bf16.gmra.mrb[0].mxu0 %v217
      %v418 = vpop.f32.mrb[0].mxu0
      %v419 = vadd.f32 %v320, %v418
      %v420 = vpop.f32.mrb[0].mxu0
      %v421 = vpop.f32.mrb[0].mxu0
      %v422 = vadd.f32 %v323, %v421
      %v423 = vpop.f32.mrb[0].mxu0
      %424 = vmatprep.mubr.bf16.mxu0 0
      %425 = vmatmul.mubr.bf16.gmra.mrb[0].mxu0 %v218
      %v426 = vpop.f32.mrb[0].mxu0
      %v427 = vadd.f32 %v328, %v426
      %v428 = vpop.f32.mrb[0].mxu0
      %v429 = vpop.f32.mrb[0].mxu0
      %v430 = vadd.f32 %v331, %v429
      %v431 = vpop.f32.mrb[0].mxu0
      %432 = vdwg.mxu0
      %v433 = vld [vmem:[%s165] sm:$0xe]
      %v434 = vld [vmem:[%s165 + $0xc] sm:$0x3]
      %s435 = scalar_lea.vmem %s1, 128
      %v436 = vld [vmem:[%s435] sm:$0xf]
      %v437 = vld [vmem:[%s435 + $0x4] sm:$0xf]
      %v438 = vld [vmem:[%s435 + $0x8] sm:$0xf]
      %v439 = vld [vmem:[%s435 + $0xc] sm:$0xf]
      %v440 = vld [vmem:[%s435 + $0x10] sm:$0xf]
      %v441 = vld [vmem:[%s435 + $0x14] sm:$0xf]
      %v442 = vld [vmem:[%s435 + $0x18] sm:$0xf]
      %v443 = vld [vmem:[%s435 + $0x1c] sm:$0xf]
      %v444 = vld [vmem:[%s435 + $0x20] sm:$0xf]
      %v445 = vld [vmem:[%s435 + $0x24] sm:$0xf]
      %v446 = vld [vmem:[%s435 + $0x28] sm:$0xf]
      %v447 = vld [vmem:[%s435 + $0x2c] sm:$0xf]
      %v448 = vld [vmem:[%s435 + $0x30] sm:$0xf]
      %v449 = vld [vmem:[%s435 + $0x34] sm:$0xf]
      %v450 = vld [vmem:[%s435 + $0x38] sm:$0xf]
      %v451 = vld [vmem:[%s435 + $0x3c] sm:$0xf]
      %v454 = vunpack.c.l.b16 %v433
      %v455 = vunpack.c.l.b16 %v434
      %v456 = vpack.c.b16 %v214, %v454
      %v457 = vpack.c.b16 %v455, %v215
      %vm458 = vcmask 1046528
      %v459 = vrot.slane %v456, 1
      %v460 = vrot.slane %v457, 1
      %v461 = vsel %vm458, %v459, %v460
      %v480 = vunpack.c.l.b16 %v436
      %v481 = vunpack.c.l.b16 %v437
      %v482 = vunpack.c.l.b16 %v438
      %v483 = vunpack.c.l.b16 %v439
      %v484 = vunpack.c.l.b16 %v440
      %v485 = vunpack.c.l.b16 %v441
      %v486 = vunpack.c.l.b16 %v442
      %v487 = vunpack.c.l.b16 %v443
      %v488 = vunpack.c.l.b16 %v444
      %v489 = vunpack.c.l.b16 %v445
      %v490 = vunpack.c.l.b16 %v446
      %v491 = vunpack.c.l.b16 %v447
      %v492 = vunpack.c.l.b16 %v448
      %v493 = vunpack.c.l.b16 %v449
      %v494 = vunpack.c.l.b16 %v450
      %v495 = vunpack.c.l.b16 %v451
      %v496 = vpack.c.b16 %v481, %v480
      %v497 = vpack.c.b16 %v483, %v482
      %v498 = vpack.c.b16 %v485, %v484
      %v499 = vpack.c.b16 %v487, %v486
      %v500 = vpack.c.b16 %v489, %v488
      %v501 = vpack.c.b16 %v491, %v490
      %v502 = vpack.c.b16 %v493, %v492
      %v503 = vpack.c.b16 %v495, %v494
      %512 = vmatprep.subr.bf16.mxu0 0
      %513 = vmatpush1.bf16.msra.mxu0 %v496
      %514 = vmatprep.subr.bf16.mxu0 0
      %515 = vmatpush1.bf16.msra.mxu0 %v497
      %516 = vmatprep.subr.bf16.mxu0 0
      %517 = vmatpush1.bf16.msra.mxu0 %v498
      %518 = vmatprep.subr.bf16.mxu0 0
      %519 = vmatpush1.bf16.msra.mxu0 %v499
      %520 = vmatprep.subr.bf16.mxu0 0
      %521 = vmatpush1.bf16.msra.mxu0 %v500
      %522 = vmatprep.subr.bf16.mxu0 0
      %523 = vmatpush1.bf16.msra.mxu0 %v501
      %524 = vmatprep.subr.bf16.mxu0 0
      %525 = vmatpush1.bf16.msra.mxu0 %v502
      %526 = vmatprep.subr.bf16.mxu0 0
      %527 = vmatpush1.bf16.msra.mxu0 %v503
      %528 = vmatprep.subr.bf16.mxu0 0
      %529 = vmatpush1.bf16.msra.mxu0 0
      %530 = vmatprep.subr.bf16.mxu0 0
      %531 = vmatpush1.bf16.msra.mxu0 0
      %532 = vmatprep.subr.bf16.mxu0 0
      %533 = vmatpush1.bf16.msra.mxu0 0
      %534 = vmatprep.subr.bf16.mxu0 0
      %535 = vmatpush1.bf16.msra.mxu0 0
      %536 = vmatprep.subr.bf16.mxu0 0
      %537 = vmatpush1.bf16.msra.mxu0 0
      %538 = vmatprep.subr.bf16.mxu0 0
      %539 = vmatpush1.bf16.msra.mxu0 0
      %540 = vmatprep.subr.bf16.mxu0 0
      %541 = vmatpush1.bf16.msra.mxu0 0
      %542 = vmatprep.subr.bf16.mxu0 0
      %543 = vmatpush1.bf16.msra.mxu0 0
      %544 = vmatprep.mubr.bf16.mxu0 0
      %545 = vmatmul.mubr.bf16.gmra.mrb[0].mxu0 %v461
      %v546 = vpop.f32.mrb[0].mxu0
      %v547 = vadd.f32 0.0, %v546
      %v548 = vpop.f32.mrb[0].mxu0
      %v549 = vpop.f32.mrb[0].mxu0
      %v550 = vadd.f32 0.0, %v549
      %v551 = vpop.f32.mrb[0].mxu0
      %552 = vmatprep.mubr.bf16.mxu0 0
      %553 = vmatmul.mubr.bf16.gmra.mrb[0].mxu0 %v460
      %v554 = vpop.f32.mrb[0].mxu0
      %v555 = vadd.f32 0.0, %v554
      %v556 = vpop.f32.mrb[0].mxu0
      %v557 = vpop.f32.mrb[0].mxu0
      %v558 = vadd.f32 0.0, %v557
      %v559 = vpop.f32.mrb[0].mxu0
      %560 = vdwg.mxu0
      %v561 = vadd.f32 %v419, %v547
      %v562 = vadd.f32 %v422, %v550
      %v563 = vadd.f32 %v427, %v555
      %v564 = vadd.f32 %v430, %v558
      %s565 = scalar_lea.vmem %s1, 192
      %v566 = vld [vmem:[%s565] sm:$0xf]
      %v567 = vld [vmem:[%s565 + $0x4] sm:$0xf]
      %v568 = vld [vmem:[%s565 + $0x8] sm:$0xf]
      %v569 = vld [vmem:[%s565 + $0xc] sm:$0xf]
      %v570 = vld [vmem:[%s565 + $0x10] sm:$0xf]
      %v571 = vld [vmem:[%s565 + $0x14] sm:$0xf]
      %v572 = vld [vmem:[%s565 + $0x18] sm:$0xf]
      %v573 = vld [vmem:[%s565 + $0x1c] sm:$0xf]
      %v574 = vld [vmem:[%s565 + $0x20] sm:$0xf]
      %v575 = vld [vmem:[%s565 + $0x24] sm:$0xf]
      %v576 = vld [vmem:[%s565 + $0x28] sm:$0xf]
      %v577 = vld [vmem:[%s565 + $0x2c] sm:$0xf]
      %v578 = vld [vmem:[%s565 + $0x30] sm:$0xf]
      %v579 = vld [vmem:[%s565 + $0x34] sm:$0xf]
      %v580 = vld [vmem:[%s565 + $0x38] sm:$0xf]
      %v581 = vld [vmem:[%s565 + $0x3c] sm:$0xf]
      %vm582 = vsmask.f32 6400
      %v584 = vshrl.u32 %v456, 16
      %v586 = vrot.slane %v584, 1
      %v587 = vshll.u32 %v456, 16
      %v589 = vrot.slane %v587, 2
      %v590 = vor.u32 %v586, %v589
      %v592 = vshrl.u32 %v457, 16
      %v594 = vrot.slane %v592, 1
      %v595 = vshll.u32 %v457, 16
      %v597 = vrot.slane %v595, 2
      %v598 = vor.u32 %v594, %v597
      %v599 = vsel %vm582, %v590, %v598
      %v618 = vunpack.c.l.b16 %v566
      %v619 = vunpack.c.l.b16 %v567
      %v620 = vunpack.c.l.b16 %v568
      %v621 = vunpack.c.l.b16 %v569
      %v622 = vunpack.c.l.b16 %v570
      %v623 = vunpack.c.l.b16 %v571
      %v624 = vunpack.c.l.b16 %v572
      %v625 = vunpack.c.l.b16 %v573
      %v626 = vunpack.c.l.b16 %v574
      %v627 = vunpack.c.l.b16 %v575
      %v628 = vunpack.c.l.b16 %v576
      %v629 = vunpack.c.l.b16 %v577
      %v630 = vunpack.c.l.b16 %v578
      %v631 = vunpack.c.l.b16 %v579
      %v632 = vunpack.c.l.b16 %v580
      %v633 = vunpack.c.l.b16 %v581
      %v634 = vpack.c.b16 %v619, %v618
      %v635 = vpack.c.b16 %v621, %v620
      %v636 = vpack.c.b16 %v623, %v622
      %v637 = vpack.c.b16 %v625, %v624
      %v638 = vpack.c.b16 %v627, %v626
      %v639 = vpack.c.b16 %v629, %v628
      %v640 = vpack.c.b16 %v631, %v630
      %v641 = vpack.c.b16 %v633, %v632
      %650 = vmatprep.subr.bf16.mxu0 0
      %651 = vmatpush1.bf16.msra.mxu0 %v634
      %652 = vmatprep.subr.bf16.mxu0 0
      %653 = vmatpush1.bf16.msra.mxu0 %v635
      %654 = vmatprep.subr.bf16.mxu0 0
      %655 = vmatpush1.bf16.msra.mxu0 %v636
      %656 = vmatprep.subr.bf16.mxu0 0
      %657 = vmatpush1.bf16.msra.mxu0 %v637
      %658 = vmatprep.subr.bf16.mxu0 0
      %659 = vmatpush1.bf16.msra.mxu0 %v638
      %660 = vmatprep.subr.bf16.mxu0 0
      %661 = vmatpush1.bf16.msra.mxu0 %v639
      %662 = vmatprep.subr.bf16.mxu0 0
      %663 = vmatpush1.bf16.msra.mxu0 %v640
      %664 = vmatprep.subr.bf16.mxu0 0
      %665 = vmatpush1.bf16.msra.mxu0 %v641
      %666 = vmatprep.subr.bf16.mxu0 0
      %667 = vmatpush1.bf16.msra.mxu0 0
      %668 = vmatprep.subr.bf16.mxu0 0
      %669 = vmatpush1.bf16.msra.mxu0 0
      %670 = vmatprep.subr.bf16.mxu0 0
      %671 = vmatpush1.bf16.msra.mxu0 0
      %672 = vmatprep.subr.bf16.mxu0 0
      %673 = vmatpush1.bf16.msra.mxu0 0
      %674 = vmatprep.subr.bf16.mxu0 0
      %675 = vmatpush1.bf16.msra.mxu0 0
      %676 = vmatprep.subr.bf16.mxu0 0
      %677 = vmatpush1.bf16.msra.mxu0 0
      %678 = vmatprep.subr.bf16.mxu0 0
      %679 = vmatpush1.bf16.msra.mxu0 0
      %680 = vmatprep.subr.bf16.mxu0 0
      %681 = vmatpush1.bf16.msra.mxu0 0
      %682 = vmatprep.mubr.bf16.mxu0 0
      %683 = vmatmul.mubr.bf16.gmra.mrb[0].mxu0 %v599
      %v684 = vpop.f32.mrb[0].mxu0
      %v685 = vadd.f32 0.0, %v684
      %v686 = vpop.f32.mrb[0].mxu0
      %v687 = vpop.f32.mrb[0].mxu0
      %v688 = vadd.f32 0.0, %v687
      %v689 = vpop.f32.mrb[0].mxu0
      %690 = vmatprep.mubr.bf16.mxu0 0
      %691 = vmatmul.mubr.bf16.gmra.mrb[0].mxu0 %v598
      %v692 = vpop.f32.mrb[0].mxu0
      %v693 = vadd.f32 0.0, %v692
      %v694 = vpop.f32.mrb[0].mxu0
      %v695 = vpop.f32.mrb[0].mxu0
      %v696 = vadd.f32 0.0, %v695
      %v697 = vpop.f32.mrb[0].mxu0
      %698 = vdwg.mxu0
      %v699 = vadd.f32 %v561, %v685
      %v700 = vadd.f32 %v562, %v688
      %v701 = vadd.f32 %v563, %v693
      %v702 = vadd.f32 %v564, %v696
      %v703 = vld [vmem:[%s165] sm:$0xc]
      %v704 = vld [vmem:[%s165 + $0xc] sm:$0x7]
      %s705 = scalar_lea.vmem %s1, 256
      %v706 = vld [vmem:[%s705] sm:$0xf]
      %v707 = vld [vmem:[%s705 + $0x4] sm:$0xf]
      %v708 = vld [vmem:[%s705 + $0x8] sm:$0xf]
      %v709 = vld [vmem:[%s705 + $0xc] sm:$0xf]
      %v710 = vld [vmem:[%s705 + $0x10] sm:$0xf]
      %v711 = vld [vmem:[%s705 + $0x14] sm:$0xf]
      %v712 = vld [vmem:[%s705 + $0x18] sm:$0xf]
      %v713 = vld [vmem:[%s705 + $0x1c] sm:$0xf]
      %v714 = vld [vmem:[%s705 + $0x20] sm:$0xf]
      %v715 = vld [vmem:[%s705 + $0x24] sm:$0xf]
      %v716 = vld [vmem:[%s705 + $0x28] sm:$0xf]
      %v717 = vld [vmem:[%s705 + $0x2c] sm:$0xf]
      %v718 = vld [vmem:[%s705 + $0x30] sm:$0xf]
      %v719 = vld [vmem:[%s705 + $0x34] sm:$0xf]
      %v720 = vld [vmem:[%s705 + $0x38] sm:$0xf]
      %v721 = vld [vmem:[%s705 + $0x3c] sm:$0xf]
      %v724 = vunpack.c.l.b16 %v703
      %v725 = vunpack.c.l.b16 %v704
      %v726 = vpack.c.b16 %v214, %v724
      %v727 = vpack.c.b16 %v725, %v215
      %vm728 = vsmask.f32 5376
      %v730 = vshrl.u32 %v726, 16
      %v732 = vrot.slane %v730, 2
      %v733 = vshll.u32 %v726, 16
      %v735 = vrot.slane %v733, 3
      %v736 = vor.u32 %v732, %v735
      %v738 = vshrl.u32 %v727, 16
      %v740 = vrot.slane %v738, 2
      %v741 = vshll.u32 %v727, 16
      %v743 = vrot.slane %v741, 3
      %v744 = vor.u32 %v740, %v743
      %v745 = vsel %vm728, %v736, %v744
      %v764 = vunpack.c.l.b16 %v706
      %v765 = vunpack.c.l.b16 %v707
      %v766 = vunpack.c.l.b16 %v708
      %v767 = vunpack.c.l.b16 %v709
      %v768 = vunpack.c.l.b16 %v710
      %v769 = vunpack.c.l.b16 %v711
      %v770 = vunpack.c.l.b16 %v712
      %v771 = vunpack.c.l.b16 %v713
      %v772 = vunpack.c.l.b16 %v714
      %v773 = vunpack.c.l.b16 %v715
      %v774 = vunpack.c.l.b16 %v716
      %v775 = vunpack.c.l.b16 %v717
      %v776 = vunpack.c.l.b16 %v718
      %v777 = vunpack.c.l.b16 %v719
      %v778 = vunpack.c.l.b16 %v720
      %v779 = vunpack.c.l.b16 %v721
      %v780 = vpack.c.b16 %v765, %v764
      %v781 = vpack.c.b16 %v767, %v766
      %v782 = vpack.c.b16 %v769, %v768
      %v783 = vpack.c.b16 %v771, %v770
      %v784 = vpack.c.b16 %v773, %v772
      %v785 = vpack.c.b16 %v775, %v774
      %v786 = vpack.c.b16 %v777, %v776
      %v787 = vpack.c.b16 %v779, %v778
      %796 = vmatprep.subr.bf16.mxu0 0
      %797 = vmatpush1.bf16.msra.mxu0 %v780
      %798 = vmatprep.subr.bf16.mxu0 0
      %799 = vmatpush1.bf16.msra.mxu0 %v781
      %800 = vmatprep.subr.bf16.mxu0 0
      %801 = vmatpush1.bf16.msra.mxu0 %v782
      %802 = vmatprep.subr.bf16.mxu0 0
      %803 = vmatpush1.bf16.msra.mxu0 %v783
      %804 = vmatprep.subr.bf16.mxu0 0
      %805 = vmatpush1.bf16.msra.mxu0 %v784
      %806 = vmatprep.subr.bf16.mxu0 0
      %807 = vmatpush1.bf16.msra.mxu0 %v785
      %808 = vmatprep.subr.bf16.mxu0 0
      %809 = vmatpush1.bf16.msra.mxu0 %v786
      %810 = vmatprep.subr.bf16.mxu0 0
      %811 = vmatpush1.bf16.msra.mxu0 %v787
      %812 = vmatprep.subr.bf16.mxu0 0
      %813 = vmatpush1.bf16.msra.mxu0 0
      %814 = vmatprep.subr.bf16.mxu0 0
      %815 = vmatpush1.bf16.msra.mxu0 0
      %816 = vmatprep.subr.bf16.mxu0 0
      %817 = vmatpush1.bf16.msra.mxu0 0
      %818 = vmatprep.subr.bf16.mxu0 0
      %819 = vmatpush1.bf16.msra.mxu0 0
      %820 = vmatprep.subr.bf16.mxu0 0
      %821 = vmatpush1.bf16.msra.mxu0 0
      %822 = vmatprep.subr.bf16.mxu0 0
      %823 = vmatpush1.bf16.msra.mxu0 0
      %824 = vmatprep.subr.bf16.mxu0 0
      %825 = vmatpush1.bf16.msra.mxu0 0
      %826 = vmatprep.subr.bf16.mxu0 0
      %827 = vmatpush1.bf16.msra.mxu0 0
      %828 = vmatprep.mubr.bf16.mxu0 0
      %829 = vmatmul.mubr.bf16.gmra.mrb[0].mxu0 %v745
      %v830 = vpop.f32.mrb[0].mxu0
      %v831 = vadd.f32 0.0, %v830
      %v832 = vpop.f32.mrb[0].mxu0
      %v833 = vpop.f32.mrb[0].mxu0
      %v834 = vadd.f32 0.0, %v833
      %v835 = vpop.f32.mrb[0].mxu0
      %836 = vmatprep.mubr.bf16.mxu0 0
      %837 = vmatmul.mubr.bf16.gmra.mrb[0].mxu0 %v744
      %v838 = vpop.f32.mrb[0].mxu0
      %v839 = vadd.f32 0.0, %v838
      %v840 = vpop.f32.mrb[0].mxu0
      %v841 = vpop.f32.mrb[0].mxu0
      %v842 = vadd.f32 0.0, %v841
      %v843 = vpop.f32.mrb[0].mxu0
      %844 = vdwg.mxu0
      %v845 = vadd.f32 %v699, %v831
      %v846 = vadd.f32 %v700, %v834
      %v847 = vadd.f32 %v701, %v839
      %v848 = vadd.f32 %v702, %v842
      %v849 = vld [vmem:[%s165] sm:$0x8]
      %v850 = vld [vmem:[%s165 + $0xc] sm:$0xf]
      %s851 = scalar_lea.vmem %s1, 320
      %v852 = vld [vmem:[%s851] sm:$0xf]
      %v853 = vld [vmem:[%s851 + $0x4] sm:$0xf]
      %v854 = vld [vmem:[%s851 + $0x8] sm:$0xf]
      %v855 = vld [vmem:[%s851 + $0xc] sm:$0xf]
      %v856 = vld [vmem:[%s851 + $0x10] sm:$0xf]
      %v857 = vld [vmem:[%s851 + $0x14] sm:$0xf]
      %v858 = vld [vmem:[%s851 + $0x18] sm:$0xf]
      %v859 = vld [vmem:[%s851 + $0x1c] sm:$0xf]
      %v860 = vld [vmem:[%s851 + $0x20] sm:$0xf]
      %v861 = vld [vmem:[%s851 + $0x24] sm:$0xf]
      %v862 = vld [vmem:[%s851 + $0x28] sm:$0xf]
      %v863 = vld [vmem:[%s851 + $0x2c] sm:$0xf]
      %v864 = vld [vmem:[%s851 + $0x30] sm:$0xf]
      %v865 = vld [vmem:[%s851 + $0x34] sm:$0xf]
      %v866 = vld [vmem:[%s851 + $0x38] sm:$0xf]
      %v867 = vld [vmem:[%s851 + $0x3c] sm:$0xf]
      %v870 = vunpack.c.l.b16 %v849
      %v871 = vunpack.c.l.b16 %v850
      %v872 = vpack.c.b16 %v214, %v870
      %v873 = vpack.c.b16 %v871, %v215
      %vm874 = vcmask 1044480
      %v875 = vrot.slane %v872, 3
      %v876 = vrot.slane %v873, 3
      %v877 = vsel %vm874, %v875, %v876
      %v896 = vunpack.c.l.b16 %v852
      %v897 = vunpack.c.l.b16 %v853
      %v898 = vunpack.c.l.b16 %v854
      %v899 = vunpack.c.l.b16 %v855
      %v900 = vunpack.c.l.b16 %v856
      %v901 = vunpack.c.l.b16 %v857
      %v902 = vunpack.c.l.b16 %v858
      %v903 = vunpack.c.l.b16 %v859
      %v904 = vunpack.c.l.b16 %v860
      %v905 = vunpack.c.l.b16 %v861
      %v906 = vunpack.c.l.b16 %v862
      %v907 = vunpack.c.l.b16 %v863
      %v908 = vunpack.c.l.b16 %v864
      %v909 = vunpack.c.l.b16 %v865
      %v910 = vunpack.c.l.b16 %v866
      %v911 = vunpack.c.l.b16 %v867
      %v912 = vpack.c.b16 %v897, %v896
      %v913 = vpack.c.b16 %v899, %v898
      %v914 = vpack.c.b16 %v901, %v900
      %v915 = vpack.c.b16 %v903, %v902
      %v916 = vpack.c.b16 %v905, %v904
      %v917 = vpack.c.b16 %v907, %v906
      %v918 = vpack.c.b16 %v909, %v908
      %v919 = vpack.c.b16 %v911, %v910
      %928 = vmatprep.subr.bf16.mxu0 0
      %929 = vmatpush1.bf16.msra.mxu0 %v912
      %930 = vmatprep.subr.bf16.mxu0 0
      %931 = vmatpush1.bf16.msra.mxu0 %v913
      %932 = vmatprep.subr.bf16.mxu0 0
      %933 = vmatpush1.bf16.msra.mxu0 %v914
      %934 = vmatprep.subr.bf16.mxu0 0
      %935 = vmatpush1.bf16.msra.mxu0 %v915
      %936 = vmatprep.subr.bf16.mxu0 0
      %937 = vmatpush1.bf16.msra.mxu0 %v916
      %938 = vmatprep.subr.bf16.mxu0 0
      %939 = vmatpush1.bf16.msra.mxu0 %v917
      %940 = vmatprep.subr.bf16.mxu0 0
      %941 = vmatpush1.bf16.msra.mxu0 %v918
      %942 = vmatprep.subr.bf16.mxu0 0
      %943 = vmatpush1.bf16.msra.mxu0 %v919
      %944 = vmatprep.subr.bf16.mxu0 0
      %945 = vmatpush1.bf16.msra.mxu0 0
      %946 = vmatprep.subr.bf16.mxu0 0
      %947 = vmatpush1.bf16.msra.mxu0 0
      %948 = vmatprep.subr.bf16.mxu0 0
      %949 = vmatpush1.bf16.msra.mxu0 0
      %950 = vmatprep.subr.bf16.mxu0 0
      %951 = vmatpush1.bf16.msra.mxu0 0
      %952 = vmatprep.subr.bf16.mxu0 0
      %953 = vmatpush1.bf16.msra.mxu0 0
      %954 = vmatprep.subr.bf16.mxu0 0
      %955 = vmatpush1.bf16.msra.mxu0 0
      %956 = vmatprep.subr.bf16.mxu0 0
      %957 = vmatpush1.bf16.msra.mxu0 0
      %958 = vmatprep.subr.bf16.mxu0 0
      %959 = vmatpush1.bf16.msra.mxu0 0
      %960 = vmatprep.mubr.bf16.mxu0 0
      %961 = vmatmul.mubr.bf16.gmra.mrb[0].mxu0 %v877
      %v962 = vpop.f32.mrb[0].mxu0
      %v963 = vadd.f32 0.0, %v962
      %v964 = vpop.f32.mrb[0].mxu0
      %v965 = vpop.f32.mrb[0].mxu0
      %v966 = vadd.f32 0.0, %v965
      %v967 = vpop.f32.mrb[0].mxu0
      %968 = vmatprep.mubr.bf16.mxu0 0
      %969 = vmatmul.mubr.bf16.gmra.mrb[0].mxu0 %v876
      %v970 = vpop.f32.mrb[0].mxu0
      %v971 = vadd.f32 0.0, %v970
      %v972 = vpop.f32.mrb[0].mxu0
      %v973 = vpop.f32.mrb[0].mxu0
      %v974 = vadd.f32 0.0, %v973
      %v975 = vpop.f32.mrb[0].mxu0
      %976 = vdwg.mxu0
      %v977 = vadd.f32 %v845, %v963
      %v978 = vadd.f32 %v846, %v966
      %v979 = vadd.f32 %v847, %v971
      %v980 = vadd.f32 %v848, %v974
      %s981 = scalar_lea.vmem %s1, 384
      %v982 = vld [vmem:[%s981] sm:$0xf]
      %v983 = vld [vmem:[%s981 + $0x4] sm:$0xf]
      %v984 = vld [vmem:[%s981 + $0x8] sm:$0xf]
      %v985 = vld [vmem:[%s981 + $0xc] sm:$0xf]
      %v986 = vld [vmem:[%s981 + $0x10] sm:$0xf]
      %v987 = vld [vmem:[%s981 + $0x14] sm:$0xf]
      %v988 = vld [vmem:[%s981 + $0x18] sm:$0xf]
      %v989 = vld [vmem:[%s981 + $0x1c] sm:$0xf]
      %v990 = vld [vmem:[%s981 + $0x20] sm:$0xf]
      %v991 = vld [vmem:[%s981 + $0x24] sm:$0xf]
      %v992 = vld [vmem:[%s981 + $0x28] sm:$0xf]
      %v993 = vld [vmem:[%s981 + $0x2c] sm:$0xf]
      %v994 = vld [vmem:[%s981 + $0x30] sm:$0xf]
      %v995 = vld [vmem:[%s981 + $0x34] sm:$0xf]
      %v996 = vld [vmem:[%s981 + $0x38] sm:$0xf]
      %v997 = vld [vmem:[%s981 + $0x3c] sm:$0xf]
      %vm998 = vsmask.f32 4352
      %v1000 = vshrl.u32 %v872, 16
      %v1002 = vrot.slane %v1000, 3
      %v1003 = vshll.u32 %v872, 16
      %v1005 = vrot.slane %v1003, 4
      %v1006 = vor.u32 %v1002, %v1005
      %v1008 = vshrl.u32 %v873, 16
      %v1010 = vrot.slane %v1008, 3
      %v1011 = vshll.u32 %v873, 16
      %v1013 = vrot.slane %v1011, 4
      %v1014 = vor.u32 %v1010, %v1013
      %v1015 = vsel %vm998, %v1006, %v1014
      %v1034 = vunpack.c.l.b16 %v982
      %v1035 = vunpack.c.l.b16 %v983
      %v1036 = vunpack.c.l.b16 %v984
      %v1037 = vunpack.c.l.b16 %v985
      %v1038 = vunpack.c.l.b16 %v986
      %v1039 = vunpack.c.l.b16 %v987
      %v1040 = vunpack.c.l.b16 %v988
      %v1041 = vunpack.c.l.b16 %v989
      %v1042 = vunpack.c.l.b16 %v990
      %v1043 = vunpack.c.l.b16 %v991
      %v1044 = vunpack.c.l.b16 %v992
      %v1045 = vunpack.c.l.b16 %v993
      %v1046 = vunpack.c.l.b16 %v994
      %v1047 = vunpack.c.l.b16 %v995
      %v1048 = vunpack.c.l.b16 %v996
      %v1049 = vunpack.c.l.b16 %v997
      %v1050 = vpack.c.b16 %v1035, %v1034
      %v1051 = vpack.c.b16 %v1037, %v1036
      %v1052 = vpack.c.b16 %v1039, %v1038
      %v1053 = vpack.c.b16 %v1041, %v1040
      %v1054 = vpack.c.b16 %v1043, %v1042
      %v1055 = vpack.c.b16 %v1045, %v1044
      %v1056 = vpack.c.b16 %v1047, %v1046
      %v1057 = vpack.c.b16 %v1049, %v1048
      %1066 = vmatprep.subr.bf16.mxu0 0
      %1067 = vmatpush1.bf16.msra.mxu0 %v1050
      %1068 = vmatprep.subr.bf16.mxu0 0
      %1069 = vmatpush1.bf16.msra.mxu0 %v1051
      %1070 = vmatprep.subr.bf16.mxu0 0
      %1071 = vmatpush1.bf16.msra.mxu0 %v1052
      %1072 = vmatprep.subr.bf16.mxu0 0
      %1073 = vmatpush1.bf16.msra.mxu0 %v1053
      %1074 = vmatprep.subr.bf16.mxu0 0
      %1075 = vmatpush1.bf16.msra.mxu0 %v1054
      %1076 = vmatprep.subr.bf16.mxu0 0
      %1077 = vmatpush1.bf16.msra.mxu0 %v1055
      %1078 = vmatprep.subr.bf16.mxu0 0
      %1079 = vmatpush1.bf16.msra.mxu0 %v1056
      %1080 = vmatprep.subr.bf16.mxu0 0
      %1081 = vmatpush1.bf16.msra.mxu0 %v1057
      %1082 = vmatprep.subr.bf16.mxu0 0
      %1083 = vmatpush1.bf16.msra.mxu0 0
      %1084 = vmatprep.subr.bf16.mxu0 0
      %1085 = vmatpush1.bf16.msra.mxu0 0
      %1086 = vmatprep.subr.bf16.mxu0 0
      %1087 = vmatpush1.bf16.msra.mxu0 0
      %1088 = vmatprep.subr.bf16.mxu0 0
      %1089 = vmatpush1.bf16.msra.mxu0 0
      %1090 = vmatprep.subr.bf16.mxu0 0
      %1091 = vmatpush1.bf16.msra.mxu0 0
      %1092 = vmatprep.subr.bf16.mxu0 0
      %1093 = vmatpush1.bf16.msra.mxu0 0
      %1094 = vmatprep.subr.bf16.mxu0 0
      %1095 = vmatpush1.bf16.msra.mxu0 0
      %1096 = vmatprep.subr.bf16.mxu0 0
      %1097 = vmatpush1.bf16.msra.mxu0 0
      %1098 = vmatprep.mubr.bf16.mxu0 0
      %1099 = vmatmul.mubr.bf16.gmra.mrb[0].mxu0 %v1015
      %v1100 = vpop.f32.mrb[0].mxu0
      %v1101 = vadd.f32 0.0, %v1100
      %v1102 = vpop.f32.mrb[0].mxu0
      %v1103 = vpop.f32.mrb[0].mxu0
      %v1104 = vadd.f32 0.0, %v1103
      %v1105 = vpop.f32.mrb[0].mxu0
      %1106 = vmatprep.mubr.bf16.mxu0 0
      %1107 = vmatmul.mubr.bf16.gmra.mrb[0].mxu0 %v1014
      %v1108 = vpop.f32.mrb[0].mxu0
      %v1109 = vadd.f32 0.0, %v1108
      %v1110 = vpop.f32.mrb[0].mxu0
      %v1111 = vpop.f32.mrb[0].mxu0
      %v1112 = vadd.f32 0.0, %v1111
      %v1113 = vpop.f32.mrb[0].mxu0
      %1114 = vdwg.mxu0
      %v1115 = vadd.f32 %v977, %v1101
      %v1116 = vadd.f32 %v978, %v1104
      %v1117 = vadd.f32 %v979, %v1109
      %v1118 = vadd.f32 %v980, %v1112
      %v1119 = vld [vmem:[%s165 + $0x4] sm:$0xf]
      %v1120 = vld [vmem:[%s165 + $0x8] sm:$0xf]
      %v1121 = vld [vmem:[%s165 + $0xc] sm:$0xf]
      %v1122 = vld [vmem:[%s165 + $0x10] sm:$0x1]
      %s1123 = scalar_lea.vmem %s1, 448
      %v1124 = vld [vmem:[%s1123] sm:$0xf]
      %v1125 = vld [vmem:[%s1123 + $0x4] sm:$0xf]
      %v1126 = vld [vmem:[%s1123 + $0x8] sm:$0xf]
      %v1127 = vld [vmem:[%s1123 + $0xc] sm:$0xf]
      %v1128 = vld [vmem:[%s1123 + $0x10] sm:$0xf]
      %v1129 = vld [vmem:[%s1123 + $0x14] sm:$0xf]
      %v1130 = vld [vmem:[%s1123 + $0x18] sm:$0xf]
      %v1131 = vld [vmem:[%s1123 + $0x1c] sm:$0xf]
      %v1132 = vld [vmem:[%s1123 + $0x20] sm:$0xf]
      %v1133 = vld [vmem:[%s1123 + $0x24] sm:$0xf]
      %v1134 = vld [vmem:[%s1123 + $0x28] sm:$0xf]
      %v1135 = vld [vmem:[%s1123 + $0x2c] sm:$0xf]
      %v1136 = vld [vmem:[%s1123 + $0x30] sm:$0xf]
      %v1137 = vld [vmem:[%s1123 + $0x34] sm:$0xf]
      %v1138 = vld [vmem:[%s1123 + $0x38] sm:$0xf]
      %v1139 = vld [vmem:[%s1123 + $0x3c] sm:$0xf]
      %v1144 = vunpack.c.l.b16 %v1119
      %v1145 = vunpack.c.l.b16 %v1120
      %v1146 = vunpack.c.l.b16 %v1121
      %v1147 = vunpack.c.l.b16 %v1122
      %v1148 = vpack.c.b16 %v1145, %v1144
      %v1149 = vpack.c.b16 %v1147, %v1146
      %v1168 = vunpack.c.l.b16 %v1124
      %v1169 = vunpack.c.l.b16 %v1125
      %v1170 = vunpack.c.l.b16 %v1126
      %v1171 = vunpack.c.l.b16 %v1127
      %v1172 = vunpack.c.l.b16 %v1128
      %v1173 = vunpack.c.l.b16 %v1129
      %v1174 = vunpack.c.l.b16 %v1130
      %v1175 = vunpack.c.l.b16 %v1131
      %v1176 = vunpack.c.l.b16 %v1132
      %v1177 = vunpack.c.l.b16 %v1133
      %v1178 = vunpack.c.l.b16 %v1134
      %v1179 = vunpack.c.l.b16 %v1135
      %v1180 = vunpack.c.l.b16 %v1136
      %v1181 = vunpack.c.l.b16 %v1137
      %v1182 = vunpack.c.l.b16 %v1138
      %v1183 = vunpack.c.l.b16 %v1139
      %v1184 = vpack.c.b16 %v1169, %v1168
      %v1185 = vpack.c.b16 %v1171, %v1170
      %v1186 = vpack.c.b16 %v1173, %v1172
      %v1187 = vpack.c.b16 %v1175, %v1174
      %v1188 = vpack.c.b16 %v1177, %v1176
      %v1189 = vpack.c.b16 %v1179, %v1178
      %v1190 = vpack.c.b16 %v1181, %v1180
      %v1191 = vpack.c.b16 %v1183, %v1182
      %1200 = vmatprep.subr.bf16.mxu0 0
      %1201 = vmatpush1.bf16.msra.mxu0 %v1184
      %1202 = vmatprep.subr.bf16.mxu0 0
      %1203 = vmatpush1.bf16.msra.mxu0 %v1185
      %1204 = vmatprep.subr.bf16.mxu0 0
      %1205 = vmatpush1.bf16.msra.mxu0 %v1186
      %1206 = vmatprep.subr.bf16.mxu0 0
      %1207 = vmatpush1.bf16.msra.mxu0 %v1187
      %1208 = vmatprep.subr.bf16.mxu0 0
      %1209 = vmatpush1.bf16.msra.mxu0 %v1188
      %1210 = vmatprep.subr.bf16.mxu0 0
      %1211 = vmatpush1.bf16.msra.mxu0 %v1189
      %1212 = vmatprep.subr.bf16.mxu0 0
      %1213 = vmatpush1.bf16.msra.mxu0 %v1190
      %1214 = vmatprep.subr.bf16.mxu0 0
      %1215 = vmatpush1.bf16.msra.mxu0 %v1191
      %1216 = vmatprep.subr.bf16.mxu0 0
      %1217 = vmatpush1.bf16.msra.mxu0 0
      %1218 = vmatprep.subr.bf16.mxu0 0
      %1219 = vmatpush1.bf16.msra.mxu0 0
      %1220 = vmatprep.subr.bf16.mxu0 0
      %1221 = vmatpush1.bf16.msra.mxu0 0
      %1222 = vmatprep.subr.bf16.mxu0 0
      %1223 = vmatpush1.bf16.msra.mxu0 0
      %1224 = vmatprep.subr.bf16.mxu0 0
      %1225 = vmatpush1.bf16.msra.mxu0 0
      %1226 = vmatprep.subr.bf16.mxu0 0
      %1227 = vmatpush1.bf16.msra.mxu0 0
      %1228 = vmatprep.subr.bf16.mxu0 0
      %1229 = vmatpush1.bf16.msra.mxu0 0
      %1230 = vmatprep.subr.bf16.mxu0 0
      %1231 = vmatpush1.bf16.msra.mxu0 0
      %1232 = vmatprep.mubr.bf16.mxu0 0
      %1233 = vmatmul.mubr.bf16.gmra.mrb[0].mxu0 %v1148
      %v1234 = vpop.f32.mrb[0].mxu0
      %v1235 = vadd.f32 0.0, %v1234
      %v1236 = vpop.f32.mrb[0].mxu0
      %v1237 = vpop.f32.mrb[0].mxu0
      %v1238 = vadd.f32 0.0, %v1237
      %v1239 = vpop.f32.mrb[0].mxu0
      %1240 = vmatprep.mubr.bf16.mxu0 0
      %1241 = vmatmul.mubr.bf16.gmra.mrb[0].mxu0 %v1149
      %v1242 = vpop.f32.mrb[0].mxu0
      %v1243 = vadd.f32 0.0, %v1242
      %v1244 = vpop.f32.mrb[0].mxu0
      %v1245 = vpop.f32.mrb[0].mxu0
      %v1246 = vadd.f32 0.0, %v1245
      %v1247 = vpop.f32.mrb[0].mxu0
      %1248 = vdwg.mxu0
      %v1249 = vadd.f32 %v1115, %v1235
      %v1250 = vadd.f32 %v1116, %v1238
      %v1251 = vadd.f32 %v1117, %v1243
      %v1252 = vadd.f32 %v1118, %v1246
      %v1253 = vld [vmem:[%s165 + $0x4] sm:$0xe]
      %v1254 = vld [vmem:[%s165 + $0x10] sm:$0x3]
      %s1255 = scalar_lea.vmem %s1, 512
      %v1256 = vld [vmem:[%s1255] sm:$0xf]
      %v1257 = vld [vmem:[%s1255 + $0x4] sm:$0xf]
      %v1258 = vld [vmem:[%s1255 + $0x8] sm:$0xf]
      %v1259 = vld [vmem:[%s1255 + $0xc] sm:$0xf]
      %v1260 = vld [vmem:[%s1255 + $0x10] sm:$0xf]
      %v1261 = vld [vmem:[%s1255 + $0x14] sm:$0xf]
      %v1262 = vld [vmem:[%s1255 + $0x18] sm:$0xf]
      %v1263 = vld [vmem:[%s1255 + $0x1c] sm:$0xf]
      %v1264 = vld [vmem:[%s1255 + $0x20] sm:$0xf]
      %v1265 = vld [vmem:[%s1255 + $0x24] sm:$0xf]
      %v1266 = vld [vmem:[%s1255 + $0x28] sm:$0xf]
      %v1267 = vld [vmem:[%s1255 + $0x2c] sm:$0xf]
      %v1268 = vld [vmem:[%s1255 + $0x30] sm:$0xf]
      %v1269 = vld [vmem:[%s1255 + $0x34] sm:$0xf]
      %v1270 = vld [vmem:[%s1255 + $0x38] sm:$0xf]
      %v1271 = vld [vmem:[%s1255 + $0x3c] sm:$0xf]
      %v1274 = vunpack.c.l.b16 %v1253
      %v1275 = vunpack.c.l.b16 %v1254
      %v1276 = vpack.c.b16 %v1145, %v1274
      %v1277 = vpack.c.b16 %v1275, %v1146
      %v1278 = vrot.slane %v1276, 1
      %v1279 = vrot.slane %v1277, 1
      %v1280 = vsel %vm458, %v1278, %v1279
      %v1299 = vunpack.c.l.b16 %v1256
      %v1300 = vunpack.c.l.b16 %v1257
      %v1301 = vunpack.c.l.b16 %v1258
      %v1302 = vunpack.c.l.b16 %v1259
      %v1303 = vunpack.c.l.b16 %v1260
      %v1304 = vunpack.c.l.b16 %v1261
      %v1305 = vunpack.c.l.b16 %v1262
      %v1306 = vunpack.c.l.b16 %v1263
      %v1307 = vunpack.c.l.b16 %v1264
      %v1308 = vunpack.c.l.b16 %v1265
      %v1309 = vunpack.c.l.b16 %v1266
      %v1310 = vunpack.c.l.b16 %v1267
      %v1311 = vunpack.c.l.b16 %v1268
      %v1312 = vunpack.c.l.b16 %v1269
      %v1313 = vunpack.c.l.b16 %v1270
      %v1314 = vunpack.c.l.b16 %v1271
      %v1315 = vpack.c.b16 %v1300, %v1299
      %v1316 = vpack.c.b16 %v1302, %v1301
      %v1317 = vpack.c.b16 %v1304, %v1303
      %v1318 = vpack.c.b16 %v1306, %v1305
      %v1319 = vpack.c.b16 %v1308, %v1307
      %v1320 = vpack.c.b16 %v1310, %v1309
      %v1321 = vpack.c.b16 %v1312, %v1311
      %v1322 = vpack.c.b16 %v1314, %v1313
      %1331 = vmatprep.subr.bf16.mxu0 0
      %1332 = vmatpush1.bf16.msra.mxu0 %v1315
      %1333 = vmatprep.subr.bf16.mxu0 0
      %1334 = vmatpush1.bf16.msra.mxu0 %v1316
      %1335 = vmatprep.subr.bf16.mxu0 0
      %1336 = vmatpush1.bf16.msra.mxu0 %v1317
      %1337 = vmatprep.subr.bf16.mxu0 0
      %1338 = vmatpush1.bf16.msra.mxu0 %v1318
      %1339 = vmatprep.subr.bf16.mxu0 0
      %1340 = vmatpush1.bf16.msra.mxu0 %v1319
      %1341 = vmatprep.subr.bf16.mxu0 0
      %1342 = vmatpush1.bf16.msra.mxu0 %v1320
      %1343 = vmatprep.subr.bf16.mxu0 0
      %1344 = vmatpush1.bf16.msra.mxu0 %v1321
      %1345 = vmatprep.subr.bf16.mxu0 0
      %1346 = vmatpush1.bf16.msra.mxu0 %v1322
      %1347 = vmatprep.subr.bf16.mxu0 0
      %1348 = vmatpush1.bf16.msra.mxu0 0
      %1349 = vmatprep.subr.bf16.mxu0 0
      %1350 = vmatpush1.bf16.msra.mxu0 0
      %1351 = vmatprep.subr.bf16.mxu0 0
      %1352 = vmatpush1.bf16.msra.mxu0 0
      %1353 = vmatprep.subr.bf16.mxu0 0
      %1354 = vmatpush1.bf16.msra.mxu0 0
      %1355 = vmatprep.subr.bf16.mxu0 0
      %1356 = vmatpush1.bf16.msra.mxu0 0
      %1357 = vmatprep.subr.bf16.mxu0 0
      %1358 = vmatpush1.bf16.msra.mxu0 0
      %1359 = vmatprep.subr.bf16.mxu0 0
      %1360 = vmatpush1.bf16.msra.mxu0 0
      %1361 = vmatprep.subr.bf16.mxu0 0
      %1362 = vmatpush1.bf16.msra.mxu0 0
      %1363 = vmatprep.mubr.bf16.mxu0 0
      %1364 = vmatmul.mubr.bf16.gmra.mrb[0].mxu0 %v1280
      %v1365 = vpop.f32.mrb[0].mxu0
      %v1366 = vadd.f32 0.0, %v1365
      %v1367 = vpop.f32.mrb[0].mxu0
      %v1368 = vpop.f32.mrb[0].mxu0
      %v1369 = vadd.f32 0.0, %v1368
      %v1370 = vpop.f32.mrb[0].mxu0
      %1371 = vmatprep.mubr.bf16.mxu0 0
      %1372 = vmatmul.mubr.bf16.gmra.mrb[0].mxu0 %v1279
      %v1373 = vpop.f32.mrb[0].mxu0
      %v1374 = vadd.f32 0.0, %v1373
      %v1375 = vpop.f32.mrb[0].mxu0
      %v1376 = vpop.f32.mrb[0].mxu0
      %v1377 = vadd.f32 0.0, %v1376
      %v1378 = vpop.f32.mrb[0].mxu0
      %1379 = vdwg.mxu0
      %v1380 = vadd.f32 %v1249, %v1366
      %v1381 = vadd.f32 %v1250, %v1369
      %v1382 = vadd.f32 %v1251, %v1374
      %v1383 = vadd.f32 %v1252, %v1377
      %s1384 = scalar_lea.vmem %s1, 576
      %v1385 = vld [vmem:[%s1384] sm:$0xf]
      %v1386 = vld [vmem:[%s1384 + $0x4] sm:$0xf]
      %v1387 = vld [vmem:[%s1384 + $0x8] sm:$0xf]
      %v1388 = vld [vmem:[%s1384 + $0xc] sm:$0xf]
      %v1389 = vld [vmem:[%s1384 + $0x10] sm:$0xf]
      %v1390 = vld [vmem:[%s1384 + $0x14] sm:$0xf]
      %v1391 = vld [vmem:[%s1384 + $0x18] sm:$0xf]
      %v1392 = vld [vmem:[%s1384 + $0x1c] sm:$0xf]
      %v1393 = vld [vmem:[%s1384 + $0x20] sm:$0xf]
      %v1394 = vld [vmem:[%s1384 + $0x24] sm:$0xf]
      %v1395 = vld [vmem:[%s1384 + $0x28] sm:$0xf]
      %v1396 = vld [vmem:[%s1384 + $0x2c] sm:$0xf]
      %v1397 = vld [vmem:[%s1384 + $0x30] sm:$0xf]
      %v1398 = vld [vmem:[%s1384 + $0x34] sm:$0xf]
      %v1399 = vld [vmem:[%s1384 + $0x38] sm:$0xf]
      %v1400 = vld [vmem:[%s1384 + $0x3c] sm:$0xf]
      %v1402 = vshrl.u32 %v1276, 16
      %v1404 = vrot.slane %v1402, 1
      %v1405 = vshll.u32 %v1276, 16
      %v1407 = vrot.slane %v1405, 2
      %v1408 = vor.u32 %v1404, %v1407
      %v1410 = vshrl.u32 %v1277, 16
      %v1412 = vrot.slane %v1410, 1
      %v1413 = vshll.u32 %v1277, 16
      %v1415 = vrot.slane %v1413, 2
      %v1416 = vor.u32 %v1412, %v1415
      %v1417 = vsel %vm582, %v1408, %v1416
      %v1436 = vunpack.c.l.b16 %v1385
      %v1437 = vunpack.c.l.b16 %v1386
      %v1438 = vunpack.c.l.b16 %v1387
      %v1439 = vunpack.c.l.b16 %v1388
      %v1440 = vunpack.c.l.b16 %v1389
      %v1441 = vunpack.c.l.b16 %v1390
      %v1442 = vunpack.c.l.b16 %v1391
      %v1443 = vunpack.c.l.b16 %v1392
      %v1444 = vunpack.c.l.b16 %v1393
      %v1445 = vunpack.c.l.b16 %v1394
      %v1446 = vunpack.c.l.b16 %v1395
      %v1447 = vunpack.c.l.b16 %v1396
      %v1448 = vunpack.c.l.b16 %v1397
      %v1449 = vunpack.c.l.b16 %v1398
      %v1450 = vunpack.c.l.b16 %v1399
      %v1451 = vunpack.c.l.b16 %v1400
      %v1452 = vpack.c.b16 %v1437, %v1436
      %v1453 = vpack.c.b16 %v1439, %v1438
      %v1454 = vpack.c.b16 %v1441, %v1440
      %v1455 = vpack.c.b16 %v1443, %v1442
      %v1456 = vpack.c.b16 %v1445, %v1444
      %v1457 = vpack.c.b16 %v1447, %v1446
      %v1458 = vpack.c.b16 %v1449, %v1448
      %v1459 = vpack.c.b16 %v1451, %v1450
      %1468 = vmatprep.subr.bf16.mxu0 0
      %1469 = vmatpush1.bf16.msra.mxu0 %v1452
      %1470 = vmatprep.subr.bf16.mxu0 0
      %1471 = vmatpush1.bf16.msra.mxu0 %v1453
      %1472 = vmatprep.subr.bf16.mxu0 0
      %1473 = vmatpush1.bf16.msra.mxu0 %v1454
      %1474 = vmatprep.subr.bf16.mxu0 0
      %1475 = vmatpush1.bf16.msra.mxu0 %v1455
      %1476 = vmatprep.subr.bf16.mxu0 0
      %1477 = vmatpush1.bf16.msra.mxu0 %v1456
      %1478 = vmatprep.subr.bf16.mxu0 0
      %1479 = vmatpush1.bf16.msra.mxu0 %v1457
      %1480 = vmatprep.subr.bf16.mxu0 0
      %1481 = vmatpush1.bf16.msra.mxu0 %v1458
      %1482 = vmatprep.subr.bf16.mxu0 0
      %1483 = vmatpush1.bf16.msra.mxu0 %v1459
      %1484 = vmatprep.subr.bf16.mxu0 0
      %1485 = vmatpush1.bf16.msra.mxu0 0
      %1486 = vmatprep.subr.bf16.mxu0 0
      %1487 = vmatpush1.bf16.msra.mxu0 0
      %1488 = vmatprep.subr.bf16.mxu0 0
      %1489 = vmatpush1.bf16.msra.mxu0 0
      %1490 = vmatprep.subr.bf16.mxu0 0
      %1491 = vmatpush1.bf16.msra.mxu0 0
      %1492 = vmatprep.subr.bf16.mxu0 0
      %1493 = vmatpush1.bf16.msra.mxu0 0
      %1494 = vmatprep.subr.bf16.mxu0 0
      %1495 = vmatpush1.bf16.msra.mxu0 0
      %1496 = vmatprep.subr.bf16.mxu0 0
      %1497 = vmatpush1.bf16.msra.mxu0 0
      %1498 = vmatprep.subr.bf16.mxu0 0
      %1499 = vmatpush1.bf16.msra.mxu0 0
      %1500 = vmatprep.mubr.bf16.mxu0 0
      %1501 = vmatmul.mubr.bf16.gmra.mrb[0].mxu0 %v1417
      %v1502 = vpop.f32.mrb[0].mxu0
      %v1503 = vadd.f32 0.0, %v1502
      %v1504 = vpop.f32.mrb[0].mxu0
      %v1505 = vpop.f32.mrb[0].mxu0
      %v1506 = vadd.f32 0.0, %v1505
      %v1507 = vpop.f32.mrb[0].mxu0
      %1508 = vmatprep.mubr.bf16.mxu0 0
      %1509 = vmatmul.mubr.bf16.gmra.mrb[0].mxu0 %v1416
      %v1510 = vpop.f32.mrb[0].mxu0
      %v1511 = vadd.f32 0.0, %v1510
      %v1512 = vpop.f32.mrb[0].mxu0
      %v1513 = vpop.f32.mrb[0].mxu0
      %v1514 = vadd.f32 0.0, %v1513
      %v1515 = vpop.f32.mrb[0].mxu0
      %1516 = vdwg.mxu0
      %v1517 = vadd.f32 %v1380, %v1503
      %v1518 = vadd.f32 %v1381, %v1506
      %v1519 = vadd.f32 %v1382, %v1511
      %v1520 = vadd.f32 %v1383, %v1514
      %v1521 = vld [vmem:[%s165 + $0x4] sm:$0xc]
      %v1522 = vld [vmem:[%s165 + $0x10] sm:$0x7]
      %s1523 = scalar_lea.vmem %s1, 640
      %v1524 = vld [vmem:[%s1523] sm:$0xf]
      %v1525 = vld [vmem:[%s1523 + $0x4] sm:$0xf]
      %v1526 = vld [vmem:[%s1523 + $0x8] sm:$0xf]
      %v1527 = vld [vmem:[%s1523 + $0xc] sm:$0xf]
      %v1528 = vld [vmem:[%s1523 + $0x10] sm:$0xf]
      %v1529 = vld [vmem:[%s1523 + $0x14] sm:$0xf]
      %v1530 = vld [vmem:[%s1523 + $0x18] sm:$0xf]
      %v1531 = vld [vmem:[%s1523 + $0x1c] sm:$0xf]
      %v1532 = vld [vmem:[%s1523 + $0x20] sm:$0xf]
      %v1533 = vld [vmem:[%s1523 + $0x24] sm:$0xf]
      %v1534 = vld [vmem:[%s1523 + $0x28] sm:$0xf]
      %v1535 = vld [vmem:[%s1523 + $0x2c] sm:$0xf]
      %v1536 = vld [vmem:[%s1523 + $0x30] sm:$0xf]
      %v1537 = vld [vmem:[%s1523 + $0x34] sm:$0xf]
      %v1538 = vld [vmem:[%s1523 + $0x38] sm:$0xf]
      %v1539 = vld [vmem:[%s1523 + $0x3c] sm:$0xf]
      %v1542 = vunpack.c.l.b16 %v1521
      %v1543 = vunpack.c.l.b16 %v1522
      %v1544 = vpack.c.b16 %v1145, %v1542
      %v1545 = vpack.c.b16 %v1543, %v1146
      %vm1546 = vcmask 1045504
      %v1547 = vrot.slane %v1544, 2
      %v1548 = vrot.slane %v1545, 2
      %v1549 = vsel %vm1546, %v1547, %v1548
      %v1568 = vunpack.c.l.b16 %v1524
      %v1569 = vunpack.c.l.b16 %v1525
      %v1570 = vunpack.c.l.b16 %v1526
      %v1571 = vunpack.c.l.b16 %v1527
      %v1572 = vunpack.c.l.b16 %v1528
      %v1573 = vunpack.c.l.b16 %v1529
      %v1574 = vunpack.c.l.b16 %v1530
      %v1575 = vunpack.c.l.b16 %v1531
      %v1576 = vunpack.c.l.b16 %v1532
      %v1577 = vunpack.c.l.b16 %v1533
      %v1578 = vunpack.c.l.b16 %v1534
      %v1579 = vunpack.c.l.b16 %v1535
      %v1580 = vunpack.c.l.b16 %v1536
      %v1581 = vunpack.c.l.b16 %v1537
      %v1582 = vunpack.c.l.b16 %v1538
      %v1583 = vunpack.c.l.b16 %v1539
      %v1584 = vpack.c.b16 %v1569, %v1568
      %v1585 = vpack.c.b16 %v1571, %v1570
      %v1586 = vpack.c.b16 %v1573, %v1572
      %v1587 = vpack.c.b16 %v1575, %v1574
      %v1588 = vpack.c.b16 %v1577, %v1576
      %v1589 = vpack.c.b16 %v1579, %v1578
      %v1590 = vpack.c.b16 %v1581, %v1580
      %v1591 = vpack.c.b16 %v1583, %v1582
      %1600 = vmatprep.subr.bf16.mxu0 0
      %1601 = vmatpush1.bf16.msra.mxu0 %v1584
      %1602 = vmatprep.subr.bf16.mxu0 0
      %1603 = vmatpush1.bf16.msra.mxu0 %v1585
      %1604 = vmatprep.subr.bf16.mxu0 0
      %1605 = vmatpush1.bf16.msra.mxu0 %v1586
      %1606 = vmatprep.subr.bf16.mxu0 0
      %1607 = vmatpush1.bf16.msra.mxu0 %v1587
      %1608 = vmatprep.subr.bf16.mxu0 0
      %1609 = vmatpush1.bf16.msra.mxu0 %v1588
      %1610 = vmatprep.subr.bf16.mxu0 0
      %1611 = vmatpush1.bf16.msra.mxu0 %v1589
      %1612 = vmatprep.subr.bf16.mxu0 0
      %1613 = vmatpush1.bf16.msra.mxu0 %v1590
      %1614 = vmatprep.subr.bf16.mxu0 0
      %1615 = vmatpush1.bf16.msra.mxu0 %v1591
      %1616 = vmatprep.subr.bf16.mxu0 0
      %1617 = vmatpush1.bf16.msra.mxu0 0
      %1618 = vmatprep.subr.bf16.mxu0 0
      %1619 = vmatpush1.bf16.msra.mxu0 0
      %1620 = vmatprep.subr.bf16.mxu0 0
      %1621 = vmatpush1.bf16.msra.mxu0 0
      %1622 = vmatprep.subr.bf16.mxu0 0
      %1623 = vmatpush1.bf16.msra.mxu0 0
      %1624 = vmatprep.subr.bf16.mxu0 0
      %1625 = vmatpush1.bf16.msra.mxu0 0
      %1626 = vmatprep.subr.bf16.mxu0 0
      %1627 = vmatpush1.bf16.msra.mxu0 0
      %1628 = vmatprep.subr.bf16.mxu0 0
      %1629 = vmatpush1.bf16.msra.mxu0 0
      %1630 = vmatprep.subr.bf16.mxu0 0
      %1631 = vmatpush1.bf16.msra.mxu0 0
      %1632 = vmatprep.mubr.bf16.mxu0 0
      %1633 = vmatmul.mubr.bf16.gmra.mrb[0].mxu0 %v1549
      %v1634 = vpop.f32.mrb[0].mxu0
      %v1635 = vadd.f32 0.0, %v1634
      %v1636 = vpop.f32.mrb[0].mxu0
      %v1637 = vpop.f32.mrb[0].mxu0
      %v1638 = vadd.f32 0.0, %v1637
      %v1639 = vpop.f32.mrb[0].mxu0
      %1640 = vmatprep.mubr.bf16.mxu0 0
      %1641 = vmatmul.mubr.bf16.gmra.mrb[0].mxu0 %v1548
      %v1642 = vpop.f32.mrb[0].mxu0
      %v1643 = vadd.f32 0.0, %v1642
      %v1644 = vpop.f32.mrb[0].mxu0
      %v1645 = vpop.f32.mrb[0].mxu0
      %v1646 = vadd.f32 0.0, %v1645
      %v1647 = vpop.f32.mrb[0].mxu0
      %1648 = vdwg.mxu0
      %v1649 = vadd.f32 %v1517, %v1635
      %v1650 = vadd.f32 %v1518, %v1638
      %v1651 = vadd.f32 %v1519, %v1643
      %v1652 = vadd.f32 %v1520, %v1646
      %s1653 = scalar_lea.vmem %s1, 704
      %v1654 = vld [vmem:[%s1653] sm:$0xf]
      %v1655 = vld [vmem:[%s1653 + $0x4] sm:$0xf]
      %v1656 = vld [vmem:[%s1653 + $0x8] sm:$0xf]
      %v1657 = vld [vmem:[%s1653 + $0xc] sm:$0xf]
      %v1658 = vld [vmem:[%s1653 + $0x10] sm:$0xf]
      %v1659 = vld [vmem:[%s1653 + $0x14] sm:$0xf]
      %v1660 = vld [vmem:[%s1653 + $0x18] sm:$0xf]
      %v1661 = vld [vmem:[%s1653 + $0x1c] sm:$0xf]
      %v1662 = vld [vmem:[%s1653 + $0x20] sm:$0xf]
      %v1663 = vld [vmem:[%s1653 + $0x24] sm:$0xf]
      %v1664 = vld [vmem:[%s1653 + $0x28] sm:$0xf]
      %v1665 = vld [vmem:[%s1653 + $0x2c] sm:$0xf]
      %v1666 = vld [vmem:[%s1653 + $0x30] sm:$0xf]
      %v1667 = vld [vmem:[%s1653 + $0x34] sm:$0xf]
      %v1668 = vld [vmem:[%s1653 + $0x38] sm:$0xf]
      %v1669 = vld [vmem:[%s1653 + $0x3c] sm:$0xf]
      %v1671 = vshrl.u32 %v1544, 16
      %v1673 = vrot.slane %v1671, 2
      %v1674 = vshll.u32 %v1544, 16
      %v1676 = vrot.slane %v1674, 3
      %v1677 = vor.u32 %v1673, %v1676
      %v1679 = vshrl.u32 %v1545, 16
      %v1681 = vrot.slane %v1679, 2
      %v1682 = vshll.u32 %v1545, 16
      %v1684 = vrot.slane %v1682, 3
      %v1685 = vor.u32 %v1681, %v1684
      %v1686 = vsel %vm728, %v1677, %v1685
      %v1705 = vunpack.c.l.b16 %v1654
      %v1706 = vunpack.c.l.b16 %v1655
      %v1707 = vunpack.c.l.b16 %v1656
      %v1708 = vunpack.c.l.b16 %v1657
      %v1709 = vunpack.c.l.b16 %v1658
      %v1710 = vunpack.c.l.b16 %v1659
      %v1711 = vunpack.c.l.b16 %v1660
      %v1712 = vunpack.c.l.b16 %v1661
      %v1713 = vunpack.c.l.b16 %v1662
      %v1714 = vunpack.c.l.b16 %v1663
      %v1715 = vunpack.c.l.b16 %v1664
      %v1716 = vunpack.c.l.b16 %v1665
      %v1717 = vunpack.c.l.b16 %v1666
      %v1718 = vunpack.c.l.b16 %v1667
      %v1719 = vunpack.c.l.b16 %v1668
      %v1720 = vunpack.c.l.b16 %v1669
      %v1721 = vpack.c.b16 %v1706, %v1705
      %v1722 = vpack.c.b16 %v1708, %v1707
      %v1723 = vpack.c.b16 %v1710, %v1709
      %v1724 = vpack.c.b16 %v1712, %v1711
      %v1725 = vpack.c.b16 %v1714, %v1713
      %v1726 = vpack.c.b16 %v1716, %v1715
      %v1727 = vpack.c.b16 %v1718, %v1717
      %v1728 = vpack.c.b16 %v1720, %v1719
      %1737 = vmatprep.subr.bf16.mxu0 0
      %1738 = vmatpush1.bf16.msra.mxu0 %v1721
      %1739 = vmatprep.subr.bf16.mxu0 0
      %1740 = vmatpush1.bf16.msra.mxu0 %v1722
      %1741 = vmatprep.subr.bf16.mxu0 0
      %1742 = vmatpush1.bf16.msra.mxu0 %v1723
      %1743 = vmatprep.subr.bf16.mxu0 0
      %1744 = vmatpush1.bf16.msra.mxu0 %v1724
      %1745 = vmatprep.subr.bf16.mxu0 0
      %1746 = vmatpush1.bf16.msra.mxu0 %v1725
      %1747 = vmatprep.subr.bf16.mxu0 0
      %1748 = vmatpush1.bf16.msra.mxu0 %v1726
      %1749 = vmatprep.subr.bf16.mxu0 0
      %1750 = vmatpush1.bf16.msra.mxu0 %v1727
      %1751 = vmatprep.subr.bf16.mxu0 0
      %1752 = vmatpush1.bf16.msra.mxu0 %v1728
      %1753 = vmatprep.subr.bf16.mxu0 0
      %1754 = vmatpush1.bf16.msra.mxu0 0
      %1755 = vmatprep.subr.bf16.mxu0 0
      %1756 = vmatpush1.bf16.msra.mxu0 0
      %1757 = vmatprep.subr.bf16.mxu0 0
      %1758 = vmatpush1.bf16.msra.mxu0 0
      %1759 = vmatprep.subr.bf16.mxu0 0
      %1760 = vmatpush1.bf16.msra.mxu0 0
      %1761 = vmatprep.subr.bf16.mxu0 0
      %1762 = vmatpush1.bf16.msra.mxu0 0
      %1763 = vmatprep.subr.bf16.mxu0 0
      %1764 = vmatpush1.bf16.msra.mxu0 0
      %1765 = vmatprep.subr.bf16.mxu0 0
      %1766 = vmatpush1.bf16.msra.mxu0 0
      %1767 = vmatprep.subr.bf16.mxu0 0
      %1768 = vmatpush1.bf16.msra.mxu0 0
      %1769 = vmatprep.mubr.bf16.mxu0 0
      %1770 = vmatmul.mubr.bf16.gmra.mrb[0].mxu0 %v1686
      %v1771 = vpop.f32.mrb[0].mxu0
      %v1772 = vadd.f32 0.0, %v1771
      %v1773 = vpop.f32.mrb[0].mxu0
      %v1774 = vpop.f32.mrb[0].mxu0
      %v1775 = vadd.f32 0.0, %v1774
      %v1776 = vpop.f32.mrb[0].mxu0
      %1777 = vmatprep.mubr.bf16.mxu0 0
      %1778 = vmatmul.mubr.bf16.gmra.mrb[0].mxu0 %v1685
      %v1779 = vpop.f32.mrb[0].mxu0
      %v1780 = vadd.f32 0.0, %v1779
      %v1781 = vpop.f32.mrb[0].mxu0
      %v1782 = vpop.f32.mrb[0].mxu0
      %v1783 = vadd.f32 0.0, %v1782
      %v1784 = vpop.f32.mrb[0].mxu0
      %1785 = vdwg.mxu0
      %v1786 = vadd.f32 %v1649, %v1772
      %v1787 = vadd.f32 %v1650, %v1775
      %v1788 = vadd.f32 %v1651, %v1780
      %v1789 = vadd.f32 %v1652, %v1783
      %v1790 = vld [vmem:[%s165 + $0x4] sm:$0x8]
      %v1791 = vld [vmem:[%s165 + $0x10] sm:$0xf]
      %s1792 = scalar_lea.vmem %s1, 768
      %v1793 = vld [vmem:[%s1792] sm:$0xf]
      %v1794 = vld [vmem:[%s1792 + $0x4] sm:$0xf]
      %v1795 = vld [vmem:[%s1792 + $0x8] sm:$0xf]
      %v1796 = vld [vmem:[%s1792 + $0xc] sm:$0xf]
      %v1797 = vld [vmem:[%s1792 + $0x10] sm:$0xf]
      %v1798 = vld [vmem:[%s1792 + $0x14] sm:$0xf]
      %v1799 = vld [vmem:[%s1792 + $0x18] sm:$0xf]
      %v1800 = vld [vmem:[%s1792 + $0x1c] sm:$0xf]
      %v1801 = vld [vmem:[%s1792 + $0x20] sm:$0xf]
      %v1802 = vld [vmem:[%s1792 + $0x24] sm:$0xf]
      %v1803 = vld [vmem:[%s1792 + $0x28] sm:$0xf]
      %v1804 = vld [vmem:[%s1792 + $0x2c] sm:$0xf]
      %v1805 = vld [vmem:[%s1792 + $0x30] sm:$0xf]
      %v1806 = vld [vmem:[%s1792 + $0x34] sm:$0xf]
      %v1807 = vld [vmem:[%s1792 + $0x38] sm:$0xf]
      %v1808 = vld [vmem:[%s1792 + $0x3c] sm:$0xf]
      %v1811 = vunpack.c.l.b16 %v1790
      %v1812 = vunpack.c.l.b16 %v1791
      %v1813 = vpack.c.b16 %v1145, %v1811
      %v1814 = vpack.c.b16 %v1812, %v1146
      %v1816 = vshrl.u32 %v1813, 16
      %v1818 = vrot.slane %v1816, 3
      %v1819 = vshll.u32 %v1813, 16
      %v1821 = vrot.slane %v1819, 4
      %v1822 = vor.u32 %v1818, %v1821
      %v1824 = vshrl.u32 %v1814, 16
      %v1826 = vrot.slane %v1824, 3
      %v1827 = vshll.u32 %v1814, 16
      %v1829 = vrot.slane %v1827, 4
      %v1830 = vor.u32 %v1826, %v1829
      %v1831 = vsel %vm998, %v1822, %v1830
      %v1850 = vunpack.c.l.b16 %v1793
      %v1851 = vunpack.c.l.b16 %v1794
      %v1852 = vunpack.c.l.b16 %v1795
      %v1853 = vunpack.c.l.b16 %v1796
      %v1854 = vunpack.c.l.b16 %v1797
      %v1855 = vunpack.c.l.b16 %v1798
      %v1856 = vunpack.c.l.b16 %v1799
      %v1857 = vunpack.c.l.b16 %v1800
      %v1858 = vunpack.c.l.b16 %v1801
      %v1859 = vunpack.c.l.b16 %v1802
      %v1860 = vunpack.c.l.b16 %v1803
      %v1861 = vunpack.c.l.b16 %v1804
      %v1862 = vunpack.c.l.b16 %v1805
      %v1863 = vunpack.c.l.b16 %v1806
      %v1864 = vunpack.c.l.b16 %v1807
      %v1865 = vunpack.c.l.b16 %v1808
      %v1866 = vpack.c.b16 %v1851, %v1850
      %v1867 = vpack.c.b16 %v1853, %v1852
      %v1868 = vpack.c.b16 %v1855, %v1854
      %v1869 = vpack.c.b16 %v1857, %v1856
      %v1870 = vpack.c.b16 %v1859, %v1858
      %v1871 = vpack.c.b16 %v1861, %v1860
      %v1872 = vpack.c.b16 %v1863, %v1862
      %v1873 = vpack.c.b16 %v1865, %v1864
      %1882 = vmatprep.subr.bf16.mxu0 0
      %1883 = vmatpush1.bf16.msra.mxu0 %v1866
      %1884 = vmatprep.subr.bf16.mxu0 0
      %1885 = vmatpush1.bf16.msra.mxu0 %v1867
      %1886 = vmatprep.subr.bf16.mxu0 0
      %1887 = vmatpush1.bf16.msra.mxu0 %v1868
      %1888 = vmatprep.subr.bf16.mxu0 0
      %1889 = vmatpush1.bf16.msra.mxu0 %v1869
      %1890 = vmatprep.subr.bf16.mxu0 0
      %1891 = vmatpush1.bf16.msra.mxu0 %v1870
      %1892 = vmatprep.subr.bf16.mxu0 0
      %1893 = vmatpush1.bf16.msra.mxu0 %v1871
      %1894 = vmatprep.subr.bf16.mxu0 0
      %1895 = vmatpush1.bf16.msra.mxu0 %v1872
      %1896 = vmatprep.subr.bf16.mxu0 0
      %1897 = vmatpush1.bf16.msra.mxu0 %v1873
      %1898 = vmatprep.subr.bf16.mxu0 0
      %1899 = vmatpush1.bf16.msra.mxu0 0
      %1900 = vmatprep.subr.bf16.mxu0 0
      %1901 = vmatpush1.bf16.msra.mxu0 0
      %1902 = vmatprep.subr.bf16.mxu0 0
      %1903 = vmatpush1.bf16.msra.mxu0 0
      %1904 = vmatprep.subr.bf16.mxu0 0
      %1905 = vmatpush1.bf16.msra.mxu0 0
      %1906 = vmatprep.subr.bf16.mxu0 0
      %1907 = vmatpush1.bf16.msra.mxu0 0
      %1908 = vmatprep.subr.bf16.mxu0 0
      %1909 = vmatpush1.bf16.msra.mxu0 0
      %1910 = vmatprep.subr.bf16.mxu0 0
      %1911 = vmatpush1.bf16.msra.mxu0 0
      %1912 = vmatprep.subr.bf16.mxu0 0
      %1913 = vmatpush1.bf16.msra.mxu0 0
      %1914 = vmatprep.mubr.bf16.mxu0 0
      %1915 = vmatmul.mubr.bf16.gmra.mrb[0].mxu0 %v1831
      %v1916 = vpop.f32.mrb[0].mxu0
      %v1917 = vadd.f32 0.0, %v1916
      %v1918 = vpop.f32.mrb[0].mxu0
      %v1919 = vpop.f32.mrb[0].mxu0
      %v1920 = vadd.f32 0.0, %v1919
      %v1921 = vpop.f32.mrb[0].mxu0
      %1922 = vmatprep.mubr.bf16.mxu0 0
      %1923 = vmatmul.mubr.bf16.gmra.mrb[0].mxu0 %v1830
      %v1924 = vpop.f32.mrb[0].mxu0
      %v1925 = vadd.f32 0.0, %v1924
      %v1926 = vpop.f32.mrb[0].mxu0
      %v1927 = vpop.f32.mrb[0].mxu0
      %v1928 = vadd.f32 0.0, %v1927
      %v1929 = vpop.f32.mrb[0].mxu0
      %1930 = vdwg.mxu0
      %v1931 = vadd.f32 %v1786, %v1917
      %v1932 = vadd.f32 %v1787, %v1920
      %v1933 = vadd.f32 %v1788, %v1925
      %v1934 = vadd.f32 %v1789, %v1928
      %v1935 = vld [vmem:[%s165 + $0x8] sm:$0xf]
      %v1936 = vld [vmem:[%s165 + $0xc] sm:$0xf]
      %v1937 = vld [vmem:[%s165 + $0x10] sm:$0xf]
      %v1938 = vld [vmem:[%s165 + $0x14] sm:$0x1]
      %s1939 = scalar_lea.vmem %s1, 832
      %v1940 = vld [vmem:[%s1939] sm:$0xf]
      %v1941 = vld [vmem:[%s1939 + $0x4] sm:$0xf]
      %v1942 = vld [vmem:[%s1939 + $0x8] sm:$0xf]
      %v1943 = vld [vmem:[%s1939 + $0xc] sm:$0xf]
      %v1944 = vld [vmem:[%s1939 + $0x10] sm:$0xf]
      %v1945 = vld [vmem:[%s1939 + $0x14] sm:$0xf]
      %v1946 = vld [vmem:[%s1939 + $0x18] sm:$0xf]
      %v1947 = vld [vmem:[%s1939 + $0x1c] sm:$0xf]
      %v1948 = vld [vmem:[%s1939 + $0x20] sm:$0xf]
      %v1949 = vld [vmem:[%s1939 + $0x24] sm:$0xf]
      %v1950 = vld [vmem:[%s1939 + $0x28] sm:$0xf]
      %v1951 = vld [vmem:[%s1939 + $0x2c] sm:$0xf]
      %v1952 = vld [vmem:[%s1939 + $0x30] sm:$0xf]
      %v1953 = vld [vmem:[%s1939 + $0x34] sm:$0xf]
      %v1954 = vld [vmem:[%s1939 + $0x38] sm:$0xf]
      %v1955 = vld [vmem:[%s1939 + $0x3c] sm:$0xf]
      %v1960 = vunpack.c.l.b16 %v1935
      %v1961 = vunpack.c.l.b16 %v1936
      %v1962 = vunpack.c.l.b16 %v1937
      %v1963 = vunpack.c.l.b16 %v1938
      %v1964 = vpack.c.b16 %v1961, %v1960
      %v1965 = vpack.c.b16 %v1963, %v1962
      %v1984 = vunpack.c.l.b16 %v1940
      %v1985 = vunpack.c.l.b16 %v1941
      %v1986 = vunpack.c.l.b16 %v1942
      %v1987 = vunpack.c.l.b16 %v1943
      %v1988 = vunpack.c.l.b16 %v1944
      %v1989 = vunpack.c.l.b16 %v1945
      %v1990 = vunpack.c.l.b16 %v1946
      %v1991 = vunpack.c.l.b16 %v1947
      %v1992 = vunpack.c.l.b16 %v1948
      %v1993 = vunpack.c.l.b16 %v1949
      %v1994 = vunpack.c.l.b16 %v1950
      %v1995 = vunpack.c.l.b16 %v1951
      %v1996 = vunpack.c.l.b16 %v1952
      %v1997 = vunpack.c.l.b16 %v1953
      %v1998 = vunpack.c.l.b16 %v1954
      %v1999 = vunpack.c.l.b16 %v1955
      %v2000 = vpack.c.b16 %v1985, %v1984
      %v2001 = vpack.c.b16 %v1987, %v1986
      %v2002 = vpack.c.b16 %v1989, %v1988
      %v2003 = vpack.c.b16 %v1991, %v1990
      %v2004 = vpack.c.b16 %v1993, %v1992
      %v2005 = vpack.c.b16 %v1995, %v1994
      %v2006 = vpack.c.b16 %v1997, %v1996
      %v2007 = vpack.c.b16 %v1999, %v1998
      %2016 = vmatprep.subr.bf16.mxu0 0
      %2017 = vmatpush1.bf16.msra.mxu0 %v2000
      %2018 = vmatprep.subr.bf16.mxu0 0
      %2019 = vmatpush1.bf16.msra.mxu0 %v2001
      %2020 = vmatprep.subr.bf16.mxu0 0
      %2021 = vmatpush1.bf16.msra.mxu0 %v2002
      %2022 = vmatprep.subr.bf16.mxu0 0
      %2023 = vmatpush1.bf16.msra.mxu0 %v2003
      %2024 = vmatprep.subr.bf16.mxu0 0
      %2025 = vmatpush1.bf16.msra.mxu0 %v2004
      %2026 = vmatprep.subr.bf16.mxu0 0
      %2027 = vmatpush1.bf16.msra.mxu0 %v2005
      %2028 = vmatprep.subr.bf16.mxu0 0
      %2029 = vmatpush1.bf16.msra.mxu0 %v2006
      %2030 = vmatprep.subr.bf16.mxu0 0
      %2031 = vmatpush1.bf16.msra.mxu0 %v2007
      %2032 = vmatprep.subr.bf16.mxu0 0
      %2033 = vmatpush1.bf16.msra.mxu0 0
      %2034 = vmatprep.subr.bf16.mxu0 0
      %2035 = vmatpush1.bf16.msra.mxu0 0
      %2036 = vmatprep.subr.bf16.mxu0 0
      %2037 = vmatpush1.bf16.msra.mxu0 0
      %2038 = vmatprep.subr.bf16.mxu0 0
      %2039 = vmatpush1.bf16.msra.mxu0 0
      %2040 = vmatprep.subr.bf16.mxu0 0
      %2041 = vmatpush1.bf16.msra.mxu0 0
      %2042 = vmatprep.subr.bf16.mxu0 0
      %2043 = vmatpush1.bf16.msra.mxu0 0
      %2044 = vmatprep.subr.bf16.mxu0 0
      %2045 = vmatpush1.bf16.msra.mxu0 0
      %2046 = vmatprep.subr.bf16.mxu0 0
      %2047 = vmatpush1.bf16.msra.mxu0 0
      %2048 = vmatprep.mubr.bf16.mxu0 0
      %2049 = vmatmul.mubr.bf16.gmra.mrb[0].mxu0 %v1964
      %v2050 = vpop.f32.mrb[0].mxu0
      %v2051 = vadd.f32 0.0, %v2050
      %v2052 = vpop.f32.mrb[0].mxu0
      %v2053 = vpop.f32.mrb[0].mxu0
      %v2054 = vadd.f32 0.0, %v2053
      %v2055 = vpop.f32.mrb[0].mxu0
      %2056 = vmatprep.mubr.bf16.mxu0 0
      %2057 = vmatmul.mubr.bf16.gmra.mrb[0].mxu0 %v1965
      %v2058 = vpop.f32.mrb[0].mxu0
      %v2059 = vadd.f32 0.0, %v2058
      %v2060 = vpop.f32.mrb[0].mxu0
      %v2061 = vpop.f32.mrb[0].mxu0
      %v2062 = vadd.f32 0.0, %v2061
      %v2063 = vpop.f32.mrb[0].mxu0
      %2064 = vdwg.mxu0
      %v2065 = vadd.f32 %v1931, %v2051
      %v2066 = vadd.f32 %v1932, %v2054
      %v2067 = vadd.f32 %v1933, %v2059
      %v2068 = vadd.f32 %v1934, %v2062
      %s2069 = scalar_lea.vmem %s1, 896
      %v2070 = vld [vmem:[%s2069] sm:$0xf]
      %v2071 = vld [vmem:[%s2069 + $0x4] sm:$0xf]
      %v2072 = vld [vmem:[%s2069 + $0x8] sm:$0xf]
      %v2073 = vld [vmem:[%s2069 + $0xc] sm:$0xf]
      %v2074 = vld [vmem:[%s2069 + $0x10] sm:$0xf]
      %v2075 = vld [vmem:[%s2069 + $0x14] sm:$0xf]
      %v2076 = vld [vmem:[%s2069 + $0x18] sm:$0xf]
      %v2077 = vld [vmem:[%s2069 + $0x1c] sm:$0xf]
      %v2078 = vld [vmem:[%s2069 + $0x20] sm:$0xf]
      %v2079 = vld [vmem:[%s2069 + $0x24] sm:$0xf]
      %v2080 = vld [vmem:[%s2069 + $0x28] sm:$0xf]
      %v2081 = vld [vmem:[%s2069 + $0x2c] sm:$0xf]
      %v2082 = vld [vmem:[%s2069 + $0x30] sm:$0xf]
      %v2083 = vld [vmem:[%s2069 + $0x34] sm:$0xf]
      %v2084 = vld [vmem:[%s2069 + $0x38] sm:$0xf]
      %v2085 = vld [vmem:[%s2069 + $0x3c] sm:$0xf]
      %v2087 = vshrl.u32 %v1964, 16
      %v2089 = vshll.u32 %v1964, 16
      %v2091 = vrot.slane %v2089, 1
      %v2092 = vor.u32 %v2087, %v2091
      %v2094 = vshll.u32 %v1965, 16
      %v2096 = vrot.slane %v2094, 1
      %v2097 = vsel %vm219, %v2092, %v2096
      %v2098 = vshrl.u32 %v1965, 16
      %v2100 = vor.u32 %v2098, %v2096
      %v2119 = vunpack.c.l.b16 %v2070
      %v2120 = vunpack.c.l.b16 %v2071
      %v2121 = vunpack.c.l.b16 %v2072
      %v2122 = vunpack.c.l.b16 %v2073
      %v2123 = vunpack.c.l.b16 %v2074
      %v2124 = vunpack.c.l.b16 %v2075
      %v2125 = vunpack.c.l.b16 %v2076
      %v2126 = vunpack.c.l.b16 %v2077
      %v2127 = vunpack.c.l.b16 %v2078
      %v2128 = vunpack.c.l.b16 %v2079
      %v2129 = vunpack.c.l.b16 %v2080
      %v2130 = vunpack.c.l.b16 %v2081
      %v2131 = vunpack.c.l.b16 %v2082
      %v2132 = vunpack.c.l.b16 %v2083
      %v2133 = vunpack.c.l.b16 %v2084
      %v2134 = vunpack.c.l.b16 %v2085
      %v2135 = vpack.c.b16 %v2120, %v2119
      %v2136 = vpack.c.b16 %v2122, %v2121
      %v2137 = vpack.c.b16 %v2124, %v2123
      %v2138 = vpack.c.b16 %v2126, %v2125
      %v2139 = vpack.c.b16 %v2128, %v2127
      %v2140 = vpack.c.b16 %v2130, %v2129
      %v2141 = vpack.c.b16 %v2132, %v2131
      %v2142 = vpack.c.b16 %v2134, %v2133
      %2151 = vmatprep.subr.bf16.mxu0 0
      %2152 = vmatpush1.bf16.msra.mxu0 %v2135
      %2153 = vmatprep.subr.bf16.mxu0 0
      %2154 = vmatpush1.bf16.msra.mxu0 %v2136
      %2155 = vmatprep.subr.bf16.mxu0 0
      %2156 = vmatpush1.bf16.msra.mxu0 %v2137
      %2157 = vmatprep.subr.bf16.mxu0 0
      %2158 = vmatpush1.bf16.msra.mxu0 %v2138
      %2159 = vmatprep.subr.bf16.mxu0 0
      %2160 = vmatpush1.bf16.msra.mxu0 %v2139
      %2161 = vmatprep.subr.bf16.mxu0 0
      %2162 = vmatpush1.bf16.msra.mxu0 %v2140
      %2163 = vmatprep.subr.bf16.mxu0 0
      %2164 = vmatpush1.bf16.msra.mxu0 %v2141
      %2165 = vmatprep.subr.bf16.mxu0 0
      %2166 = vmatpush1.bf16.msra.mxu0 %v2142
      %2167 = vmatprep.subr.bf16.mxu0 0
      %2168 = vmatpush1.bf16.msra.mxu0 0
      %2169 = vmatprep.subr.bf16.mxu0 0
      %2170 = vmatpush1.bf16.msra.mxu0 0
      %2171 = vmatprep.subr.bf16.mxu0 0
      %2172 = vmatpush1.bf16.msra.mxu0 0
      %2173 = vmatprep.subr.bf16.mxu0 0
      %2174 = vmatpush1.bf16.msra.mxu0 0
      %2175 = vmatprep.subr.bf16.mxu0 0
      %2176 = vmatpush1.bf16.msra.mxu0 0
      %2177 = vmatprep.subr.bf16.mxu0 0
      %2178 = vmatpush1.bf16.msra.mxu0 0
      %2179 = vmatprep.subr.bf16.mxu0 0
      %2180 = vmatpush1.bf16.msra.mxu0 0
      %2181 = vmatprep.subr.bf16.mxu0 0
      %2182 = vmatpush1.bf16.msra.mxu0 0
      %2183 = vmatprep.mubr.bf16.mxu0 0
      %2184 = vmatmul.mubr.bf16.gmra.mrb[0].mxu0 %v2097
      %v2185 = vpop.f32.mrb[0].mxu0
      %v2186 = vadd.f32 0.0, %v2185
      %v2187 = vpop.f32.mrb[0].mxu0
      %v2188 = vpop.f32.mrb[0].mxu0
      %v2189 = vadd.f32 0.0, %v2188
      %v2190 = vpop.f32.mrb[0].mxu0
      %2191 = vmatprep.mubr.bf16.mxu0 0
      %2192 = vmatmul.mubr.bf16.gmra.mrb[0].mxu0 %v2100
      %v2193 = vpop.f32.mrb[0].mxu0
      %v2194 = vadd.f32 0.0, %v2193
      %v2195 = vpop.f32.mrb[0].mxu0
      %v2196 = vpop.f32.mrb[0].mxu0
      %v2197 = vadd.f32 0.0, %v2196
      %v2198 = vpop.f32.mrb[0].mxu0
      %2199 = vdwg.mxu0
      %v2200 = vadd.f32 %v2065, %v2186
      %v2201 = vadd.f32 %v2066, %v2189
      %v2202 = vadd.f32 %v2067, %v2194
      %v2203 = vadd.f32 %v2068, %v2197
      %v2204 = vld [vmem:[%s165 + $0x8] sm:$0xe]
      %v2205 = vld [vmem:[%s165 + $0x14] sm:$0x3]
      %s2206 = scalar_lea.vmem %s1, 960
      %v2207 = vld [vmem:[%s2206] sm:$0xf]
      %v2208 = vld [vmem:[%s2206 + $0x4] sm:$0xf]
      %v2209 = vld [vmem:[%s2206 + $0x8] sm:$0xf]
      %v2210 = vld [vmem:[%s2206 + $0xc] sm:$0xf]
      %v2211 = vld [vmem:[%s2206 + $0x10] sm:$0xf]
      %v2212 = vld [vmem:[%s2206 + $0x14] sm:$0xf]
      %v2213 = vld [vmem:[%s2206 + $0x18] sm:$0xf]
      %v2214 = vld [vmem:[%s2206 + $0x1c] sm:$0xf]
      %v2215 = vld [vmem:[%s2206 + $0x20] sm:$0xf]
      %v2216 = vld [vmem:[%s2206 + $0x24] sm:$0xf]
      %v2217 = vld [vmem:[%s2206 + $0x28] sm:$0xf]
      %v2218 = vld [vmem:[%s2206 + $0x2c] sm:$0xf]
      %v2219 = vld [vmem:[%s2206 + $0x30] sm:$0xf]
      %v2220 = vld [vmem:[%s2206 + $0x34] sm:$0xf]
      %v2221 = vld [vmem:[%s2206 + $0x38] sm:$0xf]
      %v2222 = vld [vmem:[%s2206 + $0x3c] sm:$0xf]
      %v2225 = vunpack.c.l.b16 %v2204
      %v2226 = vunpack.c.l.b16 %v2205
      %v2227 = vpack.c.b16 %v1961, %v2225
      %v2228 = vpack.c.b16 %v2226, %v1962
      %v2229 = vrot.slane %v2227, 1
      %v2230 = vrot.slane %v2228, 1
      %v2231 = vsel %vm458, %v2229, %v2230
      %v2250 = vunpack.c.l.b16 %v2207
      %v2251 = vunpack.c.l.b16 %v2208
      %v2252 = vunpack.c.l.b16 %v2209
      %v2253 = vunpack.c.l.b16 %v2210
      %v2254 = vunpack.c.l.b16 %v2211
      %v2255 = vunpack.c.l.b16 %v2212
      %v2256 = vunpack.c.l.b16 %v2213
      %v2257 = vunpack.c.l.b16 %v2214
      %v2258 = vunpack.c.l.b16 %v2215
      %v2259 = vunpack.c.l.b16 %v2216
      %v2260 = vunpack.c.l.b16 %v2217
      %v2261 = vunpack.c.l.b16 %v2218
      %v2262 = vunpack.c.l.b16 %v2219
      %v2263 = vunpack.c.l.b16 %v2220
      %v2264 = vunpack.c.l.b16 %v2221
      %v2265 = vunpack.c.l.b16 %v2222
      %v2266 = vpack.c.b16 %v2251, %v2250
      %v2267 = vpack.c.b16 %v2253, %v2252
      %v2268 = vpack.c.b16 %v2255, %v2254
      %v2269 = vpack.c.b16 %v2257, %v2256
      %v2270 = vpack.c.b16 %v2259, %v2258
      %v2271 = vpack.c.b16 %v2261, %v2260
      %v2272 = vpack.c.b16 %v2263, %v2262
      %v2273 = vpack.c.b16 %v2265, %v2264
      %2282 = vmatprep.subr.bf16.mxu0 0
      %2283 = vmatpush1.bf16.msra.mxu0 %v2266
      %2284 = vmatprep.subr.bf16.mxu0 0
      %2285 = vmatpush1.bf16.msra.mxu0 %v2267
      %2286 = vmatprep.subr.bf16.mxu0 0
      %2287 = vmatpush1.bf16.msra.mxu0 %v2268
      %2288 = vmatprep.subr.bf16.mxu0 0
      %2289 = vmatpush1.bf16.msra.mxu0 %v2269
      %2290 = vmatprep.subr.bf16.mxu0 0
      %2291 = vmatpush1.bf16.msra.mxu0 %v2270
      %2292 = vmatprep.subr.bf16.mxu0 0
      %2293 = vmatpush1.bf16.msra.mxu0 %v2271
      %2294 = vmatprep.subr.bf16.mxu0 0
      %2295 = vmatpush1.bf16.msra.mxu0 %v2272
      %2296 = vmatprep.subr.bf16.mxu0 0
      %2297 = vmatpush1.bf16.msra.mxu0 %v2273
      %2298 = vmatprep.subr.bf16.mxu0 0
      %2299 = vmatpush1.bf16.msra.mxu0 0
      %2300 = vmatprep.subr.bf16.mxu0 0
      %2301 = vmatpush1.bf16.msra.mxu0 0
      %2302 = vmatprep.subr.bf16.mxu0 0
      %2303 = vmatpush1.bf16.msra.mxu0 0
      %2304 = vmatprep.subr.bf16.mxu0 0
      %2305 = vmatpush1.bf16.msra.mxu0 0
      %2306 = vmatprep.subr.bf16.mxu0 0
      %2307 = vmatpush1.bf16.msra.mxu0 0
      %2308 = vmatprep.subr.bf16.mxu0 0
      %2309 = vmatpush1.bf16.msra.mxu0 0
      %2310 = vmatprep.subr.bf16.mxu0 0
      %2311 = vmatpush1.bf16.msra.mxu0 0
      %2312 = vmatprep.subr.bf16.mxu0 0
      %2313 = vmatpush1.bf16.msra.mxu0 0
      %2314 = vmatprep.mubr.bf16.mxu0 0
      %2315 = vmatmul.mubr.bf16.gmra.mrb[0].mxu0 %v2231
      %v2316 = vpop.f32.mrb[0].mxu0
      %v2317 = vadd.f32 0.0, %v2316
      %v2318 = vpop.f32.mrb[0].mxu0
      %v2319 = vpop.f32.mrb[0].mxu0
      %v2320 = vadd.f32 0.0, %v2319
      %v2321 = vpop.f32.mrb[0].mxu0
      %2322 = vmatprep.mubr.bf16.mxu0 0
      %2323 = vmatmul.mubr.bf16.gmra.mrb[0].mxu0 %v2230
      %v2324 = vpop.f32.mrb[0].mxu0
      %v2325 = vadd.f32 0.0, %v2324
      %v2326 = vpop.f32.mrb[0].mxu0
      %v2327 = vpop.f32.mrb[0].mxu0
      %v2328 = vadd.f32 0.0, %v2327
      %v2329 = vpop.f32.mrb[0].mxu0
      %2330 = vdwg.mxu0
      %v2331 = vadd.f32 %v2200, %v2317
      %v2332 = vadd.f32 %v2201, %v2320
      %v2333 = vadd.f32 %v2202, %v2325
      %v2334 = vadd.f32 %v2203, %v2328
      %v2335 = vld [vmem:[%s2] sm:$0x1]
      %v2337 = vlaneseq
      %v2338 = vshrl.u32 %v2337, 7
      %v2339 = vsub.s32 0, %v2338
      %v2340 = vrot.slane %v2335, %v2339
      %v2342 = vadd.f32 %v2331, %v2340
      %v2343 = vadd.f32 %v2332, %v2340
      %v2344 = vadd.f32 %v2333, %v2340
      %v2345 = vadd.f32 %v2334, %v2340
      %2346 = vst [vmem:[%s170] sm:$0xff] %v2342
      %2347 = vst [vmem:[%s170 + $0x8] sm:$0xff] %v2343
      %2348 = vst [vmem:[%s170 + $0x10] sm:$0xff] %v2344
      %2349 = vst [vmem:[%s170 + $0x18] sm:$0x1] %v2345
      %p2350 = scmp.lt.s32.totalorder %s14, 1
      %s2351 = scalar_select %p2350, %s14, 1
      %s2352 = smul.addr %s2351, 4
      %s2353 = smul.addr %s2352, 8
      %s2354 = scalar_lea.vmem %s3, %s2353
      // Predicated region
      $region33: #{patch_discriminator_forward.17} parent=31 // pred_check
        %p2355 = pneg %p100
      $region34: #{patch_discriminator_forward.17} parent=31 // pred_check_branch
        %2357 = sbr.rel (%p2355) target = $region36
      $region35: #{patch_discriminator_forward.17} parent=31 // pred_region
        _
      $region36: #{patch_discriminator_forward.17} parent=31 // pred_fallthru
        _
    $region32: #{patch_discriminator_forward.17} parent=5 // pred_fallthru
      _
    %p2358 = scmp.le.s32.totalorder 2, %s9
    // Predicated region
    $region37: #{patch_discriminator_forward.17} parent=5 // pred_check
      %p2359 = pneg %p2358
    $region38: #{patch_discriminator_forward.17} parent=5 // pred_check_branch
      %2361 = sbr.rel (%p2359) target = $region40
    $region39: #{patch_discriminator_forward.17} parent=5 // pred_region
      %s2362 = ssub.s32 %s9, 2
      // Predicated region
      $region41: #{patch_discriminator_forward.17} parent=39 // pred_check
        %p2363 = pneg %p106
      $region42: #{patch_discriminator_forward.17} parent=39 // pred_check_branch
        %2365 = sbr.rel (%p2363) target = $region44
      $region43: #{patch_discriminator_forward.17} parent=39 // pred_region
        %p2366 = scmp.lt.s32.totalorder %s15, 1
        %s2367 = scalar_select %p2366, %s15, 1
        %s2368 = smul.addr %s2367, 4
        %s2369 = smul.addr %s2368, 8
        %s2370 = scalar_lea.vmem %s3, %s2369
      $region44: #{patch_discriminator_forward.17} parent=39 // pred_fallthru
        _
    $region40: #{patch_discriminator_forward.17} parent=5 // pred_fallthru
      _
  $region6: #{patch_discriminator_forward.17} parent=0 // loop_footer
    %s13 = sadd.s32 1, %s9
  $region7: #{patch_discriminator_forward.17} parent=0 // loop_footer_branch
    %8 = sbr.rel target = $region3
  $region8: #{patch_discriminator_forward.17} parent=0 // loop_exit
    _

</llo_original>
